<compile_context>
chip_gen: v5e
topology: v5e:2x2
jax: 0.10.0
libtpu: 0.0.40
codegen_flags: <defaults>
</compile_context>

<pallas_src>
import functools

import jax
import jax.numpy as jnp
from jax import lax
from jax.experimental import pallas as pl
from jax.experimental.pallas import tpu as pltpu

INPUT_DIM = 239  # fixed by nn.LSTM(239, hidden_size, batch_first=True, num_layers=3)


def _round_up(x, m):
    return (x + m - 1) // m * m


def critic_kernel(x_ref,
                  wih0_ref, whh0_ref, b0_ref,
                  w1cat_ref, b1_ref,
                  w2cat_ref, b2_ref,
                  wf1h_ref, wf1a_ref, bf1_ref,
                  wf2_ref, bf2_ref,
                  wf3_ref, bf3_ref,
                  out_ref,
                  h_scr, c_scr, xproj_scr, h2_scr):
    t_blk, b_blk, _ = x_ref.shape
    fsp = wih0_ref.shape[0]                     # lane-padded state feature dim (256)
    hp = whh0_ref.shape[0]                      # lane-padded hidden dim (mult. of 128)
    f32, bf16 = jnp.float32, jnp.bfloat16

    # Fresh (h, c) at the first time block of each batch block; the time axis is
    # the innermost ("arbitrary") grid axis, so state carries through scratch.
    @pl.when(pl.program_id(1) == 0)
    def _():
        h_scr[...] = jnp.zeros(h_scr.shape, h_scr.dtype)
        c_scr[...] = jnp.zeros(c_scr.shape, c_scr.dtype)

    # ---- hoisted, time-parallel layer-0 input projection (one big MXU op) ----
    xs = x_ref[:, :, :fsp].reshape(t_blk * b_blk, fsp)            # bf16 state slab
    xproj = jnp.dot(xs, wih0_ref[...], preferred_element_type=f32) + b0_ref[...]
    xproj_scr[...] = xproj.astype(bf16).reshape(t_blk, b_blk, 4 * hp)

    # Bias broadcasts / weight loads hoisted out of the recurrence.
    b1b = jnp.broadcast_to(b1_ref[...], (b_blk, 4 * hp))
    b2b = jnp.broadcast_to(b2_ref[...], (b_blk, 4 * hp))
    whh0 = whh0_ref[...]
    w1cat = w1cat_ref[...]
    w2cat = w2cat_ref[...]

    def gates_to_hc(g, c):
        # PyTorch gate order i, f, g, o; hp % 128 == 0 so each slice is whole
        # lane groups; gate math stays f32, new h is cast once to bf16.
        i = jax.nn.sigmoid(g[:, 0 * hp:1 * hp])
        f = jax.nn.sigmoid(g[:, 1 * hp:2 * hp])
        gg = jnp.tanh(g[:, 2 * hp:3 * hp])
        o = jax.nn.sigmoid(g[:, 3 * hp:4 * hp])
        c_new = f * c + i * gg
        return (o * jnp.tanh(c_new)).astype(bf16), c_new

    def step(t, carry):
        h0, c0, h1, c1, h2, c2 = carry
        # 3 dependent MXU matmuls per step (layer-0 x-proj precomputed).
        g0 = xproj_scr[t] + jnp.dot(h0, whh0, preferred_element_type=f32)
        h0, c0 = gates_to_hc(g0, c0)
        g1 = jnp.dot(jnp.concatenate([h0, h1], axis=-1), w1cat,
                     preferred_element_type=f32) + b1b
        h1, c1 = gates_to_hc(g1, c1)
        g2 = jnp.dot(jnp.concatenate([h1, h2], axis=-1), w2cat,
                     preferred_element_type=f32) + b2b
        h2, c2 = gates_to_hc(g2, c2)
        h2_scr[t] = h2                           # bf16 stash for the hoisted head
        return h0, c0, h1, c1, h2, c2

    carry = (h_scr[0], c_scr[0], h_scr[1], c_scr[1], h_scr[2], c_scr[2])
    carry = lax.fori_loop(0, t_blk, step, carry,
                          unroll=(True if t_blk <= 32 else 8))
    h0, c0, h1, c1, h2, c2 = carry               # state hand-off to next T block
    h_scr[0] = h0; h_scr[1] = h1; h_scr[2] = h2
    c_scr[0] = c0; c_scr[1] = c1; c_scr[2] = c2

    # ---- hoisted MLP head + sigmoid, batched over all (T*B) rows ----
    h2_all = h2_scr[...].reshape(t_blk * b_blk, hp)                # bf16
    xa = x_ref[:, :, fsp:].reshape(t_blk * b_blk, x_ref.shape[-1] - fsp)  # bf16 action slab
    z1 = jnp.maximum(
        jnp.dot(h2_all, wf1h_ref[...], preferred_element_type=f32)
        + jnp.dot(xa, wf1a_ref[...], preferred_element_type=f32)
        + bf1_ref[...], 0.0)
    z2 = jnp.maximum(
        jnp.dot(z1.astype(bf16), wf2_ref[...], preferred_element_type=f32)
        + bf2_ref[...], 0.0)
    # Linear(H -> 1) as a lane reduction (avoids a degenerate N=1 matmul).
    z3 = (jnp.sum(z2.reshape(t_blk, b_blk, hp) * wf3_ref[...], axis=-1)
          + bf3_ref[...])                                          # (t_blk, b_blk)
    # Lane-dense store: time in lanes.
    out_ref[...] = jax.nn.sigmoid(z3).T.astype(out_ref.dtype)      # (b_blk, t_blk)


# --------------------------- parameters / padding ---------------------------

def init_params(key, action_size, hidden_size):
    H, A = hidden_size, action_size
    ks = jax.random.split(key, 16)

    def u(k, shape, scale=0.08):
        return jax.random.uniform(k, shape, jnp.float32, -scale, scale)

    # LSTM weights stored pre-transposed (in, 4H); bias = b_ih + b_hh folded.
    return dict(
        wih0=u(ks[0], (INPUT_DIM, 4 * H)), whh0=u(ks[1], (H, 4 * H)), b0=u(ks[2], (1, 4 * H)),
        wih1=u(ks[3], (H, 4 * H)),         whh1=u(ks[4], (H, 4 * H)), b1=u(ks[5], (1, 4 * H)),
        wih2=u(ks[6], (H, 4 * H)),         whh2=u(ks[7], (H, 4 * H)), b2=u(ks[8], (1, 4 * H)),
        # fc_nxt Linear weights pre-transposed (in, out); first layer split into
        # hidden-state part and action part (avoids in-kernel concat with h2).
        wf1h=u(ks[9], (H, H)), wf1a=u(ks[10], (A, H)), bf1=u(ks[11], (1, H)),
        wf2=u(ks[12], (H, H)), bf2=u(ks[13], (1, H)),
        wf3=u(ks[14], (H, 1)), bf3=u(ks[15], (1, 1)),
    )


def _pad_gate_cols(w, h, hp):
    """Zero-pad each of the 4 gate column blocks of a (..., 4*h) array to hp."""
    if hp == h:
        return w
    lead = w.shape[:-1]
    w4 = w.reshape(lead + (4, h))
    w4 = jnp.pad(w4, [(0, 0)] * len(lead) + [(0, 0), (0, hp - h)])
    return w4.reshape(lead + (4 * hp,))


def _pad2(w, rows, cols):
    return jnp.pad(w, ((0, rows - w.shape[0]), (0, cols - w.shape[1])))


@functools.partial(jax.jit, static_argnames=("t_block", "b_block"))
def critic_forward(state, action, params, *, t_block=None, b_block=None):
    """state: (B, T, 239), action: (B, T, A) -> (B, T)."""
    B, T, F = state.shape
    A = action.shape[-1]
    H = params['whh0'].shape[0]
    f32, bf16 = jnp.float32, jnp.bfloat16

    Hp = _round_up(H, 128)                       # lane-pad hidden dim
    Fp = _round_up(F, 128)                       # 239 -> 256 (lane-aligned state slab)
    Ap = _round_up(A, 128)                       # action gets its own lane group
    Fin = Fp + Ap

    # Physical VMEM (trace-time host query); used for the limit clamp + defaults.
    try:
        phys_vmem = int(pltpu.get_tpu_info().vmem_capacity_bytes)
    except Exception:
        phys_vmem = 64 << 20                     # conservative (v7x-sized)

    # Batch tiling: multiple of 16 (bf16 vreg packing); default tile 16 so the
    # "parallel" axis has >=2 blocks whenever Bp >= 32 (v7x megacore).
    Bp = _round_up(B, 16)
    if b_block is None:
        b_blk = Bp if Bp <= 16 else 16
    else:
        b_blk = int(b_block)
    assert Bp % b_blk == 0 and b_blk % 8 == 0

    # Time tiling: real streaming default (bigger on 128-MiB parts); streamed
    # blocks are 128-aligned so the lane-dense output tile stays unmasked.
    if t_block is None:
        t_block = 1024 if phys_vmem >= (96 << 20) else 256
    t_blk = int(t_block)
    if t_blk >= T:
        t_blk, Tp = T, T
    else:
        t_blk = _round_up(t_blk, 128)
        if t_blk >= T:
            t_blk, Tp = T, T
        else:
            Tp = _round_up(T, t_blk)

    # Single bf16 streamed input: [state | action], each padded to a lane
    # boundary, time-major.  Zero T-padding is safe (causal recurrence) and
    # padded batch rows are dropped at the end.
    x_in = jnp.concatenate(
        [jnp.pad(state.astype(bf16), ((0, 0), (0, 0), (0, Fp - F))),
         jnp.pad(action.astype(bf16), ((0, 0), (0, 0), (0, Ap - A)))], axis=-1)
    x_in = jnp.pad(jnp.transpose(x_in, (1, 0, 2)),
                   ((0, Tp - T), (0, Bp - B), (0, 0)))             # (Tp, Bp, Fin)

    # Zero-padded weights; bf16 for MXU inputs, biases / lane-reduce row f32.
    wih0 = jnp.pad(_pad_gate_cols(params['wih0'], H, Hp),
                   ((0, Fp - F), (0, 0))).astype(bf16)             # (Fp, 4Hp)
    whh0 = _pad2(_pad_gate_cols(params['whh0'], H, Hp), Hp, 4 * Hp).astype(bf16)
    b0 = _pad_gate_cols(params['b0'], H, Hp)
    w1cat = jnp.concatenate(                                       # [W_ih1; W_hh1]
        [_pad2(_pad_gate_cols(params['wih1'], H, Hp), Hp, 4 * Hp),
         _pad2(_pad_gate_cols(params['whh1'], H, Hp), Hp, 4 * Hp)], axis=0).astype(bf16)
    b1 = _pad_gate_cols(params['b1'], H, Hp)
    w2cat = jnp.concatenate(                                       # [W_ih2; W_hh2]
        [_pad2(_pad_gate_cols(params['wih2'], H, Hp), Hp, 4 * Hp),
         _pad2(_pad_gate_cols(params['whh2'], H, Hp), Hp, 4 * Hp)], axis=0).astype(bf16)
    b2 = _pad_gate_cols(params['b2'], H, Hp)
    wf1h = _pad2(params['wf1h'], Hp, Hp).astype(bf16)
    wf1a = _pad2(params['wf1a'], Ap, Hp).astype(bf16)
    bf1 = _pad2(params['bf1'], 1, Hp)
    wf2 = _pad2(params['wf2'], Hp, Hp).astype(bf16)
    bf2 = _pad2(params['bf2'], 1, Hp)
    wf3 = _pad2(params['wf3'].T, 1, Hp)                            # (1, Hp) f32
    bf3 = params['bf3']                                            # (1, 1) f32

    weight_args = [wih0, whh0, b0, w1cat, b1, w2cat, b2,
                   wf1h, wf1a, bf1, wf2, bf2, wf3, bf3]

    grid = (Bp // b_blk, Tp // t_blk)            # ("parallel", "arbitrary")

    def full_spec(w):
        return pl.BlockSpec(w.shape, lambda b, t: (0,) * w.ndim)

    in_specs = ([pl.BlockSpec((t_blk, b_blk, Fin), lambda b, t: (t, b, 0))]
                + [full_spec(w) for w in weight_args])
    out_spec = pl.BlockSpec((b_blk, t_blk), lambda b, t: (b, t))   # lane-dense (time in lanes)

    scratch = [pltpu.VMEM((3, b_blk, Hp), bf16),            # h carry across T blocks
               pltpu.VMEM((3, b_blk, Hp), f32),             # c carry across T blocks
               pltpu.VMEM((t_blk, b_blk, 4 * Hp), bf16),    # hoisted layer-0 projection
               pltpu.VMEM((t_blk, b_blk, Hp), bf16)]        # per-step h2 for the head

    # VMEM budget: double-buffered streamed I/O + resident weights + scratch +
    # transient f32 projection/head values + headroom, clamped to physical VMEM.
    in_blk = 2 * t_blk * b_blk * Fin                         # bf16 input block
    out_blk = 4 * b_blk * t_blk                              # f32 output block
    w_bytes = sum(int(w.size) * w.dtype.itemsize for w in weight_args)
    scr_bytes = (3 * b_blk * Hp * (2 + 4)
                 + t_blk * b_blk * 4 * Hp * 2
                 + t_blk * b_blk * Hp * 2)
    transient = 4 * t_blk * b_blk * (4 * Hp + 2 * Hp)        # f32 xproj + head temps
    need = 2 * (in_blk + out_blk) + 2 * w_bytes + scr_bytes + transient + (8 << 20)
    vmem_limit = int(max(min(need, phys_vmem - (8 << 20)), 32 << 20))

    out = pl.pallas_call(
        critic_kernel,
        out_shape=jax.ShapeDtypeStruct((Bp, Tp), f32),
        grid=grid,
        in_specs=in_specs,
        out_specs=out_spec,
        scratch_shapes=scratch,
        compiler_params=pltpu.CompilerParams(
            dimension_semantics=("parallel", "arbitrary"),
            vmem_limit_bytes=vmem_limit),
    )(x_in, *weight_args)

    # (B, T); torch.squeeze would also drop B/T when equal to 1 (edge case).
    return out[:B, :T]


def critic_reference(state, action, params):
    """Pure-JAX f32 reference (lax.scan) matching the module semantics."""
    H = params['whh0'].shape[0]
    B = state.shape[0]

    def cell(x, h, c, wih, whh, b):
        g = x @ wih + h @ whh + b
        i = jax.nn.sigmoid(g[:, :H]); f = jax.nn.sigmoid(g[:, H:2 * H])
        gg = jnp.tanh(g[:, 2 * H:3 * H]); o = jax.nn.sigmoid(g[:, 3 * H:])
        c = f * c + i * gg
        return o * jnp.tanh(c), c

    zeros = jnp.zeros((B, H), jnp.float32)

    def step(carry, xs):
        h0, c0, h1, c1, h2, c2 = carry
        x_t, a_t = xs
        h0, c0 = cell(x_t, h0, c0, params['wih0'], params['whh0'], params['b0'])
        h1, c1 = cell(h0, h1, c1, params['wih1'], params['whh1'], params['b1'])
        h2, c2 = cell(h1, h2, c2, params['wih2'], params['whh2'], params['b2'])
        z1 = jax.nn.relu(h2 @ params['wf1h'] + a_t @ params['wf1a'] + params['bf1'])
        z2 = jax.nn.relu(z1 @ params['wf2'] + params['bf2'])
        z3 = z2 @ params['wf3'] + params['bf3']
        return (h0, c0, h1, c1, h2, c2), jax.nn.sigmoid(z3)[:, 0]

    _, ys = lax.scan(step, (zeros,) * 6,
                     (jnp.transpose(state, (1, 0, 2)).astype(jnp.float32),
                      jnp.transpose(action, (1, 0, 2)).astype(jnp.float32)))
    return ys.T


if __name__ == "__main__":
    B, T = 2, 8          # batch, sequence length
    HIDDEN = 32          # hidden_size
    ACTION = 4           # action_size

    key = jax.random.PRNGKey(0)
    k_p, k_s, k_a = jax.random.split(key, 3)
    params = init_params(k_p, ACTION, HIDDEN)
    state = jax.random.normal(k_s, (B, T, INPUT_DIM), jnp.float32)
    action = jax.random.normal(k_a, (B, T, ACTION), jnp.float32)

    out = jax.block_until_ready(critic_forward(state, action, params))
    assert out.shape == (B, T), out.shape

    ref = jax.block_until_ready(critic_reference(state, action, params))
    # bf16 MXU inputs / bf16 scratch (f32 accumulation & gate math) vs pure-f32
    # reference -> loose-ish tolerance.
    assert jnp.allclose(out, ref, atol=3e-2, rtol=3e-2), float(jnp.max(jnp.abs(out - ref)))

    print("KERNEL_OK")
</pallas_src>

<mosaic_0001>
module attributes {stable_mosaic.version = 11 : i64} {
  func.func @critic_kernel(%arg0: i32, %arg1: i32, %arg2: memref<8x16x384xbf16, #tpu.memory_space<vmem>>, %arg3: memref<256x512xbf16, #tpu.memory_space<vmem>>, %arg4: memref<128x512xbf16, #tpu.memory_space<vmem>>, %arg5: memref<1x512xf32, #tpu.memory_space<vmem>>, %arg6: memref<256x512xbf16, #tpu.memory_space<vmem>>, %arg7: memref<1x512xf32, #tpu.memory_space<vmem>>, %arg8: memref<256x512xbf16, #tpu.memory_space<vmem>>, %arg9: memref<1x512xf32, #tpu.memory_space<vmem>>, %arg10: memref<128x128xbf16, #tpu.memory_space<vmem>>, %arg11: memref<128x128xbf16, #tpu.memory_space<vmem>>, %arg12: memref<1x128xf32, #tpu.memory_space<vmem>>, %arg13: memref<128x128xbf16, #tpu.memory_space<vmem>>, %arg14: memref<1x128xf32, #tpu.memory_space<vmem>>, %arg15: memref<1x128xf32, #tpu.memory_space<vmem>>, %arg16: memref<1x1xf32, #tpu.memory_space<vmem>>, %arg17: memref<16x8xf32, #tpu.memory_space<vmem>>, %arg18: memref<3x16x128xbf16, #tpu.memory_space<vmem>>, %arg19: memref<3x16x128xf32, #tpu.memory_space<vmem>>, %arg20: memref<8x16x512xbf16, #tpu.memory_space<vmem>>, %arg21: memref<8x16x128xbf16, #tpu.memory_space<vmem>>) attributes {dimension_semantics = [#tpu.dimension_semantics<parallel>, #tpu.dimension_semantics<arbitrary>], iteration_bounds = array<i64: 1, 1>, scalar_prefetch = 0 : i64, scratch_operands = 4 : i64, tpu.core_type = #tpu.core_type<tc>, window_params = [{transform_indices = @transform_0, window_bounds = array<i64: 8, 16, 384>}, {pipeline_mode = #tpu.pipeline_mode<synchronous>, transform_indices = @transform_1, window_bounds = array<i64: 256, 512>}, {pipeline_mode = #tpu.pipeline_mode<synchronous>, transform_indices = @transform_2, window_bounds = array<i64: 128, 512>}, {pipeline_mode = #tpu.pipeline_mode<synchronous>, transform_indices = @transform_3, window_bounds = array<i64: 1, 512>}, {pipeline_mode = #tpu.pipeline_mode<synchronous>, transform_indices = @transform_4, window_bounds = array<i64: 256, 512>}, {pipeline_mode = #tpu.pipeline_mode<synchronous>, transform_indices = @transform_5, window_bounds = array<i64: 1, 512>}, {pipeline_mode = #tpu.pipeline_mode<synchronous>, transform_indices = @transform_6, window_bounds = array<i64: 256, 512>}, {pipeline_mode = #tpu.pipeline_mode<synchronous>, transform_indices = @transform_7, window_bounds = array<i64: 1, 512>}, {pipeline_mode = #tpu.pipeline_mode<synchronous>, transform_indices = @transform_8, window_bounds = array<i64: 128, 128>}, {pipeline_mode = #tpu.pipeline_mode<synchronous>, transform_indices = @transform_9, window_bounds = array<i64: 128, 128>}, {pipeline_mode = #tpu.pipeline_mode<synchronous>, transform_indices = @transform_10, window_bounds = array<i64: 1, 128>}, {pipeline_mode = #tpu.pipeline_mode<synchronous>, transform_indices = @transform_11, window_bounds = array<i64: 128, 128>}, {pipeline_mode = #tpu.pipeline_mode<synchronous>, transform_indices = @transform_12, window_bounds = array<i64: 1, 128>}, {pipeline_mode = #tpu.pipeline_mode<synchronous>, transform_indices = @transform_13, window_bounds = array<i64: 1, 128>}, {pipeline_mode = #tpu.pipeline_mode<synchronous>, transform_indices = @transform_14, window_bounds = array<i64: 1, 1>}, {transform_indices = @transform_15, window_bounds = array<i64: 16, 8>}]} {
    %c0_i32 = arith.constant 0 : i32
    %0 = arith.cmpi eq, %arg1, %c0_i32 : i32
    %1 = arith.extui %0 : i1 to i32
    %c0_i32_0 = arith.constant 0 : i32
    %2 = arith.cmpi ne, %1, %c0_i32_0 : i32
    scf.if %2 {
      %cst_211 = arith.constant 0.000000e+00 : bf16
      %842 = vector.broadcast %cst_211 : bf16 to vector<3x16x128xbf16>
      %c0_212 = arith.constant 0 : index
      %c0_213 = arith.constant 0 : index
      %c0_214 = arith.constant 0 : index
      %843 = vector.load %arg18[%c0_212, %c0_213, %c0_214] : memref<3x16x128xbf16, #tpu.memory_space<vmem>>, vector<3x16x128xbf16>
      tpu.vector_store %arg18[%c0_212, %c0_213, %c0_214], %842 {strides = array<i32>} : memref<3x16x128xbf16, #tpu.memory_space<vmem>>, vector<3x16x128xbf16>,
      %cst_215 = arith.constant 0.000000e+00 : f32
      %844 = vector.broadcast %cst_215 : f32 to vector<3x16x128xf32>
      %c0_216 = arith.constant 0 : index
      %c0_217 = arith.constant 0 : index
      %c0_218 = arith.constant 0 : index
      %845 = vector.load %arg19[%c0_216, %c0_217, %c0_218] : memref<3x16x128xf32, #tpu.memory_space<vmem>>, vector<3x16x128xf32>
      tpu.vector_store %arg19[%c0_216, %c0_217, %c0_218], %844 {strides = array<i32>} : memref<3x16x128xf32, #tpu.memory_space<vmem>>, vector<3x16x128xf32>,
    } else {
    }
    %c0 = arith.constant 0 : index
    %c0_1 = arith.constant 0 : index
    %c0_2 = arith.constant 0 : index
    %3 = vector.load %arg2[%c0, %c0_1, %c0_2] : memref<8x16x384xbf16, #tpu.memory_space<vmem>>, vector<8x16x256xbf16>
    %4 = vector.shape_cast %3 : vector<8x16x256xbf16> to vector<128x256xbf16>
    %c0_3 = arith.constant 0 : index
    %c0_4 = arith.constant 0 : index
    %5 = vector.load %arg3[%c0_3, %c0_4] : memref<256x512xbf16, #tpu.memory_space<vmem>>, vector<256x512xbf16>
    %cst = arith.constant dense<0.000000e+00> : vector<128x512xf32>
    %6 = tpu.matmul %4, %5, %cst {dimension_numbers = #tpu.dot_dimension_numbers<[1], [0], [0], [1], [0, 0, 1, 1], [], []>} : vector<128x256xbf16>, vector<256x512xbf16>, vector<128x512xf32> -> vector<128x512xf32>
    %c0_5 = arith.constant 0 : index
    %c0_6 = arith.constant 0 : index
    %7 = vector.load %arg5[%c0_5, %c0_6] : memref<1x512xf32, #tpu.memory_space<vmem>>, vector<1x512xf32>
    %8 = vector.broadcast %7 : vector<1x512xf32> to vector<128x512xf32>
    %9 = arith.addf %6, %8 : vector<128x512xf32>
    %10 = arith.truncf %9 : vector<128x512xf32> to vector<128x512xbf16>
    %11 = vector.shape_cast %10 : vector<128x512xbf16> to vector<8x16x512xbf16>
    %c0_7 = arith.constant 0 : index
    %c0_8 = arith.constant 0 : index
    %c0_9 = arith.constant 0 : index
    %12 = vector.load %arg20[%c0_7, %c0_8, %c0_9] : memref<8x16x512xbf16, #tpu.memory_space<vmem>>, vector<8x16x512xbf16>
    tpu.vector_store %arg20[%c0_7, %c0_8, %c0_9], %11 {strides = array<i32>} : memref<8x16x512xbf16, #tpu.memory_space<vmem>>, vector<8x16x512xbf16>,
    %c0_10 = arith.constant 0 : index
    %c0_11 = arith.constant 0 : index
    %13 = vector.load %arg7[%c0_10, %c0_11] : memref<1x512xf32, #tpu.memory_space<vmem>>, vector<1x512xf32>
    %14 = vector.shape_cast %13 : vector<1x512xf32> to vector<1x512xf32>
    %15 = vector.broadcast %14 : vector<1x512xf32> to vector<16x512xf32>
    %c0_12 = arith.constant 0 : index
    %c0_13 = arith.constant 0 : index
    %16 = vector.load %arg9[%c0_12, %c0_13] : memref<1x512xf32, #tpu.memory_space<vmem>>, vector<1x512xf32>
    %17 = vector.shape_cast %16 : vector<1x512xf32> to vector<1x512xf32>
    %18 = vector.broadcast %17 : vector<1x512xf32> to vector<16x512xf32>
    %c0_14 = arith.constant 0 : index
    %c0_15 = arith.constant 0 : index
    %19 = vector.load %arg4[%c0_14, %c0_15] : memref<128x512xbf16, #tpu.memory_space<vmem>>, vector<128x512xbf16>
    %c0_16 = arith.constant 0 : index
    %c0_17 = arith.constant 0 : index
    %20 = vector.load %arg6[%c0_16, %c0_17] : memref<256x512xbf16, #tpu.memory_space<vmem>>, vector<256x512xbf16>
    %c0_18 = arith.constant 0 : index
    %c0_19 = arith.constant 0 : index
    %21 = vector.load %arg8[%c0_18, %c0_19] : memref<256x512xbf16, #tpu.memory_space<vmem>>, vector<256x512xbf16>
    %c0_20 = arith.constant 0 : index
    %c0_21 = arith.constant 0 : index
    %c0_22 = arith.constant 0 : index
    %22 = vector.load %arg18[%c0_20, %c0_21, %c0_22] : memref<3x16x128xbf16, #tpu.memory_space<vmem>>, vector<1x16x128xbf16>
    %23 = vector.shape_cast %22 : vector<1x16x128xbf16> to vector<16x128xbf16>
    %c0_23 = arith.constant 0 : index
    %c0_24 = arith.constant 0 : index
    %c0_25 = arith.constant 0 : index
    %24 = vector.load %arg19[%c0_23, %c0_24, %c0_25] : memref<3x16x128xf32, #tpu.memory_space<vmem>>, vector<1x16x128xf32>
    %25 = vector.shape_cast %24 : vector<1x16x128xf32> to vector<16x128xf32>
    %c1 = arith.constant 1 : index
    %c0_26 = arith.constant 0 : index
    %c0_27 = arith.constant 0 : index
    %26 = vector.load %arg18[%c1, %c0_26, %c0_27] : memref<3x16x128xbf16, #tpu.memory_space<vmem>>, vector<1x16x128xbf16>
    %27 = vector.shape_cast %26 : vector<1x16x128xbf16> to vector<16x128xbf16>
    %c1_28 = arith.constant 1 : index
    %c0_29 = arith.constant 0 : index
    %c0_30 = arith.constant 0 : index
    %28 = vector.load %arg19[%c1_28, %c0_29, %c0_30] : memref<3x16x128xf32, #tpu.memory_space<vmem>>, vector<1x16x128xf32>
    %29 = vector.shape_cast %28 : vector<1x16x128xf32> to vector<16x128xf32>
    %c2 = arith.constant 2 : index
    %c0_31 = arith.constant 0 : index
    %c0_32 = arith.constant 0 : index
    %30 = vector.load %arg18[%c2, %c0_31, %c0_32] : memref<3x16x128xbf16, #tpu.memory_space<vmem>>, vector<1x16x128xbf16>
    %31 = vector.shape_cast %30 : vector<1x16x128xbf16> to vector<16x128xbf16>
    %c2_33 = arith.constant 2 : index
    %c0_34 = arith.constant 0 : index
    %c0_35 = arith.constant 0 : index
    %32 = vector.load %arg19[%c2_33, %c0_34, %c0_35] : memref<3x16x128xf32, #tpu.memory_space<vmem>>, vector<1x16x128xf32>
    %33 = vector.shape_cast %32 : vector<1x16x128xf32> to vector<16x128xf32>
    %c0_i32_36 = arith.constant 0 : i32
    %34 = arith.index_cast %c0_i32_36 : i32 to index
    %c0_37 = arith.constant 0 : index
    %c0_38 = arith.constant 0 : index
    %35 = vector.load %arg20[%34, %c0_37, %c0_38] : memref<8x16x512xbf16, #tpu.memory_space<vmem>>, vector<1x16x512xbf16>
    %36 = vector.shape_cast %35 : vector<1x16x512xbf16> to vector<16x512xbf16>
    %cst_39 = arith.constant dense<0.000000e+00> : vector<16x512xf32>
    %37 = tpu.matmul %23, %19, %cst_39 {dimension_numbers = #tpu.dot_dimension_numbers<[1], [0], [0], [1], [0, 0, 1, 1], [], []>} : vector<16x128xbf16>, vector<128x512xbf16>, vector<16x512xf32> -> vector<16x512xf32>
    %38 = arith.extf %36 : vector<16x512xbf16> to vector<16x512xf32>
    %39 = arith.addf %38, %37 : vector<16x512xf32>
    %40 = vector.extract_strided_slice %39 {offsets = [0, 0], sizes = [16, 128], strides = [1, 1]} : vector<16x512xf32> to vector<16x128xf32>
    %41 = arith.negf %40 : vector<16x128xf32>
    %42 = math.exp %41 : vector<16x128xf32>
    %cst_40 = arith.constant 1.000000e+00 : f32
    %43 = vector.broadcast %cst_40 : f32 to vector<16x128xf32>
    %44 = arith.addf %43, %42 : vector<16x128xf32>
    %45 = arith.divf %43, %44 : vector<16x128xf32>
    %46 = vector.extract_strided_slice %39 {offsets = [0, 128], sizes = [16, 128], strides = [1, 1]} : vector<16x512xf32> to vector<16x128xf32>
    %47 = arith.negf %46 : vector<16x128xf32>
    %48 = math.exp %47 : vector<16x128xf32>
    %cst_41 = arith.constant 1.000000e+00 : f32
    %49 = vector.broadcast %cst_41 : f32 to vector<16x128xf32>
    %50 = arith.addf %49, %48 : vector<16x128xf32>
    %51 = arith.divf %49, %50 : vector<16x128xf32>
    %52 = vector.extract_strided_slice %39 {offsets = [0, 256], sizes = [16, 128], strides = [1, 1]} : vector<16x512xf32> to vector<16x128xf32>
    %53 = math.tanh %52 : vector<16x128xf32>
    %54 = vector.extract_strided_slice %39 {offsets = [0, 384], sizes = [16, 128], strides = [1, 1]} : vector<16x512xf32> to vector<16x128xf32>
    %55 = arith.negf %54 : vector<16x128xf32>
    %56 = math.exp %55 : vector<16x128xf32>
    %cst_42 = arith.constant 1.000000e+00 : f32
    %57 = vector.broadcast %cst_42 : f32 to vector<16x128xf32>
    %58 = arith.addf %57, %56 : vector<16x128xf32>
    %59 = arith.divf %57, %58 : vector<16x128xf32>
    %60 = arith.mulf %51, %25 : vector<16x128xf32>
    %61 = arith.mulf %45, %53 : vector<16x128xf32>
    %62 = arith.addf %60, %61 : vector<16x128xf32>
    %63 = math.tanh %62 : vector<16x128xf32>
    %64 = arith.mulf %59, %63 : vector<16x128xf32>
    %65 = arith.truncf %64 : vector<16x128xf32> to vector<16x128xbf16>
    %66 = tpu.concatenate %65, %27 in 1 : vector<16x128xbf16>, vector<16x128xbf16> -> vector<16x256xbf16>
    %cst_43 = arith.constant dense<0.000000e+00> : vector<16x512xf32>
    %67 = tpu.matmul %66, %20, %cst_43 {dimension_numbers = #tpu.dot_dimension_numbers<[1], [0], [0], [1], [0, 0, 1, 1], [], []>} : vector<16x256xbf16>, vector<256x512xbf16>, vector<16x512xf32> -> vector<16x512xf32>
    %68 = arith.addf %67, %15 : vector<16x512xf32>
    %69 = vector.extract_strided_slice %68 {offsets = [0, 0], sizes = [16, 128], strides = [1, 1]} : vector<16x512xf32> to vector<16x128xf32>
    %70 = arith.negf %69 : vector<16x128xf32>
    %71 = math.exp %70 : vector<16x128xf32>
    %cst_44 = arith.constant 1.000000e+00 : f32
    %72 = vector.broadcast %cst_44 : f32 to vector<16x128xf32>
    %73 = arith.addf %72, %71 : vector<16x128xf32>
    %74 = arith.divf %72, %73 : vector<16x128xf32>
    %75 = vector.extract_strided_slice %68 {offsets = [0, 128], sizes = [16, 128], strides = [1, 1]} : vector<16x512xf32> to vector<16x128xf32>
    %76 = arith.negf %75 : vector<16x128xf32>
    %77 = math.exp %76 : vector<16x128xf32>
    %cst_45 = arith.constant 1.000000e+00 : f32
    %78 = vector.broadcast %cst_45 : f32 to vector<16x128xf32>
    %79 = arith.addf %78, %77 : vector<16x128xf32>
    %80 = arith.divf %78, %79 : vector<16x128xf32>
    %81 = vector.extract_strided_slice %68 {offsets = [0, 256], sizes = [16, 128], strides = [1, 1]} : vector<16x512xf32> to vector<16x128xf32>
    %82 = math.tanh %81 : vector<16x128xf32>
    %83 = vector.extract_strided_slice %68 {offsets = [0, 384], sizes = [16, 128], strides = [1, 1]} : vector<16x512xf32> to vector<16x128xf32>
    %84 = arith.negf %83 : vector<16x128xf32>
    %85 = math.exp %84 : vector<16x128xf32>
    %cst_46 = arith.constant 1.000000e+00 : f32
    %86 = vector.broadcast %cst_46 : f32 to vector<16x128xf32>
    %87 = arith.addf %86, %85 : vector<16x128xf32>
    %88 = arith.divf %86, %87 : vector<16x128xf32>
    %89 = arith.mulf %80, %29 : vector<16x128xf32>
    %90 = arith.mulf %74, %82 : vector<16x128xf32>
    %91 = arith.addf %89, %90 : vector<16x128xf32>
    %92 = math.tanh %91 : vector<16x128xf32>
    %93 = arith.mulf %88, %92 : vector<16x128xf32>
    %94 = arith.truncf %93 : vector<16x128xf32> to vector<16x128xbf16>
    %95 = tpu.concatenate %94, %31 in 1 : vector<16x128xbf16>, vector<16x128xbf16> -> vector<16x256xbf16>
    %cst_47 = arith.constant dense<0.000000e+00> : vector<16x512xf32>
    %96 = tpu.matmul %95, %21, %cst_47 {dimension_numbers = #tpu.dot_dimension_numbers<[1], [0], [0], [1], [0, 0, 1, 1], [], []>} : vector<16x256xbf16>, vector<256x512xbf16>, vector<16x512xf32> -> vector<16x512xf32>
    %97 = arith.addf %96, %18 : vector<16x512xf32>
    %98 = vector.extract_strided_slice %97 {offsets = [0, 0], sizes = [16, 128], strides = [1, 1]} : vector<16x512xf32> to vector<16x128xf32>
    %99 = arith.negf %98 : vector<16x128xf32>
    %100 = math.exp %99 : vector<16x128xf32>
    %cst_48 = arith.constant 1.000000e+00 : f32
    %101 = vector.broadcast %cst_48 : f32 to vector<16x128xf32>
    %102 = arith.addf %101, %100 : vector<16x128xf32>
    %103 = arith.divf %101, %102 : vector<16x128xf32>
    %104 = vector.extract_strided_slice %97 {offsets = [0, 128], sizes = [16, 128], strides = [1, 1]} : vector<16x512xf32> to vector<16x128xf32>
    %105 = arith.negf %104 : vector<16x128xf32>
    %106 = math.exp %105 : vector<16x128xf32>
    %cst_49 = arith.constant 1.000000e+00 : f32
    %107 = vector.broadcast %cst_49 : f32 to vector<16x128xf32>
    %108 = arith.addf %107, %106 : vector<16x128xf32>
    %109 = arith.divf %107, %108 : vector<16x128xf32>
    %110 = vector.extract_strided_slice %97 {offsets = [0, 256], sizes = [16, 128], strides = [1, 1]} : vector<16x512xf32> to vector<16x128xf32>
    %111 = math.tanh %110 : vector<16x128xf32>
    %112 = vector.extract_strided_slice %97 {offsets = [0, 384], sizes = [16, 128], strides = [1, 1]} : vector<16x512xf32> to vector<16x128xf32>
    %113 = arith.negf %112 : vector<16x128xf32>
    %114 = math.exp %113 : vector<16x128xf32>
    %cst_50 = arith.constant 1.000000e+00 : f32
    %115 = vector.broadcast %cst_50 : f32 to vector<16x128xf32>
    %116 = arith.addf %115, %114 : vector<16x128xf32>
    %117 = arith.divf %115, %116 : vector<16x128xf32>
    %118 = arith.mulf %109, %33 : vector<16x128xf32>
    %119 = arith.mulf %103, %111 : vector<16x128xf32>
    %120 = arith.addf %118, %119 : vector<16x128xf32>
    %121 = math.tanh %120 : vector<16x128xf32>
    %122 = arith.mulf %117, %121 : vector<16x128xf32>
    %123 = arith.truncf %122 : vector<16x128xf32> to vector<16x128xbf16>
    %124 = arith.index_cast %c0_i32_36 : i32 to index
    %c0_51 = arith.constant 0 : index
    %c0_52 = arith.constant 0 : index
    %125 = vector.load %arg21[%124, %c0_51, %c0_52] : memref<8x16x128xbf16, #tpu.memory_space<vmem>>, vector<1x16x128xbf16>
    %126 = vector.shape_cast %125 : vector<1x16x128xbf16> to vector<16x128xbf16>
    %127 = vector.shape_cast %123 : vector<16x128xbf16> to vector<1x16x128xbf16>
    tpu.vector_store %arg21[%124, %c0_51, %c0_52], %127 {strides = array<i32>} : memref<8x16x128xbf16, #tpu.memory_space<vmem>>, vector<1x16x128xbf16>,
    %c1_i32 = arith.constant 1 : i32
    %128 = arith.index_cast %c1_i32 : i32 to index
    %c0_53 = arith.constant 0 : index
    %c0_54 = arith.constant 0 : index
    %129 = vector.load %arg20[%128, %c0_53, %c0_54] : memref<8x16x512xbf16, #tpu.memory_space<vmem>>, vector<1x16x512xbf16>
    %130 = vector.shape_cast %129 : vector<1x16x512xbf16> to vector<16x512xbf16>
    %cst_55 = arith.constant dense<0.000000e+00> : vector<16x512xf32>
    %131 = tpu.matmul %65, %19, %cst_55 {dimension_numbers = #tpu.dot_dimension_numbers<[1], [0], [0], [1], [0, 0, 1, 1], [], []>} : vector<16x128xbf16>, vector<128x512xbf16>, vector<16x512xf32> -> vector<16x512xf32>
    %132 = arith.extf %130 : vector<16x512xbf16> to vector<16x512xf32>
    %133 = arith.addf %132, %131 : vector<16x512xf32>
    %134 = vector.extract_strided_slice %133 {offsets = [0, 0], sizes = [16, 128], strides = [1, 1]} : vector<16x512xf32> to vector<16x128xf32>
    %135 = arith.negf %134 : vector<16x128xf32>
    %136 = math.exp %135 : vector<16x128xf32>
    %cst_56 = arith.constant 1.000000e+00 : f32
    %137 = vector.broadcast %cst_56 : f32 to vector<16x128xf32>
    %138 = arith.addf %137, %136 : vector<16x128xf32>
    %139 = arith.divf %137, %138 : vector<16x128xf32>
    %140 = vector.extract_strided_slice %133 {offsets = [0, 128], sizes = [16, 128], strides = [1, 1]} : vector<16x512xf32> to vector<16x128xf32>
    %141 = arith.negf %140 : vector<16x128xf32>
    %142 = math.exp %141 : vector<16x128xf32>
    %cst_57 = arith.constant 1.000000e+00 : f32
    %143 = vector.broadcast %cst_57 : f32 to vector<16x128xf32>
    %144 = arith.addf %143, %142 : vector<16x128xf32>
    %145 = arith.divf %143, %144 : vector<16x128xf32>
    %146 = vector.extract_strided_slice %133 {offsets = [0, 256], sizes = [16, 128], strides = [1, 1]} : vector<16x512xf32> to vector<16x128xf32>
    %147 = math.tanh %146 : vector<16x128xf32>
    %148 = vector.extract_strided_slice %133 {offsets = [0, 384], sizes = [16, 128], strides = [1, 1]} : vector<16x512xf32> to vector<16x128xf32>
    %149 = arith.negf %148 : vector<16x128xf32>
    %150 = math.exp %149 : vector<16x128xf32>
    %cst_58 = arith.constant 1.000000e+00 : f32
    %151 = vector.broadcast %cst_58 : f32 to vector<16x128xf32>
    %152 = arith.addf %151, %150 : vector<16x128xf32>
    %153 = arith.divf %151, %152 : vector<16x128xf32>
    %154 = arith.mulf %145, %62 : vector<16x128xf32>
    %155 = arith.mulf %139, %147 : vector<16x128xf32>
    %156 = arith.addf %154, %155 : vector<16x128xf32>
    %157 = math.tanh %156 : vector<16x128xf32>
    %158 = arith.mulf %153, %157 : vector<16x128xf32>
    %159 = arith.truncf %158 : vector<16x128xf32> to vector<16x128xbf16>
    %160 = tpu.concatenate %159, %94 in 1 : vector<16x128xbf16>, vector<16x128xbf16> -> vector<16x256xbf16>
    %cst_59 = arith.constant dense<0.000000e+00> : vector<16x512xf32>
    %161 = tpu.matmul %160, %20, %cst_59 {dimension_numbers = #tpu.dot_dimension_numbers<[1], [0], [0], [1], [0, 0, 1, 1], [], []>} : vector<16x256xbf16>, vector<256x512xbf16>, vector<16x512xf32> -> vector<16x512xf32>
    %162 = arith.addf %161, %15 : vector<16x512xf32>
    %163 = vector.extract_strided_slice %162 {offsets = [0, 0], sizes = [16, 128], strides = [1, 1]} : vector<16x512xf32> to vector<16x128xf32>
    %164 = arith.negf %163 : vector<16x128xf32>
    %165 = math.exp %164 : vector<16x128xf32>
    %cst_60 = arith.constant 1.000000e+00 : f32
    %166 = vector.broadcast %cst_60 : f32 to vector<16x128xf32>
    %167 = arith.addf %166, %165 : vector<16x128xf32>
    %168 = arith.divf %166, %167 : vector<16x128xf32>
    %169 = vector.extract_strided_slice %162 {offsets = [0, 128], sizes = [16, 128], strides = [1, 1]} : vector<16x512xf32> to vector<16x128xf32>
    %170 = arith.negf %169 : vector<16x128xf32>
    %171 = math.exp %170 : vector<16x128xf32>
    %cst_61 = arith.constant 1.000000e+00 : f32
    %172 = vector.broadcast %cst_61 : f32 to vector<16x128xf32>
    %173 = arith.addf %172, %171 : vector<16x128xf32>
    %174 = arith.divf %172, %173 : vector<16x128xf32>
    %175 = vector.extract_strided_slice %162 {offsets = [0, 256], sizes = [16, 128], strides = [1, 1]} : vector<16x512xf32> to vector<16x128xf32>
    %176 = math.tanh %175 : vector<16x128xf32>
    %177 = vector.extract_strided_slice %162 {offsets = [0, 384], sizes = [16, 128], strides = [1, 1]} : vector<16x512xf32> to vector<16x128xf32>
    %178 = arith.negf %177 : vector<16x128xf32>
    %179 = math.exp %178 : vector<16x128xf32>
    %cst_62 = arith.constant 1.000000e+00 : f32
    %180 = vector.broadcast %cst_62 : f32 to vector<16x128xf32>
    %181 = arith.addf %180, %179 : vector<16x128xf32>
    %182 = arith.divf %180, %181 : vector<16x128xf32>
    %183 = arith.mulf %174, %91 : vector<16x128xf32>
    %184 = arith.mulf %168, %176 : vector<16x128xf32>
    %185 = arith.addf %183, %184 : vector<16x128xf32>
    %186 = math.tanh %185 : vector<16x128xf32>
    %187 = arith.mulf %182, %186 : vector<16x128xf32>
    %188 = arith.truncf %187 : vector<16x128xf32> to vector<16x128xbf16>
    %189 = tpu.concatenate %188, %123 in 1 : vector<16x128xbf16>, vector<16x128xbf16> -> vector<16x256xbf16>
    %cst_63 = arith.constant dense<0.000000e+00> : vector<16x512xf32>
    %190 = tpu.matmul %189, %21, %cst_63 {dimension_numbers = #tpu.dot_dimension_numbers<[1], [0], [0], [1], [0, 0, 1, 1], [], []>} : vector<16x256xbf16>, vector<256x512xbf16>, vector<16x512xf32> -> vector<16x512xf32>
    %191 = arith.addf %190, %18 : vector<16x512xf32>
    %192 = vector.extract_strided_slice %191 {offsets = [0, 0], sizes = [16, 128], strides = [1, 1]} : vector<16x512xf32> to vector<16x128xf32>
    %193 = arith.negf %192 : vector<16x128xf32>
    %194 = math.exp %193 : vector<16x128xf32>
    %cst_64 = arith.constant 1.000000e+00 : f32
    %195 = vector.broadcast %cst_64 : f32 to vector<16x128xf32>
    %196 = arith.addf %195, %194 : vector<16x128xf32>
    %197 = arith.divf %195, %196 : vector<16x128xf32>
    %198 = vector.extract_strided_slice %191 {offsets = [0, 128], sizes = [16, 128], strides = [1, 1]} : vector<16x512xf32> to vector<16x128xf32>
    %199 = arith.negf %198 : vector<16x128xf32>
    %200 = math.exp %199 : vector<16x128xf32>
    %cst_65 = arith.constant 1.000000e+00 : f32
    %201 = vector.broadcast %cst_65 : f32 to vector<16x128xf32>
    %202 = arith.addf %201, %200 : vector<16x128xf32>
    %203 = arith.divf %201, %202 : vector<16x128xf32>
    %204 = vector.extract_strided_slice %191 {offsets = [0, 256], sizes = [16, 128], strides = [1, 1]} : vector<16x512xf32> to vector<16x128xf32>
    %205 = math.tanh %204 : vector<16x128xf32>
    %206 = vector.extract_strided_slice %191 {offsets = [0, 384], sizes = [16, 128], strides = [1, 1]} : vector<16x512xf32> to vector<16x128xf32>
    %207 = arith.negf %206 : vector<16x128xf32>
    %208 = math.exp %207 : vector<16x128xf32>
    %cst_66 = arith.constant 1.000000e+00 : f32
    %209 = vector.broadcast %cst_66 : f32 to vector<16x128xf32>
    %210 = arith.addf %209, %208 : vector<16x128xf32>
    %211 = arith.divf %209, %210 : vector<16x128xf32>
    %212 = arith.mulf %203, %120 : vector<16x128xf32>
    %213 = arith.mulf %197, %205 : vector<16x128xf32>
    %214 = arith.addf %212, %213 : vector<16x128xf32>
    %215 = math.tanh %214 : vector<16x128xf32>
    %216 = arith.mulf %211, %215 : vector<16x128xf32>
    %217 = arith.truncf %216 : vector<16x128xf32> to vector<16x128xbf16>
    %218 = arith.index_cast %c1_i32 : i32 to index
    %c0_67 = arith.constant 0 : index
    %c0_68 = arith.constant 0 : index
    %219 = vector.load %arg21[%218, %c0_67, %c0_68] : memref<8x16x128xbf16, #tpu.memory_space<vmem>>, vector<1x16x128xbf16>
    %220 = vector.shape_cast %219 : vector<1x16x128xbf16> to vector<16x128xbf16>
    %221 = vector.shape_cast %217 : vector<16x128xbf16> to vector<1x16x128xbf16>
    tpu.vector_store %arg21[%218, %c0_67, %c0_68], %221 {strides = array<i32>} : memref<8x16x128xbf16, #tpu.memory_space<vmem>>, vector<1x16x128xbf16>,
    %c2_i32 = arith.constant 2 : i32
    %222 = arith.index_cast %c2_i32 : i32 to index
    %c0_69 = arith.constant 0 : index
    %c0_70 = arith.constant 0 : index
    %223 = vector.load %arg20[%222, %c0_69, %c0_70] : memref<8x16x512xbf16, #tpu.memory_space<vmem>>, vector<1x16x512xbf16>
    %224 = vector.shape_cast %223 : vector<1x16x512xbf16> to vector<16x512xbf16>
    %cst_71 = arith.constant dense<0.000000e+00> : vector<16x512xf32>
    %225 = tpu.matmul %159, %19, %cst_71 {dimension_numbers = #tpu.dot_dimension_numbers<[1], [0], [0], [1], [0, 0, 1, 1], [], []>} : vector<16x128xbf16>, vector<128x512xbf16>, vector<16x512xf32> -> vector<16x512xf32>
    %226 = arith.extf %224 : vector<16x512xbf16> to vector<16x512xf32>
    %227 = arith.addf %226, %225 : vector<16x512xf32>
    %228 = vector.extract_strided_slice %227 {offsets = [0, 0], sizes = [16, 128], strides = [1, 1]} : vector<16x512xf32> to vector<16x128xf32>
    %229 = arith.negf %228 : vector<16x128xf32>
    %230 = math.exp %229 : vector<16x128xf32>
    %cst_72 = arith.constant 1.000000e+00 : f32
    %231 = vector.broadcast %cst_72 : f32 to vector<16x128xf32>
    %232 = arith.addf %231, %230 : vector<16x128xf32>
    %233 = arith.divf %231, %232 : vector<16x128xf32>
    %234 = vector.extract_strided_slice %227 {offsets = [0, 128], sizes = [16, 128], strides = [1, 1]} : vector<16x512xf32> to vector<16x128xf32>
    %235 = arith.negf %234 : vector<16x128xf32>
    %236 = math.exp %235 : vector<16x128xf32>
    %cst_73 = arith.constant 1.000000e+00 : f32
    %237 = vector.broadcast %cst_73 : f32 to vector<16x128xf32>
    %238 = arith.addf %237, %236 : vector<16x128xf32>
    %239 = arith.divf %237, %238 : vector<16x128xf32>
    %240 = vector.extract_strided_slice %227 {offsets = [0, 256], sizes = [16, 128], strides = [1, 1]} : vector<16x512xf32> to vector<16x128xf32>
    %241 = math.tanh %240 : vector<16x128xf32>
    %242 = vector.extract_strided_slice %227 {offsets = [0, 384], sizes = [16, 128], strides = [1, 1]} : vector<16x512xf32> to vector<16x128xf32>
    %243 = arith.negf %242 : vector<16x128xf32>
    %244 = math.exp %243 : vector<16x128xf32>
    %cst_74 = arith.constant 1.000000e+00 : f32
    %245 = vector.broadcast %cst_74 : f32 to vector<16x128xf32>
    %246 = arith.addf %245, %244 : vector<16x128xf32>
    %247 = arith.divf %245, %246 : vector<16x128xf32>
    %248 = arith.mulf %239, %156 : vector<16x128xf32>
    %249 = arith.mulf %233, %241 : vector<16x128xf32>
    %250 = arith.addf %248, %249 : vector<16x128xf32>
    %251 = math.tanh %250 : vector<16x128xf32>
    %252 = arith.mulf %247, %251 : vector<16x128xf32>
    %253 = arith.truncf %252 : vector<16x128xf32> to vector<16x128xbf16>
    %254 = tpu.concatenate %253, %188 in 1 : vector<16x128xbf16>, vector<16x128xbf16> -> vector<16x256xbf16>
    %cst_75 = arith.constant dense<0.000000e+00> : vector<16x512xf32>
    %255 = tpu.matmul %254, %20, %cst_75 {dimension_numbers = #tpu.dot_dimension_numbers<[1], [0], [0], [1], [0, 0, 1, 1], [], []>} : vector<16x256xbf16>, vector<256x512xbf16>, vector<16x512xf32> -> vector<16x512xf32>
    %256 = arith.addf %255, %15 : vector<16x512xf32>
    %257 = vector.extract_strided_slice %256 {offsets = [0, 0], sizes = [16, 128], strides = [1, 1]} : vector<16x512xf32> to vector<16x128xf32>
    %258 = arith.negf %257 : vector<16x128xf32>
    %259 = math.exp %258 : vector<16x128xf32>
    %cst_76 = arith.constant 1.000000e+00 : f32
    %260 = vector.broadcast %cst_76 : f32 to vector<16x128xf32>
    %261 = arith.addf %260, %259 : vector<16x128xf32>
    %262 = arith.divf %260, %261 : vector<16x128xf32>
    %263 = vector.extract_strided_slice %256 {offsets = [0, 128], sizes = [16, 128], strides = [1, 1]} : vector<16x512xf32> to vector<16x128xf32>
    %264 = arith.negf %263 : vector<16x128xf32>
    %265 = math.exp %264 : vector<16x128xf32>
    %cst_77 = arith.constant 1.000000e+00 : f32
    %266 = vector.broadcast %cst_77 : f32 to vector<16x128xf32>
    %267 = arith.addf %266, %265 : vector<16x128xf32>
    %268 = arith.divf %266, %267 : vector<16x128xf32>
    %269 = vector.extract_strided_slice %256 {offsets = [0, 256], sizes = [16, 128], strides = [1, 1]} : vector<16x512xf32> to vector<16x128xf32>
    %270 = math.tanh %269 : vector<16x128xf32>
    %271 = vector.extract_strided_slice %256 {offsets = [0, 384], sizes = [16, 128], strides = [1, 1]} : vector<16x512xf32> to vector<16x128xf32>
    %272 = arith.negf %271 : vector<16x128xf32>
    %273 = math.exp %272 : vector<16x128xf32>
    %cst_78 = arith.constant 1.000000e+00 : f32
    %274 = vector.broadcast %cst_78 : f32 to vector<16x128xf32>
    %275 = arith.addf %274, %273 : vector<16x128xf32>
    %276 = arith.divf %274, %275 : vector<16x128xf32>
    %277 = arith.mulf %268, %185 : vector<16x128xf32>
    %278 = arith.mulf %262, %270 : vector<16x128xf32>
    %279 = arith.addf %277, %278 : vector<16x128xf32>
    %280 = math.tanh %279 : vector<16x128xf32>
    %281 = arith.mulf %276, %280 : vector<16x128xf32>
    %282 = arith.truncf %281 : vector<16x128xf32> to vector<16x128xbf16>
    %283 = tpu.concatenate %282, %217 in 1 : vector<16x128xbf16>, vector<16x128xbf16> -> vector<16x256xbf16>
    %cst_79 = arith.constant dense<0.000000e+00> : vector<16x512xf32>
    %284 = tpu.matmul %283, %21, %cst_79 {dimension_numbers = #tpu.dot_dimension_numbers<[1], [0], [0], [1], [0, 0, 1, 1], [], []>} : vector<16x256xbf16>, vector<256x512xbf16>, vector<16x512xf32> -> vector<16x512xf32>
    %285 = arith.addf %284, %18 : vector<16x512xf32>
    %286 = vector.extract_strided_slice %285 {offsets = [0, 0], sizes = [16, 128], strides = [1, 1]} : vector<16x512xf32> to vector<16x128xf32>
    %287 = arith.negf %286 : vector<16x128xf32>
    %288 = math.exp %287 : vector<16x128xf32>
    %cst_80 = arith.constant 1.000000e+00 : f32
    %289 = vector.broadcast %cst_80 : f32 to vector<16x128xf32>
    %290 = arith.addf %289, %288 : vector<16x128xf32>
    %291 = arith.divf %289, %290 : vector<16x128xf32>
    %292 = vector.extract_strided_slice %285 {offsets = [0, 128], sizes = [16, 128], strides = [1, 1]} : vector<16x512xf32> to vector<16x128xf32>
    %293 = arith.negf %292 : vector<16x128xf32>
    %294 = math.exp %293 : vector<16x128xf32>
    %cst_81 = arith.constant 1.000000e+00 : f32
    %295 = vector.broadcast %cst_81 : f32 to vector<16x128xf32>
    %296 = arith.addf %295, %294 : vector<16x128xf32>
    %297 = arith.divf %295, %296 : vector<16x128xf32>
    %298 = vector.extract_strided_slice %285 {offsets = [0, 256], sizes = [16, 128], strides = [1, 1]} : vector<16x512xf32> to vector<16x128xf32>
    %299 = math.tanh %298 : vector<16x128xf32>
    %300 = vector.extract_strided_slice %285 {offsets = [0, 384], sizes = [16, 128], strides = [1, 1]} : vector<16x512xf32> to vector<16x128xf32>
    %301 = arith.negf %300 : vector<16x128xf32>
    %302 = math.exp %301 : vector<16x128xf32>
    %cst_82 = arith.constant 1.000000e+00 : f32
    %303 = vector.broadcast %cst_82 : f32 to vector<16x128xf32>
    %304 = arith.addf %303, %302 : vector<16x128xf32>
    %305 = arith.divf %303, %304 : vector<16x128xf32>
    %306 = arith.mulf %297, %214 : vector<16x128xf32>
    %307 = arith.mulf %291, %299 : vector<16x128xf32>
    %308 = arith.addf %306, %307 : vector<16x128xf32>
    %309 = math.tanh %308 : vector<16x128xf32>
    %310 = arith.mulf %305, %309 : vector<16x128xf32>
    %311 = arith.truncf %310 : vector<16x128xf32> to vector<16x128xbf16>
    %312 = arith.index_cast %c2_i32 : i32 to index
    %c0_83 = arith.constant 0 : index
    %c0_84 = arith.constant 0 : index
    %313 = vector.load %arg21[%312, %c0_83, %c0_84] : memref<8x16x128xbf16, #tpu.memory_space<vmem>>, vector<1x16x128xbf16>
    %314 = vector.shape_cast %313 : vector<1x16x128xbf16> to vector<16x128xbf16>
    %315 = vector.shape_cast %311 : vector<16x128xbf16> to vector<1x16x128xbf16>
    tpu.vector_store %arg21[%312, %c0_83, %c0_84], %315 {strides = array<i32>} : memref<8x16x128xbf16, #tpu.memory_space<vmem>>, vector<1x16x128xbf16>,
    %c3_i32 = arith.constant 3 : i32
    %316 = arith.index_cast %c3_i32 : i32 to index
    %c0_85 = arith.constant 0 : index
    %c0_86 = arith.constant 0 : index
    %317 = vector.load %arg20[%316, %c0_85, %c0_86] : memref<8x16x512xbf16, #tpu.memory_space<vmem>>, vector<1x16x512xbf16>
    %318 = vector.shape_cast %317 : vector<1x16x512xbf16> to vector<16x512xbf16>
    %cst_87 = arith.constant dense<0.000000e+00> : vector<16x512xf32>
    %319 = tpu.matmul %253, %19, %cst_87 {dimension_numbers = #tpu.dot_dimension_numbers<[1], [0], [0], [1], [0, 0, 1, 1], [], []>} : vector<16x128xbf16>, vector<128x512xbf16>, vector<16x512xf32> -> vector<16x512xf32>
    %320 = arith.extf %318 : vector<16x512xbf16> to vector<16x512xf32>
    %321 = arith.addf %320, %319 : vector<16x512xf32>
    %322 = vector.extract_strided_slice %321 {offsets = [0, 0], sizes = [16, 128], strides = [1, 1]} : vector<16x512xf32> to vector<16x128xf32>
    %323 = arith.negf %322 : vector<16x128xf32>
    %324 = math.exp %323 : vector<16x128xf32>
    %cst_88 = arith.constant 1.000000e+00 : f32
    %325 = vector.broadcast %cst_88 : f32 to vector<16x128xf32>
    %326 = arith.addf %325, %324 : vector<16x128xf32>
    %327 = arith.divf %325, %326 : vector<16x128xf32>
    %328 = vector.extract_strided_slice %321 {offsets = [0, 128], sizes = [16, 128], strides = [1, 1]} : vector<16x512xf32> to vector<16x128xf32>
    %329 = arith.negf %328 : vector<16x128xf32>
    %330 = math.exp %329 : vector<16x128xf32>
    %cst_89 = arith.constant 1.000000e+00 : f32
    %331 = vector.broadcast %cst_89 : f32 to vector<16x128xf32>
    %332 = arith.addf %331, %330 : vector<16x128xf32>
    %333 = arith.divf %331, %332 : vector<16x128xf32>
    %334 = vector.extract_strided_slice %321 {offsets = [0, 256], sizes = [16, 128], strides = [1, 1]} : vector<16x512xf32> to vector<16x128xf32>
    %335 = math.tanh %334 : vector<16x128xf32>
    %336 = vector.extract_strided_slice %321 {offsets = [0, 384], sizes = [16, 128], strides = [1, 1]} : vector<16x512xf32> to vector<16x128xf32>
    %337 = arith.negf %336 : vector<16x128xf32>
    %338 = math.exp %337 : vector<16x128xf32>
    %cst_90 = arith.constant 1.000000e+00 : f32
    %339 = vector.broadcast %cst_90 : f32 to vector<16x128xf32>
    %340 = arith.addf %339, %338 : vector<16x128xf32>
    %341 = arith.divf %339, %340 : vector<16x128xf32>
    %342 = arith.mulf %333, %250 : vector<16x128xf32>
    %343 = arith.mulf %327, %335 : vector<16x128xf32>
    %344 = arith.addf %342, %343 : vector<16x128xf32>
    %345 = math.tanh %344 : vector<16x128xf32>
    %346 = arith.mulf %341, %345 : vector<16x128xf32>
    %347 = arith.truncf %346 : vector<16x128xf32> to vector<16x128xbf16>
    %348 = tpu.concatenate %347, %282 in 1 : vector<16x128xbf16>, vector<16x128xbf16> -> vector<16x256xbf16>
    %cst_91 = arith.constant dense<0.000000e+00> : vector<16x512xf32>
    %349 = tpu.matmul %348, %20, %cst_91 {dimension_numbers = #tpu.dot_dimension_numbers<[1], [0], [0], [1], [0, 0, 1, 1], [], []>} : vector<16x256xbf16>, vector<256x512xbf16>, vector<16x512xf32> -> vector<16x512xf32>
    %350 = arith.addf %349, %15 : vector<16x512xf32>
    %351 = vector.extract_strided_slice %350 {offsets = [0, 0], sizes = [16, 128], strides = [1, 1]} : vector<16x512xf32> to vector<16x128xf32>
    %352 = arith.negf %351 : vector<16x128xf32>
    %353 = math.exp %352 : vector<16x128xf32>
    %cst_92 = arith.constant 1.000000e+00 : f32
    %354 = vector.broadcast %cst_92 : f32 to vector<16x128xf32>
    %355 = arith.addf %354, %353 : vector<16x128xf32>
    %356 = arith.divf %354, %355 : vector<16x128xf32>
    %357 = vector.extract_strided_slice %350 {offsets = [0, 128], sizes = [16, 128], strides = [1, 1]} : vector<16x512xf32> to vector<16x128xf32>
    %358 = arith.negf %357 : vector<16x128xf32>
    %359 = math.exp %358 : vector<16x128xf32>
    %cst_93 = arith.constant 1.000000e+00 : f32
    %360 = vector.broadcast %cst_93 : f32 to vector<16x128xf32>
    %361 = arith.addf %360, %359 : vector<16x128xf32>
    %362 = arith.divf %360, %361 : vector<16x128xf32>
    %363 = vector.extract_strided_slice %350 {offsets = [0, 256], sizes = [16, 128], strides = [1, 1]} : vector<16x512xf32> to vector<16x128xf32>
    %364 = math.tanh %363 : vector<16x128xf32>
    %365 = vector.extract_strided_slice %350 {offsets = [0, 384], sizes = [16, 128], strides = [1, 1]} : vector<16x512xf32> to vector<16x128xf32>
    %366 = arith.negf %365 : vector<16x128xf32>
    %367 = math.exp %366 : vector<16x128xf32>
    %cst_94 = arith.constant 1.000000e+00 : f32
    %368 = vector.broadcast %cst_94 : f32 to vector<16x128xf32>
    %369 = arith.addf %368, %367 : vector<16x128xf32>
    %370 = arith.divf %368, %369 : vector<16x128xf32>
    %371 = arith.mulf %362, %279 : vector<16x128xf32>
    %372 = arith.mulf %356, %364 : vector<16x128xf32>
    %373 = arith.addf %371, %372 : vector<16x128xf32>
    %374 = math.tanh %373 : vector<16x128xf32>
    %375 = arith.mulf %370, %374 : vector<16x128xf32>
    %376 = arith.truncf %375 : vector<16x128xf32> to vector<16x128xbf16>
    %377 = tpu.concatenate %376, %311 in 1 : vector<16x128xbf16>, vector<16x128xbf16> -> vector<16x256xbf16>
    %cst_95 = arith.constant dense<0.000000e+00> : vector<16x512xf32>
    %378 = tpu.matmul %377, %21, %cst_95 {dimension_numbers = #tpu.dot_dimension_numbers<[1], [0], [0], [1], [0, 0, 1, 1], [], []>} : vector<16x256xbf16>, vector<256x512xbf16>, vector<16x512xf32> -> vector<16x512xf32>
    %379 = arith.addf %378, %18 : vector<16x512xf32>
    %380 = vector.extract_strided_slice %379 {offsets = [0, 0], sizes = [16, 128], strides = [1, 1]} : vector<16x512xf32> to vector<16x128xf32>
    %381 = arith.negf %380 : vector<16x128xf32>
    %382 = math.exp %381 : vector<16x128xf32>
    %cst_96 = arith.constant 1.000000e+00 : f32
    %383 = vector.broadcast %cst_96 : f32 to vector<16x128xf32>
    %384 = arith.addf %383, %382 : vector<16x128xf32>
    %385 = arith.divf %383, %384 : vector<16x128xf32>
    %386 = vector.extract_strided_slice %379 {offsets = [0, 128], sizes = [16, 128], strides = [1, 1]} : vector<16x512xf32> to vector<16x128xf32>
    %387 = arith.negf %386 : vector<16x128xf32>
    %388 = math.exp %387 : vector<16x128xf32>
    %cst_97 = arith.constant 1.000000e+00 : f32
    %389 = vector.broadcast %cst_97 : f32 to vector<16x128xf32>
    %390 = arith.addf %389, %388 : vector<16x128xf32>
    %391 = arith.divf %389, %390 : vector<16x128xf32>
    %392 = vector.extract_strided_slice %379 {offsets = [0, 256], sizes = [16, 128], strides = [1, 1]} : vector<16x512xf32> to vector<16x128xf32>
    %393 = math.tanh %392 : vector<16x128xf32>
    %394 = vector.extract_strided_slice %379 {offsets = [0, 384], sizes = [16, 128], strides = [1, 1]} : vector<16x512xf32> to vector<16x128xf32>
    %395 = arith.negf %394 : vector<16x128xf32>
    %396 = math.exp %395 : vector<16x128xf32>
    %cst_98 = arith.constant 1.000000e+00 : f32
    %397 = vector.broadcast %cst_98 : f32 to vector<16x128xf32>
    %398 = arith.addf %397, %396 : vector<16x128xf32>
    %399 = arith.divf %397, %398 : vector<16x128xf32>
    %400 = arith.mulf %391, %308 : vector<16x128xf32>
    %401 = arith.mulf %385, %393 : vector<16x128xf32>
    %402 = arith.addf %400, %401 : vector<16x128xf32>
    %403 = math.tanh %402 : vector<16x128xf32>
    %404 = arith.mulf %399, %403 : vector<16x128xf32>
    %405 = arith.truncf %404 : vector<16x128xf32> to vector<16x128xbf16>
    %406 = arith.index_cast %c3_i32 : i32 to index
    %c0_99 = arith.constant 0 : index
    %c0_100 = arith.constant 0 : index
    %407 = vector.load %arg21[%406, %c0_99, %c0_100] : memref<8x16x128xbf16, #tpu.memory_space<vmem>>, vector<1x16x128xbf16>
    %408 = vector.shape_cast %407 : vector<1x16x128xbf16> to vector<16x128xbf16>
    %409 = vector.shape_cast %405 : vector<16x128xbf16> to vector<1x16x128xbf16>
    tpu.vector_store %arg21[%406, %c0_99, %c0_100], %409 {strides = array<i32>} : memref<8x16x128xbf16, #tpu.memory_space<vmem>>, vector<1x16x128xbf16>,
    %c4_i32 = arith.constant 4 : i32
    %410 = arith.index_cast %c4_i32 : i32 to index
    %c0_101 = arith.constant 0 : index
    %c0_102 = arith.constant 0 : index
    %411 = vector.load %arg20[%410, %c0_101, %c0_102] : memref<8x16x512xbf16, #tpu.memory_space<vmem>>, vector<1x16x512xbf16>
    %412 = vector.shape_cast %411 : vector<1x16x512xbf16> to vector<16x512xbf16>
    %cst_103 = arith.constant dense<0.000000e+00> : vector<16x512xf32>
    %413 = tpu.matmul %347, %19, %cst_103 {dimension_numbers = #tpu.dot_dimension_numbers<[1], [0], [0], [1], [0, 0, 1, 1], [], []>} : vector<16x128xbf16>, vector<128x512xbf16>, vector<16x512xf32> -> vector<16x512xf32>
    %414 = arith.extf %412 : vector<16x512xbf16> to vector<16x512xf32>
    %415 = arith.addf %414, %413 : vector<16x512xf32>
    %416 = vector.extract_strided_slice %415 {offsets = [0, 0], sizes = [16, 128], strides = [1, 1]} : vector<16x512xf32> to vector<16x128xf32>
    %417 = arith.negf %416 : vector<16x128xf32>
    %418 = math.exp %417 : vector<16x128xf32>
    %cst_104 = arith.constant 1.000000e+00 : f32
    %419 = vector.broadcast %cst_104 : f32 to vector<16x128xf32>
    %420 = arith.addf %419, %418 : vector<16x128xf32>
    %421 = arith.divf %419, %420 : vector<16x128xf32>
    %422 = vector.extract_strided_slice %415 {offsets = [0, 128], sizes = [16, 128], strides = [1, 1]} : vector<16x512xf32> to vector<16x128xf32>
    %423 = arith.negf %422 : vector<16x128xf32>
    %424 = math.exp %423 : vector<16x128xf32>
    %cst_105 = arith.constant 1.000000e+00 : f32
    %425 = vector.broadcast %cst_105 : f32 to vector<16x128xf32>
    %426 = arith.addf %425, %424 : vector<16x128xf32>
    %427 = arith.divf %425, %426 : vector<16x128xf32>
    %428 = vector.extract_strided_slice %415 {offsets = [0, 256], sizes = [16, 128], strides = [1, 1]} : vector<16x512xf32> to vector<16x128xf32>
    %429 = math.tanh %428 : vector<16x128xf32>
    %430 = vector.extract_strided_slice %415 {offsets = [0, 384], sizes = [16, 128], strides = [1, 1]} : vector<16x512xf32> to vector<16x128xf32>
    %431 = arith.negf %430 : vector<16x128xf32>
    %432 = math.exp %431 : vector<16x128xf32>
    %cst_106 = arith.constant 1.000000e+00 : f32
    %433 = vector.broadcast %cst_106 : f32 to vector<16x128xf32>
    %434 = arith.addf %433, %432 : vector<16x128xf32>
    %435 = arith.divf %433, %434 : vector<16x128xf32>
    %436 = arith.mulf %427, %344 : vector<16x128xf32>
    %437 = arith.mulf %421, %429 : vector<16x128xf32>
    %438 = arith.addf %436, %437 : vector<16x128xf32>
    %439 = math.tanh %438 : vector<16x128xf32>
    %440 = arith.mulf %435, %439 : vector<16x128xf32>
    %441 = arith.truncf %440 : vector<16x128xf32> to vector<16x128xbf16>
    %442 = tpu.concatenate %441, %376 in 1 : vector<16x128xbf16>, vector<16x128xbf16> -> vector<16x256xbf16>
    %cst_107 = arith.constant dense<0.000000e+00> : vector<16x512xf32>
    %443 = tpu.matmul %442, %20, %cst_107 {dimension_numbers = #tpu.dot_dimension_numbers<[1], [0], [0], [1], [0, 0, 1, 1], [], []>} : vector<16x256xbf16>, vector<256x512xbf16>, vector<16x512xf32> -> vector<16x512xf32>
    %444 = arith.addf %443, %15 : vector<16x512xf32>
    %445 = vector.extract_strided_slice %444 {offsets = [0, 0], sizes = [16, 128], strides = [1, 1]} : vector<16x512xf32> to vector<16x128xf32>
    %446 = arith.negf %445 : vector<16x128xf32>
    %447 = math.exp %446 : vector<16x128xf32>
    %cst_108 = arith.constant 1.000000e+00 : f32
    %448 = vector.broadcast %cst_108 : f32 to vector<16x128xf32>
    %449 = arith.addf %448, %447 : vector<16x128xf32>
    %450 = arith.divf %448, %449 : vector<16x128xf32>
    %451 = vector.extract_strided_slice %444 {offsets = [0, 128], sizes = [16, 128], strides = [1, 1]} : vector<16x512xf32> to vector<16x128xf32>
    %452 = arith.negf %451 : vector<16x128xf32>
    %453 = math.exp %452 : vector<16x128xf32>
    %cst_109 = arith.constant 1.000000e+00 : f32
    %454 = vector.broadcast %cst_109 : f32 to vector<16x128xf32>
    %455 = arith.addf %454, %453 : vector<16x128xf32>
    %456 = arith.divf %454, %455 : vector<16x128xf32>
    %457 = vector.extract_strided_slice %444 {offsets = [0, 256], sizes = [16, 128], strides = [1, 1]} : vector<16x512xf32> to vector<16x128xf32>
    %458 = math.tanh %457 : vector<16x128xf32>
    %459 = vector.extract_strided_slice %444 {offsets = [0, 384], sizes = [16, 128], strides = [1, 1]} : vector<16x512xf32> to vector<16x128xf32>
    %460 = arith.negf %459 : vector<16x128xf32>
    %461 = math.exp %460 : vector<16x128xf32>
    %cst_110 = arith.constant 1.000000e+00 : f32
    %462 = vector.broadcast %cst_110 : f32 to vector<16x128xf32>
    %463 = arith.addf %462, %461 : vector<16x128xf32>
    %464 = arith.divf %462, %463 : vector<16x128xf32>
    %465 = arith.mulf %456, %373 : vector<16x128xf32>
    %466 = arith.mulf %450, %458 : vector<16x128xf32>
    %467 = arith.addf %465, %466 : vector<16x128xf32>
    %468 = math.tanh %467 : vector<16x128xf32>
    %469 = arith.mulf %464, %468 : vector<16x128xf32>
    %470 = arith.truncf %469 : vector<16x128xf32> to vector<16x128xbf16>
    %471 = tpu.concatenate %470, %405 in 1 : vector<16x128xbf16>, vector<16x128xbf16> -> vector<16x256xbf16>
    %cst_111 = arith.constant dense<0.000000e+00> : vector<16x512xf32>
    %472 = tpu.matmul %471, %21, %cst_111 {dimension_numbers = #tpu.dot_dimension_numbers<[1], [0], [0], [1], [0, 0, 1, 1], [], []>} : vector<16x256xbf16>, vector<256x512xbf16>, vector<16x512xf32> -> vector<16x512xf32>
    %473 = arith.addf %472, %18 : vector<16x512xf32>
    %474 = vector.extract_strided_slice %473 {offsets = [0, 0], sizes = [16, 128], strides = [1, 1]} : vector<16x512xf32> to vector<16x128xf32>
    %475 = arith.negf %474 : vector<16x128xf32>
    %476 = math.exp %475 : vector<16x128xf32>
    %cst_112 = arith.constant 1.000000e+00 : f32
    %477 = vector.broadcast %cst_112 : f32 to vector<16x128xf32>
    %478 = arith.addf %477, %476 : vector<16x128xf32>
    %479 = arith.divf %477, %478 : vector<16x128xf32>
    %480 = vector.extract_strided_slice %473 {offsets = [0, 128], sizes = [16, 128], strides = [1, 1]} : vector<16x512xf32> to vector<16x128xf32>
    %481 = arith.negf %480 : vector<16x128xf32>
    %482 = math.exp %481 : vector<16x128xf32>
    %cst_113 = arith.constant 1.000000e+00 : f32
    %483 = vector.broadcast %cst_113 : f32 to vector<16x128xf32>
    %484 = arith.addf %483, %482 : vector<16x128xf32>
    %485 = arith.divf %483, %484 : vector<16x128xf32>
    %486 = vector.extract_strided_slice %473 {offsets = [0, 256], sizes = [16, 128], strides = [1, 1]} : vector<16x512xf32> to vector<16x128xf32>
    %487 = math.tanh %486 : vector<16x128xf32>
    %488 = vector.extract_strided_slice %473 {offsets = [0, 384], sizes = [16, 128], strides = [1, 1]} : vector<16x512xf32> to vector<16x128xf32>
    %489 = arith.negf %488 : vector<16x128xf32>
    %490 = math.exp %489 : vector<16x128xf32>
    %cst_114 = arith.constant 1.000000e+00 : f32
    %491 = vector.broadcast %cst_114 : f32 to vector<16x128xf32>
    %492 = arith.addf %491, %490 : vector<16x128xf32>
    %493 = arith.divf %491, %492 : vector<16x128xf32>
    %494 = arith.mulf %485, %402 : vector<16x128xf32>
    %495 = arith.mulf %479, %487 : vector<16x128xf32>
    %496 = arith.addf %494, %495 : vector<16x128xf32>
    %497 = math.tanh %496 : vector<16x128xf32>
    %498 = arith.mulf %493, %497 : vector<16x128xf32>
    %499 = arith.truncf %498 : vector<16x128xf32> to vector<16x128xbf16>
    %500 = arith.index_cast %c4_i32 : i32 to index
    %c0_115 = arith.constant 0 : index
    %c0_116 = arith.constant 0 : index
    %501 = vector.load %arg21[%500, %c0_115, %c0_116] : memref<8x16x128xbf16, #tpu.memory_space<vmem>>, vector<1x16x128xbf16>
    %502 = vector.shape_cast %501 : vector<1x16x128xbf16> to vector<16x128xbf16>
    %503 = vector.shape_cast %499 : vector<16x128xbf16> to vector<1x16x128xbf16>
    tpu.vector_store %arg21[%500, %c0_115, %c0_116], %503 {strides = array<i32>} : memref<8x16x128xbf16, #tpu.memory_space<vmem>>, vector<1x16x128xbf16>,
    %c5_i32 = arith.constant 5 : i32
    %504 = arith.index_cast %c5_i32 : i32 to index
    %c0_117 = arith.constant 0 : index
    %c0_118 = arith.constant 0 : index
    %505 = vector.load %arg20[%504, %c0_117, %c0_118] : memref<8x16x512xbf16, #tpu.memory_space<vmem>>, vector<1x16x512xbf16>
    %506 = vector.shape_cast %505 : vector<1x16x512xbf16> to vector<16x512xbf16>
    %cst_119 = arith.constant dense<0.000000e+00> : vector<16x512xf32>
    %507 = tpu.matmul %441, %19, %cst_119 {dimension_numbers = #tpu.dot_dimension_numbers<[1], [0], [0], [1], [0, 0, 1, 1], [], []>} : vector<16x128xbf16>, vector<128x512xbf16>, vector<16x512xf32> -> vector<16x512xf32>
    %508 = arith.extf %506 : vector<16x512xbf16> to vector<16x512xf32>
    %509 = arith.addf %508, %507 : vector<16x512xf32>
    %510 = vector.extract_strided_slice %509 {offsets = [0, 0], sizes = [16, 128], strides = [1, 1]} : vector<16x512xf32> to vector<16x128xf32>
    %511 = arith.negf %510 : vector<16x128xf32>
    %512 = math.exp %511 : vector<16x128xf32>
    %cst_120 = arith.constant 1.000000e+00 : f32
    %513 = vector.broadcast %cst_120 : f32 to vector<16x128xf32>
    %514 = arith.addf %513, %512 : vector<16x128xf32>
    %515 = arith.divf %513, %514 : vector<16x128xf32>
    %516 = vector.extract_strided_slice %509 {offsets = [0, 128], sizes = [16, 128], strides = [1, 1]} : vector<16x512xf32> to vector<16x128xf32>
    %517 = arith.negf %516 : vector<16x128xf32>
    %518 = math.exp %517 : vector<16x128xf32>
    %cst_121 = arith.constant 1.000000e+00 : f32
    %519 = vector.broadcast %cst_121 : f32 to vector<16x128xf32>
    %520 = arith.addf %519, %518 : vector<16x128xf32>
    %521 = arith.divf %519, %520 : vector<16x128xf32>
    %522 = vector.extract_strided_slice %509 {offsets = [0, 256], sizes = [16, 128], strides = [1, 1]} : vector<16x512xf32> to vector<16x128xf32>
    %523 = math.tanh %522 : vector<16x128xf32>
    %524 = vector.extract_strided_slice %509 {offsets = [0, 384], sizes = [16, 128], strides = [1, 1]} : vector<16x512xf32> to vector<16x128xf32>
    %525 = arith.negf %524 : vector<16x128xf32>
    %526 = math.exp %525 : vector<16x128xf32>
    %cst_122 = arith.constant 1.000000e+00 : f32
    %527 = vector.broadcast %cst_122 : f32 to vector<16x128xf32>
    %528 = arith.addf %527, %526 : vector<16x128xf32>
    %529 = arith.divf %527, %528 : vector<16x128xf32>
    %530 = arith.mulf %521, %438 : vector<16x128xf32>
    %531 = arith.mulf %515, %523 : vector<16x128xf32>
    %532 = arith.addf %530, %531 : vector<16x128xf32>
    %533 = math.tanh %532 : vector<16x128xf32>
    %534 = arith.mulf %529, %533 : vector<16x128xf32>
    %535 = arith.truncf %534 : vector<16x128xf32> to vector<16x128xbf16>
    %536 = tpu.concatenate %535, %470 in 1 : vector<16x128xbf16>, vector<16x128xbf16> -> vector<16x256xbf16>
    %cst_123 = arith.constant dense<0.000000e+00> : vector<16x512xf32>
    %537 = tpu.matmul %536, %20, %cst_123 {dimension_numbers = #tpu.dot_dimension_numbers<[1], [0], [0], [1], [0, 0, 1, 1], [], []>} : vector<16x256xbf16>, vector<256x512xbf16>, vector<16x512xf32> -> vector<16x512xf32>
    %538 = arith.addf %537, %15 : vector<16x512xf32>
    %539 = vector.extract_strided_slice %538 {offsets = [0, 0], sizes = [16, 128], strides = [1, 1]} : vector<16x512xf32> to vector<16x128xf32>
    %540 = arith.negf %539 : vector<16x128xf32>
    %541 = math.exp %540 : vector<16x128xf32>
    %cst_124 = arith.constant 1.000000e+00 : f32
    %542 = vector.broadcast %cst_124 : f32 to vector<16x128xf32>
    %543 = arith.addf %542, %541 : vector<16x128xf32>
    %544 = arith.divf %542, %543 : vector<16x128xf32>
    %545 = vector.extract_strided_slice %538 {offsets = [0, 128], sizes = [16, 128], strides = [1, 1]} : vector<16x512xf32> to vector<16x128xf32>
    %546 = arith.negf %545 : vector<16x128xf32>
    %547 = math.exp %546 : vector<16x128xf32>
    %cst_125 = arith.constant 1.000000e+00 : f32
    %548 = vector.broadcast %cst_125 : f32 to vector<16x128xf32>
    %549 = arith.addf %548, %547 : vector<16x128xf32>
    %550 = arith.divf %548, %549 : vector<16x128xf32>
    %551 = vector.extract_strided_slice %538 {offsets = [0, 256], sizes = [16, 128], strides = [1, 1]} : vector<16x512xf32> to vector<16x128xf32>
    %552 = math.tanh %551 : vector<16x128xf32>
    %553 = vector.extract_strided_slice %538 {offsets = [0, 384], sizes = [16, 128], strides = [1, 1]} : vector<16x512xf32> to vector<16x128xf32>
    %554 = arith.negf %553 : vector<16x128xf32>
    %555 = math.exp %554 : vector<16x128xf32>
    %cst_126 = arith.constant 1.000000e+00 : f32
    %556 = vector.broadcast %cst_126 : f32 to vector<16x128xf32>
    %557 = arith.addf %556, %555 : vector<16x128xf32>
    %558 = arith.divf %556, %557 : vector<16x128xf32>
    %559 = arith.mulf %550, %467 : vector<16x128xf32>
    %560 = arith.mulf %544, %552 : vector<16x128xf32>
    %561 = arith.addf %559, %560 : vector<16x128xf32>
    %562 = math.tanh %561 : vector<16x128xf32>
    %563 = arith.mulf %558, %562 : vector<16x128xf32>
    %564 = arith.truncf %563 : vector<16x128xf32> to vector<16x128xbf16>
    %565 = tpu.concatenate %564, %499 in 1 : vector<16x128xbf16>, vector<16x128xbf16> -> vector<16x256xbf16>
    %cst_127 = arith.constant dense<0.000000e+00> : vector<16x512xf32>
    %566 = tpu.matmul %565, %21, %cst_127 {dimension_numbers = #tpu.dot_dimension_numbers<[1], [0], [0], [1], [0, 0, 1, 1], [], []>} : vector<16x256xbf16>, vector<256x512xbf16>, vector<16x512xf32> -> vector<16x512xf32>
    %567 = arith.addf %566, %18 : vector<16x512xf32>
    %568 = vector.extract_strided_slice %567 {offsets = [0, 0], sizes = [16, 128], strides = [1, 1]} : vector<16x512xf32> to vector<16x128xf32>
    %569 = arith.negf %568 : vector<16x128xf32>
    %570 = math.exp %569 : vector<16x128xf32>
    %cst_128 = arith.constant 1.000000e+00 : f32
    %571 = vector.broadcast %cst_128 : f32 to vector<16x128xf32>
    %572 = arith.addf %571, %570 : vector<16x128xf32>
    %573 = arith.divf %571, %572 : vector<16x128xf32>
    %574 = vector.extract_strided_slice %567 {offsets = [0, 128], sizes = [16, 128], strides = [1, 1]} : vector<16x512xf32> to vector<16x128xf32>
    %575 = arith.negf %574 : vector<16x128xf32>
    %576 = math.exp %575 : vector<16x128xf32>
    %cst_129 = arith.constant 1.000000e+00 : f32
    %577 = vector.broadcast %cst_129 : f32 to vector<16x128xf32>
    %578 = arith.addf %577, %576 : vector<16x128xf32>
    %579 = arith.divf %577, %578 : vector<16x128xf32>
    %580 = vector.extract_strided_slice %567 {offsets = [0, 256], sizes = [16, 128], strides = [1, 1]} : vector<16x512xf32> to vector<16x128xf32>
    %581 = math.tanh %580 : vector<16x128xf32>
    %582 = vector.extract_strided_slice %567 {offsets = [0, 384], sizes = [16, 128], strides = [1, 1]} : vector<16x512xf32> to vector<16x128xf32>
    %583 = arith.negf %582 : vector<16x128xf32>
    %584 = math.exp %583 : vector<16x128xf32>
    %cst_130 = arith.constant 1.000000e+00 : f32
    %585 = vector.broadcast %cst_130 : f32 to vector<16x128xf32>
    %586 = arith.addf %585, %584 : vector<16x128xf32>
    %587 = arith.divf %585, %586 : vector<16x128xf32>
    %588 = arith.mulf %579, %496 : vector<16x128xf32>
    %589 = arith.mulf %573, %581 : vector<16x128xf32>
    %590 = arith.addf %588, %589 : vector<16x128xf32>
    %591 = math.tanh %590 : vector<16x128xf32>
    %592 = arith.mulf %587, %591 : vector<16x128xf32>
    %593 = arith.truncf %592 : vector<16x128xf32> to vector<16x128xbf16>
    %594 = arith.index_cast %c5_i32 : i32 to index
    %c0_131 = arith.constant 0 : index
    %c0_132 = arith.constant 0 : index
    %595 = vector.load %arg21[%594, %c0_131, %c0_132] : memref<8x16x128xbf16, #tpu.memory_space<vmem>>, vector<1x16x128xbf16>
    %596 = vector.shape_cast %595 : vector<1x16x128xbf16> to vector<16x128xbf16>
    %597 = vector.shape_cast %593 : vector<16x128xbf16> to vector<1x16x128xbf16>
    tpu.vector_store %arg21[%594, %c0_131, %c0_132], %597 {strides = array<i32>} : memref<8x16x128xbf16, #tpu.memory_space<vmem>>, vector<1x16x128xbf16>,
    %c6_i32 = arith.constant 6 : i32
    %598 = arith.index_cast %c6_i32 : i32 to index
    %c0_133 = arith.constant 0 : index
    %c0_134 = arith.constant 0 : index
    %599 = vector.load %arg20[%598, %c0_133, %c0_134] : memref<8x16x512xbf16, #tpu.memory_space<vmem>>, vector<1x16x512xbf16>
    %600 = vector.shape_cast %599 : vector<1x16x512xbf16> to vector<16x512xbf16>
    %cst_135 = arith.constant dense<0.000000e+00> : vector<16x512xf32>
    %601 = tpu.matmul %535, %19, %cst_135 {dimension_numbers = #tpu.dot_dimension_numbers<[1], [0], [0], [1], [0, 0, 1, 1], [], []>} : vector<16x128xbf16>, vector<128x512xbf16>, vector<16x512xf32> -> vector<16x512xf32>
    %602 = arith.extf %600 : vector<16x512xbf16> to vector<16x512xf32>
    %603 = arith.addf %602, %601 : vector<16x512xf32>
    %604 = vector.extract_strided_slice %603 {offsets = [0, 0], sizes = [16, 128], strides = [1, 1]} : vector<16x512xf32> to vector<16x128xf32>
    %605 = arith.negf %604 : vector<16x128xf32>
    %606 = math.exp %605 : vector<16x128xf32>
    %cst_136 = arith.constant 1.000000e+00 : f32
    %607 = vector.broadcast %cst_136 : f32 to vector<16x128xf32>
    %608 = arith.addf %607, %606 : vector<16x128xf32>
    %609 = arith.divf %607, %608 : vector<16x128xf32>
    %610 = vector.extract_strided_slice %603 {offsets = [0, 128], sizes = [16, 128], strides = [1, 1]} : vector<16x512xf32> to vector<16x128xf32>
    %611 = arith.negf %610 : vector<16x128xf32>
    %612 = math.exp %611 : vector<16x128xf32>
    %cst_137 = arith.constant 1.000000e+00 : f32
    %613 = vector.broadcast %cst_137 : f32 to vector<16x128xf32>
    %614 = arith.addf %613, %612 : vector<16x128xf32>
    %615 = arith.divf %613, %614 : vector<16x128xf32>
    %616 = vector.extract_strided_slice %603 {offsets = [0, 256], sizes = [16, 128], strides = [1, 1]} : vector<16x512xf32> to vector<16x128xf32>
    %617 = math.tanh %616 : vector<16x128xf32>
    %618 = vector.extract_strided_slice %603 {offsets = [0, 384], sizes = [16, 128], strides = [1, 1]} : vector<16x512xf32> to vector<16x128xf32>
    %619 = arith.negf %618 : vector<16x128xf32>
    %620 = math.exp %619 : vector<16x128xf32>
    %cst_138 = arith.constant 1.000000e+00 : f32
    %621 = vector.broadcast %cst_138 : f32 to vector<16x128xf32>
    %622 = arith.addf %621, %620 : vector<16x128xf32>
    %623 = arith.divf %621, %622 : vector<16x128xf32>
    %624 = arith.mulf %615, %532 : vector<16x128xf32>
    %625 = arith.mulf %609, %617 : vector<16x128xf32>
    %626 = arith.addf %624, %625 : vector<16x128xf32>
    %627 = math.tanh %626 : vector<16x128xf32>
    %628 = arith.mulf %623, %627 : vector<16x128xf32>
    %629 = arith.truncf %628 : vector<16x128xf32> to vector<16x128xbf16>
    %630 = tpu.concatenate %629, %564 in 1 : vector<16x128xbf16>, vector<16x128xbf16> -> vector<16x256xbf16>
    %cst_139 = arith.constant dense<0.000000e+00> : vector<16x512xf32>
    %631 = tpu.matmul %630, %20, %cst_139 {dimension_numbers = #tpu.dot_dimension_numbers<[1], [0], [0], [1], [0, 0, 1, 1], [], []>} : vector<16x256xbf16>, vector<256x512xbf16>, vector<16x512xf32> -> vector<16x512xf32>
    %632 = arith.addf %631, %15 : vector<16x512xf32>
    %633 = vector.extract_strided_slice %632 {offsets = [0, 0], sizes = [16, 128], strides = [1, 1]} : vector<16x512xf32> to vector<16x128xf32>
    %634 = arith.negf %633 : vector<16x128xf32>
    %635 = math.exp %634 : vector<16x128xf32>
    %cst_140 = arith.constant 1.000000e+00 : f32
    %636 = vector.broadcast %cst_140 : f32 to vector<16x128xf32>
    %637 = arith.addf %636, %635 : vector<16x128xf32>
    %638 = arith.divf %636, %637 : vector<16x128xf32>
    %639 = vector.extract_strided_slice %632 {offsets = [0, 128], sizes = [16, 128], strides = [1, 1]} : vector<16x512xf32> to vector<16x128xf32>
    %640 = arith.negf %639 : vector<16x128xf32>
    %641 = math.exp %640 : vector<16x128xf32>
    %cst_141 = arith.constant 1.000000e+00 : f32
    %642 = vector.broadcast %cst_141 : f32 to vector<16x128xf32>
    %643 = arith.addf %642, %641 : vector<16x128xf32>
    %644 = arith.divf %642, %643 : vector<16x128xf32>
    %645 = vector.extract_strided_slice %632 {offsets = [0, 256], sizes = [16, 128], strides = [1, 1]} : vector<16x512xf32> to vector<16x128xf32>
    %646 = math.tanh %645 : vector<16x128xf32>
    %647 = vector.extract_strided_slice %632 {offsets = [0, 384], sizes = [16, 128], strides = [1, 1]} : vector<16x512xf32> to vector<16x128xf32>
    %648 = arith.negf %647 : vector<16x128xf32>
    %649 = math.exp %648 : vector<16x128xf32>
    %cst_142 = arith.constant 1.000000e+00 : f32
    %650 = vector.broadcast %cst_142 : f32 to vector<16x128xf32>
    %651 = arith.addf %650, %649 : vector<16x128xf32>
    %652 = arith.divf %650, %651 : vector<16x128xf32>
    %653 = arith.mulf %644, %561 : vector<16x128xf32>
    %654 = arith.mulf %638, %646 : vector<16x128xf32>
    %655 = arith.addf %653, %654 : vector<16x128xf32>
    %656 = math.tanh %655 : vector<16x128xf32>
    %657 = arith.mulf %652, %656 : vector<16x128xf32>
    %658 = arith.truncf %657 : vector<16x128xf32> to vector<16x128xbf16>
    %659 = tpu.concatenate %658, %593 in 1 : vector<16x128xbf16>, vector<16x128xbf16> -> vector<16x256xbf16>
    %cst_143 = arith.constant dense<0.000000e+00> : vector<16x512xf32>
    %660 = tpu.matmul %659, %21, %cst_143 {dimension_numbers = #tpu.dot_dimension_numbers<[1], [0], [0], [1], [0, 0, 1, 1], [], []>} : vector<16x256xbf16>, vector<256x512xbf16>, vector<16x512xf32> -> vector<16x512xf32>
    %661 = arith.addf %660, %18 : vector<16x512xf32>
    %662 = vector.extract_strided_slice %661 {offsets = [0, 0], sizes = [16, 128], strides = [1, 1]} : vector<16x512xf32> to vector<16x128xf32>
    %663 = arith.negf %662 : vector<16x128xf32>
    %664 = math.exp %663 : vector<16x128xf32>
    %cst_144 = arith.constant 1.000000e+00 : f32
    %665 = vector.broadcast %cst_144 : f32 to vector<16x128xf32>
    %666 = arith.addf %665, %664 : vector<16x128xf32>
    %667 = arith.divf %665, %666 : vector<16x128xf32>
    %668 = vector.extract_strided_slice %661 {offsets = [0, 128], sizes = [16, 128], strides = [1, 1]} : vector<16x512xf32> to vector<16x128xf32>
    %669 = arith.negf %668 : vector<16x128xf32>
    %670 = math.exp %669 : vector<16x128xf32>
    %cst_145 = arith.constant 1.000000e+00 : f32
    %671 = vector.broadcast %cst_145 : f32 to vector<16x128xf32>
    %672 = arith.addf %671, %670 : vector<16x128xf32>
    %673 = arith.divf %671, %672 : vector<16x128xf32>
    %674 = vector.extract_strided_slice %661 {offsets = [0, 256], sizes = [16, 128], strides = [1, 1]} : vector<16x512xf32> to vector<16x128xf32>
    %675 = math.tanh %674 : vector<16x128xf32>
    %676 = vector.extract_strided_slice %661 {offsets = [0, 384], sizes = [16, 128], strides = [1, 1]} : vector<16x512xf32> to vector<16x128xf32>
    %677 = arith.negf %676 : vector<16x128xf32>
    %678 = math.exp %677 : vector<16x128xf32>
    %cst_146 = arith.constant 1.000000e+00 : f32
    %679 = vector.broadcast %cst_146 : f32 to vector<16x128xf32>
    %680 = arith.addf %679, %678 : vector<16x128xf32>
    %681 = arith.divf %679, %680 : vector<16x128xf32>
    %682 = arith.mulf %673, %590 : vector<16x128xf32>
    %683 = arith.mulf %667, %675 : vector<16x128xf32>
    %684 = arith.addf %682, %683 : vector<16x128xf32>
    %685 = math.tanh %684 : vector<16x128xf32>
    %686 = arith.mulf %681, %685 : vector<16x128xf32>
    %687 = arith.truncf %686 : vector<16x128xf32> to vector<16x128xbf16>
    %688 = arith.index_cast %c6_i32 : i32 to index
    %c0_147 = arith.constant 0 : index
    %c0_148 = arith.constant 0 : index
    %689 = vector.load %arg21[%688, %c0_147, %c0_148] : memref<8x16x128xbf16, #tpu.memory_space<vmem>>, vector<1x16x128xbf16>
    %690 = vector.shape_cast %689 : vector<1x16x128xbf16> to vector<16x128xbf16>
    %691 = vector.shape_cast %687 : vector<16x128xbf16> to vector<1x16x128xbf16>
    tpu.vector_store %arg21[%688, %c0_147, %c0_148], %691 {strides = array<i32>} : memref<8x16x128xbf16, #tpu.memory_space<vmem>>, vector<1x16x128xbf16>,
    %c7_i32 = arith.constant 7 : i32
    %692 = arith.index_cast %c7_i32 : i32 to index
    %c0_149 = arith.constant 0 : index
    %c0_150 = arith.constant 0 : index
    %693 = vector.load %arg20[%692, %c0_149, %c0_150] : memref<8x16x512xbf16, #tpu.memory_space<vmem>>, vector<1x16x512xbf16>
    %694 = vector.shape_cast %693 : vector<1x16x512xbf16> to vector<16x512xbf16>
    %cst_151 = arith.constant dense<0.000000e+00> : vector<16x512xf32>
    %695 = tpu.matmul %629, %19, %cst_151 {dimension_numbers = #tpu.dot_dimension_numbers<[1], [0], [0], [1], [0, 0, 1, 1], [], []>} : vector<16x128xbf16>, vector<128x512xbf16>, vector<16x512xf32> -> vector<16x512xf32>
    %696 = arith.extf %694 : vector<16x512xbf16> to vector<16x512xf32>
    %697 = arith.addf %696, %695 : vector<16x512xf32>
    %698 = vector.extract_strided_slice %697 {offsets = [0, 0], sizes = [16, 128], strides = [1, 1]} : vector<16x512xf32> to vector<16x128xf32>
    %699 = arith.negf %698 : vector<16x128xf32>
    %700 = math.exp %699 : vector<16x128xf32>
    %cst_152 = arith.constant 1.000000e+00 : f32
    %701 = vector.broadcast %cst_152 : f32 to vector<16x128xf32>
    %702 = arith.addf %701, %700 : vector<16x128xf32>
    %703 = arith.divf %701, %702 : vector<16x128xf32>
    %704 = vector.extract_strided_slice %697 {offsets = [0, 128], sizes = [16, 128], strides = [1, 1]} : vector<16x512xf32> to vector<16x128xf32>
    %705 = arith.negf %704 : vector<16x128xf32>
    %706 = math.exp %705 : vector<16x128xf32>
    %cst_153 = arith.constant 1.000000e+00 : f32
    %707 = vector.broadcast %cst_153 : f32 to vector<16x128xf32>
    %708 = arith.addf %707, %706 : vector<16x128xf32>
    %709 = arith.divf %707, %708 : vector<16x128xf32>
    %710 = vector.extract_strided_slice %697 {offsets = [0, 256], sizes = [16, 128], strides = [1, 1]} : vector<16x512xf32> to vector<16x128xf32>
    %711 = math.tanh %710 : vector<16x128xf32>
    %712 = vector.extract_strided_slice %697 {offsets = [0, 384], sizes = [16, 128], strides = [1, 1]} : vector<16x512xf32> to vector<16x128xf32>
    %713 = arith.negf %712 : vector<16x128xf32>
    %714 = math.exp %713 : vector<16x128xf32>
    %cst_154 = arith.constant 1.000000e+00 : f32
    %715 = vector.broadcast %cst_154 : f32 to vector<16x128xf32>
    %716 = arith.addf %715, %714 : vector<16x128xf32>
    %717 = arith.divf %715, %716 : vector<16x128xf32>
    %718 = arith.mulf %709, %626 : vector<16x128xf32>
    %719 = arith.mulf %703, %711 : vector<16x128xf32>
    %720 = arith.addf %718, %719 : vector<16x128xf32>
    %721 = math.tanh %720 : vector<16x128xf32>
    %722 = arith.mulf %717, %721 : vector<16x128xf32>
    %723 = arith.truncf %722 : vector<16x128xf32> to vector<16x128xbf16>
    %724 = tpu.concatenate %723, %658 in 1 : vector<16x128xbf16>, vector<16x128xbf16> -> vector<16x256xbf16>
    %cst_155 = arith.constant dense<0.000000e+00> : vector<16x512xf32>
    %725 = tpu.matmul %724, %20, %cst_155 {dimension_numbers = #tpu.dot_dimension_numbers<[1], [0], [0], [1], [0, 0, 1, 1], [], []>} : vector<16x256xbf16>, vector<256x512xbf16>, vector<16x512xf32> -> vector<16x512xf32>
    %726 = arith.addf %725, %15 : vector<16x512xf32>
    %727 = vector.extract_strided_slice %726 {offsets = [0, 0], sizes = [16, 128], strides = [1, 1]} : vector<16x512xf32> to vector<16x128xf32>
    %728 = arith.negf %727 : vector<16x128xf32>
    %729 = math.exp %728 : vector<16x128xf32>
    %cst_156 = arith.constant 1.000000e+00 : f32
    %730 = vector.broadcast %cst_156 : f32 to vector<16x128xf32>
    %731 = arith.addf %730, %729 : vector<16x128xf32>
    %732 = arith.divf %730, %731 : vector<16x128xf32>
    %733 = vector.extract_strided_slice %726 {offsets = [0, 128], sizes = [16, 128], strides = [1, 1]} : vector<16x512xf32> to vector<16x128xf32>
    %734 = arith.negf %733 : vector<16x128xf32>
    %735 = math.exp %734 : vector<16x128xf32>
    %cst_157 = arith.constant 1.000000e+00 : f32
    %736 = vector.broadcast %cst_157 : f32 to vector<16x128xf32>
    %737 = arith.addf %736, %735 : vector<16x128xf32>
    %738 = arith.divf %736, %737 : vector<16x128xf32>
    %739 = vector.extract_strided_slice %726 {offsets = [0, 256], sizes = [16, 128], strides = [1, 1]} : vector<16x512xf32> to vector<16x128xf32>
    %740 = math.tanh %739 : vector<16x128xf32>
    %741 = vector.extract_strided_slice %726 {offsets = [0, 384], sizes = [16, 128], strides = [1, 1]} : vector<16x512xf32> to vector<16x128xf32>
    %742 = arith.negf %741 : vector<16x128xf32>
    %743 = math.exp %742 : vector<16x128xf32>
    %cst_158 = arith.constant 1.000000e+00 : f32
    %744 = vector.broadcast %cst_158 : f32 to vector<16x128xf32>
    %745 = arith.addf %744, %743 : vector<16x128xf32>
    %746 = arith.divf %744, %745 : vector<16x128xf32>
    %747 = arith.mulf %738, %655 : vector<16x128xf32>
    %748 = arith.mulf %732, %740 : vector<16x128xf32>
    %749 = arith.addf %747, %748 : vector<16x128xf32>
    %750 = math.tanh %749 : vector<16x128xf32>
    %751 = arith.mulf %746, %750 : vector<16x128xf32>
    %752 = arith.truncf %751 : vector<16x128xf32> to vector<16x128xbf16>
    %753 = tpu.concatenate %752, %687 in 1 : vector<16x128xbf16>, vector<16x128xbf16> -> vector<16x256xbf16>
    %cst_159 = arith.constant dense<0.000000e+00> : vector<16x512xf32>
    %754 = tpu.matmul %753, %21, %cst_159 {dimension_numbers = #tpu.dot_dimension_numbers<[1], [0], [0], [1], [0, 0, 1, 1], [], []>} : vector<16x256xbf16>, vector<256x512xbf16>, vector<16x512xf32> -> vector<16x512xf32>
    %755 = arith.addf %754, %18 : vector<16x512xf32>
    %756 = vector.extract_strided_slice %755 {offsets = [0, 0], sizes = [16, 128], strides = [1, 1]} : vector<16x512xf32> to vector<16x128xf32>
    %757 = arith.negf %756 : vector<16x128xf32>
    %758 = math.exp %757 : vector<16x128xf32>
    %cst_160 = arith.constant 1.000000e+00 : f32
    %759 = vector.broadcast %cst_160 : f32 to vector<16x128xf32>
    %760 = arith.addf %759, %758 : vector<16x128xf32>
    %761 = arith.divf %759, %760 : vector<16x128xf32>
    %762 = vector.extract_strided_slice %755 {offsets = [0, 128], sizes = [16, 128], strides = [1, 1]} : vector<16x512xf32> to vector<16x128xf32>
    %763 = arith.negf %762 : vector<16x128xf32>
    %764 = math.exp %763 : vector<16x128xf32>
    %cst_161 = arith.constant 1.000000e+00 : f32
    %765 = vector.broadcast %cst_161 : f32 to vector<16x128xf32>
    %766 = arith.addf %765, %764 : vector<16x128xf32>
    %767 = arith.divf %765, %766 : vector<16x128xf32>
    %768 = vector.extract_strided_slice %755 {offsets = [0, 256], sizes = [16, 128], strides = [1, 1]} : vector<16x512xf32> to vector<16x128xf32>
    %769 = math.tanh %768 : vector<16x128xf32>
    %770 = vector.extract_strided_slice %755 {offsets = [0, 384], sizes = [16, 128], strides = [1, 1]} : vector<16x512xf32> to vector<16x128xf32>
    %771 = arith.negf %770 : vector<16x128xf32>
    %772 = math.exp %771 : vector<16x128xf32>
    %cst_162 = arith.constant 1.000000e+00 : f32
    %773 = vector.broadcast %cst_162 : f32 to vector<16x128xf32>
    %774 = arith.addf %773, %772 : vector<16x128xf32>
    %775 = arith.divf %773, %774 : vector<16x128xf32>
    %776 = arith.mulf %767, %684 : vector<16x128xf32>
    %777 = arith.mulf %761, %769 : vector<16x128xf32>
    %778 = arith.addf %776, %777 : vector<16x128xf32>
    %779 = math.tanh %778 : vector<16x128xf32>
    %780 = arith.mulf %775, %779 : vector<16x128xf32>
    %781 = arith.truncf %780 : vector<16x128xf32> to vector<16x128xbf16>
    %782 = arith.index_cast %c7_i32 : i32 to index
    %c0_163 = arith.constant 0 : index
    %c0_164 = arith.constant 0 : index
    %783 = vector.load %arg21[%782, %c0_163, %c0_164] : memref<8x16x128xbf16, #tpu.memory_space<vmem>>, vector<1x16x128xbf16>
    %784 = vector.shape_cast %783 : vector<1x16x128xbf16> to vector<16x128xbf16>
    %785 = vector.shape_cast %781 : vector<16x128xbf16> to vector<1x16x128xbf16>
    tpu.vector_store %arg21[%782, %c0_163, %c0_164], %785 {strides = array<i32>} : memref<8x16x128xbf16, #tpu.memory_space<vmem>>, vector<1x16x128xbf16>,
    %c8_i32 = arith.constant 8 : i32
    %c0_165 = arith.constant 0 : index
    %c0_166 = arith.constant 0 : index
    %c0_167 = arith.constant 0 : index
    %786 = vector.load %arg18[%c0_165, %c0_166, %c0_167] : memref<3x16x128xbf16, #tpu.memory_space<vmem>>, vector<1x16x128xbf16>
    %787 = vector.shape_cast %786 : vector<1x16x128xbf16> to vector<16x128xbf16>
    %788 = vector.shape_cast %723 : vector<16x128xbf16> to vector<1x16x128xbf16>
    tpu.vector_store %arg18[%c0_165, %c0_166, %c0_167], %788 {strides = array<i32>} : memref<3x16x128xbf16, #tpu.memory_space<vmem>>, vector<1x16x128xbf16>,
    %c1_168 = arith.constant 1 : index
    %c0_169 = arith.constant 0 : index
    %c0_170 = arith.constant 0 : index
    %789 = vector.load %arg18[%c1_168, %c0_169, %c0_170] : memref<3x16x128xbf16, #tpu.memory_space<vmem>>, vector<1x16x128xbf16>
    %790 = vector.shape_cast %789 : vector<1x16x128xbf16> to vector<16x128xbf16>
    %791 = vector.shape_cast %752 : vector<16x128xbf16> to vector<1x16x128xbf16>
    tpu.vector_store %arg18[%c1_168, %c0_169, %c0_170], %791 {strides = array<i32>} : memref<3x16x128xbf16, #tpu.memory_space<vmem>>, vector<1x16x128xbf16>,
    %c2_171 = arith.constant 2 : index
    %c0_172 = arith.constant 0 : index
    %c0_173 = arith.constant 0 : index
    %792 = vector.load %arg18[%c2_171, %c0_172, %c0_173] : memref<3x16x128xbf16, #tpu.memory_space<vmem>>, vector<1x16x128xbf16>
    %793 = vector.shape_cast %792 : vector<1x16x128xbf16> to vector<16x128xbf16>
    %794 = vector.shape_cast %781 : vector<16x128xbf16> to vector<1x16x128xbf16>
    tpu.vector_store %arg18[%c2_171, %c0_172, %c0_173], %794 {strides = array<i32>} : memref<3x16x128xbf16, #tpu.memory_space<vmem>>, vector<1x16x128xbf16>,
    %c0_174 = arith.constant 0 : index
    %c0_175 = arith.constant 0 : index
    %c0_176 = arith.constant 0 : index
    %795 = vector.load %arg19[%c0_174, %c0_175, %c0_176] : memref<3x16x128xf32, #tpu.memory_space<vmem>>, vector<1x16x128xf32>
    %796 = vector.shape_cast %795 : vector<1x16x128xf32> to vector<16x128xf32>
    %797 = vector.shape_cast %720 : vector<16x128xf32> to vector<1x16x128xf32>
    tpu.vector_store %arg19[%c0_174, %c0_175, %c0_176], %797 {strides = array<i32>} : memref<3x16x128xf32, #tpu.memory_space<vmem>>, vector<1x16x128xf32>,
    %c1_177 = arith.constant 1 : index
    %c0_178 = arith.constant 0 : index
    %c0_179 = arith.constant 0 : index
    %798 = vector.load %arg19[%c1_177, %c0_178, %c0_179] : memref<3x16x128xf32, #tpu.memory_space<vmem>>, vector<1x16x128xf32>
    %799 = vector.shape_cast %798 : vector<1x16x128xf32> to vector<16x128xf32>
    %800 = vector.shape_cast %749 : vector<16x128xf32> to vector<1x16x128xf32>
    tpu.vector_store %arg19[%c1_177, %c0_178, %c0_179], %800 {strides = array<i32>} : memref<3x16x128xf32, #tpu.memory_space<vmem>>, vector<1x16x128xf32>,
    %c2_180 = arith.constant 2 : index
    %c0_181 = arith.constant 0 : index
    %c0_182 = arith.constant 0 : index
    %801 = vector.load %arg19[%c2_180, %c0_181, %c0_182] : memref<3x16x128xf32, #tpu.memory_space<vmem>>, vector<1x16x128xf32>
    %802 = vector.shape_cast %801 : vector<1x16x128xf32> to vector<16x128xf32>
    %803 = vector.shape_cast %778 : vector<16x128xf32> to vector<1x16x128xf32>
    tpu.vector_store %arg19[%c2_180, %c0_181, %c0_182], %803 {strides = array<i32>} : memref<3x16x128xf32, #tpu.memory_space<vmem>>, vector<1x16x128xf32>,
    %c0_183 = arith.constant 0 : index
    %c0_184 = arith.constant 0 : index
    %c0_185 = arith.constant 0 : index
    %804 = vector.load %arg21[%c0_183, %c0_184, %c0_185] : memref<8x16x128xbf16, #tpu.memory_space<vmem>>, vector<8x16x128xbf16>
    %805 = vector.shape_cast %804 : vector<8x16x128xbf16> to vector<128x128xbf16>
    %c0_186 = arith.constant 0 : index
    %c0_187 = arith.constant 0 : index
    %c256 = arith.constant 256 : index
    %806 = vector.load %arg2[%c0_186, %c0_187, %c256] : memref<8x16x384xbf16, #tpu.memory_space<vmem>>, vector<8x16x128xbf16>
    %807 = vector.shape_cast %806 : vector<8x16x128xbf16> to vector<128x128xbf16>
    %c0_188 = arith.constant 0 : index
    %c0_189 = arith.constant 0 : index
    %808 = vector.load %arg10[%c0_188, %c0_189] : memref<128x128xbf16, #tpu.memory_space<vmem>>, vector<128x128xbf16>
    %cst_190 = arith.constant dense<0.000000e+00> : vector<128x128xf32>
    %809 = tpu.matmul %805, %808, %cst_190 {dimension_numbers = #tpu.dot_dimension_numbers<[1], [0], [0], [1], [0, 0, 1, 1], [], []>} : vector<128x128xbf16>, vector<128x128xbf16>, vector<128x128xf32> -> vector<128x128xf32>
    %c0_191 = arith.constant 0 : index
    %c0_192 = arith.constant 0 : index
    %810 = vector.load %arg11[%c0_191, %c0_192] : memref<128x128xbf16, #tpu.memory_space<vmem>>, vector<128x128xbf16>
    %cst_193 = arith.constant dense<0.000000e+00> : vector<128x128xf32>
    %811 = tpu.matmul %807, %810, %cst_193 {dimension_numbers = #tpu.dot_dimension_numbers<[1], [0], [0], [1], [0, 0, 1, 1], [], []>} : vector<128x128xbf16>, vector<128x128xbf16>, vector<128x128xf32> -> vector<128x128xf32>
    %812 = arith.addf %809, %811 : vector<128x128xf32>
    %c0_194 = arith.constant 0 : index
    %c0_195 = arith.constant 0 : index
    %813 = vector.load %arg12[%c0_194, %c0_195] : memref<1x128xf32, #tpu.memory_space<vmem>>, vector<1x128xf32>
    %814 = vector.broadcast %813 : vector<1x128xf32> to vector<128x128xf32>
    %815 = arith.addf %812, %814 : vector<128x128xf32>
    %cst_196 = arith.constant 0.000000e+00 : f32
    %816 = vector.broadcast %cst_196 : f32 to vector<128x128xf32>
    %817 = arith.maximumf %815, %816 : vector<128x128xf32>
    %818 = arith.truncf %817 : vector<128x128xf32> to vector<128x128xbf16>
    %c0_197 = arith.constant 0 : index
    %c0_198 = arith.constant 0 : index
    %819 = vector.load %arg13[%c0_197, %c0_198] : memref<128x128xbf16, #tpu.memory_space<vmem>>, vector<128x128xbf16>
    %cst_199 = arith.constant dense<0.000000e+00> : vector<128x128xf32>
    %820 = tpu.matmul %818, %819, %cst_199 {dimension_numbers = #tpu.dot_dimension_numbers<[1], [0], [0], [1], [0, 0, 1, 1], [], []>} : vector<128x128xbf16>, vector<128x128xbf16>, vector<128x128xf32> -> vector<128x128xf32>
    %c0_200 = arith.constant 0 : index
    %c0_201 = arith.constant 0 : index
    %821 = vector.load %arg14[%c0_200, %c0_201] : memref<1x128xf32, #tpu.memory_space<vmem>>, vector<1x128xf32>
    %822 = vector.broadcast %821 : vector<1x128xf32> to vector<128x128xf32>
    %823 = arith.addf %820, %822 : vector<128x128xf32>
    %cst_202 = arith.constant 0.000000e+00 : f32
    %824 = vector.broadcast %cst_202 : f32 to vector<128x128xf32>
    %825 = arith.maximumf %823, %824 : vector<128x128xf32>
    %826 = vector.shape_cast %825 : vector<128x128xf32> to vector<8x16x128xf32>
    %c0_203 = arith.constant 0 : index
    %c0_204 = arith.constant 0 : index
    %827 = vector.load %arg15[%c0_203, %c0_204] : memref<1x128xf32, #tpu.memory_space<vmem>>, vector<1x128xf32>
    %828 = vector.shape_cast %827 : vector<1x128xf32> to vector<1x1x128xf32>
    %829 = vector.broadcast %828 : vector<1x1x128xf32> to vector<8x16x128xf32>
    %830 = arith.mulf %826, %829 : vector<8x16x128xf32>
    %cst_205 = arith.constant dense<0.000000e+00> : vector<8x16xf32>
    %831 = vector.multi_reduction <add>, %830, %cst_205 [2] : vector<8x16x128xf32> to vector<8x16xf32>
    %c0_206 = arith.constant 0 : index
    %c0_207 = arith.constant 0 : index
    %832 = vector.load %arg16[%c0_206, %c0_207] : memref<1x1xf32, #tpu.memory_space<vmem>>, vector<1x1xf32>
    %833 = vector.broadcast %832 : vector<1x1xf32> to vector<8x16xf32>
    %834 = arith.addf %831, %833 : vector<8x16xf32>
    %835 = arith.negf %834 : vector<8x16xf32>
    %836 = math.exp %835 : vector<8x16xf32>
    %cst_208 = arith.constant 1.000000e+00 : f32
    %837 = vector.broadcast %cst_208 : f32 to vector<8x16xf32>
    %838 = arith.addf %837, %836 : vector<8x16xf32>
    %839 = arith.divf %837, %838 : vector<8x16xf32>
    %840 = tpu.transpose %839, [1, 0] : vector<8x16xf32> -> vector<16x8xf32>
    %c0_209 = arith.constant 0 : index
    %c0_210 = arith.constant 0 : index
    %841 = vector.load %arg17[%c0_209, %c0_210] : memref<16x8xf32, #tpu.memory_space<vmem>>, vector<16x8xf32>
    tpu.vector_store %arg17[%c0_209, %c0_210], %840 {strides = array<i32>} : memref<16x8xf32, #tpu.memory_space<vmem>>, vector<16x8xf32>,
    return
  }
  func.func @transform_0(%arg0: i32, %arg1: i32) -> (i32, i32, i32) {
    %c0_i32 = arith.constant 0 : i32
    %c0_i32_0 = arith.constant 0 : i32
    return %arg1, %arg0, %c0_i32 : i32, i32, i32
  }
  func.func @transform_1(%arg0: i32, %arg1: i32) -> (i32, i32) {
    %c0_i32 = arith.constant 0 : i32
    %c0_i32_0 = arith.constant 0 : i32
    %c0_i32_1 = arith.constant 0 : i32
    return %c0_i32, %c0_i32_0 : i32, i32
  }
  func.func @transform_2(%arg0: i32, %arg1: i32) -> (i32, i32) {
    %c0_i32 = arith.constant 0 : i32
    %c0_i32_0 = arith.constant 0 : i32
    %c0_i32_1 = arith.constant 0 : i32
    return %c0_i32, %c0_i32_0 : i32, i32
  }
  func.func @transform_3(%arg0: i32, %arg1: i32) -> (i32, i32) {
    %c0_i32 = arith.constant 0 : i32
    %c0_i32_0 = arith.constant 0 : i32
    %c0_i32_1 = arith.constant 0 : i32
    return %c0_i32, %c0_i32_0 : i32, i32
  }
  func.func @transform_4(%arg0: i32, %arg1: i32) -> (i32, i32) {
    %c0_i32 = arith.constant 0 : i32
    %c0_i32_0 = arith.constant 0 : i32
    %c0_i32_1 = arith.constant 0 : i32
    return %c0_i32, %c0_i32_0 : i32, i32
  }
  func.func @transform_5(%arg0: i32, %arg1: i32) -> (i32, i32) {
    %c0_i32 = arith.constant 0 : i32
    %c0_i32_0 = arith.constant 0 : i32
    %c0_i32_1 = arith.constant 0 : i32
    return %c0_i32, %c0_i32_0 : i32, i32
  }
  func.func @transform_6(%arg0: i32, %arg1: i32) -> (i32, i32) {
    %c0_i32 = arith.constant 0 : i32
    %c0_i32_0 = arith.constant 0 : i32
    %c0_i32_1 = arith.constant 0 : i32
    return %c0_i32, %c0_i32_0 : i32, i32
  }
  func.func @transform_7(%arg0: i32, %arg1: i32) -> (i32, i32) {
    %c0_i32 = arith.constant 0 : i32
    %c0_i32_0 = arith.constant 0 : i32
    %c0_i32_1 = arith.constant 0 : i32
    return %c0_i32, %c0_i32_0 : i32, i32
  }
  func.func @transform_8(%arg0: i32, %arg1: i32) -> (i32, i32) {
    %c0_i32 = arith.constant 0 : i32
    %c0_i32_0 = arith.constant 0 : i32
    %c0_i32_1 = arith.constant 0 : i32
    return %c0_i32, %c0_i32_0 : i32, i32
  }
  func.func @transform_9(%arg0: i32, %arg1: i32) -> (i32, i32) {
    %c0_i32 = arith.constant 0 : i32
    %c0_i32_0 = arith.constant 0 : i32
    %c0_i32_1 = arith.constant 0 : i32
    return %c0_i32, %c0_i32_0 : i32, i32
  }
  func.func @transform_10(%arg0: i32, %arg1: i32) -> (i32, i32) {
    %c0_i32 = arith.constant 0 : i32
    %c0_i32_0 = arith.constant 0 : i32
    %c0_i32_1 = arith.constant 0 : i32
    return %c0_i32, %c0_i32_0 : i32, i32
  }
  func.func @transform_11(%arg0: i32, %arg1: i32) -> (i32, i32) {
    %c0_i32 = arith.constant 0 : i32
    %c0_i32_0 = arith.constant 0 : i32
    %c0_i32_1 = arith.constant 0 : i32
    return %c0_i32, %c0_i32_0 : i32, i32
  }
  func.func @transform_12(%arg0: i32, %arg1: i32) -> (i32, i32) {
    %c0_i32 = arith.constant 0 : i32
    %c0_i32_0 = arith.constant 0 : i32
    %c0_i32_1 = arith.constant 0 : i32
    return %c0_i32, %c0_i32_0 : i32, i32
  }
  func.func @transform_13(%arg0: i32, %arg1: i32) -> (i32, i32) {
    %c0_i32 = arith.constant 0 : i32
    %c0_i32_0 = arith.constant 0 : i32
    %c0_i32_1 = arith.constant 0 : i32
    return %c0_i32, %c0_i32_0 : i32, i32
  }
  func.func @transform_14(%arg0: i32, %arg1: i32) -> (i32, i32) {
    %c0_i32 = arith.constant 0 : i32
    %c0_i32_0 = arith.constant 0 : i32
    %c0_i32_1 = arith.constant 0 : i32
    return %c0_i32, %c0_i32_0 : i32, i32
  }
  func.func @transform_15(%arg0: i32, %arg1: i32) -> (i32, i32) {
    %c0_i32 = arith.constant 0 : i32
    return %arg0, %arg1 : i32, i32
  }
}

</mosaic_0001>

<llo_original>
// kernel: critic_forward.1
$region0: #{critic_forward.1}
  #allocation0 [shape = 'u32[]', space=smem, size = 0x4, offset = 0x4, fixed_abs, tag = 'smem constant byte address 0x4 - core index']
  #allocation1 [shape = 'u32[72,128]{1,0:T(1,128)}', space=vmem, size = 0x9000, scoped, tag = 'internal scratch']
  #allocation2 [shape = 'bf16[3,16,128]{2,1,0:T(8,128)(2,1)}', space=vmem, size = 0x3000, scoped, tag = 'scratch operand']
  #allocation3 [shape = 'f32[3,16,128]{2,1,0:T(8,128)}', space=vmem, size = 0x6000, scoped, tag = 'scratch operand']
  #allocation4 [shape = 'bf16[8,16,512]{2,1,0:T(8,128)(2,1)}', space=vmem, size = 0x20000, scoped, tag = 'scratch operand']
  #allocation5 [shape = 'bf16[8,16,128]{2,1,0:T(8,128)(2,1)}', space=vmem, size = 0x8000, scoped, tag = 'scratch operand']
  #allocation6 [shape = 'f32[1,1]{1,0:T(1,128)S(1)}', space=vmem, size = 0x200, scoped, tag = 'scoped memory for critic_forward.1']
  %s0 = inlined_call_operand.vmem [shape: bf16[8,16,384], index: 0, kind: input, shape index: {}]
  %s1 = inlined_call_operand.vmem [shape: bf16[256,512], index: 1, kind: input, shape index: {}]
  %s2 = inlined_call_operand.vmem [shape: bf16[128,512], index: 2, kind: input, shape index: {}]
  %s3 = inlined_call_operand.vmem [shape: f32[1,512], index: 3, kind: input, shape index: {}]
  %s4 = inlined_call_operand.vmem [shape: bf16[256,512], index: 4, kind: input, shape index: {}]
  %s5 = inlined_call_operand.vmem [shape: f32[1,512], index: 5, kind: input, shape index: {}]
  %s6 = inlined_call_operand.vmem [shape: bf16[256,512], index: 6, kind: input, shape index: {}]
  %s7 = inlined_call_operand.vmem [shape: f32[1,512], index: 7, kind: input, shape index: {}]
  %s8 = inlined_call_operand.vmem [shape: bf16[128,128], index: 8, kind: input, shape index: {}]
  %s9 = inlined_call_operand.vmem [shape: bf16[128,128], index: 9, kind: input, shape index: {}]
  %s10 = inlined_call_operand.vmem [shape: f32[1,128], index: 10, kind: input, shape index: {}]
  %s11 = inlined_call_operand.vmem [shape: bf16[128,128], index: 11, kind: input, shape index: {}]
  %s12 = inlined_call_operand.vmem [shape: f32[1,128], index: 12, kind: input, shape index: {}]
  %s13 = inlined_call_operand.vmem [shape: f32[1,128], index: 13, kind: input, shape index: {}]
  %s14 = inlined_call_operand.<no memory space> [shape: f32[1,1], index: 14, kind: input, shape index: {}]
  %s15 = inlined_call_operand.vmem [shape: f32[16,8], index: 15, kind: output, shape index: {}]
  %s16 = sld [smem:[#allocation0]]
  $region74: #{critic_forward.1} parent=0
    _
  %s18 = ssub.s32 1, %s16
  %s19 = scalar_select 0, %s18, %s16
  %v20 = vstv %s14
  %21 = vst [vmem:[#allocation6] sm:$0x1] %v20
  // Predicated region
  $region2: #{critic_forward.1} parent=0 // pred_check
    _
  $region3: #{critic_forward.1} parent=0 // pred_check_branch
    %23 = sbr.rel (0) target = $region5
  $region4: #{critic_forward.1} parent=0 // pred_region
    _
  $region5: #{critic_forward.1} parent=0 // pred_fallthru
    _
  // Predicated region
  $region6: #{critic_forward.1} parent=0 // pred_check
    _
  $region7: #{critic_forward.1} parent=0 // pred_check_branch
    %25 = sbr.rel (0) target = $region9
  $region8: #{critic_forward.1} parent=0 // pred_region
    _
  $region9: #{critic_forward.1} parent=0 // pred_fallthru
    _
  // Predicated region
  $region10: #{critic_forward.1} parent=0 // pred_check
    _
  $region11: #{critic_forward.1} parent=0 // pred_check_branch
    %27 = sbr.rel (0) target = $region13
  $region12: #{critic_forward.1} parent=0 // pred_region
    _
  $region13: #{critic_forward.1} parent=0 // pred_fallthru
    _
  // Predicated region
  $region14: #{critic_forward.1} parent=0 // pred_check
    _
  $region15: #{critic_forward.1} parent=0 // pred_check_branch
    %29 = sbr.rel (0) target = $region17
  $region16: #{critic_forward.1} parent=0 // pred_region
    _
  $region17: #{critic_forward.1} parent=0 // pred_fallthru
    _
  // Predicated region
  $region18: #{critic_forward.1} parent=0 // pred_check
    _
  $region19: #{critic_forward.1} parent=0 // pred_check_branch
    %31 = sbr.rel (0) target = $region21
  $region20: #{critic_forward.1} parent=0 // pred_region
    _
  $region21: #{critic_forward.1} parent=0 // pred_fallthru
    _
  // Predicated region
  $region22: #{critic_forward.1} parent=0 // pred_check
    _
  $region23: #{critic_forward.1} parent=0 // pred_check_branch
    %33 = sbr.rel (0) target = $region25
  $region24: #{critic_forward.1} parent=0 // pred_region
    _
  $region25: #{critic_forward.1} parent=0 // pred_fallthru
    _
  // Predicated region
  $region26: #{critic_forward.1} parent=0 // pred_check
    _
  $region27: #{critic_forward.1} parent=0 // pred_check_branch
    %35 = sbr.rel (0) target = $region29
  $region28: #{critic_forward.1} parent=0 // pred_region
    _
  $region29: #{critic_forward.1} parent=0 // pred_fallthru
    _
  // Predicated region
  $region30: #{critic_forward.1} parent=0 // pred_check
    _
  $region31: #{critic_forward.1} parent=0 // pred_check_branch
    %37 = sbr.rel (0) target = $region33
  $region32: #{critic_forward.1} parent=0 // pred_region
    _
  $region33: #{critic_forward.1} parent=0 // pred_fallthru
    _
  // Predicated region
  $region34: #{critic_forward.1} parent=0 // pred_check
    _
  $region35: #{critic_forward.1} parent=0 // pred_check_branch
    %39 = sbr.rel (0) target = $region37
  $region36: #{critic_forward.1} parent=0 // pred_region
    _
  $region37: #{critic_forward.1} parent=0 // pred_fallthru
    _
  // Predicated region
  $region38: #{critic_forward.1} parent=0 // pred_check
    _
  $region39: #{critic_forward.1} parent=0 // pred_check_branch
    %41 = sbr.rel (0) target = $region41
  $region40: #{critic_forward.1} parent=0 // pred_region
    _
  $region41: #{critic_forward.1} parent=0 // pred_fallthru
    _
  // Predicated region
  $region42: #{critic_forward.1} parent=0 // pred_check
    _
  $region43: #{critic_forward.1} parent=0 // pred_check_branch
    %43 = sbr.rel (0) target = $region45
  $region44: #{critic_forward.1} parent=0 // pred_region
    _
  $region45: #{critic_forward.1} parent=0 // pred_fallthru
    _
  // Predicated region
  $region46: #{critic_forward.1} parent=0 // pred_check
    _
  $region47: #{critic_forward.1} parent=0 // pred_check_branch
    %45 = sbr.rel (0) target = $region49
  $region48: #{critic_forward.1} parent=0 // pred_region
    _
  $region49: #{critic_forward.1} parent=0 // pred_fallthru
    _
  // Predicated region
  $region50: #{critic_forward.1} parent=0 // pred_check
    _
  $region51: #{critic_forward.1} parent=0 // pred_check_branch
    %47 = sbr.rel (0) target = $region53
  $region52: #{critic_forward.1} parent=0 // pred_region
    _
  $region53: #{critic_forward.1} parent=0 // pred_fallthru
    _
  // Predicated region
  $region54: #{critic_forward.1} parent=0 // pred_check
    _
  $region55: #{critic_forward.1} parent=0 // pred_check_branch
    %49 = sbr.rel (0) target = $region57
  $region56: #{critic_forward.1} parent=0 // pred_region
    _
  $region57: #{critic_forward.1} parent=0 // pred_fallthru
    _
  // Predicated region
  $region58: #{critic_forward.1} parent=0 // pred_check
    _
  $region59: #{critic_forward.1} parent=0 // pred_check_branch
    %51 = sbr.rel (0) target = $region61
  $region60: #{critic_forward.1} parent=0 // pred_region
    _
  $region61: #{critic_forward.1} parent=0 // pred_fallthru
    _
  %p53 = scmp.eq.s32.totalorder 0, 0
  // Predicated region
  $region62: #{critic_forward.1} parent=0 // pred_check
    %p54 = pneg %p53
  $region63: #{critic_forward.1} parent=0 // pred_check_branch
    %56 = sbr.rel (%p54) target = $region65
  $region64: #{critic_forward.1} parent=0 // pred_region
    %57 = vst [vmem:[#allocation2] sm:$0xf] 0
    %58 = vst [vmem:[#allocation2 + $0x4] sm:$0xf] 0
    %59 = vst [vmem:[#allocation2 + $0x8] sm:$0xf] 0
    %60 = vst [vmem:[#allocation2 + $0xc] sm:$0xf] 0
    %61 = vst [vmem:[#allocation2 + $0x10] sm:$0xf] 0
    %62 = vst [vmem:[#allocation2 + $0x14] sm:$0xf] 0
    %63 = vst [vmem:[#allocation3] sm:$0xff] 0.0
    %64 = vst [vmem:[#allocation3 + $0x8] sm:$0xff] 0.0
    %65 = vst [vmem:[#allocation3 + $0x10] sm:$0xff] 0.0
    %66 = vst [vmem:[#allocation3 + $0x18] sm:$0xff] 0.0
    %67 = vst [vmem:[#allocation3 + $0x20] sm:$0xff] 0.0
    %68 = vst [vmem:[#allocation3 + $0x28] sm:$0xff] 0.0
  $region65: #{critic_forward.1} parent=0 // pred_fallthru
    _
  %v69 = vld [vmem:[%s0] sm:$0xff]
  %v70 = vld [vmem:[%s0 + $0xc] sm:$0xff]
  %v71 = vld [vmem:[%s0 + $0x18] sm:$0xff]
  %v72 = vld [vmem:[%s0 + $0x24] sm:$0xff]
  %v73 = vld [vmem:[%s0 + $0x30] sm:$0xff]
  %v74 = vld [vmem:[%s0 + $0x3c] sm:$0xff]
  %v75 = vld [vmem:[%s0 + $0x48] sm:$0xff]
  %v76 = vld [vmem:[%s0 + $0x54] sm:$0xff]
  %v77 = vld [vmem:[%s0 + $0x60] sm:$0xff]
  %v78 = vld [vmem:[%s0 + $0x6c] sm:$0xff]
  %v79 = vld [vmem:[%s0 + $0x78] sm:$0xff]
  %v80 = vld [vmem:[%s0 + $0x84] sm:$0xff]
  %v81 = vld [vmem:[%s0 + $0x90] sm:$0xff]
  %v82 = vld [vmem:[%s0 + $0x9c] sm:$0xff]
  %v83 = vld [vmem:[%s0 + $0xa8] sm:$0xff]
  %v84 = vld [vmem:[%s0 + $0xb4] sm:$0xff]
  %v85 = vld [vmem:[%s1] sm:$0xff]
  %v86 = vld [vmem:[%s1 + $0x8] sm:$0xff]
  %v87 = vld [vmem:[%s1 + $0x10] sm:$0xff]
  %v88 = vld [vmem:[%s1 + $0x18] sm:$0xff]
  %v89 = vld [vmem:[%s1 + $0x20] sm:$0xff]
  %v90 = vld [vmem:[%s1 + $0x28] sm:$0xff]
  %v91 = vld [vmem:[%s1 + $0x30] sm:$0xff]
  %v92 = vld [vmem:[%s1 + $0x38] sm:$0xff]
  %v93 = vld [vmem:[%s1 + $0x40] sm:$0xff]
  %v94 = vld [vmem:[%s1 + $0x48] sm:$0xff]
  %v95 = vld [vmem:[%s1 + $0x50] sm:$0xff]
  %v96 = vld [vmem:[%s1 + $0x58] sm:$0xff]
  %v97 = vld [vmem:[%s1 + $0x60] sm:$0xff]
  %v98 = vld [vmem:[%s1 + $0x68] sm:$0xff]
  %v99 = vld [vmem:[%s1 + $0x70] sm:$0xff]
  %v100 = vld [vmem:[%s1 + $0x78] sm:$0xff]
  %v101 = vld [vmem:[%s1 + $0x80] sm:$0xff]
  %v102 = vld [vmem:[%s1 + $0x88] sm:$0xff]
  %v103 = vld [vmem:[%s1 + $0x90] sm:$0xff]
  %v104 = vld [vmem:[%s1 + $0x98] sm:$0xff]
  %v105 = vld [vmem:[%s1 + $0xa0] sm:$0xff]
  %v106 = vld [vmem:[%s1 + $0xa8] sm:$0xff]
  %v107 = vld [vmem:[%s1 + $0xb0] sm:$0xff]
  %v108 = vld [vmem:[%s1 + $0xb8] sm:$0xff]
  %v109 = vld [vmem:[%s1 + $0xc0] sm:$0xff]
  %v110 = vld [vmem:[%s1 + $0xc8] sm:$0xff]
  %v111 = vld [vmem:[%s1 + $0xd0] sm:$0xff]
  %v112 = vld [vmem:[%s1 + $0xd8] sm:$0xff]
  %v113 = vld [vmem:[%s1 + $0xe0] sm:$0xff]
  %v114 = vld [vmem:[%s1 + $0xe8] sm:$0xff]
  %v115 = vld [vmem:[%s1 + $0xf0] sm:$0xff]
  %v116 = vld [vmem:[%s1 + $0xf8] sm:$0xff]
  %v117 = vld [vmem:[%s1 + $0x100] sm:$0xff]
  %v118 = vld [vmem:[%s1 + $0x108] sm:$0xff]
  %v119 = vld [vmem:[%s1 + $0x110] sm:$0xff]
  %v120 = vld [vmem:[%s1 + $0x118] sm:$0xff]
  %v121 = vld [vmem:[%s1 + $0x120] sm:$0xff]
  %v122 = vld [vmem:[%s1 + $0x128] sm:$0xff]
  %v123 = vld [vmem:[%s1 + $0x130] sm:$0xff]
  %v124 = vld [vmem:[%s1 + $0x138] sm:$0xff]
  %v125 = vld [vmem:[%s1 + $0x140] sm:$0xff]
  %v126 = vld [vmem:[%s1 + $0x148] sm:$0xff]
  %v127 = vld [vmem:[%s1 + $0x150] sm:$0xff]
  %v128 = vld [vmem:[%s1 + $0x158] sm:$0xff]
  %v129 = vld [vmem:[%s1 + $0x160] sm:$0xff]
  %v130 = vld [vmem:[%s1 + $0x168] sm:$0xff]
  %v131 = vld [vmem:[%s1 + $0x170] sm:$0xff]
  %v132 = vld [vmem:[%s1 + $0x178] sm:$0xff]
  %v133 = vld [vmem:[%s1 + $0x180] sm:$0xff]
  %v134 = vld [vmem:[%s1 + $0x188] sm:$0xff]
  %v135 = vld [vmem:[%s1 + $0x190] sm:$0xff]
  %v136 = vld [vmem:[%s1 + $0x198] sm:$0xff]
  %v137 = vld [vmem:[%s1 + $0x1a0] sm:$0xff]
  %v138 = vld [vmem:[%s1 + $0x1a8] sm:$0xff]
  %v139 = vld [vmem:[%s1 + $0x1b0] sm:$0xff]
  %v140 = vld [vmem:[%s1 + $0x1b8] sm:$0xff]
  %v141 = vld [vmem:[%s1 + $0x1c0] sm:$0xff]
  %v142 = vld [vmem:[%s1 + $0x1c8] sm:$0xff]
  %v143 = vld [vmem:[%s1 + $0x1d0] sm:$0xff]
  %v144 = vld [vmem:[%s1 + $0x1d8] sm:$0xff]
  %v145 = vld [vmem:[%s1 + $0x1e0] sm:$0xff]
  %v146 = vld [vmem:[%s1 + $0x1e8] sm:$0xff]
  %v147 = vld [vmem:[%s1 + $0x1f0] sm:$0xff]
  %v148 = vld [vmem:[%s1 + $0x1f8] sm:$0xff]
  %v149 = vld [vmem:[%s3] sm:$0xf]
  %v151 = vperm.slane %v149, 0
  %v152 = vperm.slane %v149, 1
  %v153 = vperm.slane %v149, 2
  %v154 = vperm.slane %v149, 3
  %v175 = vunpack.c.l.b16 %v69
  %v176 = vunpack.c.h.b16 %v69
  %v177 = vunpack.c.l.b16 %v70
  %v178 = vunpack.c.h.b16 %v70
  %v179 = vunpack.c.l.b16 %v71
  %v180 = vunpack.c.h.b16 %v71
  %v181 = vunpack.c.l.b16 %v72
  %v182 = vunpack.c.h.b16 %v72
  %v183 = vunpack.c.l.b16 %v73
  %v184 = vunpack.c.h.b16 %v73
  %v185 = vunpack.c.l.b16 %v74
  %v186 = vunpack.c.h.b16 %v74
  %v187 = vunpack.c.l.b16 %v75
  %v188 = vunpack.c.h.b16 %v75
  %v189 = vunpack.c.l.b16 %v76
  %v190 = vunpack.c.h.b16 %v76
  %v191 = vunpack.c.l.b16 %v77
  %v192 = vunpack.c.h.b16 %v77
  %v193 = vunpack.c.l.b16 %v78
  %v194 = vunpack.c.h.b16 %v78
  %v195 = vunpack.c.l.b16 %v79
  %v196 = vunpack.c.h.b16 %v79
  %v197 = vunpack.c.l.b16 %v80
  %v198 = vunpack.c.h.b16 %v80
  %v199 = vunpack.c.l.b16 %v81
  %v200 = vunpack.c.h.b16 %v81
  %v201 = vunpack.c.l.b16 %v82
  %v202 = vunpack.c.h.b16 %v82
  %v203 = vunpack.c.l.b16 %v83
  %v204 = vunpack.c.h.b16 %v83
  %v205 = vunpack.c.l.b16 %v84
  %v206 = vunpack.c.h.b16 %v84
  %v207 = vpack.c.b16 %v177, %v175
  %v208 = vpack.c.b16 %v178, %v176
  %v209 = vpack.c.b16 %v181, %v179
  %v210 = vpack.c.b16 %v182, %v180
  %v211 = vpack.c.b16 %v185, %v183
  %v212 = vpack.c.b16 %v186, %v184
  %v213 = vpack.c.b16 %v189, %v187
  %v214 = vpack.c.b16 %v190, %v188
  %v215 = vpack.c.b16 %v193, %v191
  %v216 = vpack.c.b16 %v194, %v192
  %v217 = vpack.c.b16 %v197, %v195
  %v218 = vpack.c.b16 %v198, %v196
  %v219 = vpack.c.b16 %v201, %v199
  %v220 = vpack.c.b16 %v202, %v200
  %v221 = vpack.c.b16 %v205, %v203
  %v222 = vpack.c.b16 %v206, %v204
  %v303 = vunpack.c.l.b16 %v85
  %v304 = vunpack.c.h.b16 %v85
  %v305 = vunpack.c.l.b16 %v86
  %v306 = vunpack.c.h.b16 %v86
  %v307 = vunpack.c.l.b16 %v87
  %v308 = vunpack.c.h.b16 %v87
  %v309 = vunpack.c.l.b16 %v88
  %v310 = vunpack.c.h.b16 %v88
  %v311 = vunpack.c.l.b16 %v89
  %v312 = vunpack.c.h.b16 %v89
  %v313 = vunpack.c.l.b16 %v90
  %v314 = vunpack.c.h.b16 %v90
  %v315 = vunpack.c.l.b16 %v91
  %v316 = vunpack.c.h.b16 %v91
  %v317 = vunpack.c.l.b16 %v92
  %v318 = vunpack.c.h.b16 %v92
  %v319 = vunpack.c.l.b16 %v93
  %v320 = vunpack.c.h.b16 %v93
  %v321 = vunpack.c.l.b16 %v94
  %v322 = vunpack.c.h.b16 %v94
  %v323 = vunpack.c.l.b16 %v95
  %v324 = vunpack.c.h.b16 %v95
  %v325 = vunpack.c.l.b16 %v96
  %v326 = vunpack.c.h.b16 %v96
  %v327 = vunpack.c.l.b16 %v97
  %v328 = vunpack.c.h.b16 %v97
  %v329 = vunpack.c.l.b16 %v98
  %v330 = vunpack.c.h.b16 %v98
  %v331 = vunpack.c.l.b16 %v99
  %v332 = vunpack.c.h.b16 %v99
  %v333 = vunpack.c.l.b16 %v100
  %v334 = vunpack.c.h.b16 %v100
  %v335 = vunpack.c.l.b16 %v101
  %v336 = vunpack.c.h.b16 %v101
  %v337 = vunpack.c.l.b16 %v102
  %v338 = vunpack.c.h.b16 %v102
  %v339 = vunpack.c.l.b16 %v103
  %v340 = vunpack.c.h.b16 %v103
  %v341 = vunpack.c.l.b16 %v104
  %v342 = vunpack.c.h.b16 %v104
  %v343 = vunpack.c.l.b16 %v105
  %v344 = vunpack.c.h.b16 %v105
  %v345 = vunpack.c.l.b16 %v106
  %v346 = vunpack.c.h.b16 %v106
  %v347 = vunpack.c.l.b16 %v107
  %v348 = vunpack.c.h.b16 %v107
  %v349 = vunpack.c.l.b16 %v108
  %v350 = vunpack.c.h.b16 %v108
  %v351 = vunpack.c.l.b16 %v109
  %v352 = vunpack.c.h.b16 %v109
  %v353 = vunpack.c.l.b16 %v110
  %v354 = vunpack.c.h.b16 %v110
  %v355 = vunpack.c.l.b16 %v111
  %v356 = vunpack.c.h.b16 %v111
  %v357 = vunpack.c.l.b16 %v112
  %v358 = vunpack.c.h.b16 %v112
  %v359 = vunpack.c.l.b16 %v113
  %v360 = vunpack.c.h.b16 %v113
  %v361 = vunpack.c.l.b16 %v114
  %v362 = vunpack.c.h.b16 %v114
  %v363 = vunpack.c.l.b16 %v115
  %v364 = vunpack.c.h.b16 %v115
  %v365 = vunpack.c.l.b16 %v116
  %v366 = vunpack.c.h.b16 %v116
  %v367 = vunpack.c.l.b16 %v117
  %v368 = vunpack.c.h.b16 %v117
  %v369 = vunpack.c.l.b16 %v118
  %v370 = vunpack.c.h.b16 %v118
  %v371 = vunpack.c.l.b16 %v119
  %v372 = vunpack.c.h.b16 %v119
  %v373 = vunpack.c.l.b16 %v120
  %v374 = vunpack.c.h.b16 %v120
  %v375 = vunpack.c.l.b16 %v121
  %v376 = vunpack.c.h.b16 %v121
  %v377 = vunpack.c.l.b16 %v122
  %v378 = vunpack.c.h.b16 %v122
  %v379 = vunpack.c.l.b16 %v123
  %v380 = vunpack.c.h.b16 %v123
  %v381 = vunpack.c.l.b16 %v124
  %v382 = vunpack.c.h.b16 %v124
  %v383 = vunpack.c.l.b16 %v125
  %v384 = vunpack.c.h.b16 %v125
  %v385 = vunpack.c.l.b16 %v126
  %v386 = vunpack.c.h.b16 %v126
  %v387 = vunpack.c.l.b16 %v127
  %v388 = vunpack.c.h.b16 %v127
  %v389 = vunpack.c.l.b16 %v128
  %v390 = vunpack.c.h.b16 %v128
  %v391 = vunpack.c.l.b16 %v129
  %v392 = vunpack.c.h.b16 %v129
  %v393 = vunpack.c.l.b16 %v130
  %v394 = vunpack.c.h.b16 %v130
  %v395 = vunpack.c.l.b16 %v131
  %v396 = vunpack.c.h.b16 %v131
  %v397 = vunpack.c.l.b16 %v132
  %v398 = vunpack.c.h.b16 %v132
  %v399 = vunpack.c.l.b16 %v133
  %v400 = vunpack.c.h.b16 %v133
  %v401 = vunpack.c.l.b16 %v134
  %v402 = vunpack.c.h.b16 %v134
  %v403 = vunpack.c.l.b16 %v135
  %v404 = vunpack.c.h.b16 %v135
  %v405 = vunpack.c.l.b16 %v136
  %v406 = vunpack.c.h.b16 %v136
  %v407 = vunpack.c.l.b16 %v137
  %v408 = vunpack.c.h.b16 %v137
  %v409 = vunpack.c.l.b16 %v138
  %v410 = vunpack.c.h.b16 %v138
  %v411 = vunpack.c.l.b16 %v139
  %v412 = vunpack.c.h.b16 %v139
  %v413 = vunpack.c.l.b16 %v140
  %v414 = vunpack.c.h.b16 %v140
  %v415 = vunpack.c.l.b16 %v141
  %v416 = vunpack.c.h.b16 %v141
  %v417 = vunpack.c.l.b16 %v142
  %v418 = vunpack.c.h.b16 %v142
  %v419 = vunpack.c.l.b16 %v143
  %v420 = vunpack.c.h.b16 %v143
  %v421 = vunpack.c.l.b16 %v144
  %v422 = vunpack.c.h.b16 %v144
  %v423 = vunpack.c.l.b16 %v145
  %v424 = vunpack.c.h.b16 %v145
  %v425 = vunpack.c.l.b16 %v146
  %v426 = vunpack.c.h.b16 %v146
  %v427 = vunpack.c.l.b16 %v147
  %v428 = vunpack.c.h.b16 %v147
  %v429 = vunpack.c.l.b16 %v148
  %v430 = vunpack.c.h.b16 %v148
  %v431 = vpack.c.b16 %v307, %v303
  %v432 = vpack.c.b16 %v308, %v304
  %v433 = vpack.c.b16 %v309, %v305
  %v434 = vpack.c.b16 %v310, %v306
  %v435 = vpack.c.b16 %v315, %v311
  %v436 = vpack.c.b16 %v316, %v312
  %v437 = vpack.c.b16 %v317, %v313
  %v438 = vpack.c.b16 %v318, %v314
  %v439 = vpack.c.b16 %v323, %v319
  %v440 = vpack.c.b16 %v324, %v320
  %v441 = vpack.c.b16 %v325, %v321
  %v442 = vpack.c.b16 %v326, %v322
  %v443 = vpack.c.b16 %v331, %v327
  %v444 = vpack.c.b16 %v332, %v328
  %v445 = vpack.c.b16 %v333, %v329
  %v446 = vpack.c.b16 %v334, %v330
  %v447 = vpack.c.b16 %v339, %v335
  %v448 = vpack.c.b16 %v340, %v336
  %v449 = vpack.c.b16 %v341, %v337
  %v450 = vpack.c.b16 %v342, %v338
  %v451 = vpack.c.b16 %v347, %v343
  %v452 = vpack.c.b16 %v348, %v344
  %v453 = vpack.c.b16 %v349, %v345
  %v454 = vpack.c.b16 %v350, %v346
  %v455 = vpack.c.b16 %v355, %v351
  %v456 = vpack.c.b16 %v356, %v352
  %v457 = vpack.c.b16 %v357, %v353
  %v458 = vpack.c.b16 %v358, %v354
  %v459 = vpack.c.b16 %v363, %v359
  %v460 = vpack.c.b16 %v364, %v360
  %v461 = vpack.c.b16 %v365, %v361
  %v462 = vpack.c.b16 %v366, %v362
  %v463 = vpack.c.b16 %v371, %v367
  %v464 = vpack.c.b16 %v372, %v368
  %v465 = vpack.c.b16 %v373, %v369
  %v466 = vpack.c.b16 %v374, %v370
  %v467 = vpack.c.b16 %v379, %v375
  %v468 = vpack.c.b16 %v380, %v376
  %v469 = vpack.c.b16 %v381, %v377
  %v470 = vpack.c.b16 %v382, %v378
  %v471 = vpack.c.b16 %v387, %v383
  %v472 = vpack.c.b16 %v388, %v384
  %v473 = vpack.c.b16 %v389, %v385
  %v474 = vpack.c.b16 %v390, %v386
  %v475 = vpack.c.b16 %v395, %v391
  %v476 = vpack.c.b16 %v396, %v392
  %v477 = vpack.c.b16 %v397, %v393
  %v478 = vpack.c.b16 %v398, %v394
  %v479 = vpack.c.b16 %v403, %v399
  %v480 = vpack.c.b16 %v404, %v400
  %v481 = vpack.c.b16 %v405, %v401
  %v482 = vpack.c.b16 %v406, %v402
  %v483 = vpack.c.b16 %v411, %v407
  %v484 = vpack.c.b16 %v412, %v408
  %v485 = vpack.c.b16 %v413, %v409
  %v486 = vpack.c.b16 %v414, %v410
  %v487 = vpack.c.b16 %v419, %v415
  %v488 = vpack.c.b16 %v420, %v416
  %v489 = vpack.c.b16 %v421, %v417
  %v490 = vpack.c.b16 %v422, %v418
  %v491 = vpack.c.b16 %v427, %v423
  %v492 = vpack.c.b16 %v428, %v424
  %v493 = vpack.c.b16 %v429, %v425
  %v494 = vpack.c.b16 %v430, %v426
  %559 = vmatpush.bf16.msra.mxu0 %v459
  %560 = vmatpush.bf16.msra.mxu0 %v455
  %561 = vmatpush.bf16.msra.mxu0 %v451
  %562 = vmatpush.bf16.msra.mxu0 %v447
  %563 = vmatpush.bf16.msra.mxu0 %v443
  %564 = vmatpush.bf16.msra.mxu0 %v439
  %565 = vmatpush.bf16.msra.mxu0 %v435
  %566 = vmatpush.bf16.msra.mxu0 %v431
  %567 = vmatmul.bf16.gmra.mxu0 %v207
  %v568 = vpop.f32.mrf.mxu0
  %v569 = vadd.f32 %v151, %v568
  %v570 = vpop.f32.mrf.mxu0
  %v571 = vadd.f32 %v151, %v570
  %572 = vmatmul.bf16.gmra.mxu0 %v209
  %v573 = vpop.f32.mrf.mxu0
  %v574 = vadd.f32 %v151, %v573
  %v575 = vpop.f32.mrf.mxu0
  %v576 = vadd.f32 %v151, %v575
  %577 = vmatmul.bf16.gmra.mxu0 %v211
  %v578 = vpop.f32.mrf.mxu0
  %v579 = vadd.f32 %v151, %v578
  %v580 = vpop.f32.mrf.mxu0
  %v581 = vadd.f32 %v151, %v580
  %582 = vmatmul.bf16.gmra.mxu0 %v213
  %v583 = vpop.f32.mrf.mxu0
  %v584 = vadd.f32 %v151, %v583
  %v585 = vpop.f32.mrf.mxu0
  %v586 = vadd.f32 %v151, %v585
  %587 = vmatmul.bf16.gmra.mxu0 %v215
  %v588 = vpop.f32.mrf.mxu0
  %v589 = vadd.f32 %v151, %v588
  %v590 = vpop.f32.mrf.mxu0
  %v591 = vadd.f32 %v151, %v590
  %592 = vmatmul.bf16.gmra.mxu0 %v217
  %v593 = vpop.f32.mrf.mxu0
  %v594 = vadd.f32 %v151, %v593
  %v595 = vpop.f32.mrf.mxu0
  %v596 = vadd.f32 %v151, %v595
  %597 = vmatmul.bf16.gmra.mxu0 %v219
  %v598 = vpop.f32.mrf.mxu0
  %v599 = vadd.f32 %v151, %v598
  %v600 = vpop.f32.mrf.mxu0
  %v601 = vadd.f32 %v151, %v600
  %602 = vmatmul.bf16.gmra.mxu0 %v221
  %v603 = vpop.f32.mrf.mxu0
  %v604 = vadd.f32 %v151, %v603
  %v605 = vpop.f32.mrf.mxu0
  %v606 = vadd.f32 %v151, %v605
  %607 = vdwg.mxu0
  %608 = vmatpush.bf16.msra.mxu0 %v491
  %609 = vmatpush.bf16.msra.mxu0 %v487
  %610 = vmatpush.bf16.msra.mxu0 %v483
  %611 = vmatpush.bf16.msra.mxu0 %v479
  %612 = vmatpush.bf16.msra.mxu0 %v475
  %613 = vmatpush.bf16.msra.mxu0 %v471
  %614 = vmatpush.bf16.msra.mxu0 %v467
  %615 = vmatpush.bf16.msra.mxu0 %v463
  %616 = vmatmul.bf16.gmra.mxu0 %v208
  %v617 = vpop.f32.mrf.mxu0
  %v618 = vadd.f32 %v569, %v617
  %v619 = vpop.f32.mrf.mxu0
  %v620 = vadd.f32 %v571, %v619
  %621 = vmatmul.bf16.gmra.mxu0 %v210
  %v622 = vpop.f32.mrf.mxu0
  %v623 = vadd.f32 %v574, %v622
  %v624 = vpop.f32.mrf.mxu0
  %v625 = vadd.f32 %v576, %v624
  %626 = vmatmul.bf16.gmra.mxu0 %v212
  %v627 = vpop.f32.mrf.mxu0
  %v628 = vadd.f32 %v579, %v627
  %v629 = vpop.f32.mrf.mxu0
  %v630 = vadd.f32 %v581, %v629
  %631 = vmatmul.bf16.gmra.mxu0 %v214
  %v632 = vpop.f32.mrf.mxu0
  %v633 = vadd.f32 %v584, %v632
  %v634 = vpop.f32.mrf.mxu0
  %v635 = vadd.f32 %v586, %v634
  %636 = vmatmul.bf16.gmra.mxu0 %v216
  %v637 = vpop.f32.mrf.mxu0
  %v638 = vadd.f32 %v589, %v637
  %v639 = vpop.f32.mrf.mxu0
  %v640 = vadd.f32 %v591, %v639
  %641 = vmatmul.bf16.gmra.mxu0 %v218
  %v642 = vpop.f32.mrf.mxu0
  %v643 = vadd.f32 %v594, %v642
  %v644 = vpop.f32.mrf.mxu0
  %v645 = vadd.f32 %v596, %v644
  %646 = vmatmul.bf16.gmra.mxu0 %v220
  %v647 = vpop.f32.mrf.mxu0
  %v648 = vadd.f32 %v599, %v647
  %v649 = vpop.f32.mrf.mxu0
  %v650 = vadd.f32 %v601, %v649
  %651 = vmatmul.bf16.gmra.mxu0 %v222
  %v652 = vpop.f32.mrf.mxu0
  %v653 = vadd.f32 %v604, %v652
  %v654 = vpop.f32.mrf.mxu0
  %v655 = vadd.f32 %v606, %v654
  %656 = vdwg.mxu0
  %657 = vmatpush.bf16.msra.mxu0 %v460
  %658 = vmatpush.bf16.msra.mxu0 %v456
  %659 = vmatpush.bf16.msra.mxu0 %v452
  %660 = vmatpush.bf16.msra.mxu0 %v448
  %661 = vmatpush.bf16.msra.mxu0 %v444
  %662 = vmatpush.bf16.msra.mxu0 %v440
  %663 = vmatpush.bf16.msra.mxu0 %v436
  %664 = vmatpush.bf16.msra.mxu0 %v432
  %665 = vmatmul.bf16.gmra.mxu0 %v207
  %v666 = vpop.f32.mrf.mxu0
  %v667 = vadd.f32 %v152, %v666
  %v668 = vpop.f32.mrf.mxu0
  %v669 = vadd.f32 %v152, %v668
  %670 = vmatmul.bf16.gmra.mxu0 %v209
  %v671 = vpop.f32.mrf.mxu0
  %v672 = vadd.f32 %v152, %v671
  %v673 = vpop.f32.mrf.mxu0
  %v674 = vadd.f32 %v152, %v673
  %675 = vmatmul.bf16.gmra.mxu0 %v211
  %v676 = vpop.f32.mrf.mxu0
  %v677 = vadd.f32 %v152, %v676
  %v678 = vpop.f32.mrf.mxu0
  %v679 = vadd.f32 %v152, %v678
  %680 = vmatmul.bf16.gmra.mxu0 %v213
  %v681 = vpop.f32.mrf.mxu0
  %v682 = vadd.f32 %v152, %v681
  %v683 = vpop.f32.mrf.mxu0
  %v684 = vadd.f32 %v152, %v683
  %685 = vmatmul.bf16.gmra.mxu0 %v215
  %v686 = vpop.f32.mrf.mxu0
  %v687 = vadd.f32 %v152, %v686
  %v688 = vpop.f32.mrf.mxu0
  %v689 = vadd.f32 %v152, %v688
  %690 = vmatmul.bf16.gmra.mxu0 %v217
  %v691 = vpop.f32.mrf.mxu0
  %v692 = vadd.f32 %v152, %v691
  %v693 = vpop.f32.mrf.mxu0
  %v694 = vadd.f32 %v152, %v693
  %695 = vmatmul.bf16.gmra.mxu0 %v219
  %v696 = vpop.f32.mrf.mxu0
  %v697 = vadd.f32 %v152, %v696
  %v698 = vpop.f32.mrf.mxu0
  %v699 = vadd.f32 %v152, %v698
  %700 = vmatmul.bf16.gmra.mxu0 %v221
  %v701 = vpop.f32.mrf.mxu0
  %v702 = vadd.f32 %v152, %v701
  %v703 = vpop.f32.mrf.mxu0
  %v704 = vadd.f32 %v152, %v703
  %705 = vdwg.mxu0
  %706 = vmatpush.bf16.msra.mxu0 %v492
  %707 = vmatpush.bf16.msra.mxu0 %v488
  %708 = vmatpush.bf16.msra.mxu0 %v484
  %709 = vmatpush.bf16.msra.mxu0 %v480
  %710 = vmatpush.bf16.msra.mxu0 %v476
  %711 = vmatpush.bf16.msra.mxu0 %v472
  %712 = vmatpush.bf16.msra.mxu0 %v468
  %713 = vmatpush.bf16.msra.mxu0 %v464
  %714 = vmatmul.bf16.gmra.mxu0 %v208
  %v715 = vpop.f32.mrf.mxu0
  %v716 = vadd.f32 %v667, %v715
  %v717 = vpop.f32.mrf.mxu0
  %v718 = vadd.f32 %v669, %v717
  %719 = vmatmul.bf16.gmra.mxu0 %v210
  %v720 = vpop.f32.mrf.mxu0
  %v721 = vadd.f32 %v672, %v720
  %v722 = vpop.f32.mrf.mxu0
  %v723 = vadd.f32 %v674, %v722
  %724 = vmatmul.bf16.gmra.mxu0 %v212
  %v725 = vpop.f32.mrf.mxu0
  %v726 = vadd.f32 %v677, %v725
  %v727 = vpop.f32.mrf.mxu0
  %v728 = vadd.f32 %v679, %v727
  %729 = vmatmul.bf16.gmra.mxu0 %v214
  %v730 = vpop.f32.mrf.mxu0
  %v731 = vadd.f32 %v682, %v730
  %v732 = vpop.f32.mrf.mxu0
  %v733 = vadd.f32 %v684, %v732
  %734 = vmatmul.bf16.gmra.mxu0 %v216
  %v735 = vpop.f32.mrf.mxu0
  %v736 = vadd.f32 %v687, %v735
  %v737 = vpop.f32.mrf.mxu0
  %v738 = vadd.f32 %v689, %v737
  %739 = vmatmul.bf16.gmra.mxu0 %v218
  %v740 = vpop.f32.mrf.mxu0
  %v741 = vadd.f32 %v692, %v740
  %v742 = vpop.f32.mrf.mxu0
  %v743 = vadd.f32 %v694, %v742
  %744 = vmatmul.bf16.gmra.mxu0 %v220
  %v745 = vpop.f32.mrf.mxu0
  %v746 = vadd.f32 %v697, %v745
  %v747 = vpop.f32.mrf.mxu0
  %v748 = vadd.f32 %v699, %v747
  %749 = vmatmul.bf16.gmra.mxu0 %v222
  %v750 = vpop.f32.mrf.mxu0
  %v751 = vadd.f32 %v702, %v750
  %v752 = vpop.f32.mrf.mxu0
  %v753 = vadd.f32 %v704, %v752
  %754 = vdwg.mxu0
  %755 = vmatpush.bf16.msra.mxu0 %v461
  %756 = vmatpush.bf16.msra.mxu0 %v457
  %757 = vmatpush.bf16.msra.mxu0 %v453
  %758 = vmatpush.bf16.msra.mxu0 %v449
  %759 = vmatpush.bf16.msra.mxu0 %v445
  %760 = vmatpush.bf16.msra.mxu0 %v441
  %761 = vmatpush.bf16.msra.mxu0 %v437
  %762 = vmatpush.bf16.msra.mxu0 %v433
  %763 = vmatmul.bf16.gmra.mxu0 %v207
  %v764 = vpop.f32.mrf.mxu0
  %v765 = vadd.f32 %v153, %v764
  %v766 = vpop.f32.mrf.mxu0
  %v767 = vadd.f32 %v153, %v766
  %768 = vmatmul.bf16.gmra.mxu0 %v209
  %v769 = vpop.f32.mrf.mxu0
  %v770 = vadd.f32 %v153, %v769
  %v771 = vpop.f32.mrf.mxu0
  %v772 = vadd.f32 %v153, %v771
  %773 = vmatmul.bf16.gmra.mxu0 %v211
  %v774 = vpop.f32.mrf.mxu0
  %v775 = vadd.f32 %v153, %v774
  %v776 = vpop.f32.mrf.mxu0
  %v777 = vadd.f32 %v153, %v776
  %778 = vmatmul.bf16.gmra.mxu0 %v213
  %v779 = vpop.f32.mrf.mxu0
  %v780 = vadd.f32 %v153, %v779
  %v781 = vpop.f32.mrf.mxu0
  %v782 = vadd.f32 %v153, %v781
  %783 = vmatmul.bf16.gmra.mxu0 %v215
  %v784 = vpop.f32.mrf.mxu0
  %v785 = vadd.f32 %v153, %v784
  %v786 = vpop.f32.mrf.mxu0
  %v787 = vadd.f32 %v153, %v786
  %788 = vmatmul.bf16.gmra.mxu0 %v217
  %v789 = vpop.f32.mrf.mxu0
  %v790 = vadd.f32 %v153, %v789
  %v791 = vpop.f32.mrf.mxu0
  %v792 = vadd.f32 %v153, %v791
  %793 = vmatmul.bf16.gmra.mxu0 %v219
  %v794 = vpop.f32.mrf.mxu0
  %v795 = vadd.f32 %v153, %v794
  %v796 = vpop.f32.mrf.mxu0
  %v797 = vadd.f32 %v153, %v796
  %798 = vmatmul.bf16.gmra.mxu0 %v221
  %v799 = vpop.f32.mrf.mxu0
  %v800 = vadd.f32 %v153, %v799
  %v801 = vpop.f32.mrf.mxu0
  %v802 = vadd.f32 %v153, %v801
  %803 = vdwg.mxu0
  %804 = vmatpush.bf16.msra.mxu0 %v493
  %805 = vmatpush.bf16.msra.mxu0 %v489
  %806 = vmatpush.bf16.msra.mxu0 %v485
  %807 = vmatpush.bf16.msra.mxu0 %v481
  %808 = vmatpush.bf16.msra.mxu0 %v477
  %809 = vmatpush.bf16.msra.mxu0 %v473
  %810 = vmatpush.bf16.msra.mxu0 %v469
  %811 = vmatpush.bf16.msra.mxu0 %v465
  %812 = vmatmul.bf16.gmra.mxu0 %v208
  %v813 = vpop.f32.mrf.mxu0
  %v814 = vadd.f32 %v765, %v813
  %v815 = vpop.f32.mrf.mxu0
  %v816 = vadd.f32 %v767, %v815
  %817 = vmatmul.bf16.gmra.mxu0 %v210
  %v818 = vpop.f32.mrf.mxu0
  %v819 = vadd.f32 %v770, %v818
  %v820 = vpop.f32.mrf.mxu0
  %v821 = vadd.f32 %v772, %v820
  %822 = vmatmul.bf16.gmra.mxu0 %v212
  %v823 = vpop.f32.mrf.mxu0
  %v824 = vadd.f32 %v775, %v823
  %v825 = vpop.f32.mrf.mxu0
  %v826 = vadd.f32 %v777, %v825
  %827 = vmatmul.bf16.gmra.mxu0 %v214
  %v828 = vpop.f32.mrf.mxu0
  %v829 = vadd.f32 %v780, %v828
  %v830 = vpop.f32.mrf.mxu0
  %v831 = vadd.f32 %v782, %v830
  %832 = vmatmul.bf16.gmra.mxu0 %v216
  %v833 = vpop.f32.mrf.mxu0
  %v834 = vadd.f32 %v785, %v833
  %v835 = vpop.f32.mrf.mxu0
  %v836 = vadd.f32 %v787, %v835
  %837 = vmatmul.bf16.gmra.mxu0 %v218
  %v838 = vpop.f32.mrf.mxu0
  %v839 = vadd.f32 %v790, %v838
  %v840 = vpop.f32.mrf.mxu0
  %v841 = vadd.f32 %v792, %v840
  %842 = vmatmul.bf16.gmra.mxu0 %v220
  %v843 = vpop.f32.mrf.mxu0
  %v844 = vadd.f32 %v795, %v843
  %v845 = vpop.f32.mrf.mxu0
  %v846 = vadd.f32 %v797, %v845
  %847 = vmatmul.bf16.gmra.mxu0 %v222
  %v848 = vpop.f32.mrf.mxu0
  %v849 = vadd.f32 %v800, %v848
  %v850 = vpop.f32.mrf.mxu0
  %v851 = vadd.f32 %v802, %v850
  %852 = vdwg.mxu0
  %853 = vmatpush.bf16.msra.mxu0 %v462
  %854 = vmatpush.bf16.msra.mxu0 %v458
  %855 = vmatpush.bf16.msra.mxu0 %v454
  %856 = vmatpush.bf16.msra.mxu0 %v450
  %857 = vmatpush.bf16.msra.mxu0 %v446
  %858 = vmatpush.bf16.msra.mxu0 %v442
  %859 = vmatpush.bf16.msra.mxu0 %v438
  %860 = vmatpush.bf16.msra.mxu0 %v434
  %861 = vmatmul.bf16.gmra.mxu0 %v207
  %v862 = vpop.f32.mrf.mxu0
  %v863 = vadd.f32 %v154, %v862
  %v864 = vpop.f32.mrf.mxu0
  %v865 = vadd.f32 %v154, %v864
  %866 = vmatmul.bf16.gmra.mxu0 %v209
  %v867 = vpop.f32.mrf.mxu0
  %v868 = vadd.f32 %v154, %v867
  %v869 = vpop.f32.mrf.mxu0
  %v870 = vadd.f32 %v154, %v869
  %871 = vmatmul.bf16.gmra.mxu0 %v211
  %v872 = vpop.f32.mrf.mxu0
  %v873 = vadd.f32 %v154, %v872
  %v874 = vpop.f32.mrf.mxu0
  %v875 = vadd.f32 %v154, %v874
  %876 = vmatmul.bf16.gmra.mxu0 %v213
  %v877 = vpop.f32.mrf.mxu0
  %v878 = vadd.f32 %v154, %v877
  %v879 = vpop.f32.mrf.mxu0
  %v880 = vadd.f32 %v154, %v879
  %881 = vmatmul.bf16.gmra.mxu0 %v215
  %v882 = vpop.f32.mrf.mxu0
  %v883 = vadd.f32 %v154, %v882
  %v884 = vpop.f32.mrf.mxu0
  %v885 = vadd.f32 %v154, %v884
  %886 = vmatmul.bf16.gmra.mxu0 %v217
  %v887 = vpop.f32.mrf.mxu0
  %v888 = vadd.f32 %v154, %v887
  %v889 = vpop.f32.mrf.mxu0
  %v890 = vadd.f32 %v154, %v889
  %891 = vmatmul.bf16.gmra.mxu0 %v219
  %v892 = vpop.f32.mrf.mxu0
  %v893 = vadd.f32 %v154, %v892
  %v894 = vpop.f32.mrf.mxu0
  %v895 = vadd.f32 %v154, %v894
  %896 = vmatmul.bf16.gmra.mxu0 %v221
  %v897 = vpop.f32.mrf.mxu0
  %v898 = vadd.f32 %v154, %v897
  %v899 = vpop.f32.mrf.mxu0
  %v900 = vadd.f32 %v154, %v899
  %901 = vdwg.mxu0
  %902 = vmatpush.bf16.msra.mxu0 %v494
  %903 = vmatpush.bf16.msra.mxu0 %v490
  %904 = vmatpush.bf16.msra.mxu0 %v486
  %905 = vmatpush.bf16.msra.mxu0 %v482
  %906 = vmatpush.bf16.msra.mxu0 %v478
  %907 = vmatpush.bf16.msra.mxu0 %v474
  %908 = vmatpush.bf16.msra.mxu0 %v470
  %909 = vmatpush.bf16.msra.mxu0 %v466
  %910 = vmatmul.bf16.gmra.mxu0 %v208
  %v911 = vpop.f32.mrf.mxu0
  %v912 = vadd.f32 %v863, %v911
  %v913 = vpop.f32.mrf.mxu0
  %v914 = vadd.f32 %v865, %v913
  %915 = vmatmul.bf16.gmra.mxu0 %v210
  %v916 = vpop.f32.mrf.mxu0
  %v917 = vadd.f32 %v868, %v916
  %v918 = vpop.f32.mrf.mxu0
  %v919 = vadd.f32 %v870, %v918
  %920 = vmatmul.bf16.gmra.mxu0 %v212
  %v921 = vpop.f32.mrf.mxu0
  %v922 = vadd.f32 %v873, %v921
  %v923 = vpop.f32.mrf.mxu0
  %v924 = vadd.f32 %v875, %v923
  %925 = vmatmul.bf16.gmra.mxu0 %v214
  %v926 = vpop.f32.mrf.mxu0
  %v927 = vadd.f32 %v878, %v926
  %v928 = vpop.f32.mrf.mxu0
  %v929 = vadd.f32 %v880, %v928
  %930 = vmatmul.bf16.gmra.mxu0 %v216
  %v931 = vpop.f32.mrf.mxu0
  %v932 = vadd.f32 %v883, %v931
  %v933 = vpop.f32.mrf.mxu0
  %v934 = vadd.f32 %v885, %v933
  %935 = vmatmul.bf16.gmra.mxu0 %v218
  %v936 = vpop.f32.mrf.mxu0
  %v937 = vadd.f32 %v888, %v936
  %v938 = vpop.f32.mrf.mxu0
  %v939 = vadd.f32 %v890, %v938
  %940 = vmatmul.bf16.gmra.mxu0 %v220
  %v941 = vpop.f32.mrf.mxu0
  %v942 = vadd.f32 %v893, %v941
  %v943 = vpop.f32.mrf.mxu0
  %v944 = vadd.f32 %v895, %v943
  %945 = vmatmul.bf16.gmra.mxu0 %v222
  %v946 = vpop.f32.mrf.mxu0
  %v947 = vadd.f32 %v898, %v946
  %v948 = vpop.f32.mrf.mxu0
  %v949 = vadd.f32 %v900, %v948
  %950 = vdwg.mxu0
  %v951 = vpack.c.bf16 %v716, %v618
  %v952 = vpack.c.bf16 %v912, %v814
  %v953 = vpack.c.bf16 %v718, %v620
  %v954 = vpack.c.bf16 %v914, %v816
  %v955 = vpack.c.bf16 %v721, %v623
  %v956 = vpack.c.bf16 %v917, %v819
  %v957 = vpack.c.bf16 %v723, %v625
  %v958 = vpack.c.bf16 %v919, %v821
  %v959 = vpack.c.bf16 %v726, %v628
  %v960 = vpack.c.bf16 %v922, %v824
  %v961 = vpack.c.bf16 %v728, %v630
  %v962 = vpack.c.bf16 %v924, %v826
  %v963 = vpack.c.bf16 %v731, %v633
  %v964 = vpack.c.bf16 %v927, %v829
  %v965 = vpack.c.bf16 %v733, %v635
  %v966 = vpack.c.bf16 %v929, %v831
  %v967 = vpack.c.bf16 %v736, %v638
  %v968 = vpack.c.bf16 %v932, %v834
  %v969 = vpack.c.bf16 %v738, %v640
  %v970 = vpack.c.bf16 %v934, %v836
  %v971 = vpack.c.bf16 %v741, %v643
  %v972 = vpack.c.bf16 %v937, %v839
  %v973 = vpack.c.bf16 %v743, %v645
  %v974 = vpack.c.bf16 %v939, %v841
  %v975 = vpack.c.bf16 %v746, %v648
  %v976 = vpack.c.bf16 %v942, %v844
  %v977 = vpack.c.bf16 %v748, %v650
  %v978 = vpack.c.bf16 %v944, %v846
  %v979 = vpack.c.bf16 %v751, %v653
  %v980 = vpack.c.bf16 %v947, %v849
  %v981 = vpack.c.bf16 %v753, %v655
  %v982 = vpack.c.bf16 %v949, %v851
  %983 = vst [vmem:[#allocation4] sm:$0xff] %v951
  %984 = vst [vmem:[#allocation4 + $0x8] sm:$0xff] %v952
  %985 = vst [vmem:[#allocation4 + $0x10] sm:$0xff] %v953
  %986 = vst [vmem:[#allocation4 + $0x18] sm:$0xff] %v954
  %987 = vst [vmem:[#allocation4 + $0x20] sm:$0xff] %v955
  %988 = vst [vmem:[#allocation4 + $0x28] sm:$0xff] %v956
  %989 = vst [vmem:[#allocation4 + $0x30] sm:$0xff] %v957
  %990 = vst [vmem:[#allocation4 + $0x38] sm:$0xff] %v958
  %991 = vst [vmem:[#allocation4 + $0x40] sm:$0xff] %v959
  %992 = vst [vmem:[#allocation4 + $0x48] sm:$0xff] %v960
  %993 = vst [vmem:[#allocation4 + $0x50] sm:$0xff] %v961
  %994 = vst [vmem:[#allocation4 + $0x58] sm:$0xff] %v962
  %995 = vst [vmem:[#allocation4 + $0x60] sm:$0xff] %v963
  %996 = vst [vmem:[#allocation4 + $0x68] sm:$0xff] %v964
  %997 = vst [vmem:[#allocation4 + $0x70] sm:$0xff] %v965
  %998 = vst [vmem:[#allocation4 + $0x78] sm:$0xff] %v966
  %999 = vst [vmem:[#allocation4 + $0x80] sm:$0xff] %v967
  %1000 = vst [vmem:[#allocation4 + $0x88] sm:$0xff] %v968
  %1001 = vst [vmem:[#allocation4 + $0x90] sm:$0xff] %v969
  %1002 = vst [vmem:[#allocation4 + $0x98] sm:$0xff] %v970
  %1003 = vst [vmem:[#allocation4 + $0xa0] sm:$0xff] %v971
  %1004 = vst [vmem:[#allocation4 + $0xa8] sm:$0xff] %v972
  %1005 = vst [vmem:[#allocation4 + $0xb0] sm:$0xff] %v973
  %1006 = vst [vmem:[#allocation4 + $0xb8] sm:$0xff] %v974
  %1007 = vst [vmem:[#allocation4 + $0xc0] sm:$0xff] %v975
  %1008 = vst [vmem:[#allocation4 + $0xc8] sm:$0xff] %v976
  %1009 = vst [vmem:[#allocation4 + $0xd0] sm:$0xff] %v977
  %1010 = vst [vmem:[#allocation4 + $0xd8] sm:$0xff] %v978
  %1011 = vst [vmem:[#allocation4 + $0xe0] sm:$0xff] %v979
  %1012 = vst [vmem:[#allocation4 + $0xe8] sm:$0xff] %v980
  %1013 = vst [vmem:[#allocation4 + $0xf0] sm:$0xff] %v981
  %1014 = vst [vmem:[#allocation4 + $0xf8] sm:$0xff] %v982
  %v1015 = vld [vmem:[%s5] sm:$0xf]
  %v1017 = vperm.slane %v1015, 0
  %v1018 = vperm.slane %v1015, 1
  %v1019 = vperm.slane %v1015, 2
  %v1020 = vperm.slane %v1015, 3
  %v1025 = vld [vmem:[%s7] sm:$0xf]
  %v1027 = vperm.slane %v1025, 0
  %v1028 = vperm.slane %v1025, 1
  %v1029 = vperm.slane %v1025, 2
  %v1030 = vperm.slane %v1025, 3
  %v1035 = vld [vmem:[%s2] sm:$0xff]
  %v1036 = vld [vmem:[%s2 + $0x8] sm:$0xff]
  %v1037 = vld [vmem:[%s2 + $0x10] sm:$0xff]
  %v1038 = vld [vmem:[%s2 + $0x18] sm:$0xff]
  %v1039 = vld [vmem:[%s2 + $0x20] sm:$0xff]
  %v1040 = vld [vmem:[%s2 + $0x28] sm:$0xff]
  %v1041 = vld [vmem:[%s2 + $0x30] sm:$0xff]
  %v1042 = vld [vmem:[%s2 + $0x38] sm:$0xff]
  %v1043 = vld [vmem:[%s2 + $0x40] sm:$0xff]
  %v1044 = vld [vmem:[%s2 + $0x48] sm:$0xff]
  %v1045 = vld [vmem:[%s2 + $0x50] sm:$0xff]
  %v1046 = vld [vmem:[%s2 + $0x58] sm:$0xff]
  %v1047 = vld [vmem:[%s2 + $0x60] sm:$0xff]
  %v1048 = vld [vmem:[%s2 + $0x68] sm:$0xff]
  %v1049 = vld [vmem:[%s2 + $0x70] sm:$0xff]
  %v1050 = vld [vmem:[%s2 + $0x78] sm:$0xff]
  %v1051 = vld [vmem:[%s2 + $0x80] sm:$0xff]
  %v1052 = vld [vmem:[%s2 + $0x88] sm:$0xff]
  %v1053 = vld [vmem:[%s2 + $0x90] sm:$0xff]
  %v1054 = vld [vmem:[%s2 + $0x98] sm:$0xff]
  %v1055 = vld [vmem:[%s2 + $0xa0] sm:$0xff]
  %v1056 = vld [vmem:[%s2 + $0xa8] sm:$0xff]
  %v1057 = vld [vmem:[%s2 + $0xb0] sm:$0xff]
  %v1058 = vld [vmem:[%s2 + $0xb8] sm:$0xff]
  %v1059 = vld [vmem:[%s2 + $0xc0] sm:$0xff]
  %v1060 = vld [vmem:[%s2 + $0xc8] sm:$0xff]
  %v1061 = vld [vmem:[%s2 + $0xd0] sm:$0xff]
  %v1062 = vld [vmem:[%s2 + $0xd8] sm:$0xff]
  %v1063 = vld [vmem:[%s2 + $0xe0] sm:$0xff]
  %v1064 = vld [vmem:[%s2 + $0xe8] sm:$0xff]
  %v1065 = vld [vmem:[%s2 + $0xf0] sm:$0xff]
  %v1066 = vld [vmem:[%s2 + $0xf8] sm:$0xff]
  %v1067 = vld [vmem:[%s4] sm:$0xff]
  %v1068 = vld [vmem:[%s4 + $0x8] sm:$0xff]
  %v1069 = vld [vmem:[%s4 + $0x10] sm:$0xff]
  %v1070 = vld [vmem:[%s4 + $0x18] sm:$0xff]
  %v1071 = vld [vmem:[%s4 + $0x20] sm:$0xff]
  %v1072 = vld [vmem:[%s4 + $0x28] sm:$0xff]
  %v1073 = vld [vmem:[%s4 + $0x30] sm:$0xff]
  %v1074 = vld [vmem:[%s4 + $0x38] sm:$0xff]
  %v1075 = vld [vmem:[%s4 + $0x40] sm:$0xff]
  %v1076 = vld [vmem:[%s4 + $0x48] sm:$0xff]
  %v1077 = vld [vmem:[%s4 + $0x50] sm:$0xff]
  %v1078 = vld [vmem:[%s4 + $0x58] sm:$0xff]
  %v1079 = vld [vmem:[%s4 + $0x60] sm:$0xff]
  %v1080 = vld [vmem:[%s4 + $0x68] sm:$0xff]
  %v1081 = vld [vmem:[%s4 + $0x70] sm:$0xff]
  %v1082 = vld [vmem:[%s4 + $0x78] sm:$0xff]
  %v1083 = vld [vmem:[%s4 + $0x80] sm:$0xff]
  %v1084 = vld [vmem:[%s4 + $0x88] sm:$0xff]
  %v1085 = vld [vmem:[%s4 + $0x90] sm:$0xff]
  %v1086 = vld [vmem:[%s4 + $0x98] sm:$0xff]
  %v1087 = vld [vmem:[%s4 + $0xa0] sm:$0xff]
  %v1088 = vld [vmem:[%s4 + $0xa8] sm:$0xff]
  %v1089 = vld [vmem:[%s4 + $0xb0] sm:$0xff]
  %v1090 = vld [vmem:[%s4 + $0xb8] sm:$0xff]
  %v1091 = vld [vmem:[%s4 + $0xc0] sm:$0xff]
  %v1092 = vld [vmem:[%s4 + $0xc8] sm:$0xff]
  %v1093 = vld [vmem:[%s4 + $0xd0] sm:$0xff]
  %v1094 = vld [vmem:[%s4 + $0xd8] sm:$0xff]
  %v1095 = vld [vmem:[%s4 + $0xe0] sm:$0xff]
  %v1096 = vld [vmem:[%s4 + $0xe8] sm:$0xff]
  %v1097 = vld [vmem:[%s4 + $0xf0] sm:$0xff]
  %v1098 = vld [vmem:[%s4 + $0xf8] sm:$0xff]
  %v1099 = vld [vmem:[%s4 + $0x100] sm:$0xff]
  %v1100 = vld [vmem:[%s4 + $0x108] sm:$0xff]
  %v1101 = vld [vmem:[%s4 + $0x110] sm:$0xff]
  %v1102 = vld [vmem:[%s4 + $0x118] sm:$0xff]
  %v1103 = vld [vmem:[%s4 + $0x120] sm:$0xff]
  %v1104 = vld [vmem:[%s4 + $0x128] sm:$0xff]
  %v1105 = vld [vmem:[%s4 + $0x130] sm:$0xff]
  %v1106 = vld [vmem:[%s4 + $0x138] sm:$0xff]
  %v1107 = vld [vmem:[%s4 + $0x140] sm:$0xff]
  %v1108 = vld [vmem:[%s4 + $0x148] sm:$0xff]
  %v1109 = vld [vmem:[%s4 + $0x150] sm:$0xff]
  %v1110 = vld [vmem:[%s4 + $0x158] sm:$0xff]
  %v1111 = vld [vmem:[%s4 + $0x160] sm:$0xff]
  %v1112 = vld [vmem:[%s4 + $0x168] sm:$0xff]
  %v1113 = vld [vmem:[%s4 + $0x170] sm:$0xff]
  %v1114 = vld [vmem:[%s4 + $0x178] sm:$0xff]
  %v1115 = vld [vmem:[%s4 + $0x180] sm:$0xff]
  %v1116 = vld [vmem:[%s4 + $0x188] sm:$0xff]
  %v1117 = vld [vmem:[%s4 + $0x190] sm:$0xff]
  %v1118 = vld [vmem:[%s4 + $0x198] sm:$0xff]
  %v1119 = vld [vmem:[%s4 + $0x1a0] sm:$0xff]
  %v1120 = vld [vmem:[%s4 + $0x1a8] sm:$0xff]
  %v1121 = vld [vmem:[%s4 + $0x1b0] sm:$0xff]
  %v1122 = vld [vmem:[%s4 + $0x1b8] sm:$0xff]
  %v1123 = vld [vmem:[%s4 + $0x1c0] sm:$0xff]
  %v1124 = vld [vmem:[%s4 + $0x1c8] sm:$0xff]
  %v1125 = vld [vmem:[%s4 + $0x1d0] sm:$0xff]
  %v1126 = vld [vmem:[%s4 + $0x1d8] sm:$0xff]
  %v1127 = vld [vmem:[%s4 + $0x1e0] sm:$0xff]
  %v1128 = vld [vmem:[%s4 + $0x1e8] sm:$0xff]
  %v1129 = vld [vmem:[%s4 + $0x1f0] sm:$0xff]
  %v1130 = vld [vmem:[%s4 + $0x1f8] sm:$0xff]
  %v1131 = vld [vmem:[%s6] sm:$0xff]
  %v1132 = vld [vmem:[%s6 + $0x8] sm:$0xff]
  %v1133 = vld [vmem:[%s6 + $0x10] sm:$0xff]
  %v1134 = vld [vmem:[%s6 + $0x18] sm:$0xff]
  %v1135 = vld [vmem:[%s6 + $0x20] sm:$0xff]
  %v1136 = vld [vmem:[%s6 + $0x28] sm:$0xff]
  %v1137 = vld [vmem:[%s6 + $0x30] sm:$0xff]
  %v1138 = vld [vmem:[%s6 + $0x38] sm:$0xff]
  %v1139 = vld [vmem:[%s6 + $0x40] sm:$0xff]
  %v1140 = vld [vmem:[%s6 + $0x48] sm:$0xff]
  %v1141 = vld [vmem:[%s6 + $0x50] sm:$0xff]
  %v1142 = vld [vmem:[%s6 + $0x58] sm:$0xff]
  %v1143 = vld [vmem:[%s6 + $0x60] sm:$0xff]
  %v1144 = vld [vmem:[%s6 + $0x68] sm:$0xff]
  %v1145 = vld [vmem:[%s6 + $0x70] sm:$0xff]
  %v1146 = vld [vmem:[%s6 + $0x78] sm:$0xff]
  %v1147 = vld [vmem:[%s6 + $0x80] sm:$0xff]
  %v1148 = vld [vmem:[%s6 + $0x88] sm:$0xff]
  %v1149 = vld [vmem:[%s6 + $0x90] sm:$0xff]
  %v1150 = vld [vmem:[%s6 + $0x98] sm:$0xff]
  %v1151 = vld [vmem:[%s6 + $0xa0] sm:$0xff]
  %v1152 = vld [vmem:[%s6 + $0xa8] sm:$0xff]
  %v1153 = vld [vmem:[%s6 + $0xb0] sm:$0xff]
  %v1154 = vld [vmem:[%s6 + $0xb8] sm:$0xff]
  %v1155 = vld [vmem:[%s6 + $0xc0] sm:$0xff]
  %v1156 = vld [vmem:[%s6 + $0xc8] sm:$0xff]
  %v1157 = vld [vmem:[%s6 + $0xd0] sm:$0xff]
  %v1158 = vld [vmem:[%s6 + $0xd8] sm:$0xff]
  %v1159 = vld [vmem:[%s6 + $0xe0] sm:$0xff]
  %v1160 = vld [vmem:[%s6 + $0xe8] sm:$0xff]
  %v1161 = vld [vmem:[%s6 + $0xf0] sm:$0xff]
  %v1162 = vld [vmem:[%s6 + $0xf8] sm:$0xff]
  %v1163 = vld [vmem:[%s6 + $0x100] sm:$0xff]
  %v1164 = vld [vmem:[%s6 + $0x108] sm:$0xff]
  %v1165 = vld [vmem:[%s6 + $0x110] sm:$0xff]
  %v1166 = vld [vmem:[%s6 + $0x118] sm:$0xff]
  %v1167 = vld [vmem:[%s6 + $0x120] sm:$0xff]
  %v1168 = vld [vmem:[%s6 + $0x128] sm:$0xff]
  %v1169 = vld [vmem:[%s6 + $0x130] sm:$0xff]
  %v1170 = vld [vmem:[%s6 + $0x138] sm:$0xff]
  %v1171 = vld [vmem:[%s6 + $0x140] sm:$0xff]
  %v1172 = vld [vmem:[%s6 + $0x148] sm:$0xff]
  %v1173 = vld [vmem:[%s6 + $0x150] sm:$0xff]
  %v1174 = vld [vmem:[%s6 + $0x158] sm:$0xff]
  %v1175 = vld [vmem:[%s6 + $0x160] sm:$0xff]
  %v1176 = vld [vmem:[%s6 + $0x168] sm:$0xff]
  %v1177 = vld [vmem:[%s6 + $0x170] sm:$0xff]
  %v1178 = vld [vmem:[%s6 + $0x178] sm:$0xff]
  %v1179 = vld [vmem:[%s6 + $0x180] sm:$0xff]
  %v1180 = vld [vmem:[%s6 + $0x188] sm:$0xff]
  %v1181 = vld [vmem:[%s6 + $0x190] sm:$0xff]
  %v1182 = vld [vmem:[%s6 + $0x198] sm:$0xff]
  %v1183 = vld [vmem:[%s6 + $0x1a0] sm:$0xff]
  %v1184 = vld [vmem:[%s6 + $0x1a8] sm:$0xff]
  %v1185 = vld [vmem:[%s6 + $0x1b0] sm:$0xff]
  %v1186 = vld [vmem:[%s6 + $0x1b8] sm:$0xff]
  %v1187 = vld [vmem:[%s6 + $0x1c0] sm:$0xff]
  %v1188 = vld [vmem:[%s6 + $0x1c8] sm:$0xff]
  %v1189 = vld [vmem:[%s6 + $0x1d0] sm:$0xff]
  %v1190 = vld [vmem:[%s6 + $0x1d8] sm:$0xff]
  %v1191 = vld [vmem:[%s6 + $0x1e0] sm:$0xff]
  %v1192 = vld [vmem:[%s6 + $0x1e8] sm:$0xff]
  %v1193 = vld [vmem:[%s6 + $0x1f0] sm:$0xff]
  %v1194 = vld [vmem:[%s6 + $0x1f8] sm:$0xff]
  %v1195 = vld [vmem:[#allocation2] sm:$0xf]
  %v1196 = vld [vmem:[#allocation2 + $0x4] sm:$0xf]
  %v1197 = vld [vmem:[#allocation3] sm:$0xff]
  %v1198 = vld [vmem:[#allocation3 + $0x8] sm:$0xff]
  %s1199 = scalar_lea.vmem [#allocation2], 8
  %v1200 = vld [vmem:[%s1199] sm:$0xf]
  %v1201 = vld [vmem:[%s1199 + $0x4] sm:$0xf]
  %s1202 = scalar_lea.vmem [#allocation3], 16
  %v1203 = vld [vmem:[%s1202] sm:$0xff]
  %v1204 = vld [vmem:[%s1202 + $0x8] sm:$0xff]
  %s1205 = scalar_lea.vmem [#allocation2], 16
  %v1206 = vld [vmem:[%s1205] sm:$0xf]
  %v1207 = vld [vmem:[%s1205 + $0x4] sm:$0xf]
  %s1208 = scalar_lea.vmem [#allocation3], 32
  %v1209 = vld [vmem:[%s1208] sm:$0xff]
  %v1210 = vld [vmem:[%s1208 + $0x8] sm:$0xff]
  %v1211 = vld [vmem:[#allocation4] sm:$0xff]
  %v1212 = vld [vmem:[#allocation4 + $0x8] sm:$0xff]
  %v1213 = vld [vmem:[#allocation4 + $0x10] sm:$0xff]
  %v1214 = vld [vmem:[#allocation4 + $0x18] sm:$0xff]
  %v1217 = vunpack.c.l.b16 %v1195
  %v1218 = vunpack.c.l.b16 %v1196
  %v1219 = vpack.c.b16 %v1218, %v1217
  %v1253 = vunpack.c.l.b16 %v1035
  %v1254 = vunpack.c.h.b16 %v1035
  %v1255 = vunpack.c.l.b16 %v1036
  %v1256 = vunpack.c.h.b16 %v1036
  %v1257 = vunpack.c.l.b16 %v1037
  %v1258 = vunpack.c.h.b16 %v1037
  %v1259 = vunpack.c.l.b16 %v1038
  %v1260 = vunpack.c.h.b16 %v1038
  %v1261 = vunpack.c.l.b16 %v1039
  %v1262 = vunpack.c.h.b16 %v1039
  %v1263 = vunpack.c.l.b16 %v1040
  %v1264 = vunpack.c.h.b16 %v1040
  %v1265 = vunpack.c.l.b16 %v1041
  %v1266 = vunpack.c.h.b16 %v1041
  %v1267 = vunpack.c.l.b16 %v1042
  %v1268 = vunpack.c.h.b16 %v1042
  %v1269 = vunpack.c.l.b16 %v1043
  %v1270 = vunpack.c.h.b16 %v1043
  %v1271 = vunpack.c.l.b16 %v1044
  %v1272 = vunpack.c.h.b16 %v1044
  %v1273 = vunpack.c.l.b16 %v1045
  %v1274 = vunpack.c.h.b16 %v1045
  %v1275 = vunpack.c.l.b16 %v1046
  %v1276 = vunpack.c.h.b16 %v1046
  %v1277 = vunpack.c.l.b16 %v1047
  %v1278 = vunpack.c.h.b16 %v1047
  %v1279 = vunpack.c.l.b16 %v1048
  %v1280 = vunpack.c.h.b16 %v1048
  %v1281 = vunpack.c.l.b16 %v1049
  %v1282 = vunpack.c.h.b16 %v1049
  %v1283 = vunpack.c.l.b16 %v1050
  %v1284 = vunpack.c.h.b16 %v1050
  %v1285 = vunpack.c.l.b16 %v1051
  %v1286 = vunpack.c.h.b16 %v1051
  %v1287 = vunpack.c.l.b16 %v1052
  %v1288 = vunpack.c.h.b16 %v1052
  %v1289 = vunpack.c.l.b16 %v1053
  %v1290 = vunpack.c.h.b16 %v1053
  %v1291 = vunpack.c.l.b16 %v1054
  %v1292 = vunpack.c.h.b16 %v1054
  %v1293 = vunpack.c.l.b16 %v1055
  %v1294 = vunpack.c.h.b16 %v1055
  %v1295 = vunpack.c.l.b16 %v1056
  %v1296 = vunpack.c.h.b16 %v1056
  %v1297 = vunpack.c.l.b16 %v1057
  %v1298 = vunpack.c.h.b16 %v1057
  %v1299 = vunpack.c.l.b16 %v1058
  %v1300 = vunpack.c.h.b16 %v1058
  %v1301 = vunpack.c.l.b16 %v1059
  %v1302 = vunpack.c.h.b16 %v1059
  %v1303 = vunpack.c.l.b16 %v1060
  %v1304 = vunpack.c.h.b16 %v1060
  %v1305 = vunpack.c.l.b16 %v1061
  %v1306 = vunpack.c.h.b16 %v1061
  %v1307 = vunpack.c.l.b16 %v1062
  %v1308 = vunpack.c.h.b16 %v1062
  %v1309 = vunpack.c.l.b16 %v1063
  %v1310 = vunpack.c.h.b16 %v1063
  %v1311 = vunpack.c.l.b16 %v1064
  %v1312 = vunpack.c.h.b16 %v1064
  %v1313 = vunpack.c.l.b16 %v1065
  %v1314 = vunpack.c.h.b16 %v1065
  %v1315 = vunpack.c.l.b16 %v1066
  %v1316 = vunpack.c.h.b16 %v1066
  %v1317 = vpack.c.b16 %v1257, %v1253
  %v1318 = vpack.c.b16 %v1258, %v1254
  %v1319 = vpack.c.b16 %v1259, %v1255
  %v1320 = vpack.c.b16 %v1260, %v1256
  %v1321 = vpack.c.b16 %v1265, %v1261
  %v1322 = vpack.c.b16 %v1266, %v1262
  %v1323 = vpack.c.b16 %v1267, %v1263
  %v1324 = vpack.c.b16 %v1268, %v1264
  %v1325 = vpack.c.b16 %v1273, %v1269
  %v1326 = vpack.c.b16 %v1274, %v1270
  %v1327 = vpack.c.b16 %v1275, %v1271
  %v1328 = vpack.c.b16 %v1276, %v1272
  %v1329 = vpack.c.b16 %v1281, %v1277
  %v1330 = vpack.c.b16 %v1282, %v1278
  %v1331 = vpack.c.b16 %v1283, %v1279
  %v1332 = vpack.c.b16 %v1284, %v1280
  %v1333 = vpack.c.b16 %v1289, %v1285
  %v1334 = vpack.c.b16 %v1290, %v1286
  %v1335 = vpack.c.b16 %v1291, %v1287
  %v1336 = vpack.c.b16 %v1292, %v1288
  %v1337 = vpack.c.b16 %v1297, %v1293
  %v1338 = vpack.c.b16 %v1298, %v1294
  %v1339 = vpack.c.b16 %v1299, %v1295
  %v1340 = vpack.c.b16 %v1300, %v1296
  %v1341 = vpack.c.b16 %v1305, %v1301
  %v1342 = vpack.c.b16 %v1306, %v1302
  %v1343 = vpack.c.b16 %v1307, %v1303
  %v1344 = vpack.c.b16 %v1308, %v1304
  %v1345 = vpack.c.b16 %v1313, %v1309
  %v1346 = vpack.c.b16 %v1314, %v1310
  %v1347 = vpack.c.b16 %v1315, %v1311
  %v1348 = vpack.c.b16 %v1316, %v1312
  %1381 = vmatpush.bf16.msra.mxu0 %v1345
  %1382 = vmatpush.bf16.msra.mxu0 %v1341
  %1383 = vmatpush.bf16.msra.mxu0 %v1337
  %1384 = vmatpush.bf16.msra.mxu0 %v1333
  %1385 = vmatpush.bf16.msra.mxu0 %v1329
  %1386 = vmatpush.bf16.msra.mxu0 %v1325
  %1387 = vmatpush.bf16.msra.mxu0 %v1321
  %1388 = vmatpush.bf16.msra.mxu0 %v1317
  %1389 = vmatmul.bf16.gmra.mxu0 %v1219
  %v1390 = vpop.f32.mrf.mxu0
  %v1391 = vadd.f32 0.0, %v1390
  %v1392 = vpop.f32.mrf.mxu0
  %v1393 = vadd.f32 0.0, %v1392
  %1394 = vdwg.mxu0
  %1395 = vmatpush.bf16.msra.mxu0 %v1346
  %1396 = vmatpush.bf16.msra.mxu0 %v1342
  %1397 = vmatpush.bf16.msra.mxu0 %v1338
  %1398 = vmatpush.bf16.msra.mxu0 %v1334
  %1399 = vmatpush.bf16.msra.mxu0 %v1330
  %1400 = vmatpush.bf16.msra.mxu0 %v1326
  %1401 = vmatpush.bf16.msra.mxu0 %v1322
  %1402 = vmatpush.bf16.msra.mxu0 %v1318
  %1403 = vmatmul.bf16.gmra.mxu0 %v1219
  %v1404 = vpop.f32.mrf.mxu0
  %v1405 = vadd.f32 0.0, %v1404
  %v1406 = vpop.f32.mrf.mxu0
  %v1407 = vadd.f32 0.0, %v1406
  %1408 = vdwg.mxu0
  %1409 = vmatpush.bf16.msra.mxu0 %v1347
  %1410 = vmatpush.bf16.msra.mxu0 %v1343
  %1411 = vmatpush.bf16.msra.mxu0 %v1339
  %1412 = vmatpush.bf16.msra.mxu0 %v1335
  %1413 = vmatpush.bf16.msra.mxu0 %v1331
  %1414 = vmatpush.bf16.msra.mxu0 %v1327
  %1415 = vmatpush.bf16.msra.mxu0 %v1323
  %1416 = vmatpush.bf16.msra.mxu0 %v1319
  %1417 = vmatmul.bf16.gmra.mxu0 %v1219
  %v1418 = vpop.f32.mrf.mxu0
  %v1419 = vadd.f32 0.0, %v1418
  %v1420 = vpop.f32.mrf.mxu0
  %v1421 = vadd.f32 0.0, %v1420
  %1422 = vdwg.mxu0
  %1423 = vmatpush.bf16.msra.mxu0 %v1348
  %1424 = vmatpush.bf16.msra.mxu0 %v1344
  %1425 = vmatpush.bf16.msra.mxu0 %v1340
  %1426 = vmatpush.bf16.msra.mxu0 %v1336
  %1427 = vmatpush.bf16.msra.mxu0 %v1332
  %1428 = vmatpush.bf16.msra.mxu0 %v1328
  %1429 = vmatpush.bf16.msra.mxu0 %v1324
  %1430 = vmatpush.bf16.msra.mxu0 %v1320
  %1431 = vmatmul.bf16.gmra.mxu0 %v1219
  %v1432 = vpop.f32.mrf.mxu0
  %v1433 = vadd.f32 0.0, %v1432
  %v1434 = vpop.f32.mrf.mxu0
  %v1435 = vadd.f32 0.0, %v1434
  %1436 = vdwg.mxu0
  %v1437 = vunpack.c.l.bf16 %v1211
  %v1438 = vunpack.c.h.bf16 %v1211
  %v1439 = vunpack.c.l.bf16 %v1212
  %v1440 = vunpack.c.h.bf16 %v1212
  %v1441 = vunpack.c.l.bf16 %v1213
  %v1442 = vunpack.c.h.bf16 %v1213
  %v1443 = vunpack.c.l.bf16 %v1214
  %v1444 = vunpack.c.h.bf16 %v1214
  %v1445 = vadd.f32 %v1437, %v1391
  %v1446 = vadd.f32 %v1438, %v1405
  %v1447 = vadd.f32 %v1439, %v1419
  %v1448 = vadd.f32 %v1440, %v1433
  %v1449 = vadd.f32 %v1441, %v1393
  %v1450 = vadd.f32 %v1442, %v1407
  %v1451 = vadd.f32 %v1443, %v1421
  %v1452 = vadd.f32 %v1444, %v1435
  %v1453 = vxor.u32 %v1445, 2147483648
  %v1454 = vxor.u32 %v1449, 2147483648
  %v1455 = vmul.f32 %v1453, 1.442695
  %v1456 = vpow.pop %v1455
  %v1457 = vmul.f32 %v1454, 1.442695
  %v1458 = vpow.pop %v1457
  %v1459 = vadd.f32 %v1456, 1.0
  %v1460 = vadd.f32 %v1458, 1.0
  %v1461 = vrcp.pop %v1459
  %v1462 = vmul.f32 %v1459, %v1461
  %v1463 = vsub.f32 1.0, %v1462
  %v1464 = vmul.f32 %v1461, %v1463
  %v1465 = vadd.f32 %v1461, %v1464
  %vm1466 = vweird.f32 %v1459
  %vm1467 = vweird.f32 %v1461
  %vm1468 = vmor %vm1466, %vm1467
  %v1469 = vsel %vm1468, %v1461, %v1465
  %v1470 = vand.u32 2147483647, %v1459
  %vm1471 = vcmp.eq.f32.partialorder %v1470, 8.507059e+37
  %v1472 = vand.u32 %v1459, 2147483648
  %v1473 = vor.u32 1.1754944e-38, %v1472
  %v1474 = vsel %vm1471, %v1473, %v1469
  %v1475 = vmul.f32 1.0, %v1474
  %v1476 = vrcp.pop %v1460
  %v1477 = vmul.f32 %v1460, %v1476
  %v1478 = vsub.f32 1.0, %v1477
  %v1479 = vmul.f32 %v1476, %v1478
  %v1480 = vadd.f32 %v1476, %v1479
  %vm1481 = vweird.f32 %v1460
  %vm1482 = vweird.f32 %v1476
  %vm1483 = vmor %vm1481, %vm1482
  %v1484 = vsel %vm1483, %v1476, %v1480
  %v1485 = vand.u32 2147483647, %v1460
  %vm1486 = vcmp.eq.f32.partialorder %v1485, 8.507059e+37
  %v1487 = vand.u32 %v1460, 2147483648
  %v1488 = vor.u32 1.1754944e-38, %v1487
  %v1489 = vsel %vm1486, %v1488, %v1484
  %v1490 = vmul.f32 1.0, %v1489
  %v1491 = vxor.u32 %v1446, 2147483648
  %v1492 = vxor.u32 %v1450, 2147483648
  %v1493 = vmul.f32 %v1491, 1.442695
  %v1494 = vpow.pop %v1493
  %v1495 = vmul.f32 %v1492, 1.442695
  %v1496 = vpow.pop %v1495
  %v1497 = vadd.f32 %v1494, 1.0
  %v1498 = vadd.f32 %v1496, 1.0
  %v1499 = vrcp.pop %v1497
  %v1500 = vmul.f32 %v1497, %v1499
  %v1501 = vsub.f32 1.0, %v1500
  %v1502 = vmul.f32 %v1499, %v1501
  %v1503 = vadd.f32 %v1499, %v1502
  %vm1504 = vweird.f32 %v1497
  %vm1505 = vweird.f32 %v1499
  %vm1506 = vmor %vm1504, %vm1505
  %v1507 = vsel %vm1506, %v1499, %v1503
  %v1508 = vand.u32 2147483647, %v1497
  %vm1509 = vcmp.eq.f32.partialorder %v1508, 8.507059e+37
  %v1510 = vand.u32 %v1497, 2147483648
  %v1511 = vor.u32 1.1754944e-38, %v1510
  %v1512 = vsel %vm1509, %v1511, %v1507
  %v1513 = vmul.f32 1.0, %v1512
  %v1514 = vrcp.pop %v1498
  %v1515 = vmul.f32 %v1498, %v1514
  %v1516 = vsub.f32 1.0, %v1515
  %v1517 = vmul.f32 %v1514, %v1516
  %v1518 = vadd.f32 %v1514, %v1517
  %vm1519 = vweird.f32 %v1498
  %vm1520 = vweird.f32 %v1514
  %vm1521 = vmor %vm1519, %vm1520
  %v1522 = vsel %vm1521, %v1514, %v1518
  %v1523 = vand.u32 2147483647, %v1498
  %vm1524 = vcmp.eq.f32.partialorder %v1523, 8.507059e+37
  %v1525 = vand.u32 %v1498, 2147483648
  %v1526 = vor.u32 1.1754944e-38, %v1525
  %v1527 = vsel %vm1524, %v1526, %v1522
  %v1528 = vmul.f32 1.0, %v1527
  %v1529 = vtanh.pop %v1447
  %v1530 = vtanh.pop %v1451
  %v1531 = vxor.u32 %v1448, 2147483648
  %v1532 = vxor.u32 %v1452, 2147483648
  %v1533 = vmul.f32 %v1531, 1.442695
  %v1534 = vpow.pop %v1533
  %v1535 = vmul.f32 %v1532, 1.442695
  %v1536 = vpow.pop %v1535
  %v1537 = vadd.f32 %v1534, 1.0
  %v1538 = vadd.f32 %v1536, 1.0
  %v1539 = vrcp.pop %v1537
  %v1540 = vmul.f32 %v1537, %v1539
  %v1541 = vsub.f32 1.0, %v1540
  %v1542 = vmul.f32 %v1539, %v1541
  %v1543 = vadd.f32 %v1539, %v1542
  %vm1544 = vweird.f32 %v1537
  %vm1545 = vweird.f32 %v1539
  %vm1546 = vmor %vm1544, %vm1545
  %v1547 = vsel %vm1546, %v1539, %v1543
  %v1548 = vand.u32 2147483647, %v1537
  %vm1549 = vcmp.eq.f32.partialorder %v1548, 8.507059e+37
  %v1550 = vand.u32 %v1537, 2147483648
  %v1551 = vor.u32 1.1754944e-38, %v1550
  %v1552 = vsel %vm1549, %v1551, %v1547
  %v1553 = vmul.f32 1.0, %v1552
  %v1554 = vrcp.pop %v1538
  %v1555 = vmul.f32 %v1538, %v1554
  %v1556 = vsub.f32 1.0, %v1555
  %v1557 = vmul.f32 %v1554, %v1556
  %v1558 = vadd.f32 %v1554, %v1557
  %vm1559 = vweird.f32 %v1538
  %vm1560 = vweird.f32 %v1554
  %vm1561 = vmor %vm1559, %vm1560
  %v1562 = vsel %vm1561, %v1554, %v1558
  %v1563 = vand.u32 2147483647, %v1538
  %vm1564 = vcmp.eq.f32.partialorder %v1563, 8.507059e+37
  %v1565 = vand.u32 %v1538, 2147483648
  %v1566 = vor.u32 1.1754944e-38, %v1565
  %v1567 = vsel %vm1564, %v1566, %v1562
  %v1568 = vmul.f32 1.0, %v1567
  %v1569 = vmul.f32 %v1513, %v1197
  %v1570 = vmul.f32 %v1528, %v1198
  %v1571 = vmul.f32 %v1475, %v1529
  %v1572 = vmul.f32 %v1490, %v1530
  %v1573 = vadd.f32 %v1569, %v1571
  %v1574 = vadd.f32 %v1570, %v1572
  %v1575 = vtanh.pop %v1573
  %v1576 = vtanh.pop %v1574
  %v1577 = vmul.f32 %v1553, %v1575
  %v1578 = vmul.f32 %v1568, %v1576
  %v1579 = vpack.c.bf16 %v1577, %v1577
  %v1580 = vpack.c.bf16 %v1578, %v1578
  %v1583 = vunpack.c.l.b16 %v1579
  %v1584 = vunpack.c.l.b16 %v1580
  %v1585 = vpack.c.b16 %v1584, %v1583
  %v1589 = vunpack.c.l.b16 %v1200
  %v1590 = vunpack.c.l.b16 %v1201
  %v1591 = vpack.c.b16 %v1590, %v1589
  %v1657 = vunpack.c.l.b16 %v1067
  %v1658 = vunpack.c.h.b16 %v1067
  %v1659 = vunpack.c.l.b16 %v1068
  %v1660 = vunpack.c.h.b16 %v1068
  %v1661 = vunpack.c.l.b16 %v1069
  %v1662 = vunpack.c.h.b16 %v1069
  %v1663 = vunpack.c.l.b16 %v1070
  %v1664 = vunpack.c.h.b16 %v1070
  %v1665 = vunpack.c.l.b16 %v1071
  %v1666 = vunpack.c.h.b16 %v1071
  %v1667 = vunpack.c.l.b16 %v1072
  %v1668 = vunpack.c.h.b16 %v1072
  %v1669 = vunpack.c.l.b16 %v1073
  %v1670 = vunpack.c.h.b16 %v1073
  %v1671 = vunpack.c.l.b16 %v1074
  %v1672 = vunpack.c.h.b16 %v1074
  %v1673 = vunpack.c.l.b16 %v1075
  %v1674 = vunpack.c.h.b16 %v1075
  %v1675 = vunpack.c.l.b16 %v1076
  %v1676 = vunpack.c.h.b16 %v1076
  %v1677 = vunpack.c.l.b16 %v1077
  %v1678 = vunpack.c.h.b16 %v1077
  %v1679 = vunpack.c.l.b16 %v1078
  %v1680 = vunpack.c.h.b16 %v1078
  %v1681 = vunpack.c.l.b16 %v1079
  %v1682 = vunpack.c.h.b16 %v1079
  %v1683 = vunpack.c.l.b16 %v1080
  %v1684 = vunpack.c.h.b16 %v1080
  %v1685 = vunpack.c.l.b16 %v1081
  %v1686 = vunpack.c.h.b16 %v1081
  %v1687 = vunpack.c.l.b16 %v1082
  %v1688 = vunpack.c.h.b16 %v1082
  %v1689 = vunpack.c.l.b16 %v1083
  %v1690 = vunpack.c.h.b16 %v1083
  %v1691 = vunpack.c.l.b16 %v1084
  %v1692 = vunpack.c.h.b16 %v1084
  %v1693 = vunpack.c.l.b16 %v1085
  %v1694 = vunpack.c.h.b16 %v1085
  %v1695 = vunpack.c.l.b16 %v1086
  %v1696 = vunpack.c.h.b16 %v1086
  %v1697 = vunpack.c.l.b16 %v1087
  %v1698 = vunpack.c.h.b16 %v1087
  %v1699 = vunpack.c.l.b16 %v1088
  %v1700 = vunpack.c.h.b16 %v1088
  %v1701 = vunpack.c.l.b16 %v1089
  %v1702 = vunpack.c.h.b16 %v1089
  %v1703 = vunpack.c.l.b16 %v1090
  %v1704 = vunpack.c.h.b16 %v1090
  %v1705 = vunpack.c.l.b16 %v1091
  %v1706 = vunpack.c.h.b16 %v1091
  %v1707 = vunpack.c.l.b16 %v1092
  %v1708 = vunpack.c.h.b16 %v1092
  %v1709 = vunpack.c.l.b16 %v1093
  %v1710 = vunpack.c.h.b16 %v1093
  %v1711 = vunpack.c.l.b16 %v1094
  %v1712 = vunpack.c.h.b16 %v1094
  %v1713 = vunpack.c.l.b16 %v1095
  %v1714 = vunpack.c.h.b16 %v1095
  %v1715 = vunpack.c.l.b16 %v1096
  %v1716 = vunpack.c.h.b16 %v1096
  %v1717 = vunpack.c.l.b16 %v1097
  %v1718 = vunpack.c.h.b16 %v1097
  %v1719 = vunpack.c.l.b16 %v1098
  %v1720 = vunpack.c.h.b16 %v1098
  %v1721 = vunpack.c.l.b16 %v1099
  %v1722 = vunpack.c.h.b16 %v1099
  %v1723 = vunpack.c.l.b16 %v1100
  %v1724 = vunpack.c.h.b16 %v1100
  %v1725 = vunpack.c.l.b16 %v1101
  %v1726 = vunpack.c.h.b16 %v1101
  %v1727 = vunpack.c.l.b16 %v1102
  %v1728 = vunpack.c.h.b16 %v1102
  %v1729 = vunpack.c.l.b16 %v1103
  %v1730 = vunpack.c.h.b16 %v1103
  %v1731 = vunpack.c.l.b16 %v1104
  %v1732 = vunpack.c.h.b16 %v1104
  %v1733 = vunpack.c.l.b16 %v1105
  %v1734 = vunpack.c.h.b16 %v1105
  %v1735 = vunpack.c.l.b16 %v1106
  %v1736 = vunpack.c.h.b16 %v1106
  %v1737 = vunpack.c.l.b16 %v1107
  %v1738 = vunpack.c.h.b16 %v1107
  %v1739 = vunpack.c.l.b16 %v1108
  %v1740 = vunpack.c.h.b16 %v1108
  %v1741 = vunpack.c.l.b16 %v1109
  %v1742 = vunpack.c.h.b16 %v1109
  %v1743 = vunpack.c.l.b16 %v1110
  %v1744 = vunpack.c.h.b16 %v1110
  %v1745 = vunpack.c.l.b16 %v1111
  %v1746 = vunpack.c.h.b16 %v1111
  %v1747 = vunpack.c.l.b16 %v1112
  %v1748 = vunpack.c.h.b16 %v1112
  %v1749 = vunpack.c.l.b16 %v1113
  %v1750 = vunpack.c.h.b16 %v1113
  %v1751 = vunpack.c.l.b16 %v1114
  %v1752 = vunpack.c.h.b16 %v1114
  %v1753 = vunpack.c.l.b16 %v1115
  %v1754 = vunpack.c.h.b16 %v1115
  %v1755 = vunpack.c.l.b16 %v1116
  %v1756 = vunpack.c.h.b16 %v1116
  %v1757 = vunpack.c.l.b16 %v1117
  %v1758 = vunpack.c.h.b16 %v1117
  %v1759 = vunpack.c.l.b16 %v1118
  %v1760 = vunpack.c.h.b16 %v1118
  %v1761 = vunpack.c.l.b16 %v1119
  %v1762 = vunpack.c.h.b16 %v1119
  %v1763 = vunpack.c.l.b16 %v1120
  %v1764 = vunpack.c.h.b16 %v1120
  %v1765 = vunpack.c.l.b16 %v1121
  %v1766 = vunpack.c.h.b16 %v1121
  %v1767 = vunpack.c.l.b16 %v1122
  %v1768 = vunpack.c.h.b16 %v1122
  %v1769 = vunpack.c.l.b16 %v1123
  %v1770 = vunpack.c.h.b16 %v1123
  %v1771 = vunpack.c.l.b16 %v1124
  %v1772 = vunpack.c.h.b16 %v1124
  %v1773 = vunpack.c.l.b16 %v1125
  %v1774 = vunpack.c.h.b16 %v1125
  %v1775 = vunpack.c.l.b16 %v1126
  %v1776 = vunpack.c.h.b16 %v1126
  %v1777 = vunpack.c.l.b16 %v1127
  %v1778 = vunpack.c.h.b16 %v1127
  %v1779 = vunpack.c.l.b16 %v1128
  %v1780 = vunpack.c.h.b16 %v1128
  %v1781 = vunpack.c.l.b16 %v1129
  %v1782 = vunpack.c.h.b16 %v1129
  %v1783 = vunpack.c.l.b16 %v1130
  %v1784 = vunpack.c.h.b16 %v1130
  %v1785 = vpack.c.b16 %v1661, %v1657
  %v1786 = vpack.c.b16 %v1662, %v1658
  %v1787 = vpack.c.b16 %v1663, %v1659
  %v1788 = vpack.c.b16 %v1664, %v1660
  %v1789 = vpack.c.b16 %v1669, %v1665
  %v1790 = vpack.c.b16 %v1670, %v1666
  %v1791 = vpack.c.b16 %v1671, %v1667
  %v1792 = vpack.c.b16 %v1672, %v1668
  %v1793 = vpack.c.b16 %v1677, %v1673
  %v1794 = vpack.c.b16 %v1678, %v1674
  %v1795 = vpack.c.b16 %v1679, %v1675
  %v1796 = vpack.c.b16 %v1680, %v1676
  %v1797 = vpack.c.b16 %v1685, %v1681
  %v1798 = vpack.c.b16 %v1686, %v1682
  %v1799 = vpack.c.b16 %v1687, %v1683
  %v1800 = vpack.c.b16 %v1688, %v1684
  %v1801 = vpack.c.b16 %v1693, %v1689
  %v1802 = vpack.c.b16 %v1694, %v1690
  %v1803 = vpack.c.b16 %v1695, %v1691
  %v1804 = vpack.c.b16 %v1696, %v1692
  %v1805 = vpack.c.b16 %v1701, %v1697
  %v1806 = vpack.c.b16 %v1702, %v1698
  %v1807 = vpack.c.b16 %v1703, %v1699
  %v1808 = vpack.c.b16 %v1704, %v1700
  %v1809 = vpack.c.b16 %v1709, %v1705
  %v1810 = vpack.c.b16 %v1710, %v1706
  %v1811 = vpack.c.b16 %v1711, %v1707
  %v1812 = vpack.c.b16 %v1712, %v1708
  %v1813 = vpack.c.b16 %v1717, %v1713
  %v1814 = vpack.c.b16 %v1718, %v1714
  %v1815 = vpack.c.b16 %v1719, %v1715
  %v1816 = vpack.c.b16 %v1720, %v1716
  %v1817 = vpack.c.b16 %v1725, %v1721
  %v1818 = vpack.c.b16 %v1726, %v1722
  %v1819 = vpack.c.b16 %v1727, %v1723
  %v1820 = vpack.c.b16 %v1728, %v1724
  %v1821 = vpack.c.b16 %v1733, %v1729
  %v1822 = vpack.c.b16 %v1734, %v1730
  %v1823 = vpack.c.b16 %v1735, %v1731
  %v1824 = vpack.c.b16 %v1736, %v1732
  %v1825 = vpack.c.b16 %v1741, %v1737
  %v1826 = vpack.c.b16 %v1742, %v1738
  %v1827 = vpack.c.b16 %v1743, %v1739
  %v1828 = vpack.c.b16 %v1744, %v1740
  %v1829 = vpack.c.b16 %v1749, %v1745
  %v1830 = vpack.c.b16 %v1750, %v1746
  %v1831 = vpack.c.b16 %v1751, %v1747
  %v1832 = vpack.c.b16 %v1752, %v1748
  %v1833 = vpack.c.b16 %v1757, %v1753
  %v1834 = vpack.c.b16 %v1758, %v1754
  %v1835 = vpack.c.b16 %v1759, %v1755
  %v1836 = vpack.c.b16 %v1760, %v1756
  %v1837 = vpack.c.b16 %v1765, %v1761
  %v1838 = vpack.c.b16 %v1766, %v1762
  %v1839 = vpack.c.b16 %v1767, %v1763
  %v1840 = vpack.c.b16 %v1768, %v1764
  %v1841 = vpack.c.b16 %v1773, %v1769
  %v1842 = vpack.c.b16 %v1774, %v1770
  %v1843 = vpack.c.b16 %v1775, %v1771
  %v1844 = vpack.c.b16 %v1776, %v1772
  %v1845 = vpack.c.b16 %v1781, %v1777
  %v1846 = vpack.c.b16 %v1782, %v1778
  %v1847 = vpack.c.b16 %v1783, %v1779
  %v1848 = vpack.c.b16 %v1784, %v1780
  %1913 = vmatpush.bf16.msra.mxu0 %v1813
  %1914 = vmatpush.bf16.msra.mxu0 %v1809
  %1915 = vmatpush.bf16.msra.mxu0 %v1805
  %1916 = vmatpush.bf16.msra.mxu0 %v1801
  %1917 = vmatpush.bf16.msra.mxu0 %v1797
  %1918 = vmatpush.bf16.msra.mxu0 %v1793
  %1919 = vmatpush.bf16.msra.mxu0 %v1789
  %1920 = vmatpush.bf16.msra.mxu0 %v1785
  %1921 = vmatmul.bf16.gmra.mxu0 %v1585
  %v1922 = vpop.f32.mrf.mxu0
  %v1923 = vadd.f32 %v1017, %v1922
  %v1924 = vpop.f32.mrf.mxu0
  %v1925 = vadd.f32 %v1017, %v1924
  %1926 = vdwg.mxu0
  %1927 = vmatpush.bf16.msra.mxu0 %v1845
  %1928 = vmatpush.bf16.msra.mxu0 %v1841
  %1929 = vmatpush.bf16.msra.mxu0 %v1837
  %1930 = vmatpush.bf16.msra.mxu0 %v1833
  %1931 = vmatpush.bf16.msra.mxu0 %v1829
  %1932 = vmatpush.bf16.msra.mxu0 %v1825
  %1933 = vmatpush.bf16.msra.mxu0 %v1821
  %1934 = vmatpush.bf16.msra.mxu0 %v1817
  %1935 = vmatmul.bf16.gmra.mxu0 %v1591
  %v1936 = vpop.f32.mrf.mxu0
  %v1937 = vadd.f32 %v1923, %v1936
  %v1938 = vpop.f32.mrf.mxu0
  %v1939 = vadd.f32 %v1925, %v1938
  %1940 = vdwg.mxu0
  %1941 = vmatpush.bf16.msra.mxu0 %v1814
  %1942 = vmatpush.bf16.msra.mxu0 %v1810
  %1943 = vmatpush.bf16.msra.mxu0 %v1806
  %1944 = vmatpush.bf16.msra.mxu0 %v1802
  %1945 = vmatpush.bf16.msra.mxu0 %v1798
  %1946 = vmatpush.bf16.msra.mxu0 %v1794
  %1947 = vmatpush.bf16.msra.mxu0 %v1790
  %1948 = vmatpush.bf16.msra.mxu0 %v1786
  %1949 = vmatmul.bf16.gmra.mxu0 %v1585
  %v1950 = vpop.f32.mrf.mxu0
  %v1951 = vadd.f32 %v1018, %v1950
  %v1952 = vpop.f32.mrf.mxu0
  %v1953 = vadd.f32 %v1018, %v1952
  %1954 = vdwg.mxu0
  %1955 = vmatpush.bf16.msra.mxu0 %v1846
  %1956 = vmatpush.bf16.msra.mxu0 %v1842
  %1957 = vmatpush.bf16.msra.mxu0 %v1838
  %1958 = vmatpush.bf16.msra.mxu0 %v1834
  %1959 = vmatpush.bf16.msra.mxu0 %v1830
  %1960 = vmatpush.bf16.msra.mxu0 %v1826
  %1961 = vmatpush.bf16.msra.mxu0 %v1822
  %1962 = vmatpush.bf16.msra.mxu0 %v1818
  %1963 = vmatmul.bf16.gmra.mxu0 %v1591
  %v1964 = vpop.f32.mrf.mxu0
  %v1965 = vadd.f32 %v1951, %v1964
  %v1966 = vpop.f32.mrf.mxu0
  %v1967 = vadd.f32 %v1953, %v1966
  %1968 = vdwg.mxu0
  %1969 = vmatpush.bf16.msra.mxu0 %v1815
  %1970 = vmatpush.bf16.msra.mxu0 %v1811
  %1971 = vmatpush.bf16.msra.mxu0 %v1807
  %1972 = vmatpush.bf16.msra.mxu0 %v1803
  %1973 = vmatpush.bf16.msra.mxu0 %v1799
  %1974 = vmatpush.bf16.msra.mxu0 %v1795
  %1975 = vmatpush.bf16.msra.mxu0 %v1791
  %1976 = vmatpush.bf16.msra.mxu0 %v1787
  %1977 = vmatmul.bf16.gmra.mxu0 %v1585
  %v1978 = vpop.f32.mrf.mxu0
  %v1979 = vadd.f32 %v1019, %v1978
  %v1980 = vpop.f32.mrf.mxu0
  %v1981 = vadd.f32 %v1019, %v1980
  %1982 = vdwg.mxu0
  %1983 = vmatpush.bf16.msra.mxu0 %v1847
  %1984 = vmatpush.bf16.msra.mxu0 %v1843
  %1985 = vmatpush.bf16.msra.mxu0 %v1839
  %1986 = vmatpush.bf16.msra.mxu0 %v1835
  %1987 = vmatpush.bf16.msra.mxu0 %v1831
  %1988 = vmatpush.bf16.msra.mxu0 %v1827
  %1989 = vmatpush.bf16.msra.mxu0 %v1823
  %1990 = vmatpush.bf16.msra.mxu0 %v1819
  %1991 = vmatmul.bf16.gmra.mxu0 %v1591
  %v1992 = vpop.f32.mrf.mxu0
  %v1993 = vadd.f32 %v1979, %v1992
  %v1994 = vpop.f32.mrf.mxu0
  %v1995 = vadd.f32 %v1981, %v1994
  %1996 = vdwg.mxu0
  %1997 = vmatpush.bf16.msra.mxu0 %v1816
  %1998 = vmatpush.bf16.msra.mxu0 %v1812
  %1999 = vmatpush.bf16.msra.mxu0 %v1808
  %2000 = vmatpush.bf16.msra.mxu0 %v1804
  %2001 = vmatpush.bf16.msra.mxu0 %v1800
  %2002 = vmatpush.bf16.msra.mxu0 %v1796
  %2003 = vmatpush.bf16.msra.mxu0 %v1792
  %2004 = vmatpush.bf16.msra.mxu0 %v1788
  %2005 = vmatmul.bf16.gmra.mxu0 %v1585
  %v2006 = vpop.f32.mrf.mxu0
  %v2007 = vadd.f32 %v1020, %v2006
  %v2008 = vpop.f32.mrf.mxu0
  %v2009 = vadd.f32 %v1020, %v2008
  %2010 = vdwg.mxu0
  %2011 = vmatpush.bf16.msra.mxu0 %v1848
  %2012 = vmatpush.bf16.msra.mxu0 %v1844
  %2013 = vmatpush.bf16.msra.mxu0 %v1840
  %2014 = vmatpush.bf16.msra.mxu0 %v1836
  %2015 = vmatpush.bf16.msra.mxu0 %v1832
  %2016 = vmatpush.bf16.msra.mxu0 %v1828
  %2017 = vmatpush.bf16.msra.mxu0 %v1824
  %2018 = vmatpush.bf16.msra.mxu0 %v1820
  %2019 = vmatmul.bf16.gmra.mxu0 %v1591
  %v2020 = vpop.f32.mrf.mxu0
  %v2021 = vadd.f32 %v2007, %v2020
  %v2022 = vpop.f32.mrf.mxu0
  %v2023 = vadd.f32 %v2009, %v2022
  %2024 = vdwg.mxu0
  %v2025 = vxor.u32 %v1937, 2147483648
  %v2026 = vxor.u32 %v1939, 2147483648
  %v2027 = vmul.f32 %v2025, 1.442695
  %v2028 = vpow.pop %v2027
  %v2029 = vmul.f32 %v2026, 1.442695
  %v2030 = vpow.pop %v2029
  %v2031 = vadd.f32 %v2028, 1.0
  %v2032 = vadd.f32 %v2030, 1.0
  %v2033 = vrcp.pop %v2031
  %v2034 = vmul.f32 %v2031, %v2033
  %v2035 = vsub.f32 1.0, %v2034
  %v2036 = vmul.f32 %v2033, %v2035
  %v2037 = vadd.f32 %v2033, %v2036
  %vm2038 = vweird.f32 %v2031
  %vm2039 = vweird.f32 %v2033
  %vm2040 = vmor %vm2038, %vm2039
  %v2041 = vsel %vm2040, %v2033, %v2037
  %v2042 = vand.u32 2147483647, %v2031
  %vm2043 = vcmp.eq.f32.partialorder %v2042, 8.507059e+37
  %v2044 = vand.u32 %v2031, 2147483648
  %v2045 = vor.u32 1.1754944e-38, %v2044
  %v2046 = vsel %vm2043, %v2045, %v2041
  %v2047 = vmul.f32 1.0, %v2046
  %v2048 = vrcp.pop %v2032
  %v2049 = vmul.f32 %v2032, %v2048
  %v2050 = vsub.f32 1.0, %v2049
  %v2051 = vmul.f32 %v2048, %v2050
  %v2052 = vadd.f32 %v2048, %v2051
  %vm2053 = vweird.f32 %v2032
  %vm2054 = vweird.f32 %v2048
  %vm2055 = vmor %vm2053, %vm2054
  %v2056 = vsel %vm2055, %v2048, %v2052
  %v2057 = vand.u32 2147483647, %v2032
  %vm2058 = vcmp.eq.f32.partialorder %v2057, 8.507059e+37
  %v2059 = vand.u32 %v2032, 2147483648
  %v2060 = vor.u32 1.1754944e-38, %v2059
  %v2061 = vsel %vm2058, %v2060, %v2056
  %v2062 = vmul.f32 1.0, %v2061
  %v2063 = vxor.u32 %v1965, 2147483648
  %v2064 = vxor.u32 %v1967, 2147483648
  %v2065 = vmul.f32 %v2063, 1.442695
  %v2066 = vpow.pop %v2065
  %v2067 = vmul.f32 %v2064, 1.442695
  %v2068 = vpow.pop %v2067
  %v2069 = vadd.f32 %v2066, 1.0
  %v2070 = vadd.f32 %v2068, 1.0
  %v2071 = vrcp.pop %v2069
  %v2072 = vmul.f32 %v2069, %v2071
  %v2073 = vsub.f32 1.0, %v2072
  %v2074 = vmul.f32 %v2071, %v2073
  %v2075 = vadd.f32 %v2071, %v2074
  %vm2076 = vweird.f32 %v2069
  %vm2077 = vweird.f32 %v2071
  %vm2078 = vmor %vm2076, %vm2077
  %v2079 = vsel %vm2078, %v2071, %v2075
  %v2080 = vand.u32 2147483647, %v2069
  %vm2081 = vcmp.eq.f32.partialorder %v2080, 8.507059e+37
  %v2082 = vand.u32 %v2069, 2147483648
  %v2083 = vor.u32 1.1754944e-38, %v2082
  %v2084 = vsel %vm2081, %v2083, %v2079
  %v2085 = vmul.f32 1.0, %v2084
  %v2086 = vrcp.pop %v2070
  %v2087 = vmul.f32 %v2070, %v2086
  %v2088 = vsub.f32 1.0, %v2087
  %v2089 = vmul.f32 %v2086, %v2088
  %v2090 = vadd.f32 %v2086, %v2089
  %vm2091 = vweird.f32 %v2070
  %vm2092 = vweird.f32 %v2086
  %vm2093 = vmor %vm2091, %vm2092
  %v2094 = vsel %vm2093, %v2086, %v2090
  %v2095 = vand.u32 2147483647, %v2070
  %vm2096 = vcmp.eq.f32.partialorder %v2095, 8.507059e+37
  %v2097 = vand.u32 %v2070, 2147483648
  %v2098 = vor.u32 1.1754944e-38, %v2097
  %v2099 = vsel %vm2096, %v2098, %v2094
  %v2100 = vmul.f32 1.0, %v2099
  %v2101 = vtanh.pop %v1993
  %v2102 = vtanh.pop %v1995
  %v2103 = vxor.u32 %v2021, 2147483648
  %v2104 = vxor.u32 %v2023, 2147483648
  %v2105 = vmul.f32 %v2103, 1.442695
  %v2106 = vpow.pop %v2105
  %v2107 = vmul.f32 %v2104, 1.442695
  %v2108 = vpow.pop %v2107
  %v2109 = vadd.f32 %v2106, 1.0
  %v2110 = vadd.f32 %v2108, 1.0
  %v2111 = vrcp.pop %v2109
  %v2112 = vmul.f32 %v2109, %v2111
  %v2113 = vsub.f32 1.0, %v2112
  %v2114 = vmul.f32 %v2111, %v2113
  %v2115 = vadd.f32 %v2111, %v2114
  %vm2116 = vweird.f32 %v2109
  %vm2117 = vweird.f32 %v2111
  %vm2118 = vmor %vm2116, %vm2117
  %v2119 = vsel %vm2118, %v2111, %v2115
  %v2120 = vand.u32 2147483647, %v2109
  %vm2121 = vcmp.eq.f32.partialorder %v2120, 8.507059e+37
  %v2122 = vand.u32 %v2109, 2147483648
  %v2123 = vor.u32 1.1754944e-38, %v2122
  %v2124 = vsel %vm2121, %v2123, %v2119
  %v2125 = vmul.f32 1.0, %v2124
  %v2126 = vrcp.pop %v2110
  %v2127 = vmul.f32 %v2110, %v2126
  %v2128 = vsub.f32 1.0, %v2127
  %v2129 = vmul.f32 %v2126, %v2128
  %v2130 = vadd.f32 %v2126, %v2129
  %vm2131 = vweird.f32 %v2110
  %vm2132 = vweird.f32 %v2126
  %vm2133 = vmor %vm2131, %vm2132
  %v2134 = vsel %vm2133, %v2126, %v2130
  %v2135 = vand.u32 2147483647, %v2110
  %vm2136 = vcmp.eq.f32.partialorder %v2135, 8.507059e+37
  %v2137 = vand.u32 %v2110, 2147483648
  %v2138 = vor.u32 1.1754944e-38, %v2137
  %v2139 = vsel %vm2136, %v2138, %v2134
  %v2140 = vmul.f32 1.0, %v2139
  %v2141 = vmul.f32 %v2085, %v1203
  %v2142 = vmul.f32 %v2100, %v1204
  %v2143 = vmul.f32 %v2047, %v2101
  %v2144 = vmul.f32 %v2062, %v2102
  %v2145 = vadd.f32 %v2141, %v2143
  %v2146 = vadd.f32 %v2142, %v2144
  %v2147 = vtanh.pop %v2145
  %v2148 = vtanh.pop %v2146
  %v2149 = vmul.f32 %v2125, %v2147
  %v2150 = vmul.f32 %v2140, %v2148
  %v2151 = vpack.c.bf16 %v2149, %v2149
  %v2152 = vpack.c.bf16 %v2150, %v2150
  %v2155 = vunpack.c.l.b16 %v2151
  %v2156 = vunpack.c.l.b16 %v2152
  %v2157 = vpack.c.b16 %v2156, %v2155
  %v2161 = vunpack.c.l.b16 %v1206
  %v2162 = vunpack.c.l.b16 %v1207
  %v2163 = vpack.c.b16 %v2162, %v2161
  %v2229 = vunpack.c.l.b16 %v1131
  %v2230 = vunpack.c.h.b16 %v1131
  %v2231 = vunpack.c.l.b16 %v1132
  %v2232 = vunpack.c.h.b16 %v1132
  %v2233 = vunpack.c.l.b16 %v1133
  %v2234 = vunpack.c.h.b16 %v1133
  %v2235 = vunpack.c.l.b16 %v1134
  %v2236 = vunpack.c.h.b16 %v1134
  %v2237 = vunpack.c.l.b16 %v1135
  %v2238 = vunpack.c.h.b16 %v1135
  %v2239 = vunpack.c.l.b16 %v1136
  %v2240 = vunpack.c.h.b16 %v1136
  %v2241 = vunpack.c.l.b16 %v1137
  %v2242 = vunpack.c.h.b16 %v1137
  %v2243 = vunpack.c.l.b16 %v1138
  %v2244 = vunpack.c.h.b16 %v1138
  %v2245 = vunpack.c.l.b16 %v1139
  %v2246 = vunpack.c.h.b16 %v1139
  %v2247 = vunpack.c.l.b16 %v1140
  %v2248 = vunpack.c.h.b16 %v1140
  %v2249 = vunpack.c.l.b16 %v1141
  %v2250 = vunpack.c.h.b16 %v1141
  %v2251 = vunpack.c.l.b16 %v1142
  %v2252 = vunpack.c.h.b16 %v1142
  %v2253 = vunpack.c.l.b16 %v1143
  %v2254 = vunpack.c.h.b16 %v1143
  %v2255 = vunpack.c.l.b16 %v1144
  %v2256 = vunpack.c.h.b16 %v1144
  %v2257 = vunpack.c.l.b16 %v1145
  %v2258 = vunpack.c.h.b16 %v1145
  %v2259 = vunpack.c.l.b16 %v1146
  %v2260 = vunpack.c.h.b16 %v1146
  %v2261 = vunpack.c.l.b16 %v1147
  %v2262 = vunpack.c.h.b16 %v1147
  %v2263 = vunpack.c.l.b16 %v1148
  %v2264 = vunpack.c.h.b16 %v1148
  %v2265 = vunpack.c.l.b16 %v1149
  %v2266 = vunpack.c.h.b16 %v1149
  %v2267 = vunpack.c.l.b16 %v1150
  %v2268 = vunpack.c.h.b16 %v1150
  %v2269 = vunpack.c.l.b16 %v1151
  %v2270 = vunpack.c.h.b16 %v1151
  %v2271 = vunpack.c.l.b16 %v1152
  %v2272 = vunpack.c.h.b16 %v1152
  %v2273 = vunpack.c.l.b16 %v1153
  %v2274 = vunpack.c.h.b16 %v1153
  %v2275 = vunpack.c.l.b16 %v1154
  %v2276 = vunpack.c.h.b16 %v1154
  %v2277 = vunpack.c.l.b16 %v1155
  %v2278 = vunpack.c.h.b16 %v1155
  %v2279 = vunpack.c.l.b16 %v1156
  %v2280 = vunpack.c.h.b16 %v1156
  %v2281 = vunpack.c.l.b16 %v1157
  %v2282 = vunpack.c.h.b16 %v1157
  %v2283 = vunpack.c.l.b16 %v1158
  %v2284 = vunpack.c.h.b16 %v1158
  %v2285 = vunpack.c.l.b16 %v1159
  %v2286 = vunpack.c.h.b16 %v1159
  %v2287 = vunpack.c.l.b16 %v1160
  %v2288 = vunpack.c.h.b16 %v1160
  %v2289 = vunpack.c.l.b16 %v1161
  %v2290 = vunpack.c.h.b16 %v1161
  %v2291 = vunpack.c.l.b16 %v1162
  %v2292 = vunpack.c.h.b16 %v1162
  %v2293 = vunpack.c.l.b16 %v1163
  %v2294 = vunpack.c.h.b16 %v1163
  %v2295 = vunpack.c.l.b16 %v1164
  %v2296 = vunpack.c.h.b16 %v1164
  %v2297 = vunpack.c.l.b16 %v1165
  %v2298 = vunpack.c.h.b16 %v1165
  %v2299 = vunpack.c.l.b16 %v1166
  %v2300 = vunpack.c.h.b16 %v1166
  %v2301 = vunpack.c.l.b16 %v1167
  %v2302 = vunpack.c.h.b16 %v1167
  %v2303 = vunpack.c.l.b16 %v1168
  %v2304 = vunpack.c.h.b16 %v1168
  %v2305 = vunpack.c.l.b16 %v1169
  %v2306 = vunpack.c.h.b16 %v1169
  %v2307 = vunpack.c.l.b16 %v1170
  %v2308 = vunpack.c.h.b16 %v1170
  %v2309 = vunpack.c.l.b16 %v1171
  %v2310 = vunpack.c.h.b16 %v1171
  %v2311 = vunpack.c.l.b16 %v1172
  %v2312 = vunpack.c.h.b16 %v1172
  %v2313 = vunpack.c.l.b16 %v1173
  %v2314 = vunpack.c.h.b16 %v1173
  %v2315 = vunpack.c.l.b16 %v1174
  %v2316 = vunpack.c.h.b16 %v1174
  %v2317 = vunpack.c.l.b16 %v1175
  %v2318 = vunpack.c.h.b16 %v1175
  %v2319 = vunpack.c.l.b16 %v1176
  %v2320 = vunpack.c.h.b16 %v1176
  %v2321 = vunpack.c.l.b16 %v1177
  %v2322 = vunpack.c.h.b16 %v1177
  %v2323 = vunpack.c.l.b16 %v1178
  %v2324 = vunpack.c.h.b16 %v1178
  %v2325 = vunpack.c.l.b16 %v1179
  %v2326 = vunpack.c.h.b16 %v1179
  %v2327 = vunpack.c.l.b16 %v1180
  %v2328 = vunpack.c.h.b16 %v1180
  %v2329 = vunpack.c.l.b16 %v1181
  %v2330 = vunpack.c.h.b16 %v1181
  %v2331 = vunpack.c.l.b16 %v1182
  %v2332 = vunpack.c.h.b16 %v1182
  %v2333 = vunpack.c.l.b16 %v1183
  %v2334 = vunpack.c.h.b16 %v1183
  %v2335 = vunpack.c.l.b16 %v1184
  %v2336 = vunpack.c.h.b16 %v1184
  %v2337 = vunpack.c.l.b16 %v1185
  %v2338 = vunpack.c.h.b16 %v1185
  %v2339 = vunpack.c.l.b16 %v1186
  %v2340 = vunpack.c.h.b16 %v1186
  %v2341 = vunpack.c.l.b16 %v1187
  %v2342 = vunpack.c.h.b16 %v1187
  %v2343 = vunpack.c.l.b16 %v1188
  %v2344 = vunpack.c.h.b16 %v1188
  %v2345 = vunpack.c.l.b16 %v1189
  %v2346 = vunpack.c.h.b16 %v1189
  %v2347 = vunpack.c.l.b16 %v1190
  %v2348 = vunpack.c.h.b16 %v1190
  %v2349 = vunpack.c.l.b16 %v1191
  %v2350 = vunpack.c.h.b16 %v1191
  %v2351 = vunpack.c.l.b16 %v1192
  %v2352 = vunpack.c.h.b16 %v1192
  %v2353 = vunpack.c.l.b16 %v1193
  %v2354 = vunpack.c.h.b16 %v1193
  %v2355 = vunpack.c.l.b16 %v1194
  %v2356 = vunpack.c.h.b16 %v1194
  %v2357 = vpack.c.b16 %v2233, %v2229
  %v2358 = vpack.c.b16 %v2234, %v2230
  %v2359 = vpack.c.b16 %v2235, %v2231
  %v2360 = vpack.c.b16 %v2236, %v2232
  %v2361 = vpack.c.b16 %v2241, %v2237
  %v2362 = vpack.c.b16 %v2242, %v2238
  %v2363 = vpack.c.b16 %v2243, %v2239
  %v2364 = vpack.c.b16 %v2244, %v2240
  %v2365 = vpack.c.b16 %v2249, %v2245
  %v2366 = vpack.c.b16 %v2250, %v2246
  %v2367 = vpack.c.b16 %v2251, %v2247
  %v2368 = vpack.c.b16 %v2252, %v2248
  %v2369 = vpack.c.b16 %v2257, %v2253
  %v2370 = vpack.c.b16 %v2258, %v2254
  %v2371 = vpack.c.b16 %v2259, %v2255
  %v2372 = vpack.c.b16 %v2260, %v2256
  %v2373 = vpack.c.b16 %v2265, %v2261
  %v2374 = vpack.c.b16 %v2266, %v2262
  %v2375 = vpack.c.b16 %v2267, %v2263
  %v2376 = vpack.c.b16 %v2268, %v2264
  %v2377 = vpack.c.b16 %v2273, %v2269
  %v2378 = vpack.c.b16 %v2274, %v2270
  %v2379 = vpack.c.b16 %v2275, %v2271
  %v2380 = vpack.c.b16 %v2276, %v2272
  %v2381 = vpack.c.b16 %v2281, %v2277
  %v2382 = vpack.c.b16 %v2282, %v2278
  %v2383 = vpack.c.b16 %v2283, %v2279
  %v2384 = vpack.c.b16 %v2284, %v2280
  %v2385 = vpack.c.b16 %v2289, %v2285
  %v2386 = vpack.c.b16 %v2290, %v2286
  %v2387 = vpack.c.b16 %v2291, %v2287
  %v2388 = vpack.c.b16 %v2292, %v2288
  %v2389 = vpack.c.b16 %v2297, %v2293
  %v2390 = vpack.c.b16 %v2298, %v2294
  %v2391 = vpack.c.b16 %v2299, %v2295
  %v2392 = vpack.c.b16 %v2300, %v2296
  %v2393 = vpack.c.b16 %v2305, %v2301
  %v2394 = vpack.c.b16 %v2306, %v2302
  %v2395 = vpack.c.b16 %v2307, %v2303
  %v2396 = vpack.c.b16 %v2308, %v2304
  %v2397 = vpack.c.b16 %v2313, %v2309
  %v2398 = vpack.c.b16 %v2314, %v2310
  %v2399 = vpack.c.b16 %v2315, %v2311
  %v2400 = vpack.c.b16 %v2316, %v2312
  %v2401 = vpack.c.b16 %v2321, %v2317
  %v2402 = vpack.c.b16 %v2322, %v2318
  %v2403 = vpack.c.b16 %v2323, %v2319
  %v2404 = vpack.c.b16 %v2324, %v2320
  %v2405 = vpack.c.b16 %v2329, %v2325
  %v2406 = vpack.c.b16 %v2330, %v2326
  %v2407 = vpack.c.b16 %v2331, %v2327
  %v2408 = vpack.c.b16 %v2332, %v2328
  %v2409 = vpack.c.b16 %v2337, %v2333
  %v2410 = vpack.c.b16 %v2338, %v2334
  %v2411 = vpack.c.b16 %v2339, %v2335
  %v2412 = vpack.c.b16 %v2340, %v2336
  %v2413 = vpack.c.b16 %v2345, %v2341
  %v2414 = vpack.c.b16 %v2346, %v2342
  %v2415 = vpack.c.b16 %v2347, %v2343
  %v2416 = vpack.c.b16 %v2348, %v2344
  %v2417 = vpack.c.b16 %v2353, %v2349
  %v2418 = vpack.c.b16 %v2354, %v2350
  %v2419 = vpack.c.b16 %v2355, %v2351
  %v2420 = vpack.c.b16 %v2356, %v2352
  %2485 = vmatpush.bf16.msra.mxu0 %v2385
  %2486 = vmatpush.bf16.msra.mxu0 %v2381
  %2487 = vmatpush.bf16.msra.mxu0 %v2377
  %2488 = vmatpush.bf16.msra.mxu0 %v2373
  %2489 = vmatpush.bf16.msra.mxu0 %v2369
  %2490 = vmatpush.bf16.msra.mxu0 %v2365
  %2491 = vmatpush.bf16.msra.mxu0 %v2361
  %2492 = vmatpush.bf16.msra.mxu0 %v2357
  %2493 = vmatmul.bf16.gmra.mxu0 %v2157
  %v2494 = vpop.f32.mrf.mxu0
  %v2495 = vadd.f32 %v1027, %v2494
  %v2496 = vpop.f32.mrf.mxu0
  %v2497 = vadd.f32 %v1027, %v2496
  %2498 = vdwg.mxu0
  %2499 = vmatpush.bf16.msra.mxu0 %v2417
  %2500 = vmatpush.bf16.msra.mxu0 %v2413
  %2501 = vmatpush.bf16.msra.mxu0 %v2409
  %2502 = vmatpush.bf16.msra.mxu0 %v2405
  %2503 = vmatpush.bf16.msra.mxu0 %v2401
  %2504 = vmatpush.bf16.msra.mxu0 %v2397
  %2505 = vmatpush.bf16.msra.mxu0 %v2393
  %2506 = vmatpush.bf16.msra.mxu0 %v2389
  %2507 = vmatmul.bf16.gmra.mxu0 %v2163
  %v2508 = vpop.f32.mrf.mxu0
  %v2509 = vadd.f32 %v2495, %v2508
  %v2510 = vpop.f32.mrf.mxu0
  %v2511 = vadd.f32 %v2497, %v2510
  %2512 = vdwg.mxu0
  %2513 = vmatpush.bf16.msra.mxu0 %v2386
  %2514 = vmatpush.bf16.msra.mxu0 %v2382
  %2515 = vmatpush.bf16.msra.mxu0 %v2378
  %2516 = vmatpush.bf16.msra.mxu0 %v2374
  %2517 = vmatpush.bf16.msra.mxu0 %v2370
  %2518 = vmatpush.bf16.msra.mxu0 %v2366
  %2519 = vmatpush.bf16.msra.mxu0 %v2362
  %2520 = vmatpush.bf16.msra.mxu0 %v2358
  %2521 = vmatmul.bf16.gmra.mxu0 %v2157
  %v2522 = vpop.f32.mrf.mxu0
  %v2523 = vadd.f32 %v1028, %v2522
  %v2524 = vpop.f32.mrf.mxu0
  %v2525 = vadd.f32 %v1028, %v2524
  %2526 = vdwg.mxu0
  %2527 = vmatpush.bf16.msra.mxu0 %v2418
  %2528 = vmatpush.bf16.msra.mxu0 %v2414
  %2529 = vmatpush.bf16.msra.mxu0 %v2410
  %2530 = vmatpush.bf16.msra.mxu0 %v2406
  %2531 = vmatpush.bf16.msra.mxu0 %v2402
  %2532 = vmatpush.bf16.msra.mxu0 %v2398
  %2533 = vmatpush.bf16.msra.mxu0 %v2394
  %2534 = vmatpush.bf16.msra.mxu0 %v2390
  %2535 = vmatmul.bf16.gmra.mxu0 %v2163
  %v2536 = vpop.f32.mrf.mxu0
  %v2537 = vadd.f32 %v2523, %v2536
  %v2538 = vpop.f32.mrf.mxu0
  %v2539 = vadd.f32 %v2525, %v2538
  %2540 = vdwg.mxu0
  %2541 = vmatpush.bf16.msra.mxu0 %v2387
  %2542 = vmatpush.bf16.msra.mxu0 %v2383
  %2543 = vmatpush.bf16.msra.mxu0 %v2379
  %2544 = vmatpush.bf16.msra.mxu0 %v2375
  %2545 = vmatpush.bf16.msra.mxu0 %v2371
  %2546 = vmatpush.bf16.msra.mxu0 %v2367
  %2547 = vmatpush.bf16.msra.mxu0 %v2363
  %2548 = vmatpush.bf16.msra.mxu0 %v2359
  %2549 = vmatmul.bf16.gmra.mxu0 %v2157
  %v2550 = vpop.f32.mrf.mxu0
  %v2551 = vadd.f32 %v1029, %v2550
  %v2552 = vpop.f32.mrf.mxu0
  %v2553 = vadd.f32 %v1029, %v2552
  %2554 = vdwg.mxu0
  %2555 = vmatpush.bf16.msra.mxu0 %v2419
  %2556 = vmatpush.bf16.msra.mxu0 %v2415
  %2557 = vmatpush.bf16.msra.mxu0 %v2411
  %2558 = vmatpush.bf16.msra.mxu0 %v2407
  %2559 = vmatpush.bf16.msra.mxu0 %v2403
  %2560 = vmatpush.bf16.msra.mxu0 %v2399
  %2561 = vmatpush.bf16.msra.mxu0 %v2395
  %2562 = vmatpush.bf16.msra.mxu0 %v2391
  %2563 = vmatmul.bf16.gmra.mxu0 %v2163
  %v2564 = vpop.f32.mrf.mxu0
  %v2565 = vadd.f32 %v2551, %v2564
  %v2566 = vpop.f32.mrf.mxu0
  %v2567 = vadd.f32 %v2553, %v2566
  %2568 = vdwg.mxu0
  %2569 = vmatpush.bf16.msra.mxu0 %v2388
  %2570 = vmatpush.bf16.msra.mxu0 %v2384
  %2571 = vmatpush.bf16.msra.mxu0 %v2380
  %2572 = vmatpush.bf16.msra.mxu0 %v2376
  %2573 = vmatpush.bf16.msra.mxu0 %v2372
  %2574 = vmatpush.bf16.msra.mxu0 %v2368
  %2575 = vmatpush.bf16.msra.mxu0 %v2364
  %2576 = vmatpush.bf16.msra.mxu0 %v2360
  %2577 = vmatmul.bf16.gmra.mxu0 %v2157
  %v2578 = vpop.f32.mrf.mxu0
  %v2579 = vadd.f32 %v1030, %v2578
  %v2580 = vpop.f32.mrf.mxu0
  %v2581 = vadd.f32 %v1030, %v2580
  %2582 = vdwg.mxu0
  %2583 = vmatpush.bf16.msra.mxu0 %v2420
  %2584 = vmatpush.bf16.msra.mxu0 %v2416
  %2585 = vmatpush.bf16.msra.mxu0 %v2412
  %2586 = vmatpush.bf16.msra.mxu0 %v2408
  %2587 = vmatpush.bf16.msra.mxu0 %v2404
  %2588 = vmatpush.bf16.msra.mxu0 %v2400
  %2589 = vmatpush.bf16.msra.mxu0 %v2396
  %2590 = vmatpush.bf16.msra.mxu0 %v2392
  %2591 = vmatmul.bf16.gmra.mxu0 %v2163
  %v2592 = vpop.f32.mrf.mxu0
  %v2593 = vadd.f32 %v2579, %v2592
  %v2594 = vpop.f32.mrf.mxu0
  %v2595 = vadd.f32 %v2581, %v2594
  %2596 = vdwg.mxu0
  %v2597 = vxor.u32 %v2509, 2147483648
  %v2598 = vxor.u32 %v2511, 2147483648
  %v2599 = vmul.f32 %v2597, 1.442695
  %v2600 = vpow.pop %v2599
  %v2601 = vmul.f32 %v2598, 1.442695
  %v2602 = vpow.pop %v2601
  %v2603 = vadd.f32 %v2600, 1.0
  %v2604 = vadd.f32 %v2602, 1.0
  %v2605 = vrcp.pop %v2603
  %v2606 = vmul.f32 %v2603, %v2605
  %v2607 = vsub.f32 1.0, %v2606
  %v2608 = vmul.f32 %v2605, %v2607
  %v2609 = vadd.f32 %v2605, %v2608
  %vm2610 = vweird.f32 %v2603
  %vm2611 = vweird.f32 %v2605
  %vm2612 = vmor %vm2610, %vm2611
  %v2613 = vsel %vm2612, %v2605, %v2609
  %v2614 = vand.u32 2147483647, %v2603
  %vm2615 = vcmp.eq.f32.partialorder %v2614, 8.507059e+37
  %v2616 = vand.u32 %v2603, 2147483648
  %v2617 = vor.u32 1.1754944e-38, %v2616
  %v2618 = vsel %vm2615, %v2617, %v2613
  %v2619 = vmul.f32 1.0, %v2618
  %v2620 = vrcp.pop %v2604
  %v2621 = vmul.f32 %v2604, %v2620
  %v2622 = vsub.f32 1.0, %v2621
  %v2623 = vmul.f32 %v2620, %v2622
  %v2624 = vadd.f32 %v2620, %v2623
  %vm2625 = vweird.f32 %v2604
  %vm2626 = vweird.f32 %v2620
  %vm2627 = vmor %vm2625, %vm2626
  %v2628 = vsel %vm2627, %v2620, %v2624
  %v2629 = vand.u32 2147483647, %v2604
  %vm2630 = vcmp.eq.f32.partialorder %v2629, 8.507059e+37
  %v2631 = vand.u32 %v2604, 2147483648
  %v2632 = vor.u32 1.1754944e-38, %v2631
  %v2633 = vsel %vm2630, %v2632, %v2628
  %v2634 = vmul.f32 1.0, %v2633
  %v2635 = vxor.u32 %v2537, 2147483648
  %v2636 = vxor.u32 %v2539, 2147483648
  %v2637 = vmul.f32 %v2635, 1.442695
  %v2638 = vpow.pop %v2637
  %v2639 = vmul.f32 %v2636, 1.442695
  %v2640 = vpow.pop %v2639
  %v2641 = vadd.f32 %v2638, 1.0
  %v2642 = vadd.f32 %v2640, 1.0
  %v2643 = vrcp.pop %v2641
  %v2644 = vmul.f32 %v2641, %v2643
  %v2645 = vsub.f32 1.0, %v2644
  %v2646 = vmul.f32 %v2643, %v2645
  %v2647 = vadd.f32 %v2643, %v2646
  %vm2648 = vweird.f32 %v2641
  %vm2649 = vweird.f32 %v2643
  %vm2650 = vmor %vm2648, %vm2649
  %v2651 = vsel %vm2650, %v2643, %v2647
  %v2652 = vand.u32 2147483647, %v2641
  %vm2653 = vcmp.eq.f32.partialorder %v2652, 8.507059e+37
  %v2654 = vand.u32 %v2641, 2147483648
  %v2655 = vor.u32 1.1754944e-38, %v2654
  %v2656 = vsel %vm2653, %v2655, %v2651
  %v2657 = vmul.f32 1.0, %v2656
  %v2658 = vrcp.pop %v2642
  %v2659 = vmul.f32 %v2642, %v2658
  %v2660 = vsub.f32 1.0, %v2659
  %v2661 = vmul.f32 %v2658, %v2660
  %v2662 = vadd.f32 %v2658, %v2661
  %vm2663 = vweird.f32 %v2642
  %vm2664 = vweird.f32 %v2658
  %vm2665 = vmor %vm2663, %vm2664
  %v2666 = vsel %vm2665, %v2658, %v2662
  %v2667 = vand.u32 2147483647, %v2642
  %vm2668 = vcmp.eq.f32.partialorder %v2667, 8.507059e+37
  %v2669 = vand.u32 %v2642, 2147483648
  %v2670 = vor.u32 1.1754944e-38, %v2669
  %v2671 = vsel %vm2668, %v2670, %v2666
  %v2672 = vmul.f32 1.0, %v2671
  %v2673 = vtanh.pop %v2565
  %v2674 = vtanh.pop %v2567
  %v2675 = vxor.u32 %v2593, 2147483648
  %v2676 = vxor.u32 %v2595, 2147483648
  %v2677 = vmul.f32 %v2675, 1.442695
  %v2678 = vpow.pop %v2677
  %v2679 = vmul.f32 %v2676, 1.442695
  %v2680 = vpow.pop %v2679
  %v2681 = vadd.f32 %v2678, 1.0
  %v2682 = vadd.f32 %v2680, 1.0
  %v2683 = vrcp.pop %v2681
  %v2684 = vmul.f32 %v2681, %v2683
  %v2685 = vsub.f32 1.0, %v2684
  %v2686 = vmul.f32 %v2683, %v2685
  %v2687 = vadd.f32 %v2683, %v2686
  %vm2688 = vweird.f32 %v2681
  %vm2689 = vweird.f32 %v2683
  %vm2690 = vmor %vm2688, %vm2689
  %v2691 = vsel %vm2690, %v2683, %v2687
  %v2692 = vand.u32 2147483647, %v2681
  %vm2693 = vcmp.eq.f32.partialorder %v2692, 8.507059e+37
  %v2694 = vand.u32 %v2681, 2147483648
  %v2695 = vor.u32 1.1754944e-38, %v2694
  %v2696 = vsel %vm2693, %v2695, %v2691
  %v2697 = vmul.f32 1.0, %v2696
  %v2698 = vrcp.pop %v2682
  %v2699 = vmul.f32 %v2682, %v2698
  %v2700 = vsub.f32 1.0, %v2699
  %v2701 = vmul.f32 %v2698, %v2700
  %v2702 = vadd.f32 %v2698, %v2701
  %vm2703 = vweird.f32 %v2682
  %vm2704 = vweird.f32 %v2698
  %vm2705 = vmor %vm2703, %vm2704
  %v2706 = vsel %vm2705, %v2698, %v2702
  %v2707 = vand.u32 2147483647, %v2682
  %vm2708 = vcmp.eq.f32.partialorder %v2707, 8.507059e+37
  %v2709 = vand.u32 %v2682, 2147483648
  %v2710 = vor.u32 1.1754944e-38, %v2709
  %v2711 = vsel %vm2708, %v2710, %v2706
  %v2712 = vmul.f32 1.0, %v2711
  %v2713 = vmul.f32 %v2657, %v1209
  %v2714 = vmul.f32 %v2672, %v1210
  %v2715 = vmul.f32 %v2619, %v2673
  %v2716 = vmul.f32 %v2634, %v2674
  %v2717 = vadd.f32 %v2713, %v2715
  %v2718 = vadd.f32 %v2714, %v2716
  %v2719 = vtanh.pop %v2717
  %v2720 = vtanh.pop %v2718
  %v2721 = vmul.f32 %v2697, %v2719
  %v2722 = vmul.f32 %v2712, %v2720
  %v2723 = vpack.c.bf16 %v2721, %v2721
  %v2724 = vpack.c.bf16 %v2722, %v2722
  %2725 = vst [vmem:[#allocation5] sm:$0xf] %v2723
  %2726 = vst [vmem:[#allocation5 + $0x4] sm:$0xf] %v2724
  %s2727 = scalar_lea.vmem [#allocation4], 32
  %v2728 = vld [vmem:[%s2727] sm:$0xff]
  %v2729 = vld [vmem:[%s2727 + $0x8] sm:$0xff]
  %v2730 = vld [vmem:[%s2727 + $0x10] sm:$0xff]
  %v2731 = vld [vmem:[%s2727 + $0x18] sm:$0xff]
  %2732 = vmatpush.bf16.msra.mxu0 %v1345
  %2733 = vmatpush.bf16.msra.mxu0 %v1341
  %2734 = vmatpush.bf16.msra.mxu0 %v1337
  %2735 = vmatpush.bf16.msra.mxu0 %v1333
  %2736 = vmatpush.bf16.msra.mxu0 %v1329
  %2737 = vmatpush.bf16.msra.mxu0 %v1325
  %2738 = vmatpush.bf16.msra.mxu0 %v1321
  %2739 = vmatpush.bf16.msra.mxu0 %v1317
  %2740 = vmatmul.bf16.gmra.mxu0 %v1585
  %v2741 = vpop.f32.mrf.mxu0
  %v2742 = vadd.f32 0.0, %v2741
  %v2743 = vpop.f32.mrf.mxu0
  %v2744 = vadd.f32 0.0, %v2743
  %2745 = vdwg.mxu0
  %2746 = vmatpush.bf16.msra.mxu0 %v1346
  %2747 = vmatpush.bf16.msra.mxu0 %v1342
  %2748 = vmatpush.bf16.msra.mxu0 %v1338
  %2749 = vmatpush.bf16.msra.mxu0 %v1334
  %2750 = vmatpush.bf16.msra.mxu0 %v1330
  %2751 = vmatpush.bf16.msra.mxu0 %v1326
  %2752 = vmatpush.bf16.msra.mxu0 %v1322
  %2753 = vmatpush.bf16.msra.mxu0 %v1318
  %2754 = vmatmul.bf16.gmra.mxu0 %v1585
  %v2755 = vpop.f32.mrf.mxu0
  %v2756 = vadd.f32 0.0, %v2755
  %v2757 = vpop.f32.mrf.mxu0
  %v2758 = vadd.f32 0.0, %v2757
  %2759 = vdwg.mxu0
  %2760 = vmatpush.bf16.msra.mxu0 %v1347
  %2761 = vmatpush.bf16.msra.mxu0 %v1343
  %2762 = vmatpush.bf16.msra.mxu0 %v1339
  %2763 = vmatpush.bf16.msra.mxu0 %v1335
  %2764 = vmatpush.bf16.msra.mxu0 %v1331
  %2765 = vmatpush.bf16.msra.mxu0 %v1327
  %2766 = vmatpush.bf16.msra.mxu0 %v1323
  %2767 = vmatpush.bf16.msra.mxu0 %v1319
  %2768 = vmatmul.bf16.gmra.mxu0 %v1585
  %v2769 = vpop.f32.mrf.mxu0
  %v2770 = vadd.f32 0.0, %v2769
  %v2771 = vpop.f32.mrf.mxu0
  %v2772 = vadd.f32 0.0, %v2771
  %2773 = vdwg.mxu0
  %2774 = vmatpush.bf16.msra.mxu0 %v1348
  %2775 = vmatpush.bf16.msra.mxu0 %v1344
  %2776 = vmatpush.bf16.msra.mxu0 %v1340
  %2777 = vmatpush.bf16.msra.mxu0 %v1336
  %2778 = vmatpush.bf16.msra.mxu0 %v1332
  %2779 = vmatpush.bf16.msra.mxu0 %v1328
  %2780 = vmatpush.bf16.msra.mxu0 %v1324
  %2781 = vmatpush.bf16.msra.mxu0 %v1320
  %2782 = vmatmul.bf16.gmra.mxu0 %v1585
  %v2783 = vpop.f32.mrf.mxu0
  %v2784 = vadd.f32 0.0, %v2783
  %v2785 = vpop.f32.mrf.mxu0
  %v2786 = vadd.f32 0.0, %v2785
  %2787 = vdwg.mxu0
  %v2788 = vunpack.c.l.bf16 %v2728
  %v2789 = vunpack.c.h.bf16 %v2728
  %v2790 = vunpack.c.l.bf16 %v2729
  %v2791 = vunpack.c.h.bf16 %v2729
  %v2792 = vunpack.c.l.bf16 %v2730
  %v2793 = vunpack.c.h.bf16 %v2730
  %v2794 = vunpack.c.l.bf16 %v2731
  %v2795 = vunpack.c.h.bf16 %v2731
  %v2796 = vadd.f32 %v2788, %v2742
  %v2797 = vadd.f32 %v2789, %v2756
  %v2798 = vadd.f32 %v2790, %v2770
  %v2799 = vadd.f32 %v2791, %v2784
  %v2800 = vadd.f32 %v2792, %v2744
  %v2801 = vadd.f32 %v2793, %v2758
  %v2802 = vadd.f32 %v2794, %v2772
  %v2803 = vadd.f32 %v2795, %v2786
  %v2804 = vxor.u32 %v2796, 2147483648
  %v2805 = vxor.u32 %v2800, 2147483648
  %v2806 = vmul.f32 %v2804, 1.442695
  %v2807 = vpow.pop %v2806
  %v2808 = vmul.f32 %v2805, 1.442695
  %v2809 = vpow.pop %v2808
  %v2810 = vadd.f32 %v2807, 1.0
  %v2811 = vadd.f32 %v2809, 1.0
  %v2812 = vrcp.pop %v2810
  %v2813 = vmul.f32 %v2810, %v2812
  %v2814 = vsub.f32 1.0, %v2813
  %v2815 = vmul.f32 %v2812, %v2814
  %v2816 = vadd.f32 %v2812, %v2815
  %vm2817 = vweird.f32 %v2810
  %vm2818 = vweird.f32 %v2812
  %vm2819 = vmor %vm2817, %vm2818
  %v2820 = vsel %vm2819, %v2812, %v2816
  %v2821 = vand.u32 2147483647, %v2810
  %vm2822 = vcmp.eq.f32.partialorder %v2821, 8.507059e+37
  %v2823 = vand.u32 %v2810, 2147483648
  %v2824 = vor.u32 1.1754944e-38, %v2823
  %v2825 = vsel %vm2822, %v2824, %v2820
  %v2826 = vmul.f32 1.0, %v2825
  %v2827 = vrcp.pop %v2811
  %v2828 = vmul.f32 %v2811, %v2827
  %v2829 = vsub.f32 1.0, %v2828
  %v2830 = vmul.f32 %v2827, %v2829
  %v2831 = vadd.f32 %v2827, %v2830
  %vm2832 = vweird.f32 %v2811
  %vm2833 = vweird.f32 %v2827
  %vm2834 = vmor %vm2832, %vm2833
  %v2835 = vsel %vm2834, %v2827, %v2831
  %v2836 = vand.u32 2147483647, %v2811
  %vm2837 = vcmp.eq.f32.partialorder %v2836, 8.507059e+37
  %v2838 = vand.u32 %v2811, 2147483648
  %v2839 = vor.u32 1.1754944e-38, %v2838
  %v2840 = vsel %vm2837, %v2839, %v2835
  %v2841 = vmul.f32 1.0, %v2840
  %v2842 = vxor.u32 %v2797, 2147483648
  %v2843 = vxor.u32 %v2801, 2147483648
  %v2844 = vmul.f32 %v2842, 1.442695
  %v2845 = vpow.pop %v2844
  %v2846 = vmul.f32 %v2843, 1.442695
  %v2847 = vpow.pop %v2846
  %v2848 = vadd.f32 %v2845, 1.0
  %v2849 = vadd.f32 %v2847, 1.0
  %v2850 = vrcp.pop %v2848
  %v2851 = vmul.f32 %v2848, %v2850
  %v2852 = vsub.f32 1.0, %v2851
  %v2853 = vmul.f32 %v2850, %v2852
  %v2854 = vadd.f32 %v2850, %v2853
  %vm2855 = vweird.f32 %v2848
  %vm2856 = vweird.f32 %v2850
  %vm2857 = vmor %vm2855, %vm2856
  %v2858 = vsel %vm2857, %v2850, %v2854
  %v2859 = vand.u32 2147483647, %v2848
  %vm2860 = vcmp.eq.f32.partialorder %v2859, 8.507059e+37
  %v2861 = vand.u32 %v2848, 2147483648
  %v2862 = vor.u32 1.1754944e-38, %v2861
  %v2863 = vsel %vm2860, %v2862, %v2858
  %v2864 = vmul.f32 1.0, %v2863
  %v2865 = vrcp.pop %v2849
  %v2866 = vmul.f32 %v2849, %v2865
  %v2867 = vsub.f32 1.0, %v2866
  %v2868 = vmul.f32 %v2865, %v2867
  %v2869 = vadd.f32 %v2865, %v2868
  %vm2870 = vweird.f32 %v2849
  %vm2871 = vweird.f32 %v2865
  %vm2872 = vmor %vm2870, %vm2871
  %v2873 = vsel %vm2872, %v2865, %v2869
  %v2874 = vand.u32 2147483647, %v2849
  %vm2875 = vcmp.eq.f32.partialorder %v2874, 8.507059e+37
  %v2876 = vand.u32 %v2849, 2147483648
  %v2877 = vor.u32 1.1754944e-38, %v2876
  %v2878 = vsel %vm2875, %v2877, %v2873
  %v2879 = vmul.f32 1.0, %v2878
  %v2880 = vtanh.pop %v2798
  %v2881 = vtanh.pop %v2802
  %v2882 = vxor.u32 %v2799, 2147483648
  %v2883 = vxor.u32 %v2803, 2147483648
  %v2884 = vmul.f32 %v2882, 1.442695
  %v2885 = vpow.pop %v2884
  %v2886 = vmul.f32 %v2883, 1.442695
  %v2887 = vpow.pop %v2886
  %v2888 = vadd.f32 %v2885, 1.0
  %v2889 = vadd.f32 %v2887, 1.0
  %v2890 = vrcp.pop %v2888
  %v2891 = vmul.f32 %v2888, %v2890
  %v2892 = vsub.f32 1.0, %v2891
  %v2893 = vmul.f32 %v2890, %v2892
  %v2894 = vadd.f32 %v2890, %v2893
  %vm2895 = vweird.f32 %v2888
  %vm2896 = vweird.f32 %v2890
  %vm2897 = vmor %vm2895, %vm2896
  %v2898 = vsel %vm2897, %v2890, %v2894
  %v2899 = vand.u32 2147483647, %v2888
  %vm2900 = vcmp.eq.f32.partialorder %v2899, 8.507059e+37
  %v2901 = vand.u32 %v2888, 2147483648
  %v2902 = vor.u32 1.1754944e-38, %v2901
  %v2903 = vsel %vm2900, %v2902, %v2898
  %v2904 = vmul.f32 1.0, %v2903
  %v2905 = vrcp.pop %v2889
  %v2906 = vmul.f32 %v2889, %v2905
  %v2907 = vsub.f32 1.0, %v2906
  %v2908 = vmul.f32 %v2905, %v2907
  %v2909 = vadd.f32 %v2905, %v2908
  %vm2910 = vweird.f32 %v2889
  %vm2911 = vweird.f32 %v2905
  %vm2912 = vmor %vm2910, %vm2911
  %v2913 = vsel %vm2912, %v2905, %v2909
  %v2914 = vand.u32 2147483647, %v2889
  %vm2915 = vcmp.eq.f32.partialorder %v2914, 8.507059e+37
  %v2916 = vand.u32 %v2889, 2147483648
  %v2917 = vor.u32 1.1754944e-38, %v2916
  %v2918 = vsel %vm2915, %v2917, %v2913
  %v2919 = vmul.f32 1.0, %v2918
  %v2920 = vmul.f32 %v2864, %v1573
  %v2921 = vmul.f32 %v2879, %v1574
  %v2922 = vmul.f32 %v2826, %v2880
  %v2923 = vmul.f32 %v2841, %v2881
  %v2924 = vadd.f32 %v2920, %v2922
  %v2925 = vadd.f32 %v2921, %v2923
  %v2926 = vtanh.pop %v2924
  %v2927 = vtanh.pop %v2925
  %v2928 = vmul.f32 %v2904, %v2926
  %v2929 = vmul.f32 %v2919, %v2927
  %v2930 = vpack.c.bf16 %v2928, %v2928
  %v2931 = vpack.c.bf16 %v2929, %v2929
  %v2934 = vunpack.c.l.b16 %v2930
  %v2935 = vunpack.c.l.b16 %v2931
  %v2936 = vpack.c.b16 %v2935, %v2934
  %2938 = vmatpush.bf16.msra.mxu0 %v1813
  %2939 = vmatpush.bf16.msra.mxu0 %v1809
  %2940 = vmatpush.bf16.msra.mxu0 %v1805
  %2941 = vmatpush.bf16.msra.mxu0 %v1801
  %2942 = vmatpush.bf16.msra.mxu0 %v1797
  %2943 = vmatpush.bf16.msra.mxu0 %v1793
  %2944 = vmatpush.bf16.msra.mxu0 %v1789
  %2945 = vmatpush.bf16.msra.mxu0 %v1785
  %2946 = vmatmul.bf16.gmra.mxu0 %v2936
  %v2947 = vpop.f32.mrf.mxu0
  %v2948 = vadd.f32 %v1017, %v2947
  %v2949 = vpop.f32.mrf.mxu0
  %v2950 = vadd.f32 %v1017, %v2949
  %2951 = vdwg.mxu0
  %2952 = vmatpush.bf16.msra.mxu0 %v1845
  %2953 = vmatpush.bf16.msra.mxu0 %v1841
  %2954 = vmatpush.bf16.msra.mxu0 %v1837
  %2955 = vmatpush.bf16.msra.mxu0 %v1833
  %2956 = vmatpush.bf16.msra.mxu0 %v1829
  %2957 = vmatpush.bf16.msra.mxu0 %v1825
  %2958 = vmatpush.bf16.msra.mxu0 %v1821
  %2959 = vmatpush.bf16.msra.mxu0 %v1817
  %2960 = vmatmul.bf16.gmra.mxu0 %v2157
  %v2961 = vpop.f32.mrf.mxu0
  %v2962 = vadd.f32 %v2948, %v2961
  %v2963 = vpop.f32.mrf.mxu0
  %v2964 = vadd.f32 %v2950, %v2963
  %2965 = vdwg.mxu0
  %2966 = vmatpush.bf16.msra.mxu0 %v1814
  %2967 = vmatpush.bf16.msra.mxu0 %v1810
  %2968 = vmatpush.bf16.msra.mxu0 %v1806
  %2969 = vmatpush.bf16.msra.mxu0 %v1802
  %2970 = vmatpush.bf16.msra.mxu0 %v1798
  %2971 = vmatpush.bf16.msra.mxu0 %v1794
  %2972 = vmatpush.bf16.msra.mxu0 %v1790
  %2973 = vmatpush.bf16.msra.mxu0 %v1786
  %2974 = vmatmul.bf16.gmra.mxu0 %v2936
  %v2975 = vpop.f32.mrf.mxu0
  %v2976 = vadd.f32 %v1018, %v2975
  %v2977 = vpop.f32.mrf.mxu0
  %v2978 = vadd.f32 %v1018, %v2977
  %2979 = vdwg.mxu0
  %2980 = vmatpush.bf16.msra.mxu0 %v1846
  %2981 = vmatpush.bf16.msra.mxu0 %v1842
  %2982 = vmatpush.bf16.msra.mxu0 %v1838
  %2983 = vmatpush.bf16.msra.mxu0 %v1834
  %2984 = vmatpush.bf16.msra.mxu0 %v1830
  %2985 = vmatpush.bf16.msra.mxu0 %v1826
  %2986 = vmatpush.bf16.msra.mxu0 %v1822
  %2987 = vmatpush.bf16.msra.mxu0 %v1818
  %2988 = vmatmul.bf16.gmra.mxu0 %v2157
  %v2989 = vpop.f32.mrf.mxu0
  %v2990 = vadd.f32 %v2976, %v2989
  %v2991 = vpop.f32.mrf.mxu0
  %v2992 = vadd.f32 %v2978, %v2991
  %2993 = vdwg.mxu0
  %2994 = vmatpush.bf16.msra.mxu0 %v1815
  %2995 = vmatpush.bf16.msra.mxu0 %v1811
  %2996 = vmatpush.bf16.msra.mxu0 %v1807
  %2997 = vmatpush.bf16.msra.mxu0 %v1803
  %2998 = vmatpush.bf16.msra.mxu0 %v1799
  %2999 = vmatpush.bf16.msra.mxu0 %v1795
  %3000 = vmatpush.bf16.msra.mxu0 %v1791
  %3001 = vmatpush.bf16.msra.mxu0 %v1787
  %3002 = vmatmul.bf16.gmra.mxu0 %v2936
  %v3003 = vpop.f32.mrf.mxu0
  %v3004 = vadd.f32 %v1019, %v3003
  %v3005 = vpop.f32.mrf.mxu0
  %v3006 = vadd.f32 %v1019, %v3005
  %3007 = vdwg.mxu0
  %3008 = vmatpush.bf16.msra.mxu0 %v1847
  %3009 = vmatpush.bf16.msra.mxu0 %v1843
  %3010 = vmatpush.bf16.msra.mxu0 %v1839
  %3011 = vmatpush.bf16.msra.mxu0 %v1835
  %3012 = vmatpush.bf16.msra.mxu0 %v1831
  %3013 = vmatpush.bf16.msra.mxu0 %v1827
  %3014 = vmatpush.bf16.msra.mxu0 %v1823
  %3015 = vmatpush.bf16.msra.mxu0 %v1819
  %3016 = vmatmul.bf16.gmra.mxu0 %v2157
  %v3017 = vpop.f32.mrf.mxu0
  %v3018 = vadd.f32 %v3004, %v3017
  %v3019 = vpop.f32.mrf.mxu0
  %v3020 = vadd.f32 %v3006, %v3019
  %3021 = vdwg.mxu0
  %3022 = vmatpush.bf16.msra.mxu0 %v1816
  %3023 = vmatpush.bf16.msra.mxu0 %v1812
  %3024 = vmatpush.bf16.msra.mxu0 %v1808
  %3025 = vmatpush.bf16.msra.mxu0 %v1804
  %3026 = vmatpush.bf16.msra.mxu0 %v1800
  %3027 = vmatpush.bf16.msra.mxu0 %v1796
  %3028 = vmatpush.bf16.msra.mxu0 %v1792
  %3029 = vmatpush.bf16.msra.mxu0 %v1788
  %3030 = vmatmul.bf16.gmra.mxu0 %v2936
  %v3031 = vpop.f32.mrf.mxu0
  %v3032 = vadd.f32 %v1020, %v3031
  %v3033 = vpop.f32.mrf.mxu0
  %v3034 = vadd.f32 %v1020, %v3033
  %3035 = vdwg.mxu0
  %3036 = vmatpush.bf16.msra.mxu0 %v1848
  %3037 = vmatpush.bf16.msra.mxu0 %v1844
  %3038 = vmatpush.bf16.msra.mxu0 %v1840
  %3039 = vmatpush.bf16.msra.mxu0 %v1836
  %3040 = vmatpush.bf16.msra.mxu0 %v1832
  %3041 = vmatpush.bf16.msra.mxu0 %v1828
  %3042 = vmatpush.bf16.msra.mxu0 %v1824
  %3043 = vmatpush.bf16.msra.mxu0 %v1820
  %3044 = vmatmul.bf16.gmra.mxu0 %v2157
  %v3045 = vpop.f32.mrf.mxu0
  %v3046 = vadd.f32 %v3032, %v3045
  %v3047 = vpop.f32.mrf.mxu0
  %v3048 = vadd.f32 %v3034, %v3047
  %3049 = vdwg.mxu0
  %v3050 = vxor.u32 %v2962, 2147483648
  %v3051 = vxor.u32 %v2964, 2147483648
  %v3052 = vmul.f32 %v3050, 1.442695
  %v3053 = vpow.pop %v3052
  %v3054 = vmul.f32 %v3051, 1.442695
  %v3055 = vpow.pop %v3054
  %v3056 = vadd.f32 %v3053, 1.0
  %v3057 = vadd.f32 %v3055, 1.0
  %v3058 = vrcp.pop %v3056
  %v3059 = vmul.f32 %v3056, %v3058
  %v3060 = vsub.f32 1.0, %v3059
  %v3061 = vmul.f32 %v3058, %v3060
  %v3062 = vadd.f32 %v3058, %v3061
  %vm3063 = vweird.f32 %v3056
  %vm3064 = vweird.f32 %v3058
  %vm3065 = vmor %vm3063, %vm3064
  %v3066 = vsel %vm3065, %v3058, %v3062
  %v3067 = vand.u32 2147483647, %v3056
  %vm3068 = vcmp.eq.f32.partialorder %v3067, 8.507059e+37
  %v3069 = vand.u32 %v3056, 2147483648
  %v3070 = vor.u32 1.1754944e-38, %v3069
  %v3071 = vsel %vm3068, %v3070, %v3066
  %v3072 = vmul.f32 1.0, %v3071
  %v3073 = vrcp.pop %v3057
  %v3074 = vmul.f32 %v3057, %v3073
  %v3075 = vsub.f32 1.0, %v3074
  %v3076 = vmul.f32 %v3073, %v3075
  %v3077 = vadd.f32 %v3073, %v3076
  %vm3078 = vweird.f32 %v3057
  %vm3079 = vweird.f32 %v3073
  %vm3080 = vmor %vm3078, %vm3079
  %v3081 = vsel %vm3080, %v3073, %v3077
  %v3082 = vand.u32 2147483647, %v3057
  %vm3083 = vcmp.eq.f32.partialorder %v3082, 8.507059e+37
  %v3084 = vand.u32 %v3057, 2147483648
  %v3085 = vor.u32 1.1754944e-38, %v3084
  %v3086 = vsel %vm3083, %v3085, %v3081
  %v3087 = vmul.f32 1.0, %v3086
  %v3088 = vxor.u32 %v2990, 2147483648
  %v3089 = vxor.u32 %v2992, 2147483648
  %v3090 = vmul.f32 %v3088, 1.442695
  %v3091 = vpow.pop %v3090
  %v3092 = vmul.f32 %v3089, 1.442695
  %v3093 = vpow.pop %v3092
  %v3094 = vadd.f32 %v3091, 1.0
  %v3095 = vadd.f32 %v3093, 1.0
  %v3096 = vrcp.pop %v3094
  %v3097 = vmul.f32 %v3094, %v3096
  %v3098 = vsub.f32 1.0, %v3097
  %v3099 = vmul.f32 %v3096, %v3098
  %v3100 = vadd.f32 %v3096, %v3099
  %vm3101 = vweird.f32 %v3094
  %vm3102 = vweird.f32 %v3096
  %vm3103 = vmor %vm3101, %vm3102
  %v3104 = vsel %vm3103, %v3096, %v3100
  %v3105 = vand.u32 2147483647, %v3094
  %vm3106 = vcmp.eq.f32.partialorder %v3105, 8.507059e+37
  %v3107 = vand.u32 %v3094, 2147483648
  %v3108 = vor.u32 1.1754944e-38, %v3107
  %v3109 = vsel %vm3106, %v3108, %v3104
  %v3110 = vmul.f32 1.0, %v3109
  %v3111 = vrcp.pop %v3095
  %v3112 = vmul.f32 %v3095, %v3111
  %v3113 = vsub.f32 1.0, %v3112
  %v3114 = vmul.f32 %v3111, %v3113
  %v3115 = vadd.f32 %v3111, %v3114
  %vm3116 = vweird.f32 %v3095
  %vm3117 = vweird.f32 %v3111
  %vm3118 = vmor %vm3116, %vm3117
  %v3119 = vsel %vm3118, %v3111, %v3115
  %v3120 = vand.u32 2147483647, %v3095
  %vm3121 = vcmp.eq.f32.partialorder %v3120, 8.507059e+37
  %v3122 = vand.u32 %v3095, 2147483648
  %v3123 = vor.u32 1.1754944e-38, %v3122
  %v3124 = vsel %vm3121, %v3123, %v3119
  %v3125 = vmul.f32 1.0, %v3124
  %v3126 = vtanh.pop %v3018
  %v3127 = vtanh.pop %v3020
  %v3128 = vxor.u32 %v3046, 2147483648
  %v3129 = vxor.u32 %v3048, 2147483648
  %v3130 = vmul.f32 %v3128, 1.442695
  %v3131 = vpow.pop %v3130
  %v3132 = vmul.f32 %v3129, 1.442695
  %v3133 = vpow.pop %v3132
  %v3134 = vadd.f32 %v3131, 1.0
  %v3135 = vadd.f32 %v3133, 1.0
  %v3136 = vrcp.pop %v3134
  %v3137 = vmul.f32 %v3134, %v3136
  %v3138 = vsub.f32 1.0, %v3137
  %v3139 = vmul.f32 %v3136, %v3138
  %v3140 = vadd.f32 %v3136, %v3139
  %vm3141 = vweird.f32 %v3134
  %vm3142 = vweird.f32 %v3136
  %vm3143 = vmor %vm3141, %vm3142
  %v3144 = vsel %vm3143, %v3136, %v3140
  %v3145 = vand.u32 2147483647, %v3134
  %vm3146 = vcmp.eq.f32.partialorder %v3145, 8.507059e+37
  %v3147 = vand.u32 %v3134, 2147483648
  %v3148 = vor.u32 1.1754944e-38, %v3147
  %v3149 = vsel %vm3146, %v3148, %v3144
  %v3150 = vmul.f32 1.0, %v3149
  %v3151 = vrcp.pop %v3135
  %v3152 = vmul.f32 %v3135, %v3151
  %v3153 = vsub.f32 1.0, %v3152
  %v3154 = vmul.f32 %v3151, %v3153
  %v3155 = vadd.f32 %v3151, %v3154
  %vm3156 = vweird.f32 %v3135
  %vm3157 = vweird.f32 %v3151
  %vm3158 = vmor %vm3156, %vm3157
  %v3159 = vsel %vm3158, %v3151, %v3155
  %v3160 = vand.u32 2147483647, %v3135
  %vm3161 = vcmp.eq.f32.partialorder %v3160, 8.507059e+37
  %v3162 = vand.u32 %v3135, 2147483648
  %v3163 = vor.u32 1.1754944e-38, %v3162
  %v3164 = vsel %vm3161, %v3163, %v3159
  %v3165 = vmul.f32 1.0, %v3164
  %v3166 = vmul.f32 %v3110, %v2145
  %v3167 = vmul.f32 %v3125, %v2146
  %v3168 = vmul.f32 %v3072, %v3126
  %v3169 = vmul.f32 %v3087, %v3127
  %v3170 = vadd.f32 %v3166, %v3168
  %v3171 = vadd.f32 %v3167, %v3169
  %v3172 = vtanh.pop %v3170
  %v3173 = vtanh.pop %v3171
  %v3174 = vmul.f32 %v3150, %v3172
  %v3175 = vmul.f32 %v3165, %v3173
  %v3176 = vpack.c.bf16 %v3174, %v3174
  %v3177 = vpack.c.bf16 %v3175, %v3175
  %v3180 = vunpack.c.l.b16 %v3176
  %v3181 = vunpack.c.l.b16 %v3177
  %v3182 = vpack.c.b16 %v3181, %v3180
  %v3186 = vunpack.c.l.b16 %v2723
  %v3187 = vunpack.c.l.b16 %v2724
  %v3188 = vpack.c.b16 %v3187, %v3186
  %3190 = vmatpush.bf16.msra.mxu0 %v2385
  %3191 = vmatpush.bf16.msra.mxu0 %v2381
  %3192 = vmatpush.bf16.msra.mxu0 %v2377
  %3193 = vmatpush.bf16.msra.mxu0 %v2373
  %3194 = vmatpush.bf16.msra.mxu0 %v2369
  %3195 = vmatpush.bf16.msra.mxu0 %v2365
  %3196 = vmatpush.bf16.msra.mxu0 %v2361
  %3197 = vmatpush.bf16.msra.mxu0 %v2357
  %3198 = vmatmul.bf16.gmra.mxu0 %v3182
  %v3199 = vpop.f32.mrf.mxu0
  %v3200 = vadd.f32 %v1027, %v3199
  %v3201 = vpop.f32.mrf.mxu0
  %v3202 = vadd.f32 %v1027, %v3201
  %3203 = vdwg.mxu0
  %3204 = vmatpush.bf16.msra.mxu0 %v2417
  %3205 = vmatpush.bf16.msra.mxu0 %v2413
  %3206 = vmatpush.bf16.msra.mxu0 %v2409
  %3207 = vmatpush.bf16.msra.mxu0 %v2405
  %3208 = vmatpush.bf16.msra.mxu0 %v2401
  %3209 = vmatpush.bf16.msra.mxu0 %v2397
  %3210 = vmatpush.bf16.msra.mxu0 %v2393
  %3211 = vmatpush.bf16.msra.mxu0 %v2389
  %3212 = vmatmul.bf16.gmra.mxu0 %v3188
  %v3213 = vpop.f32.mrf.mxu0
  %v3214 = vadd.f32 %v3200, %v3213
  %v3215 = vpop.f32.mrf.mxu0
  %v3216 = vadd.f32 %v3202, %v3215
  %3217 = vdwg.mxu0
  %3218 = vmatpush.bf16.msra.mxu0 %v2386
  %3219 = vmatpush.bf16.msra.mxu0 %v2382
  %3220 = vmatpush.bf16.msra.mxu0 %v2378
  %3221 = vmatpush.bf16.msra.mxu0 %v2374
  %3222 = vmatpush.bf16.msra.mxu0 %v2370
  %3223 = vmatpush.bf16.msra.mxu0 %v2366
  %3224 = vmatpush.bf16.msra.mxu0 %v2362
  %3225 = vmatpush.bf16.msra.mxu0 %v2358
  %3226 = vmatmul.bf16.gmra.mxu0 %v3182
  %v3227 = vpop.f32.mrf.mxu0
  %v3228 = vadd.f32 %v1028, %v3227
  %v3229 = vpop.f32.mrf.mxu0
  %v3230 = vadd.f32 %v1028, %v3229
  %3231 = vdwg.mxu0
  %3232 = vmatpush.bf16.msra.mxu0 %v2418
  %3233 = vmatpush.bf16.msra.mxu0 %v2414
  %3234 = vmatpush.bf16.msra.mxu0 %v2410
  %3235 = vmatpush.bf16.msra.mxu0 %v2406
  %3236 = vmatpush.bf16.msra.mxu0 %v2402
  %3237 = vmatpush.bf16.msra.mxu0 %v2398
  %3238 = vmatpush.bf16.msra.mxu0 %v2394
  %3239 = vmatpush.bf16.msra.mxu0 %v2390
  %3240 = vmatmul.bf16.gmra.mxu0 %v3188
  %v3241 = vpop.f32.mrf.mxu0
  %v3242 = vadd.f32 %v3228, %v3241
  %v3243 = vpop.f32.mrf.mxu0
  %v3244 = vadd.f32 %v3230, %v3243
  %3245 = vdwg.mxu0
  %3246 = vmatpush.bf16.msra.mxu0 %v2387
  %3247 = vmatpush.bf16.msra.mxu0 %v2383
  %3248 = vmatpush.bf16.msra.mxu0 %v2379
  %3249 = vmatpush.bf16.msra.mxu0 %v2375
  %3250 = vmatpush.bf16.msra.mxu0 %v2371
  %3251 = vmatpush.bf16.msra.mxu0 %v2367
  %3252 = vmatpush.bf16.msra.mxu0 %v2363
  %3253 = vmatpush.bf16.msra.mxu0 %v2359
  %3254 = vmatmul.bf16.gmra.mxu0 %v3182
  %v3255 = vpop.f32.mrf.mxu0
  %v3256 = vadd.f32 %v1029, %v3255
  %v3257 = vpop.f32.mrf.mxu0
  %v3258 = vadd.f32 %v1029, %v3257
  %3259 = vdwg.mxu0
  %3260 = vmatpush.bf16.msra.mxu0 %v2419
  %3261 = vmatpush.bf16.msra.mxu0 %v2415
  %3262 = vmatpush.bf16.msra.mxu0 %v2411
  %3263 = vmatpush.bf16.msra.mxu0 %v2407
  %3264 = vmatpush.bf16.msra.mxu0 %v2403
  %3265 = vmatpush.bf16.msra.mxu0 %v2399
  %3266 = vmatpush.bf16.msra.mxu0 %v2395
  %3267 = vmatpush.bf16.msra.mxu0 %v2391
  %3268 = vmatmul.bf16.gmra.mxu0 %v3188
  %v3269 = vpop.f32.mrf.mxu0
  %v3270 = vadd.f32 %v3256, %v3269
  %v3271 = vpop.f32.mrf.mxu0
  %v3272 = vadd.f32 %v3258, %v3271
  %3273 = vdwg.mxu0
  %3274 = vmatpush.bf16.msra.mxu0 %v2388
  %3275 = vmatpush.bf16.msra.mxu0 %v2384
  %3276 = vmatpush.bf16.msra.mxu0 %v2380
  %3277 = vmatpush.bf16.msra.mxu0 %v2376
  %3278 = vmatpush.bf16.msra.mxu0 %v2372
  %3279 = vmatpush.bf16.msra.mxu0 %v2368
  %3280 = vmatpush.bf16.msra.mxu0 %v2364
  %3281 = vmatpush.bf16.msra.mxu0 %v2360
  %3282 = vmatmul.bf16.gmra.mxu0 %v3182
  %v3283 = vpop.f32.mrf.mxu0
  %v3284 = vadd.f32 %v1030, %v3283
  %v3285 = vpop.f32.mrf.mxu0
  %v3286 = vadd.f32 %v1030, %v3285
  %3287 = vdwg.mxu0
  %3288 = vmatpush.bf16.msra.mxu0 %v2420
  %3289 = vmatpush.bf16.msra.mxu0 %v2416
  %3290 = vmatpush.bf16.msra.mxu0 %v2412
  %3291 = vmatpush.bf16.msra.mxu0 %v2408
  %3292 = vmatpush.bf16.msra.mxu0 %v2404
  %3293 = vmatpush.bf16.msra.mxu0 %v2400
  %3294 = vmatpush.bf16.msra.mxu0 %v2396
  %3295 = vmatpush.bf16.msra.mxu0 %v2392
  %3296 = vmatmul.bf16.gmra.mxu0 %v3188
  %v3297 = vpop.f32.mrf.mxu0
  %v3298 = vadd.f32 %v3284, %v3297
  %v3299 = vpop.f32.mrf.mxu0
  %v3300 = vadd.f32 %v3286, %v3299
  %3301 = vdwg.mxu0
  %v3302 = vxor.u32 %v3214, 2147483648
  %v3303 = vxor.u32 %v3216, 2147483648
  %v3304 = vmul.f32 %v3302, 1.442695
  %v3305 = vpow.pop %v3304
  %v3306 = vmul.f32 %v3303, 1.442695
  %v3307 = vpow.pop %v3306
  %v3308 = vadd.f32 %v3305, 1.0
  %v3309 = vadd.f32 %v3307, 1.0
  %v3310 = vrcp.pop %v3308
  %v3311 = vmul.f32 %v3308, %v3310
  %v3312 = vsub.f32 1.0, %v3311
  %v3313 = vmul.f32 %v3310, %v3312
  %v3314 = vadd.f32 %v3310, %v3313
  %vm3315 = vweird.f32 %v3308
  %vm3316 = vweird.f32 %v3310
  %vm3317 = vmor %vm3315, %vm3316
  %v3318 = vsel %vm3317, %v3310, %v3314
  %v3319 = vand.u32 2147483647, %v3308
  %vm3320 = vcmp.eq.f32.partialorder %v3319, 8.507059e+37
  %v3321 = vand.u32 %v3308, 2147483648
  %v3322 = vor.u32 1.1754944e-38, %v3321
  %v3323 = vsel %vm3320, %v3322, %v3318
  %v3324 = vmul.f32 1.0, %v3323
  %v3325 = vrcp.pop %v3309
  %v3326 = vmul.f32 %v3309, %v3325
  %v3327 = vsub.f32 1.0, %v3326
  %v3328 = vmul.f32 %v3325, %v3327
  %v3329 = vadd.f32 %v3325, %v3328
  %vm3330 = vweird.f32 %v3309
  %vm3331 = vweird.f32 %v3325
  %vm3332 = vmor %vm3330, %vm3331
  %v3333 = vsel %vm3332, %v3325, %v3329
  %v3334 = vand.u32 2147483647, %v3309
  %vm3335 = vcmp.eq.f32.partialorder %v3334, 8.507059e+37
  %v3336 = vand.u32 %v3309, 2147483648
  %v3337 = vor.u32 1.1754944e-38, %v3336
  %v3338 = vsel %vm3335, %v3337, %v3333
  %v3339 = vmul.f32 1.0, %v3338
  %v3340 = vxor.u32 %v3242, 2147483648
  %v3341 = vxor.u32 %v3244, 2147483648
  %v3342 = vmul.f32 %v3340, 1.442695
  %v3343 = vpow.pop %v3342
  %v3344 = vmul.f32 %v3341, 1.442695
  %v3345 = vpow.pop %v3344
  %v3346 = vadd.f32 %v3343, 1.0
  %v3347 = vadd.f32 %v3345, 1.0
  %v3348 = vrcp.pop %v3346
  %v3349 = vmul.f32 %v3346, %v3348
  %v3350 = vsub.f32 1.0, %v3349
  %v3351 = vmul.f32 %v3348, %v3350
  %v3352 = vadd.f32 %v3348, %v3351
  %vm3353 = vweird.f32 %v3346
  %vm3354 = vweird.f32 %v3348
  %vm3355 = vmor %vm3353, %vm3354
  %v3356 = vsel %vm3355, %v3348, %v3352
  %v3357 = vand.u32 2147483647, %v3346
  %vm3358 = vcmp.eq.f32.partialorder %v3357, 8.507059e+37
  %v3359 = vand.u32 %v3346, 2147483648
  %v3360 = vor.u32 1.1754944e-38, %v3359
  %v3361 = vsel %vm3358, %v3360, %v3356
  %v3362 = vmul.f32 1.0, %v3361
  %v3363 = vrcp.pop %v3347
  %v3364 = vmul.f32 %v3347, %v3363
  %v3365 = vsub.f32 1.0, %v3364
  %v3366 = vmul.f32 %v3363, %v3365
  %v3367 = vadd.f32 %v3363, %v3366
  %vm3368 = vweird.f32 %v3347
  %vm3369 = vweird.f32 %v3363
  %vm3370 = vmor %vm3368, %vm3369
  %v3371 = vsel %vm3370, %v3363, %v3367
  %v3372 = vand.u32 2147483647, %v3347
  %vm3373 = vcmp.eq.f32.partialorder %v3372, 8.507059e+37
  %v3374 = vand.u32 %v3347, 2147483648
  %v3375 = vor.u32 1.1754944e-38, %v3374
  %v3376 = vsel %vm3373, %v3375, %v3371
  %v3377 = vmul.f32 1.0, %v3376
  %v3378 = vtanh.pop %v3270
  %v3379 = vtanh.pop %v3272
  %v3380 = vxor.u32 %v3298, 2147483648
  %v3381 = vxor.u32 %v3300, 2147483648
  %v3382 = vmul.f32 %v3380, 1.442695
  %v3383 = vpow.pop %v3382
  %v3384 = vmul.f32 %v3381, 1.442695
  %v3385 = vpow.pop %v3384
  %v3386 = vadd.f32 %v3383, 1.0
  %v3387 = vadd.f32 %v3385, 1.0
  %v3388 = vrcp.pop %v3386
  %v3389 = vmul.f32 %v3386, %v3388
  %v3390 = vsub.f32 1.0, %v3389
  %v3391 = vmul.f32 %v3388, %v3390
  %v3392 = vadd.f32 %v3388, %v3391
  %vm3393 = vweird.f32 %v3386
  %vm3394 = vweird.f32 %v3388
  %vm3395 = vmor %vm3393, %vm3394
  %v3396 = vsel %vm3395, %v3388, %v3392
  %v3397 = vand.u32 2147483647, %v3386
  %vm3398 = vcmp.eq.f32.partialorder %v3397, 8.507059e+37
  %v3399 = vand.u32 %v3386, 2147483648
  %v3400 = vor.u32 1.1754944e-38, %v3399
  %v3401 = vsel %vm3398, %v3400, %v3396
  %v3402 = vmul.f32 1.0, %v3401
  %v3403 = vrcp.pop %v3387
  %v3404 = vmul.f32 %v3387, %v3403
  %v3405 = vsub.f32 1.0, %v3404
  %v3406 = vmul.f32 %v3403, %v3405
  %v3407 = vadd.f32 %v3403, %v3406
  %vm3408 = vweird.f32 %v3387
  %vm3409 = vweird.f32 %v3403
  %vm3410 = vmor %vm3408, %vm3409
  %v3411 = vsel %vm3410, %v3403, %v3407
  %v3412 = vand.u32 2147483647, %v3387
  %vm3413 = vcmp.eq.f32.partialorder %v3412, 8.507059e+37
  %v3414 = vand.u32 %v3387, 2147483648
  %v3415 = vor.u32 1.1754944e-38, %v3414
  %v3416 = vsel %vm3413, %v3415, %v3411
  %v3417 = vmul.f32 1.0, %v3416
  %v3418 = vmul.f32 %v3362, %v2717
  %v3419 = vmul.f32 %v3377, %v2718
  %v3420 = vmul.f32 %v3324, %v3378
  %v3421 = vmul.f32 %v3339, %v3379
  %v3422 = vadd.f32 %v3418, %v3420
  %v3423 = vadd.f32 %v3419, %v3421
  %v3424 = vtanh.pop %v3422
  %v3425 = vtanh.pop %v3423
  %v3426 = vmul.f32 %v3402, %v3424
  %v3427 = vmul.f32 %v3417, %v3425
  %v3428 = vpack.c.bf16 %v3426, %v3426
  %v3429 = vpack.c.bf16 %v3427, %v3427
  %s3430 = scalar_lea.vmem [#allocation5], 8
  %3431 = vst [vmem:[%s3430] sm:$0xf] %v3428
  %3432 = vst [vmem:[%s3430 + $0x4] sm:$0xf] %v3429
  %s3433 = scalar_lea.vmem [#allocation4], 64
  %v3434 = vld [vmem:[%s3433] sm:$0xff]
  %v3435 = vld [vmem:[%s3433 + $0x8] sm:$0xff]
  %v3436 = vld [vmem:[%s3433 + $0x10] sm:$0xff]
  %v3437 = vld [vmem:[%s3433 + $0x18] sm:$0xff]
  %3438 = vmatpush.bf16.msra.mxu0 %v1345
  %3439 = vmatpush.bf16.msra.mxu0 %v1341
  %3440 = vmatpush.bf16.msra.mxu0 %v1337
  %3441 = vmatpush.bf16.msra.mxu0 %v1333
  %3442 = vmatpush.bf16.msra.mxu0 %v1329
  %3443 = vmatpush.bf16.msra.mxu0 %v1325
  %3444 = vmatpush.bf16.msra.mxu0 %v1321
  %3445 = vmatpush.bf16.msra.mxu0 %v1317
  %3446 = vmatmul.bf16.gmra.mxu0 %v2936
  %v3447 = vpop.f32.mrf.mxu0
  %v3448 = vadd.f32 0.0, %v3447
  %v3449 = vpop.f32.mrf.mxu0
  %v3450 = vadd.f32 0.0, %v3449
  %3451 = vdwg.mxu0
  %3452 = vmatpush.bf16.msra.mxu0 %v1346
  %3453 = vmatpush.bf16.msra.mxu0 %v1342
  %3454 = vmatpush.bf16.msra.mxu0 %v1338
  %3455 = vmatpush.bf16.msra.mxu0 %v1334
  %3456 = vmatpush.bf16.msra.mxu0 %v1330
  %3457 = vmatpush.bf16.msra.mxu0 %v1326
  %3458 = vmatpush.bf16.msra.mxu0 %v1322
  %3459 = vmatpush.bf16.msra.mxu0 %v1318
  %3460 = vmatmul.bf16.gmra.mxu0 %v2936
  %v3461 = vpop.f32.mrf.mxu0
  %v3462 = vadd.f32 0.0, %v3461
  %v3463 = vpop.f32.mrf.mxu0
  %v3464 = vadd.f32 0.0, %v3463
  %3465 = vdwg.mxu0
  %3466 = vmatpush.bf16.msra.mxu0 %v1347
  %3467 = vmatpush.bf16.msra.mxu0 %v1343
  %3468 = vmatpush.bf16.msra.mxu0 %v1339
  %3469 = vmatpush.bf16.msra.mxu0 %v1335
  %3470 = vmatpush.bf16.msra.mxu0 %v1331
  %3471 = vmatpush.bf16.msra.mxu0 %v1327
  %3472 = vmatpush.bf16.msra.mxu0 %v1323
  %3473 = vmatpush.bf16.msra.mxu0 %v1319
  %3474 = vmatmul.bf16.gmra.mxu0 %v2936
  %v3475 = vpop.f32.mrf.mxu0
  %v3476 = vadd.f32 0.0, %v3475
  %v3477 = vpop.f32.mrf.mxu0
  %v3478 = vadd.f32 0.0, %v3477
  %3479 = vdwg.mxu0
  %3480 = vmatpush.bf16.msra.mxu0 %v1348
  %3481 = vmatpush.bf16.msra.mxu0 %v1344
  %3482 = vmatpush.bf16.msra.mxu0 %v1340
  %3483 = vmatpush.bf16.msra.mxu0 %v1336
  %3484 = vmatpush.bf16.msra.mxu0 %v1332
  %3485 = vmatpush.bf16.msra.mxu0 %v1328
  %3486 = vmatpush.bf16.msra.mxu0 %v1324
  %3487 = vmatpush.bf16.msra.mxu0 %v1320
  %3488 = vmatmul.bf16.gmra.mxu0 %v2936
  %v3489 = vpop.f32.mrf.mxu0
  %v3490 = vadd.f32 0.0, %v3489
  %v3491 = vpop.f32.mrf.mxu0
  %v3492 = vadd.f32 0.0, %v3491
  %3493 = vdwg.mxu0
  %v3494 = vunpack.c.l.bf16 %v3434
  %v3495 = vunpack.c.h.bf16 %v3434
  %v3496 = vunpack.c.l.bf16 %v3435
  %v3497 = vunpack.c.h.bf16 %v3435
  %v3498 = vunpack.c.l.bf16 %v3436
  %v3499 = vunpack.c.h.bf16 %v3436
  %v3500 = vunpack.c.l.bf16 %v3437
  %v3501 = vunpack.c.h.bf16 %v3437
  %v3502 = vadd.f32 %v3494, %v3448
  %v3503 = vadd.f32 %v3495, %v3462
  %v3504 = vadd.f32 %v3496, %v3476
  %v3505 = vadd.f32 %v3497, %v3490
  %v3506 = vadd.f32 %v3498, %v3450
  %v3507 = vadd.f32 %v3499, %v3464
  %v3508 = vadd.f32 %v3500, %v3478
  %v3509 = vadd.f32 %v3501, %v3492
  %v3510 = vxor.u32 %v3502, 2147483648
  %v3511 = vxor.u32 %v3506, 2147483648
  %v3512 = vmul.f32 %v3510, 1.442695
  %v3513 = vpow.pop %v3512
  %v3514 = vmul.f32 %v3511, 1.442695
  %v3515 = vpow.pop %v3514
  %v3516 = vadd.f32 %v3513, 1.0
  %v3517 = vadd.f32 %v3515, 1.0
  %v3518 = vrcp.pop %v3516
  %v3519 = vmul.f32 %v3516, %v3518
  %v3520 = vsub.f32 1.0, %v3519
  %v3521 = vmul.f32 %v3518, %v3520
  %v3522 = vadd.f32 %v3518, %v3521
  %vm3523 = vweird.f32 %v3516
  %vm3524 = vweird.f32 %v3518
  %vm3525 = vmor %vm3523, %vm3524
  %v3526 = vsel %vm3525, %v3518, %v3522
  %v3527 = vand.u32 2147483647, %v3516
  %vm3528 = vcmp.eq.f32.partialorder %v3527, 8.507059e+37
  %v3529 = vand.u32 %v3516, 2147483648
  %v3530 = vor.u32 1.1754944e-38, %v3529
  %v3531 = vsel %vm3528, %v3530, %v3526
  %v3532 = vmul.f32 1.0, %v3531
  %v3533 = vrcp.pop %v3517
  %v3534 = vmul.f32 %v3517, %v3533
  %v3535 = vsub.f32 1.0, %v3534
  %v3536 = vmul.f32 %v3533, %v3535
  %v3537 = vadd.f32 %v3533, %v3536
  %vm3538 = vweird.f32 %v3517
  %vm3539 = vweird.f32 %v3533
  %vm3540 = vmor %vm3538, %vm3539
  %v3541 = vsel %vm3540, %v3533, %v3537
  %v3542 = vand.u32 2147483647, %v3517
  %vm3543 = vcmp.eq.f32.partialorder %v3542, 8.507059e+37
  %v3544 = vand.u32 %v3517, 2147483648
  %v3545 = vor.u32 1.1754944e-38, %v3544
  %v3546 = vsel %vm3543, %v3545, %v3541
  %v3547 = vmul.f32 1.0, %v3546
  %v3548 = vxor.u32 %v3503, 2147483648
  %v3549 = vxor.u32 %v3507, 2147483648
  %v3550 = vmul.f32 %v3548, 1.442695
  %v3551 = vpow.pop %v3550
  %v3552 = vmul.f32 %v3549, 1.442695
  %v3553 = vpow.pop %v3552
  %v3554 = vadd.f32 %v3551, 1.0
  %v3555 = vadd.f32 %v3553, 1.0
  %v3556 = vrcp.pop %v3554
  %v3557 = vmul.f32 %v3554, %v3556
  %v3558 = vsub.f32 1.0, %v3557
  %v3559 = vmul.f32 %v3556, %v3558
  %v3560 = vadd.f32 %v3556, %v3559
  %vm3561 = vweird.f32 %v3554
  %vm3562 = vweird.f32 %v3556
  %vm3563 = vmor %vm3561, %vm3562
  %v3564 = vsel %vm3563, %v3556, %v3560
  %v3565 = vand.u32 2147483647, %v3554
  %vm3566 = vcmp.eq.f32.partialorder %v3565, 8.507059e+37
  %v3567 = vand.u32 %v3554, 2147483648
  %v3568 = vor.u32 1.1754944e-38, %v3567
  %v3569 = vsel %vm3566, %v3568, %v3564
  %v3570 = vmul.f32 1.0, %v3569
  %v3571 = vrcp.pop %v3555
  %v3572 = vmul.f32 %v3555, %v3571
  %v3573 = vsub.f32 1.0, %v3572
  %v3574 = vmul.f32 %v3571, %v3573
  %v3575 = vadd.f32 %v3571, %v3574
  %vm3576 = vweird.f32 %v3555
  %vm3577 = vweird.f32 %v3571
  %vm3578 = vmor %vm3576, %vm3577
  %v3579 = vsel %vm3578, %v3571, %v3575
  %v3580 = vand.u32 2147483647, %v3555
  %vm3581 = vcmp.eq.f32.partialorder %v3580, 8.507059e+37
  %v3582 = vand.u32 %v3555, 2147483648
  %v3583 = vor.u32 1.1754944e-38, %v3582
  %v3584 = vsel %vm3581, %v3583, %v3579
  %v3585 = vmul.f32 1.0, %v3584
  %v3586 = vtanh.pop %v3504
  %v3587 = vtanh.pop %v3508
  %v3588 = vxor.u32 %v3505, 2147483648
  %v3589 = vxor.u32 %v3509, 2147483648
  %v3590 = vmul.f32 %v3588, 1.442695
  %v3591 = vpow.pop %v3590
  %v3592 = vmul.f32 %v3589, 1.442695
  %v3593 = vpow.pop %v3592
  %v3594 = vadd.f32 %v3591, 1.0
  %v3595 = vadd.f32 %v3593, 1.0
  %v3596 = vrcp.pop %v3594
  %v3597 = vmul.f32 %v3594, %v3596
  %v3598 = vsub.f32 1.0, %v3597
  %v3599 = vmul.f32 %v3596, %v3598
  %v3600 = vadd.f32 %v3596, %v3599
  %vm3601 = vweird.f32 %v3594
  %vm3602 = vweird.f32 %v3596
  %vm3603 = vmor %vm3601, %vm3602
  %v3604 = vsel %vm3603, %v3596, %v3600
  %v3605 = vand.u32 2147483647, %v3594
  %vm3606 = vcmp.eq.f32.partialorder %v3605, 8.507059e+37
  %v3607 = vand.u32 %v3594, 2147483648
  %v3608 = vor.u32 1.1754944e-38, %v3607
  %v3609 = vsel %vm3606, %v3608, %v3604
  %v3610 = vmul.f32 1.0, %v3609
  %v3611 = vrcp.pop %v3595
  %v3612 = vmul.f32 %v3595, %v3611
  %v3613 = vsub.f32 1.0, %v3612
  %v3614 = vmul.f32 %v3611, %v3613
  %v3615 = vadd.f32 %v3611, %v3614
  %vm3616 = vweird.f32 %v3595
  %vm3617 = vweird.f32 %v3611
  %vm3618 = vmor %vm3616, %vm3617
  %v3619 = vsel %vm3618, %v3611, %v3615
  %v3620 = vand.u32 2147483647, %v3595
  %vm3621 = vcmp.eq.f32.partialorder %v3620, 8.507059e+37
  %v3622 = vand.u32 %v3595, 2147483648
  %v3623 = vor.u32 1.1754944e-38, %v3622
  %v3624 = vsel %vm3621, %v3623, %v3619
  %v3625 = vmul.f32 1.0, %v3624
  %v3626 = vmul.f32 %v3570, %v2924
  %v3627 = vmul.f32 %v3585, %v2925
  %v3628 = vmul.f32 %v3532, %v3586
  %v3629 = vmul.f32 %v3547, %v3587
  %v3630 = vadd.f32 %v3626, %v3628
  %v3631 = vadd.f32 %v3627, %v3629
  %v3632 = vtanh.pop %v3630
  %v3633 = vtanh.pop %v3631
  %v3634 = vmul.f32 %v3610, %v3632
  %v3635 = vmul.f32 %v3625, %v3633
  %v3636 = vpack.c.bf16 %v3634, %v3634
  %v3637 = vpack.c.bf16 %v3635, %v3635
  %v3640 = vunpack.c.l.b16 %v3636
  %v3641 = vunpack.c.l.b16 %v3637
  %v3642 = vpack.c.b16 %v3641, %v3640
  %3644 = vmatpush.bf16.msra.mxu0 %v1813
  %3645 = vmatpush.bf16.msra.mxu0 %v1809
  %3646 = vmatpush.bf16.msra.mxu0 %v1805
  %3647 = vmatpush.bf16.msra.mxu0 %v1801
  %3648 = vmatpush.bf16.msra.mxu0 %v1797
  %3649 = vmatpush.bf16.msra.mxu0 %v1793
  %3650 = vmatpush.bf16.msra.mxu0 %v1789
  %3651 = vmatpush.bf16.msra.mxu0 %v1785
  %3652 = vmatmul.bf16.gmra.mxu0 %v3642
  %v3653 = vpop.f32.mrf.mxu0
  %v3654 = vadd.f32 %v1017, %v3653
  %v3655 = vpop.f32.mrf.mxu0
  %v3656 = vadd.f32 %v1017, %v3655
  %3657 = vdwg.mxu0
  %3658 = vmatpush.bf16.msra.mxu0 %v1845
  %3659 = vmatpush.bf16.msra.mxu0 %v1841
  %3660 = vmatpush.bf16.msra.mxu0 %v1837
  %3661 = vmatpush.bf16.msra.mxu0 %v1833
  %3662 = vmatpush.bf16.msra.mxu0 %v1829
  %3663 = vmatpush.bf16.msra.mxu0 %v1825
  %3664 = vmatpush.bf16.msra.mxu0 %v1821
  %3665 = vmatpush.bf16.msra.mxu0 %v1817
  %3666 = vmatmul.bf16.gmra.mxu0 %v3182
  %v3667 = vpop.f32.mrf.mxu0
  %v3668 = vadd.f32 %v3654, %v3667
  %v3669 = vpop.f32.mrf.mxu0
  %v3670 = vadd.f32 %v3656, %v3669
  %3671 = vdwg.mxu0
  %3672 = vmatpush.bf16.msra.mxu0 %v1814
  %3673 = vmatpush.bf16.msra.mxu0 %v1810
  %3674 = vmatpush.bf16.msra.mxu0 %v1806
  %3675 = vmatpush.bf16.msra.mxu0 %v1802
  %3676 = vmatpush.bf16.msra.mxu0 %v1798
  %3677 = vmatpush.bf16.msra.mxu0 %v1794
  %3678 = vmatpush.bf16.msra.mxu0 %v1790
  %3679 = vmatpush.bf16.msra.mxu0 %v1786
  %3680 = vmatmul.bf16.gmra.mxu0 %v3642
  %v3681 = vpop.f32.mrf.mxu0
  %v3682 = vadd.f32 %v1018, %v3681
  %v3683 = vpop.f32.mrf.mxu0
  %v3684 = vadd.f32 %v1018, %v3683
  %3685 = vdwg.mxu0
  %3686 = vmatpush.bf16.msra.mxu0 %v1846
  %3687 = vmatpush.bf16.msra.mxu0 %v1842
  %3688 = vmatpush.bf16.msra.mxu0 %v1838
  %3689 = vmatpush.bf16.msra.mxu0 %v1834
  %3690 = vmatpush.bf16.msra.mxu0 %v1830
  %3691 = vmatpush.bf16.msra.mxu0 %v1826
  %3692 = vmatpush.bf16.msra.mxu0 %v1822
  %3693 = vmatpush.bf16.msra.mxu0 %v1818
  %3694 = vmatmul.bf16.gmra.mxu0 %v3182
  %v3695 = vpop.f32.mrf.mxu0
  %v3696 = vadd.f32 %v3682, %v3695
  %v3697 = vpop.f32.mrf.mxu0
  %v3698 = vadd.f32 %v3684, %v3697
  %3699 = vdwg.mxu0
  %3700 = vmatpush.bf16.msra.mxu0 %v1815
  %3701 = vmatpush.bf16.msra.mxu0 %v1811
  %3702 = vmatpush.bf16.msra.mxu0 %v1807
  %3703 = vmatpush.bf16.msra.mxu0 %v1803
  %3704 = vmatpush.bf16.msra.mxu0 %v1799
  %3705 = vmatpush.bf16.msra.mxu0 %v1795
  %3706 = vmatpush.bf16.msra.mxu0 %v1791
  %3707 = vmatpush.bf16.msra.mxu0 %v1787
  %3708 = vmatmul.bf16.gmra.mxu0 %v3642
  %v3709 = vpop.f32.mrf.mxu0
  %v3710 = vadd.f32 %v1019, %v3709
  %v3711 = vpop.f32.mrf.mxu0
  %v3712 = vadd.f32 %v1019, %v3711
  %3713 = vdwg.mxu0
  %3714 = vmatpush.bf16.msra.mxu0 %v1847
  %3715 = vmatpush.bf16.msra.mxu0 %v1843
  %3716 = vmatpush.bf16.msra.mxu0 %v1839
  %3717 = vmatpush.bf16.msra.mxu0 %v1835
  %3718 = vmatpush.bf16.msra.mxu0 %v1831
  %3719 = vmatpush.bf16.msra.mxu0 %v1827
  %3720 = vmatpush.bf16.msra.mxu0 %v1823
  %3721 = vmatpush.bf16.msra.mxu0 %v1819
  %3722 = vmatmul.bf16.gmra.mxu0 %v3182
  %v3723 = vpop.f32.mrf.mxu0
  %v3724 = vadd.f32 %v3710, %v3723
  %v3725 = vpop.f32.mrf.mxu0
  %v3726 = vadd.f32 %v3712, %v3725
  %3727 = vdwg.mxu0
  %3728 = vmatpush.bf16.msra.mxu0 %v1816
  %3729 = vmatpush.bf16.msra.mxu0 %v1812
  %3730 = vmatpush.bf16.msra.mxu0 %v1808
  %3731 = vmatpush.bf16.msra.mxu0 %v1804
  %3732 = vmatpush.bf16.msra.mxu0 %v1800
  %3733 = vmatpush.bf16.msra.mxu0 %v1796
  %3734 = vmatpush.bf16.msra.mxu0 %v1792
  %3735 = vmatpush.bf16.msra.mxu0 %v1788
  %3736 = vmatmul.bf16.gmra.mxu0 %v3642
  %v3737 = vpop.f32.mrf.mxu0
  %v3738 = vadd.f32 %v1020, %v3737
  %v3739 = vpop.f32.mrf.mxu0
  %v3740 = vadd.f32 %v1020, %v3739
  %3741 = vdwg.mxu0
  %3742 = vmatpush.bf16.msra.mxu0 %v1848
  %3743 = vmatpush.bf16.msra.mxu0 %v1844
  %3744 = vmatpush.bf16.msra.mxu0 %v1840
  %3745 = vmatpush.bf16.msra.mxu0 %v1836
  %3746 = vmatpush.bf16.msra.mxu0 %v1832
  %3747 = vmatpush.bf16.msra.mxu0 %v1828
  %3748 = vmatpush.bf16.msra.mxu0 %v1824
  %3749 = vmatpush.bf16.msra.mxu0 %v1820
  %3750 = vmatmul.bf16.gmra.mxu0 %v3182
  %v3751 = vpop.f32.mrf.mxu0
  %v3752 = vadd.f32 %v3738, %v3751
  %v3753 = vpop.f32.mrf.mxu0
  %v3754 = vadd.f32 %v3740, %v3753
  %3755 = vdwg.mxu0
  %v3756 = vxor.u32 %v3668, 2147483648
  %v3757 = vxor.u32 %v3670, 2147483648
  %v3758 = vmul.f32 %v3756, 1.442695
  %v3759 = vpow.pop %v3758
  %v3760 = vmul.f32 %v3757, 1.442695
  %v3761 = vpow.pop %v3760
  %v3762 = vadd.f32 %v3759, 1.0
  %v3763 = vadd.f32 %v3761, 1.0
  %v3764 = vrcp.pop %v3762
  %v3765 = vmul.f32 %v3762, %v3764
  %v3766 = vsub.f32 1.0, %v3765
  %v3767 = vmul.f32 %v3764, %v3766
  %v3768 = vadd.f32 %v3764, %v3767
  %vm3769 = vweird.f32 %v3762
  %vm3770 = vweird.f32 %v3764
  %vm3771 = vmor %vm3769, %vm3770
  %v3772 = vsel %vm3771, %v3764, %v3768
  %v3773 = vand.u32 2147483647, %v3762
  %vm3774 = vcmp.eq.f32.partialorder %v3773, 8.507059e+37
  %v3775 = vand.u32 %v3762, 2147483648
  %v3776 = vor.u32 1.1754944e-38, %v3775
  %v3777 = vsel %vm3774, %v3776, %v3772
  %v3778 = vmul.f32 1.0, %v3777
  %v3779 = vrcp.pop %v3763
  %v3780 = vmul.f32 %v3763, %v3779
  %v3781 = vsub.f32 1.0, %v3780
  %v3782 = vmul.f32 %v3779, %v3781
  %v3783 = vadd.f32 %v3779, %v3782
  %vm3784 = vweird.f32 %v3763
  %vm3785 = vweird.f32 %v3779
  %vm3786 = vmor %vm3784, %vm3785
  %v3787 = vsel %vm3786, %v3779, %v3783
  %v3788 = vand.u32 2147483647, %v3763
  %vm3789 = vcmp.eq.f32.partialorder %v3788, 8.507059e+37
  %v3790 = vand.u32 %v3763, 2147483648
  %v3791 = vor.u32 1.1754944e-38, %v3790
  %v3792 = vsel %vm3789, %v3791, %v3787
  %v3793 = vmul.f32 1.0, %v3792
  %v3794 = vxor.u32 %v3696, 2147483648
  %v3795 = vxor.u32 %v3698, 2147483648
  %v3796 = vmul.f32 %v3794, 1.442695
  %v3797 = vpow.pop %v3796
  %v3798 = vmul.f32 %v3795, 1.442695
  %v3799 = vpow.pop %v3798
  %v3800 = vadd.f32 %v3797, 1.0
  %v3801 = vadd.f32 %v3799, 1.0
  %v3802 = vrcp.pop %v3800
  %v3803 = vmul.f32 %v3800, %v3802
  %v3804 = vsub.f32 1.0, %v3803
  %v3805 = vmul.f32 %v3802, %v3804
  %v3806 = vadd.f32 %v3802, %v3805
  %vm3807 = vweird.f32 %v3800
  %vm3808 = vweird.f32 %v3802
  %vm3809 = vmor %vm3807, %vm3808
  %v3810 = vsel %vm3809, %v3802, %v3806
  %v3811 = vand.u32 2147483647, %v3800
  %vm3812 = vcmp.eq.f32.partialorder %v3811, 8.507059e+37
  %v3813 = vand.u32 %v3800, 2147483648
  %v3814 = vor.u32 1.1754944e-38, %v3813
  %v3815 = vsel %vm3812, %v3814, %v3810
  %v3816 = vmul.f32 1.0, %v3815
  %v3817 = vrcp.pop %v3801
  %v3818 = vmul.f32 %v3801, %v3817
  %v3819 = vsub.f32 1.0, %v3818
  %v3820 = vmul.f32 %v3817, %v3819
  %v3821 = vadd.f32 %v3817, %v3820
  %vm3822 = vweird.f32 %v3801
  %vm3823 = vweird.f32 %v3817
  %vm3824 = vmor %vm3822, %vm3823
  %v3825 = vsel %vm3824, %v3817, %v3821
  %v3826 = vand.u32 2147483647, %v3801
  %vm3827 = vcmp.eq.f32.partialorder %v3826, 8.507059e+37
  %v3828 = vand.u32 %v3801, 2147483648
  %v3829 = vor.u32 1.1754944e-38, %v3828
  %v3830 = vsel %vm3827, %v3829, %v3825
  %v3831 = vmul.f32 1.0, %v3830
  %v3832 = vtanh.pop %v3724
  %v3833 = vtanh.pop %v3726
  %v3834 = vxor.u32 %v3752, 2147483648
  %v3835 = vxor.u32 %v3754, 2147483648
  %v3836 = vmul.f32 %v3834, 1.442695
  %v3837 = vpow.pop %v3836
  %v3838 = vmul.f32 %v3835, 1.442695
  %v3839 = vpow.pop %v3838
  %v3840 = vadd.f32 %v3837, 1.0
  %v3841 = vadd.f32 %v3839, 1.0
  %v3842 = vrcp.pop %v3840
  %v3843 = vmul.f32 %v3840, %v3842
  %v3844 = vsub.f32 1.0, %v3843
  %v3845 = vmul.f32 %v3842, %v3844
  %v3846 = vadd.f32 %v3842, %v3845
  %vm3847 = vweird.f32 %v3840
  %vm3848 = vweird.f32 %v3842
  %vm3849 = vmor %vm3847, %vm3848
  %v3850 = vsel %vm3849, %v3842, %v3846
  %v3851 = vand.u32 2147483647, %v3840
  %vm3852 = vcmp.eq.f32.partialorder %v3851, 8.507059e+37
  %v3853 = vand.u32 %v3840, 2147483648
  %v3854 = vor.u32 1.1754944e-38, %v3853
  %v3855 = vsel %vm3852, %v3854, %v3850
  %v3856 = vmul.f32 1.0, %v3855
  %v3857 = vrcp.pop %v3841
  %v3858 = vmul.f32 %v3841, %v3857
  %v3859 = vsub.f32 1.0, %v3858
  %v3860 = vmul.f32 %v3857, %v3859
  %v3861 = vadd.f32 %v3857, %v3860
  %vm3862 = vweird.f32 %v3841
  %vm3863 = vweird.f32 %v3857
  %vm3864 = vmor %vm3862, %vm3863
  %v3865 = vsel %vm3864, %v3857, %v3861
  %v3866 = vand.u32 2147483647, %v3841
  %vm3867 = vcmp.eq.f32.partialorder %v3866, 8.507059e+37
  %v3868 = vand.u32 %v3841, 2147483648
  %v3869 = vor.u32 1.1754944e-38, %v3868
  %v3870 = vsel %vm3867, %v3869, %v3865
  %v3871 = vmul.f32 1.0, %v3870
  %v3872 = vmul.f32 %v3816, %v3170
  %v3873 = vmul.f32 %v3831, %v3171
  %v3874 = vmul.f32 %v3778, %v3832
  %v3875 = vmul.f32 %v3793, %v3833
  %v3876 = vadd.f32 %v3872, %v3874
  %v3877 = vadd.f32 %v3873, %v3875
  %v3878 = vtanh.pop %v3876
  %v3879 = vtanh.pop %v3877
  %v3880 = vmul.f32 %v3856, %v3878
  %v3881 = vmul.f32 %v3871, %v3879
  %v3882 = vpack.c.bf16 %v3880, %v3880
  %v3883 = vpack.c.bf16 %v3881, %v3881
  %v3886 = vunpack.c.l.b16 %v3882
  %v3887 = vunpack.c.l.b16 %v3883
  %v3888 = vpack.c.b16 %v3887, %v3886
  %v3892 = vunpack.c.l.b16 %v3428
  %v3893 = vunpack.c.l.b16 %v3429
  %v3894 = vpack.c.b16 %v3893, %v3892
  %3896 = vmatpush.bf16.msra.mxu0 %v2385
  %3897 = vmatpush.bf16.msra.mxu0 %v2381
  %3898 = vmatpush.bf16.msra.mxu0 %v2377
  %3899 = vmatpush.bf16.msra.mxu0 %v2373
  %3900 = vmatpush.bf16.msra.mxu0 %v2369
  %3901 = vmatpush.bf16.msra.mxu0 %v2365
  %3902 = vmatpush.bf16.msra.mxu0 %v2361
  %3903 = vmatpush.bf16.msra.mxu0 %v2357
  %3904 = vmatmul.bf16.gmra.mxu0 %v3888
  %v3905 = vpop.f32.mrf.mxu0
  %v3906 = vadd.f32 %v1027, %v3905
  %v3907 = vpop.f32.mrf.mxu0
  %v3908 = vadd.f32 %v1027, %v3907
  %3909 = vdwg.mxu0
  %3910 = vmatpush.bf16.msra.mxu0 %v2417
  %3911 = vmatpush.bf16.msra.mxu0 %v2413
  %3912 = vmatpush.bf16.msra.mxu0 %v2409
  %3913 = vmatpush.bf16.msra.mxu0 %v2405
  %3914 = vmatpush.bf16.msra.mxu0 %v2401
  %3915 = vmatpush.bf16.msra.mxu0 %v2397
  %3916 = vmatpush.bf16.msra.mxu0 %v2393
  %3917 = vmatpush.bf16.msra.mxu0 %v2389
  %3918 = vmatmul.bf16.gmra.mxu0 %v3894
  %v3919 = vpop.f32.mrf.mxu0
  %v3920 = vadd.f32 %v3906, %v3919
  %v3921 = vpop.f32.mrf.mxu0
  %v3922 = vadd.f32 %v3908, %v3921
  %3923 = vdwg.mxu0
  %3924 = vmatpush.bf16.msra.mxu0 %v2386
  %3925 = vmatpush.bf16.msra.mxu0 %v2382
  %3926 = vmatpush.bf16.msra.mxu0 %v2378
  %3927 = vmatpush.bf16.msra.mxu0 %v2374
  %3928 = vmatpush.bf16.msra.mxu0 %v2370
  %3929 = vmatpush.bf16.msra.mxu0 %v2366
  %3930 = vmatpush.bf16.msra.mxu0 %v2362
  %3931 = vmatpush.bf16.msra.mxu0 %v2358
  %3932 = vmatmul.bf16.gmra.mxu0 %v3888
  %v3933 = vpop.f32.mrf.mxu0
  %v3934 = vadd.f32 %v1028, %v3933
  %v3935 = vpop.f32.mrf.mxu0
  %v3936 = vadd.f32 %v1028, %v3935
  %3937 = vdwg.mxu0
  %3938 = vmatpush.bf16.msra.mxu0 %v2418
  %3939 = vmatpush.bf16.msra.mxu0 %v2414
  %3940 = vmatpush.bf16.msra.mxu0 %v2410
  %3941 = vmatpush.bf16.msra.mxu0 %v2406
  %3942 = vmatpush.bf16.msra.mxu0 %v2402
  %3943 = vmatpush.bf16.msra.mxu0 %v2398
  %3944 = vmatpush.bf16.msra.mxu0 %v2394
  %3945 = vmatpush.bf16.msra.mxu0 %v2390
  %3946 = vmatmul.bf16.gmra.mxu0 %v3894
  %v3947 = vpop.f32.mrf.mxu0
  %v3948 = vadd.f32 %v3934, %v3947
  %v3949 = vpop.f32.mrf.mxu0
  %v3950 = vadd.f32 %v3936, %v3949
  %3951 = vdwg.mxu0
  %3952 = vmatpush.bf16.msra.mxu0 %v2387
  %3953 = vmatpush.bf16.msra.mxu0 %v2383
  %3954 = vmatpush.bf16.msra.mxu0 %v2379
  %3955 = vmatpush.bf16.msra.mxu0 %v2375
  %3956 = vmatpush.bf16.msra.mxu0 %v2371
  %3957 = vmatpush.bf16.msra.mxu0 %v2367
  %3958 = vmatpush.bf16.msra.mxu0 %v2363
  %3959 = vmatpush.bf16.msra.mxu0 %v2359
  %3960 = vmatmul.bf16.gmra.mxu0 %v3888
  %v3961 = vpop.f32.mrf.mxu0
  %v3962 = vadd.f32 %v1029, %v3961
  %v3963 = vpop.f32.mrf.mxu0
  %v3964 = vadd.f32 %v1029, %v3963
  %3965 = vdwg.mxu0
  %3966 = vmatpush.bf16.msra.mxu0 %v2419
  %3967 = vmatpush.bf16.msra.mxu0 %v2415
  %3968 = vmatpush.bf16.msra.mxu0 %v2411
  %3969 = vmatpush.bf16.msra.mxu0 %v2407
  %3970 = vmatpush.bf16.msra.mxu0 %v2403
  %3971 = vmatpush.bf16.msra.mxu0 %v2399
  %3972 = vmatpush.bf16.msra.mxu0 %v2395
  %3973 = vmatpush.bf16.msra.mxu0 %v2391
  %3974 = vmatmul.bf16.gmra.mxu0 %v3894
  %v3975 = vpop.f32.mrf.mxu0
  %v3976 = vadd.f32 %v3962, %v3975
  %v3977 = vpop.f32.mrf.mxu0
  %v3978 = vadd.f32 %v3964, %v3977
  %3979 = vdwg.mxu0
  %3980 = vmatpush.bf16.msra.mxu0 %v2388
  %3981 = vmatpush.bf16.msra.mxu0 %v2384
  %3982 = vmatpush.bf16.msra.mxu0 %v2380
  %3983 = vmatpush.bf16.msra.mxu0 %v2376
  %3984 = vmatpush.bf16.msra.mxu0 %v2372
  %3985 = vmatpush.bf16.msra.mxu0 %v2368
  %3986 = vmatpush.bf16.msra.mxu0 %v2364
  %3987 = vmatpush.bf16.msra.mxu0 %v2360
  %3988 = vmatmul.bf16.gmra.mxu0 %v3888
  %v3989 = vpop.f32.mrf.mxu0
  %v3990 = vadd.f32 %v1030, %v3989
  %v3991 = vpop.f32.mrf.mxu0
  %v3992 = vadd.f32 %v1030, %v3991
  %3993 = vdwg.mxu0
  %3994 = vmatpush.bf16.msra.mxu0 %v2420
  %3995 = vmatpush.bf16.msra.mxu0 %v2416
  %3996 = vmatpush.bf16.msra.mxu0 %v2412
  %3997 = vmatpush.bf16.msra.mxu0 %v2408
  %3998 = vmatpush.bf16.msra.mxu0 %v2404
  %3999 = vmatpush.bf16.msra.mxu0 %v2400
  %4000 = vmatpush.bf16.msra.mxu0 %v2396
  %4001 = vmatpush.bf16.msra.mxu0 %v2392
  %4002 = vmatmul.bf16.gmra.mxu0 %v3894
  %v4003 = vpop.f32.mrf.mxu0
  %v4004 = vadd.f32 %v3990, %v4003
  %v4005 = vpop.f32.mrf.mxu0
  %v4006 = vadd.f32 %v3992, %v4005
  %4007 = vdwg.mxu0
  %v4008 = vxor.u32 %v3920, 2147483648
  %v4009 = vxor.u32 %v3922, 2147483648
  %v4010 = vmul.f32 %v4008, 1.442695
  %v4011 = vpow.pop %v4010
  %v4012 = vmul.f32 %v4009, 1.442695
  %v4013 = vpow.pop %v4012
  %v4014 = vadd.f32 %v4011, 1.0
  %v4015 = vadd.f32 %v4013, 1.0
  %v4016 = vrcp.pop %v4014
  %v4017 = vmul.f32 %v4014, %v4016
  %v4018 = vsub.f32 1.0, %v4017
  %v4019 = vmul.f32 %v4016, %v4018
  %v4020 = vadd.f32 %v4016, %v4019
  %vm4021 = vweird.f32 %v4014
  %vm4022 = vweird.f32 %v4016
  %vm4023 = vmor %vm4021, %vm4022
  %v4024 = vsel %vm4023, %v4016, %v4020
  %v4025 = vand.u32 2147483647, %v4014
  %vm4026 = vcmp.eq.f32.partialorder %v4025, 8.507059e+37
  %v4027 = vand.u32 %v4014, 2147483648
  %v4028 = vor.u32 1.1754944e-38, %v4027
  %v4029 = vsel %vm4026, %v4028, %v4024
  %v4030 = vmul.f32 1.0, %v4029
  %v4031 = vrcp.pop %v4015
  %v4032 = vmul.f32 %v4015, %v4031
  %v4033 = vsub.f32 1.0, %v4032
  %v4034 = vmul.f32 %v4031, %v4033
  %v4035 = vadd.f32 %v4031, %v4034
  %vm4036 = vweird.f32 %v4015
  %vm4037 = vweird.f32 %v4031
  %vm4038 = vmor %vm4036, %vm4037
  %v4039 = vsel %vm4038, %v4031, %v4035
  %v4040 = vand.u32 2147483647, %v4015
  %vm4041 = vcmp.eq.f32.partialorder %v4040, 8.507059e+37
  %v4042 = vand.u32 %v4015, 2147483648
  %v4043 = vor.u32 1.1754944e-38, %v4042
  %v4044 = vsel %vm4041, %v4043, %v4039
  %v4045 = vmul.f32 1.0, %v4044
  %v4046 = vxor.u32 %v3948, 2147483648
  %v4047 = vxor.u32 %v3950, 2147483648
  %v4048 = vmul.f32 %v4046, 1.442695
  %v4049 = vpow.pop %v4048
  %v4050 = vmul.f32 %v4047, 1.442695
  %v4051 = vpow.pop %v4050
  %v4052 = vadd.f32 %v4049, 1.0
  %v4053 = vadd.f32 %v4051, 1.0
  %v4054 = vrcp.pop %v4052
  %v4055 = vmul.f32 %v4052, %v4054
  %v4056 = vsub.f32 1.0, %v4055
  %v4057 = vmul.f32 %v4054, %v4056
  %v4058 = vadd.f32 %v4054, %v4057
  %vm4059 = vweird.f32 %v4052
  %vm4060 = vweird.f32 %v4054
  %vm4061 = vmor %vm4059, %vm4060
  %v4062 = vsel %vm4061, %v4054, %v4058
  %v4063 = vand.u32 2147483647, %v4052
  %vm4064 = vcmp.eq.f32.partialorder %v4063, 8.507059e+37
  %v4065 = vand.u32 %v4052, 2147483648
  %v4066 = vor.u32 1.1754944e-38, %v4065
  %v4067 = vsel %vm4064, %v4066, %v4062
  %v4068 = vmul.f32 1.0, %v4067
  %v4069 = vrcp.pop %v4053
  %v4070 = vmul.f32 %v4053, %v4069
  %v4071 = vsub.f32 1.0, %v4070
  %v4072 = vmul.f32 %v4069, %v4071
  %v4073 = vadd.f32 %v4069, %v4072
  %vm4074 = vweird.f32 %v4053
  %vm4075 = vweird.f32 %v4069
  %vm4076 = vmor %vm4074, %vm4075
  %v4077 = vsel %vm4076, %v4069, %v4073
  %v4078 = vand.u32 2147483647, %v4053
  %vm4079 = vcmp.eq.f32.partialorder %v4078, 8.507059e+37
  %v4080 = vand.u32 %v4053, 2147483648
  %v4081 = vor.u32 1.1754944e-38, %v4080
  %v4082 = vsel %vm4079, %v4081, %v4077
  %v4083 = vmul.f32 1.0, %v4082
  %v4084 = vtanh.pop %v3976
  %v4085 = vtanh.pop %v3978
  %v4086 = vxor.u32 %v4004, 2147483648
  %v4087 = vxor.u32 %v4006, 2147483648
  %v4088 = vmul.f32 %v4086, 1.442695
  %v4089 = vpow.pop %v4088
  %v4090 = vmul.f32 %v4087, 1.442695
  %v4091 = vpow.pop %v4090
  %v4092 = vadd.f32 %v4089, 1.0
  %v4093 = vadd.f32 %v4091, 1.0
  %v4094 = vrcp.pop %v4092
  %v4095 = vmul.f32 %v4092, %v4094
  %v4096 = vsub.f32 1.0, %v4095
  %v4097 = vmul.f32 %v4094, %v4096
  %v4098 = vadd.f32 %v4094, %v4097
  %vm4099 = vweird.f32 %v4092
  %vm4100 = vweird.f32 %v4094
  %vm4101 = vmor %vm4099, %vm4100
  %v4102 = vsel %vm4101, %v4094, %v4098
  %v4103 = vand.u32 2147483647, %v4092
  %vm4104 = vcmp.eq.f32.partialorder %v4103, 8.507059e+37
  %v4105 = vand.u32 %v4092, 2147483648
  %v4106 = vor.u32 1.1754944e-38, %v4105
  %v4107 = vsel %vm4104, %v4106, %v4102
  %v4108 = vmul.f32 1.0, %v4107
  %v4109 = vrcp.pop %v4093
  %v4110 = vmul.f32 %v4093, %v4109
  %v4111 = vsub.f32 1.0, %v4110
  %v4112 = vmul.f32 %v4109, %v4111
  %v4113 = vadd.f32 %v4109, %v4112
  %vm4114 = vweird.f32 %v4093
  %vm4115 = vweird.f32 %v4109
  %vm4116 = vmor %vm4114, %vm4115
  %v4117 = vsel %vm4116, %v4109, %v4113
  %v4118 = vand.u32 2147483647, %v4093
  %vm4119 = vcmp.eq.f32.partialorder %v4118, 8.507059e+37
  %v4120 = vand.u32 %v4093, 2147483648
  %v4121 = vor.u32 1.1754944e-38, %v4120
  %v4122 = vsel %vm4119, %v4121, %v4117
  %v4123 = vmul.f32 1.0, %v4122
  %v4124 = vmul.f32 %v4068, %v3422
  %v4125 = vmul.f32 %v4083, %v3423
  %v4126 = vmul.f32 %v4030, %v4084
  %v4127 = vmul.f32 %v4045, %v4085
  %v4128 = vadd.f32 %v4124, %v4126
  %v4129 = vadd.f32 %v4125, %v4127
  %v4130 = vtanh.pop %v4128
  %v4131 = vtanh.pop %v4129
  %v4132 = vmul.f32 %v4108, %v4130
  %v4133 = vmul.f32 %v4123, %v4131
  %v4134 = vpack.c.bf16 %v4132, %v4132
  %v4135 = vpack.c.bf16 %v4133, %v4133
  %s4136 = scalar_lea.vmem [#allocation5], 16
  %4137 = vst [vmem:[%s4136] sm:$0xf] %v4134
  %4138 = vst [vmem:[%s4136 + $0x4] sm:$0xf] %v4135
  %s4139 = scalar_lea.vmem [#allocation4], 96
  %v4140 = vld [vmem:[%s4139] sm:$0xff]
  %v4141 = vld [vmem:[%s4139 + $0x8] sm:$0xff]
  %v4142 = vld [vmem:[%s4139 + $0x10] sm:$0xff]
  %v4143 = vld [vmem:[%s4139 + $0x18] sm:$0xff]
  %4144 = vmatpush.bf16.msra.mxu0 %v1345
  %4145 = vmatpush.bf16.msra.mxu0 %v1341
  %4146 = vmatpush.bf16.msra.mxu0 %v1337
  %4147 = vmatpush.bf16.msra.mxu0 %v1333
  %4148 = vmatpush.bf16.msra.mxu0 %v1329
  %4149 = vmatpush.bf16.msra.mxu0 %v1325
  %4150 = vmatpush.bf16.msra.mxu0 %v1321
  %4151 = vmatpush.bf16.msra.mxu0 %v1317
  %4152 = vmatmul.bf16.gmra.mxu0 %v3642
  %v4153 = vpop.f32.mrf.mxu0
  %v4154 = vadd.f32 0.0, %v4153
  %v4155 = vpop.f32.mrf.mxu0
  %v4156 = vadd.f32 0.0, %v4155
  %4157 = vdwg.mxu0
  %4158 = vmatpush.bf16.msra.mxu0 %v1346
  %4159 = vmatpush.bf16.msra.mxu0 %v1342
  %4160 = vmatpush.bf16.msra.mxu0 %v1338
  %4161 = vmatpush.bf16.msra.mxu0 %v1334
  %4162 = vmatpush.bf16.msra.mxu0 %v1330
  %4163 = vmatpush.bf16.msra.mxu0 %v1326
  %4164 = vmatpush.bf16.msra.mxu0 %v1322
  %4165 = vmatpush.bf16.msra.mxu0 %v1318
  %4166 = vmatmul.bf16.gmra.mxu0 %v3642
  %v4167 = vpop.f32.mrf.mxu0
  %v4168 = vadd.f32 0.0, %v4167
  %v4169 = vpop.f32.mrf.mxu0
  %v4170 = vadd.f32 0.0, %v4169
  %4171 = vdwg.mxu0
  %4172 = vmatpush.bf16.msra.mxu0 %v1347
  %4173 = vmatpush.bf16.msra.mxu0 %v1343
  %4174 = vmatpush.bf16.msra.mxu0 %v1339
  %4175 = vmatpush.bf16.msra.mxu0 %v1335
  %4176 = vmatpush.bf16.msra.mxu0 %v1331
  %4177 = vmatpush.bf16.msra.mxu0 %v1327
  %4178 = vmatpush.bf16.msra.mxu0 %v1323
  %4179 = vmatpush.bf16.msra.mxu0 %v1319
  %4180 = vmatmul.bf16.gmra.mxu0 %v3642
  %v4181 = vpop.f32.mrf.mxu0
  %v4182 = vadd.f32 0.0, %v4181
  %v4183 = vpop.f32.mrf.mxu0
  %v4184 = vadd.f32 0.0, %v4183
  %4185 = vdwg.mxu0
  %4186 = vmatpush.bf16.msra.mxu0 %v1348
  %4187 = vmatpush.bf16.msra.mxu0 %v1344
  %4188 = vmatpush.bf16.msra.mxu0 %v1340
  %4189 = vmatpush.bf16.msra.mxu0 %v1336
  %4190 = vmatpush.bf16.msra.mxu0 %v1332
  %4191 = vmatpush.bf16.msra.mxu0 %v1328
  %4192 = vmatpush.bf16.msra.mxu0 %v1324
  %4193 = vmatpush.bf16.msra.mxu0 %v1320
  %4194 = vmatmul.bf16.gmra.mxu0 %v3642
  %v4195 = vpop.f32.mrf.mxu0
  %v4196 = vadd.f32 0.0, %v4195
  %v4197 = vpop.f32.mrf.mxu0
  %v4198 = vadd.f32 0.0, %v4197
  %4199 = vdwg.mxu0
  %v4200 = vunpack.c.l.bf16 %v4140
  %v4201 = vunpack.c.h.bf16 %v4140
  %v4202 = vunpack.c.l.bf16 %v4141
  %v4203 = vunpack.c.h.bf16 %v4141
  %v4204 = vunpack.c.l.bf16 %v4142
  %v4205 = vunpack.c.h.bf16 %v4142
  %v4206 = vunpack.c.l.bf16 %v4143
  %v4207 = vunpack.c.h.bf16 %v4143
  %v4208 = vadd.f32 %v4200, %v4154
  %v4209 = vadd.f32 %v4201, %v4168
  %v4210 = vadd.f32 %v4202, %v4182
  %v4211 = vadd.f32 %v4203, %v4196
  %v4212 = vadd.f32 %v4204, %v4156
  %v4213 = vadd.f32 %v4205, %v4170
  %v4214 = vadd.f32 %v4206, %v4184
  %v4215 = vadd.f32 %v4207, %v4198
  %v4216 = vxor.u32 %v4208, 2147483648
  %v4217 = vxor.u32 %v4212, 2147483648
  %v4218 = vmul.f32 %v4216, 1.442695
  %v4219 = vpow.pop %v4218
  %v4220 = vmul.f32 %v4217, 1.442695
  %v4221 = vpow.pop %v4220
  %v4222 = vadd.f32 %v4219, 1.0
  %v4223 = vadd.f32 %v4221, 1.0
  %v4224 = vrcp.pop %v4222
  %v4225 = vmul.f32 %v4222, %v4224
  %v4226 = vsub.f32 1.0, %v4225
  %v4227 = vmul.f32 %v4224, %v4226
  %v4228 = vadd.f32 %v4224, %v4227
  %vm4229 = vweird.f32 %v4222
  %vm4230 = vweird.f32 %v4224
  %vm4231 = vmor %vm4229, %vm4230
  %v4232 = vsel %vm4231, %v4224, %v4228
  %v4233 = vand.u32 2147483647, %v4222
  %vm4234 = vcmp.eq.f32.partialorder %v4233, 8.507059e+37
  %v4235 = vand.u32 %v4222, 2147483648
  %v4236 = vor.u32 1.1754944e-38, %v4235
  %v4237 = vsel %vm4234, %v4236, %v4232
  %v4238 = vmul.f32 1.0, %v4237
  %v4239 = vrcp.pop %v4223
  %v4240 = vmul.f32 %v4223, %v4239
  %v4241 = vsub.f32 1.0, %v4240
  %v4242 = vmul.f32 %v4239, %v4241
  %v4243 = vadd.f32 %v4239, %v4242
  %vm4244 = vweird.f32 %v4223
  %vm4245 = vweird.f32 %v4239
  %vm4246 = vmor %vm4244, %vm4245
  %v4247 = vsel %vm4246, %v4239, %v4243
  %v4248 = vand.u32 2147483647, %v4223
  %vm4249 = vcmp.eq.f32.partialorder %v4248, 8.507059e+37
  %v4250 = vand.u32 %v4223, 2147483648
  %v4251 = vor.u32 1.1754944e-38, %v4250
  %v4252 = vsel %vm4249, %v4251, %v4247
  %v4253 = vmul.f32 1.0, %v4252
  %v4254 = vxor.u32 %v4209, 2147483648
  %v4255 = vxor.u32 %v4213, 2147483648
  %v4256 = vmul.f32 %v4254, 1.442695
  %v4257 = vpow.pop %v4256
  %v4258 = vmul.f32 %v4255, 1.442695
  %v4259 = vpow.pop %v4258
  %v4260 = vadd.f32 %v4257, 1.0
  %v4261 = vadd.f32 %v4259, 1.0
  %v4262 = vrcp.pop %v4260
  %v4263 = vmul.f32 %v4260, %v4262
  %v4264 = vsub.f32 1.0, %v4263
  %v4265 = vmul.f32 %v4262, %v4264
  %v4266 = vadd.f32 %v4262, %v4265
  %vm4267 = vweird.f32 %v4260
  %vm4268 = vweird.f32 %v4262
  %vm4269 = vmor %vm4267, %vm4268
  %v4270 = vsel %vm4269, %v4262, %v4266
  %v4271 = vand.u32 2147483647, %v4260
  %vm4272 = vcmp.eq.f32.partialorder %v4271, 8.507059e+37
  %v4273 = vand.u32 %v4260, 2147483648
  %v4274 = vor.u32 1.1754944e-38, %v4273
  %v4275 = vsel %vm4272, %v4274, %v4270
  %v4276 = vmul.f32 1.0, %v4275
  %v4277 = vrcp.pop %v4261
  %v4278 = vmul.f32 %v4261, %v4277
  %v4279 = vsub.f32 1.0, %v4278
  %v4280 = vmul.f32 %v4277, %v4279
  %v4281 = vadd.f32 %v4277, %v4280
  %vm4282 = vweird.f32 %v4261
  %vm4283 = vweird.f32 %v4277
  %vm4284 = vmor %vm4282, %vm4283
  %v4285 = vsel %vm4284, %v4277, %v4281
  %v4286 = vand.u32 2147483647, %v4261
  %vm4287 = vcmp.eq.f32.partialorder %v4286, 8.507059e+37
  %v4288 = vand.u32 %v4261, 2147483648
  %v4289 = vor.u32 1.1754944e-38, %v4288
  %v4290 = vsel %vm4287, %v4289, %v4285
  %v4291 = vmul.f32 1.0, %v4290
  %v4292 = vtanh.pop %v4210
  %v4293 = vtanh.pop %v4214
  %v4294 = vxor.u32 %v4211, 2147483648
  %v4295 = vxor.u32 %v4215, 2147483648
  %v4296 = vmul.f32 %v4294, 1.442695
  %v4297 = vpow.pop %v4296
  %v4298 = vmul.f32 %v4295, 1.442695
  %v4299 = vpow.pop %v4298
  %v4300 = vadd.f32 %v4297, 1.0
  %v4301 = vadd.f32 %v4299, 1.0
  %v4302 = vrcp.pop %v4300
  %v4303 = vmul.f32 %v4300, %v4302
  %v4304 = vsub.f32 1.0, %v4303
  %v4305 = vmul.f32 %v4302, %v4304
  %v4306 = vadd.f32 %v4302, %v4305
  %vm4307 = vweird.f32 %v4300
  %vm4308 = vweird.f32 %v4302
  %vm4309 = vmor %vm4307, %vm4308
  %v4310 = vsel %vm4309, %v4302, %v4306
  %v4311 = vand.u32 2147483647, %v4300
  %vm4312 = vcmp.eq.f32.partialorder %v4311, 8.507059e+37
  %v4313 = vand.u32 %v4300, 2147483648
  %v4314 = vor.u32 1.1754944e-38, %v4313
  %v4315 = vsel %vm4312, %v4314, %v4310
  %v4316 = vmul.f32 1.0, %v4315
  %v4317 = vrcp.pop %v4301
  %v4318 = vmul.f32 %v4301, %v4317
  %v4319 = vsub.f32 1.0, %v4318
  %v4320 = vmul.f32 %v4317, %v4319
  %v4321 = vadd.f32 %v4317, %v4320
  %vm4322 = vweird.f32 %v4301
  %vm4323 = vweird.f32 %v4317
  %vm4324 = vmor %vm4322, %vm4323
  %v4325 = vsel %vm4324, %v4317, %v4321
  %v4326 = vand.u32 2147483647, %v4301
  %vm4327 = vcmp.eq.f32.partialorder %v4326, 8.507059e+37
  %v4328 = vand.u32 %v4301, 2147483648
  %v4329 = vor.u32 1.1754944e-38, %v4328
  %v4330 = vsel %vm4327, %v4329, %v4325
  %v4331 = vmul.f32 1.0, %v4330
  %v4332 = vmul.f32 %v4276, %v3630
  %v4333 = vmul.f32 %v4291, %v3631
  %v4334 = vmul.f32 %v4238, %v4292
  %v4335 = vmul.f32 %v4253, %v4293
  %v4336 = vadd.f32 %v4332, %v4334
  %v4337 = vadd.f32 %v4333, %v4335
  %v4338 = vtanh.pop %v4336
  %v4339 = vtanh.pop %v4337
  %v4340 = vmul.f32 %v4316, %v4338
  %v4341 = vmul.f32 %v4331, %v4339
  %v4342 = vpack.c.bf16 %v4340, %v4340
  %v4343 = vpack.c.bf16 %v4341, %v4341
  %v4346 = vunpack.c.l.b16 %v4342
  %v4347 = vunpack.c.l.b16 %v4343
  %v4348 = vpack.c.b16 %v4347, %v4346
  %4350 = vmatpush.bf16.msra.mxu0 %v1813
  %4351 = vmatpush.bf16.msra.mxu0 %v1809
  %4352 = vmatpush.bf16.msra.mxu0 %v1805
  %4353 = vmatpush.bf16.msra.mxu0 %v1801
  %4354 = vmatpush.bf16.msra.mxu0 %v1797
  %4355 = vmatpush.bf16.msra.mxu0 %v1793
  %4356 = vmatpush.bf16.msra.mxu0 %v1789
  %4357 = vmatpush.bf16.msra.mxu0 %v1785
  %4358 = vmatmul.bf16.gmra.mxu0 %v4348
  %v4359 = vpop.f32.mrf.mxu0
  %v4360 = vadd.f32 %v1017, %v4359
  %v4361 = vpop.f32.mrf.mxu0
  %v4362 = vadd.f32 %v1017, %v4361
  %4363 = vdwg.mxu0
  %4364 = vmatpush.bf16.msra.mxu0 %v1845
  %4365 = vmatpush.bf16.msra.mxu0 %v1841
  %4366 = vmatpush.bf16.msra.mxu0 %v1837
  %4367 = vmatpush.bf16.msra.mxu0 %v1833
  %4368 = vmatpush.bf16.msra.mxu0 %v1829
  %4369 = vmatpush.bf16.msra.mxu0 %v1825
  %4370 = vmatpush.bf16.msra.mxu0 %v1821
  %4371 = vmatpush.bf16.msra.mxu0 %v1817
  %4372 = vmatmul.bf16.gmra.mxu0 %v3888
  %v4373 = vpop.f32.mrf.mxu0
  %v4374 = vadd.f32 %v4360, %v4373
  %v4375 = vpop.f32.mrf.mxu0
  %v4376 = vadd.f32 %v4362, %v4375
  %4377 = vdwg.mxu0
  %4378 = vmatpush.bf16.msra.mxu0 %v1814
  %4379 = vmatpush.bf16.msra.mxu0 %v1810
  %4380 = vmatpush.bf16.msra.mxu0 %v1806
  %4381 = vmatpush.bf16.msra.mxu0 %v1802
  %4382 = vmatpush.bf16.msra.mxu0 %v1798
  %4383 = vmatpush.bf16.msra.mxu0 %v1794
  %4384 = vmatpush.bf16.msra.mxu0 %v1790
  %4385 = vmatpush.bf16.msra.mxu0 %v1786
  %4386 = vmatmul.bf16.gmra.mxu0 %v4348
  %v4387 = vpop.f32.mrf.mxu0
  %v4388 = vadd.f32 %v1018, %v4387
  %v4389 = vpop.f32.mrf.mxu0
  %v4390 = vadd.f32 %v1018, %v4389
  %4391 = vdwg.mxu0
  %4392 = vmatpush.bf16.msra.mxu0 %v1846
  %4393 = vmatpush.bf16.msra.mxu0 %v1842
  %4394 = vmatpush.bf16.msra.mxu0 %v1838
  %4395 = vmatpush.bf16.msra.mxu0 %v1834
  %4396 = vmatpush.bf16.msra.mxu0 %v1830
  %4397 = vmatpush.bf16.msra.mxu0 %v1826
  %4398 = vmatpush.bf16.msra.mxu0 %v1822
  %4399 = vmatpush.bf16.msra.mxu0 %v1818
  %4400 = vmatmul.bf16.gmra.mxu0 %v3888
  %v4401 = vpop.f32.mrf.mxu0
  %v4402 = vadd.f32 %v4388, %v4401
  %v4403 = vpop.f32.mrf.mxu0
  %v4404 = vadd.f32 %v4390, %v4403
  %4405 = vdwg.mxu0
  %4406 = vmatpush.bf16.msra.mxu0 %v1815
  %4407 = vmatpush.bf16.msra.mxu0 %v1811
  %4408 = vmatpush.bf16.msra.mxu0 %v1807
  %4409 = vmatpush.bf16.msra.mxu0 %v1803
  %4410 = vmatpush.bf16.msra.mxu0 %v1799
  %4411 = vmatpush.bf16.msra.mxu0 %v1795
  %4412 = vmatpush.bf16.msra.mxu0 %v1791
  %4413 = vmatpush.bf16.msra.mxu0 %v1787
  %4414 = vmatmul.bf16.gmra.mxu0 %v4348
  %v4415 = vpop.f32.mrf.mxu0
  %v4416 = vadd.f32 %v1019, %v4415
  %v4417 = vpop.f32.mrf.mxu0
  %v4418 = vadd.f32 %v1019, %v4417
  %4419 = vdwg.mxu0
  %4420 = vmatpush.bf16.msra.mxu0 %v1847
  %4421 = vmatpush.bf16.msra.mxu0 %v1843
  %4422 = vmatpush.bf16.msra.mxu0 %v1839
  %4423 = vmatpush.bf16.msra.mxu0 %v1835
  %4424 = vmatpush.bf16.msra.mxu0 %v1831
  %4425 = vmatpush.bf16.msra.mxu0 %v1827
  %4426 = vmatpush.bf16.msra.mxu0 %v1823
  %4427 = vmatpush.bf16.msra.mxu0 %v1819
  %4428 = vmatmul.bf16.gmra.mxu0 %v3888
  %v4429 = vpop.f32.mrf.mxu0
  %v4430 = vadd.f32 %v4416, %v4429
  %v4431 = vpop.f32.mrf.mxu0
  %v4432 = vadd.f32 %v4418, %v4431
  %4433 = vdwg.mxu0
  %4434 = vmatpush.bf16.msra.mxu0 %v1816
  %4435 = vmatpush.bf16.msra.mxu0 %v1812
  %4436 = vmatpush.bf16.msra.mxu0 %v1808
  %4437 = vmatpush.bf16.msra.mxu0 %v1804
  %4438 = vmatpush.bf16.msra.mxu0 %v1800
  %4439 = vmatpush.bf16.msra.mxu0 %v1796
  %4440 = vmatpush.bf16.msra.mxu0 %v1792
  %4441 = vmatpush.bf16.msra.mxu0 %v1788
  %4442 = vmatmul.bf16.gmra.mxu0 %v4348
  %v4443 = vpop.f32.mrf.mxu0
  %v4444 = vadd.f32 %v1020, %v4443
  %v4445 = vpop.f32.mrf.mxu0
  %v4446 = vadd.f32 %v1020, %v4445
  %4447 = vdwg.mxu0
  %4448 = vmatpush.bf16.msra.mxu0 %v1848
  %4449 = vmatpush.bf16.msra.mxu0 %v1844
  %4450 = vmatpush.bf16.msra.mxu0 %v1840
  %4451 = vmatpush.bf16.msra.mxu0 %v1836
  %4452 = vmatpush.bf16.msra.mxu0 %v1832
  %4453 = vmatpush.bf16.msra.mxu0 %v1828
  %4454 = vmatpush.bf16.msra.mxu0 %v1824
  %4455 = vmatpush.bf16.msra.mxu0 %v1820
  %4456 = vmatmul.bf16.gmra.mxu0 %v3888
  %v4457 = vpop.f32.mrf.mxu0
  %v4458 = vadd.f32 %v4444, %v4457
  %v4459 = vpop.f32.mrf.mxu0
  %v4460 = vadd.f32 %v4446, %v4459
  %4461 = vdwg.mxu0
  %v4462 = vxor.u32 %v4374, 2147483648
  %v4463 = vxor.u32 %v4376, 2147483648
  %v4464 = vmul.f32 %v4462, 1.442695
  %v4465 = vpow.pop %v4464
  %v4466 = vmul.f32 %v4463, 1.442695
  %v4467 = vpow.pop %v4466
  %v4468 = vadd.f32 %v4465, 1.0
  %v4469 = vadd.f32 %v4467, 1.0
  %v4470 = vrcp.pop %v4468
  %v4471 = vmul.f32 %v4468, %v4470
  %v4472 = vsub.f32 1.0, %v4471
  %v4473 = vmul.f32 %v4470, %v4472
  %v4474 = vadd.f32 %v4470, %v4473
  %vm4475 = vweird.f32 %v4468
  %vm4476 = vweird.f32 %v4470
  %vm4477 = vmor %vm4475, %vm4476
  %v4478 = vsel %vm4477, %v4470, %v4474
  %v4479 = vand.u32 2147483647, %v4468
  %vm4480 = vcmp.eq.f32.partialorder %v4479, 8.507059e+37
  %v4481 = vand.u32 %v4468, 2147483648
  %v4482 = vor.u32 1.1754944e-38, %v4481
  %v4483 = vsel %vm4480, %v4482, %v4478
  %v4484 = vmul.f32 1.0, %v4483
  %v4485 = vrcp.pop %v4469
  %v4486 = vmul.f32 %v4469, %v4485
  %v4487 = vsub.f32 1.0, %v4486
  %v4488 = vmul.f32 %v4485, %v4487
  %v4489 = vadd.f32 %v4485, %v4488
  %vm4490 = vweird.f32 %v4469
  %vm4491 = vweird.f32 %v4485
  %vm4492 = vmor %vm4490, %vm4491
  %v4493 = vsel %vm4492, %v4485, %v4489
  %v4494 = vand.u32 2147483647, %v4469
  %vm4495 = vcmp.eq.f32.partialorder %v4494, 8.507059e+37
  %v4496 = vand.u32 %v4469, 2147483648
  %v4497 = vor.u32 1.1754944e-38, %v4496
  %v4498 = vsel %vm4495, %v4497, %v4493
  %v4499 = vmul.f32 1.0, %v4498
  %v4500 = vxor.u32 %v4402, 2147483648
  %v4501 = vxor.u32 %v4404, 2147483648
  %v4502 = vmul.f32 %v4500, 1.442695
  %v4503 = vpow.pop %v4502
  %v4504 = vmul.f32 %v4501, 1.442695
  %v4505 = vpow.pop %v4504
  %v4506 = vadd.f32 %v4503, 1.0
  %v4507 = vadd.f32 %v4505, 1.0
  %v4508 = vrcp.pop %v4506
  %v4509 = vmul.f32 %v4506, %v4508
  %v4510 = vsub.f32 1.0, %v4509
  %v4511 = vmul.f32 %v4508, %v4510
  %v4512 = vadd.f32 %v4508, %v4511
  %vm4513 = vweird.f32 %v4506
  %vm4514 = vweird.f32 %v4508
  %vm4515 = vmor %vm4513, %vm4514
  %v4516 = vsel %vm4515, %v4508, %v4512
  %v4517 = vand.u32 2147483647, %v4506
  %vm4518 = vcmp.eq.f32.partialorder %v4517, 8.507059e+37
  %v4519 = vand.u32 %v4506, 2147483648
  %v4520 = vor.u32 1.1754944e-38, %v4519
  %v4521 = vsel %vm4518, %v4520, %v4516
  %v4522 = vmul.f32 1.0, %v4521
  %v4523 = vrcp.pop %v4507
  %v4524 = vmul.f32 %v4507, %v4523
  %v4525 = vsub.f32 1.0, %v4524
  %v4526 = vmul.f32 %v4523, %v4525
  %v4527 = vadd.f32 %v4523, %v4526
  %vm4528 = vweird.f32 %v4507
  %vm4529 = vweird.f32 %v4523
  %vm4530 = vmor %vm4528, %vm4529
  %v4531 = vsel %vm4530, %v4523, %v4527
  %v4532 = vand.u32 2147483647, %v4507
  %vm4533 = vcmp.eq.f32.partialorder %v4532, 8.507059e+37
  %v4534 = vand.u32 %v4507, 2147483648
  %v4535 = vor.u32 1.1754944e-38, %v4534
  %v4536 = vsel %vm4533, %v4535, %v4531
  %v4537 = vmul.f32 1.0, %v4536
  %v4538 = vtanh.pop %v4430
  %v4539 = vtanh.pop %v4432
  %v4540 = vxor.u32 %v4458, 2147483648
  %v4541 = vxor.u32 %v4460, 2147483648
  %v4542 = vmul.f32 %v4540, 1.442695
  %v4543 = vpow.pop %v4542
  %v4544 = vmul.f32 %v4541, 1.442695
  %v4545 = vpow.pop %v4544
  %v4546 = vadd.f32 %v4543, 1.0
  %v4547 = vadd.f32 %v4545, 1.0
  %v4548 = vrcp.pop %v4546
  %v4549 = vmul.f32 %v4546, %v4548
  %v4550 = vsub.f32 1.0, %v4549
  %v4551 = vmul.f32 %v4548, %v4550
  %v4552 = vadd.f32 %v4548, %v4551
  %vm4553 = vweird.f32 %v4546
  %vm4554 = vweird.f32 %v4548
  %vm4555 = vmor %vm4553, %vm4554
  %v4556 = vsel %vm4555, %v4548, %v4552
  %v4557 = vand.u32 2147483647, %v4546
  %vm4558 = vcmp.eq.f32.partialorder %v4557, 8.507059e+37
  %v4559 = vand.u32 %v4546, 2147483648
  %v4560 = vor.u32 1.1754944e-38, %v4559
  %v4561 = vsel %vm4558, %v4560, %v4556
  %v4562 = vmul.f32 1.0, %v4561
  %v4563 = vrcp.pop %v4547
  %v4564 = vmul.f32 %v4547, %v4563
  %v4565 = vsub.f32 1.0, %v4564
  %v4566 = vmul.f32 %v4563, %v4565
  %v4567 = vadd.f32 %v4563, %v4566
  %vm4568 = vweird.f32 %v4547
  %vm4569 = vweird.f32 %v4563
  %vm4570 = vmor %vm4568, %vm4569
  %v4571 = vsel %vm4570, %v4563, %v4567
  %v4572 = vand.u32 2147483647, %v4547
  %vm4573 = vcmp.eq.f32.partialorder %v4572, 8.507059e+37
  %v4574 = vand.u32 %v4547, 2147483648
  %v4575 = vor.u32 1.1754944e-38, %v4574
  %v4576 = vsel %vm4573, %v4575, %v4571
  %v4577 = vmul.f32 1.0, %v4576
  %v4578 = vmul.f32 %v4522, %v3876
  %v4579 = vmul.f32 %v4537, %v3877
  %v4580 = vmul.f32 %v4484, %v4538
  %v4581 = vmul.f32 %v4499, %v4539
  %v4582 = vadd.f32 %v4578, %v4580
  %v4583 = vadd.f32 %v4579, %v4581
  %v4584 = vtanh.pop %v4582
  %v4585 = vtanh.pop %v4583
  %v4586 = vmul.f32 %v4562, %v4584
  %v4587 = vmul.f32 %v4577, %v4585
  %v4588 = vpack.c.bf16 %v4586, %v4586
  %v4589 = vpack.c.bf16 %v4587, %v4587
  %v4592 = vunpack.c.l.b16 %v4588
  %v4593 = vunpack.c.l.b16 %v4589
  %v4594 = vpack.c.b16 %v4593, %v4592
  %v4598 = vunpack.c.l.b16 %v4134
  %v4599 = vunpack.c.l.b16 %v4135
  %v4600 = vpack.c.b16 %v4599, %v4598
  %4602 = vmatpush.bf16.msra.mxu0 %v2385
  %4603 = vmatpush.bf16.msra.mxu0 %v2381
  %4604 = vmatpush.bf16.msra.mxu0 %v2377
  %4605 = vmatpush.bf16.msra.mxu0 %v2373
  %4606 = vmatpush.bf16.msra.mxu0 %v2369
  %4607 = vmatpush.bf16.msra.mxu0 %v2365
  %4608 = vmatpush.bf16.msra.mxu0 %v2361
  %4609 = vmatpush.bf16.msra.mxu0 %v2357
  %4610 = vmatmul.bf16.gmra.mxu0 %v4594
  %v4611 = vpop.f32.mrf.mxu0
  %v4612 = vadd.f32 %v1027, %v4611
  %v4613 = vpop.f32.mrf.mxu0
  %v4614 = vadd.f32 %v1027, %v4613
  %4615 = vdwg.mxu0
  %4616 = vmatpush.bf16.msra.mxu0 %v2417
  %4617 = vmatpush.bf16.msra.mxu0 %v2413
  %4618 = vmatpush.bf16.msra.mxu0 %v2409
  %4619 = vmatpush.bf16.msra.mxu0 %v2405
  %4620 = vmatpush.bf16.msra.mxu0 %v2401
  %4621 = vmatpush.bf16.msra.mxu0 %v2397
  %4622 = vmatpush.bf16.msra.mxu0 %v2393
  %4623 = vmatpush.bf16.msra.mxu0 %v2389
  %4624 = vmatmul.bf16.gmra.mxu0 %v4600
  %v4625 = vpop.f32.mrf.mxu0
  %v4626 = vadd.f32 %v4612, %v4625
  %v4627 = vpop.f32.mrf.mxu0
  %v4628 = vadd.f32 %v4614, %v4627
  %4629 = vdwg.mxu0
  %4630 = vmatpush.bf16.msra.mxu0 %v2386
  %4631 = vmatpush.bf16.msra.mxu0 %v2382
  %4632 = vmatpush.bf16.msra.mxu0 %v2378
  %4633 = vmatpush.bf16.msra.mxu0 %v2374
  %4634 = vmatpush.bf16.msra.mxu0 %v2370
  %4635 = vmatpush.bf16.msra.mxu0 %v2366
  %4636 = vmatpush.bf16.msra.mxu0 %v2362
  %4637 = vmatpush.bf16.msra.mxu0 %v2358
  %4638 = vmatmul.bf16.gmra.mxu0 %v4594
  %v4639 = vpop.f32.mrf.mxu0
  %v4640 = vadd.f32 %v1028, %v4639
  %v4641 = vpop.f32.mrf.mxu0
  %v4642 = vadd.f32 %v1028, %v4641
  %4643 = vdwg.mxu0
  %4644 = vmatpush.bf16.msra.mxu0 %v2418
  %4645 = vmatpush.bf16.msra.mxu0 %v2414
  %4646 = vmatpush.bf16.msra.mxu0 %v2410
  %4647 = vmatpush.bf16.msra.mxu0 %v2406
  %4648 = vmatpush.bf16.msra.mxu0 %v2402
  %4649 = vmatpush.bf16.msra.mxu0 %v2398
  %4650 = vmatpush.bf16.msra.mxu0 %v2394
  %4651 = vmatpush.bf16.msra.mxu0 %v2390
  %4652 = vmatmul.bf16.gmra.mxu0 %v4600
  %v4653 = vpop.f32.mrf.mxu0
  %v4654 = vadd.f32 %v4640, %v4653
  %v4655 = vpop.f32.mrf.mxu0
  %v4656 = vadd.f32 %v4642, %v4655
  %4657 = vdwg.mxu0
  %4658 = vmatpush.bf16.msra.mxu0 %v2387
  %4659 = vmatpush.bf16.msra.mxu0 %v2383
  %4660 = vmatpush.bf16.msra.mxu0 %v2379
  %4661 = vmatpush.bf16.msra.mxu0 %v2375
  %4662 = vmatpush.bf16.msra.mxu0 %v2371
  %4663 = vmatpush.bf16.msra.mxu0 %v2367
  %4664 = vmatpush.bf16.msra.mxu0 %v2363
  %4665 = vmatpush.bf16.msra.mxu0 %v2359
  %4666 = vmatmul.bf16.gmra.mxu0 %v4594
  %v4667 = vpop.f32.mrf.mxu0
  %v4668 = vadd.f32 %v1029, %v4667
  %v4669 = vpop.f32.mrf.mxu0
  %v4670 = vadd.f32 %v1029, %v4669
  %4671 = vdwg.mxu0
  %4672 = vmatpush.bf16.msra.mxu0 %v2419
  %4673 = vmatpush.bf16.msra.mxu0 %v2415
  %4674 = vmatpush.bf16.msra.mxu0 %v2411
  %4675 = vmatpush.bf16.msra.mxu0 %v2407
  %4676 = vmatpush.bf16.msra.mxu0 %v2403
  %4677 = vmatpush.bf16.msra.mxu0 %v2399
  %4678 = vmatpush.bf16.msra.mxu0 %v2395
  %4679 = vmatpush.bf16.msra.mxu0 %v2391
  %4680 = vmatmul.bf16.gmra.mxu0 %v4600
  %v4681 = vpop.f32.mrf.mxu0
  %v4682 = vadd.f32 %v4668, %v4681
  %v4683 = vpop.f32.mrf.mxu0
  %v4684 = vadd.f32 %v4670, %v4683
  %4685 = vdwg.mxu0
  %4686 = vmatpush.bf16.msra.mxu0 %v2388
  %4687 = vmatpush.bf16.msra.mxu0 %v2384
  %4688 = vmatpush.bf16.msra.mxu0 %v2380
  %4689 = vmatpush.bf16.msra.mxu0 %v2376
  %4690 = vmatpush.bf16.msra.mxu0 %v2372
  %4691 = vmatpush.bf16.msra.mxu0 %v2368
  %4692 = vmatpush.bf16.msra.mxu0 %v2364
  %4693 = vmatpush.bf16.msra.mxu0 %v2360
  %4694 = vmatmul.bf16.gmra.mxu0 %v4594
  %v4695 = vpop.f32.mrf.mxu0
  %v4696 = vadd.f32 %v1030, %v4695
  %v4697 = vpop.f32.mrf.mxu0
  %v4698 = vadd.f32 %v1030, %v4697
  %4699 = vdwg.mxu0
  %4700 = vmatpush.bf16.msra.mxu0 %v2420
  %4701 = vmatpush.bf16.msra.mxu0 %v2416
  %4702 = vmatpush.bf16.msra.mxu0 %v2412
  %4703 = vmatpush.bf16.msra.mxu0 %v2408
  %4704 = vmatpush.bf16.msra.mxu0 %v2404
  %4705 = vmatpush.bf16.msra.mxu0 %v2400
  %4706 = vmatpush.bf16.msra.mxu0 %v2396
  %4707 = vmatpush.bf16.msra.mxu0 %v2392
  %4708 = vmatmul.bf16.gmra.mxu0 %v4600
  %v4709 = vpop.f32.mrf.mxu0
  %v4710 = vadd.f32 %v4696, %v4709
  %v4711 = vpop.f32.mrf.mxu0
  %v4712 = vadd.f32 %v4698, %v4711
  %4713 = vdwg.mxu0
  %v4714 = vxor.u32 %v4626, 2147483648
  %v4715 = vxor.u32 %v4628, 2147483648
  %v4716 = vmul.f32 %v4714, 1.442695
  %v4717 = vpow.pop %v4716
  %v4718 = vmul.f32 %v4715, 1.442695
  %v4719 = vpow.pop %v4718
  %v4720 = vadd.f32 %v4717, 1.0
  %v4721 = vadd.f32 %v4719, 1.0
  %v4722 = vrcp.pop %v4720
  %v4723 = vmul.f32 %v4720, %v4722
  %v4724 = vsub.f32 1.0, %v4723
  %v4725 = vmul.f32 %v4722, %v4724
  %v4726 = vadd.f32 %v4722, %v4725
  %vm4727 = vweird.f32 %v4720
  %vm4728 = vweird.f32 %v4722
  %vm4729 = vmor %vm4727, %vm4728
  %v4730 = vsel %vm4729, %v4722, %v4726
  %v4731 = vand.u32 2147483647, %v4720
  %vm4732 = vcmp.eq.f32.partialorder %v4731, 8.507059e+37
  %v4733 = vand.u32 %v4720, 2147483648
  %v4734 = vor.u32 1.1754944e-38, %v4733
  %v4735 = vsel %vm4732, %v4734, %v4730
  %v4736 = vmul.f32 1.0, %v4735
  %v4737 = vrcp.pop %v4721
  %v4738 = vmul.f32 %v4721, %v4737
  %v4739 = vsub.f32 1.0, %v4738
  %v4740 = vmul.f32 %v4737, %v4739
  %v4741 = vadd.f32 %v4737, %v4740
  %vm4742 = vweird.f32 %v4721
  %vm4743 = vweird.f32 %v4737
  %vm4744 = vmor %vm4742, %vm4743
  %v4745 = vsel %vm4744, %v4737, %v4741
  %v4746 = vand.u32 2147483647, %v4721
  %vm4747 = vcmp.eq.f32.partialorder %v4746, 8.507059e+37
  %v4748 = vand.u32 %v4721, 2147483648
  %v4749 = vor.u32 1.1754944e-38, %v4748
  %v4750 = vsel %vm4747, %v4749, %v4745
  %v4751 = vmul.f32 1.0, %v4750
  %v4752 = vxor.u32 %v4654, 2147483648
  %v4753 = vxor.u32 %v4656, 2147483648
  %v4754 = vmul.f32 %v4752, 1.442695
  %v4755 = vpow.pop %v4754
  %v4756 = vmul.f32 %v4753, 1.442695
  %v4757 = vpow.pop %v4756
  %v4758 = vadd.f32 %v4755, 1.0
  %v4759 = vadd.f32 %v4757, 1.0
  %v4760 = vrcp.pop %v4758
  %v4761 = vmul.f32 %v4758, %v4760
  %v4762 = vsub.f32 1.0, %v4761
  %v4763 = vmul.f32 %v4760, %v4762
  %v4764 = vadd.f32 %v4760, %v4763
  %vm4765 = vweird.f32 %v4758
  %vm4766 = vweird.f32 %v4760
  %vm4767 = vmor %vm4765, %vm4766
  %v4768 = vsel %vm4767, %v4760, %v4764
  %v4769 = vand.u32 2147483647, %v4758
  %vm4770 = vcmp.eq.f32.partialorder %v4769, 8.507059e+37
  %v4771 = vand.u32 %v4758, 2147483648
  %v4772 = vor.u32 1.1754944e-38, %v4771
  %v4773 = vsel %vm4770, %v4772, %v4768
  %v4774 = vmul.f32 1.0, %v4773
  %v4775 = vrcp.pop %v4759
  %v4776 = vmul.f32 %v4759, %v4775
  %v4777 = vsub.f32 1.0, %v4776
  %v4778 = vmul.f32 %v4775, %v4777
  %v4779 = vadd.f32 %v4775, %v4778
  %vm4780 = vweird.f32 %v4759
  %vm4781 = vweird.f32 %v4775
  %vm4782 = vmor %vm4780, %vm4781
  %v4783 = vsel %vm4782, %v4775, %v4779
  %v4784 = vand.u32 2147483647, %v4759
  %vm4785 = vcmp.eq.f32.partialorder %v4784, 8.507059e+37
  %v4786 = vand.u32 %v4759, 2147483648
  %v4787 = vor.u32 1.1754944e-38, %v4786
  %v4788 = vsel %vm4785, %v4787, %v4783
  %v4789 = vmul.f32 1.0, %v4788
  %v4790 = vtanh.pop %v4682
  %v4791 = vtanh.pop %v4684
  %v4792 = vxor.u32 %v4710, 2147483648
  %v4793 = vxor.u32 %v4712, 2147483648
  %v4794 = vmul.f32 %v4792, 1.442695
  %v4795 = vpow.pop %v4794
  %v4796 = vmul.f32 %v4793, 1.442695
  %v4797 = vpow.pop %v4796
  %v4798 = vadd.f32 %v4795, 1.0
  %v4799 = vadd.f32 %v4797, 1.0
  %v4800 = vrcp.pop %v4798
  %v4801 = vmul.f32 %v4798, %v4800
  %v4802 = vsub.f32 1.0, %v4801
  %v4803 = vmul.f32 %v4800, %v4802
  %v4804 = vadd.f32 %v4800, %v4803
  %vm4805 = vweird.f32 %v4798
  %vm4806 = vweird.f32 %v4800
  %vm4807 = vmor %vm4805, %vm4806
  %v4808 = vsel %vm4807, %v4800, %v4804
  %v4809 = vand.u32 2147483647, %v4798
  %vm4810 = vcmp.eq.f32.partialorder %v4809, 8.507059e+37
  %v4811 = vand.u32 %v4798, 2147483648
  %v4812 = vor.u32 1.1754944e-38, %v4811
  %v4813 = vsel %vm4810, %v4812, %v4808
  %v4814 = vmul.f32 1.0, %v4813
  %v4815 = vrcp.pop %v4799
  %v4816 = vmul.f32 %v4799, %v4815
  %v4817 = vsub.f32 1.0, %v4816
  %v4818 = vmul.f32 %v4815, %v4817
  %v4819 = vadd.f32 %v4815, %v4818
  %vm4820 = vweird.f32 %v4799
  %vm4821 = vweird.f32 %v4815
  %vm4822 = vmor %vm4820, %vm4821
  %v4823 = vsel %vm4822, %v4815, %v4819
  %v4824 = vand.u32 2147483647, %v4799
  %vm4825 = vcmp.eq.f32.partialorder %v4824, 8.507059e+37
  %v4826 = vand.u32 %v4799, 2147483648
  %v4827 = vor.u32 1.1754944e-38, %v4826
  %v4828 = vsel %vm4825, %v4827, %v4823
  %v4829 = vmul.f32 1.0, %v4828
  %v4830 = vmul.f32 %v4774, %v4128
  %v4831 = vmul.f32 %v4789, %v4129
  %v4832 = vmul.f32 %v4736, %v4790
  %v4833 = vmul.f32 %v4751, %v4791
  %v4834 = vadd.f32 %v4830, %v4832
  %v4835 = vadd.f32 %v4831, %v4833
  %v4836 = vtanh.pop %v4834
  %v4837 = vtanh.pop %v4835
  %v4838 = vmul.f32 %v4814, %v4836
  %v4839 = vmul.f32 %v4829, %v4837
  %v4840 = vpack.c.bf16 %v4838, %v4838
  %v4841 = vpack.c.bf16 %v4839, %v4839
  %s4842 = scalar_lea.vmem [#allocation5], 24
  %4843 = vst [vmem:[%s4842] sm:$0xf] %v4840
  %4844 = vst [vmem:[%s4842 + $0x4] sm:$0xf] %v4841
  %s4845 = scalar_lea.vmem [#allocation4], 128
  %v4846 = vld [vmem:[%s4845] sm:$0xff]
  %v4847 = vld [vmem:[%s4845 + $0x8] sm:$0xff]
  %v4848 = vld [vmem:[%s4845 + $0x10] sm:$0xff]
  %v4849 = vld [vmem:[%s4845 + $0x18] sm:$0xff]
  %4850 = vmatpush.bf16.msra.mxu0 %v1345
  %4851 = vmatpush.bf16.msra.mxu0 %v1341
  %4852 = vmatpush.bf16.msra.mxu0 %v1337
  %4853 = vmatpush.bf16.msra.mxu0 %v1333
  %4854 = vmatpush.bf16.msra.mxu0 %v1329
  %4855 = vmatpush.bf16.msra.mxu0 %v1325
  %4856 = vmatpush.bf16.msra.mxu0 %v1321
  %4857 = vmatpush.bf16.msra.mxu0 %v1317
  %4858 = vmatmul.bf16.gmra.mxu0 %v4348
  %v4859 = vpop.f32.mrf.mxu0
  %v4860 = vadd.f32 0.0, %v4859
  %v4861 = vpop.f32.mrf.mxu0
  %v4862 = vadd.f32 0.0, %v4861
  %4863 = vdwg.mxu0
  %4864 = vmatpush.bf16.msra.mxu0 %v1346
  %4865 = vmatpush.bf16.msra.mxu0 %v1342
  %4866 = vmatpush.bf16.msra.mxu0 %v1338
  %4867 = vmatpush.bf16.msra.mxu0 %v1334
  %4868 = vmatpush.bf16.msra.mxu0 %v1330
  %4869 = vmatpush.bf16.msra.mxu0 %v1326
  %4870 = vmatpush.bf16.msra.mxu0 %v1322
  %4871 = vmatpush.bf16.msra.mxu0 %v1318
  %4872 = vmatmul.bf16.gmra.mxu0 %v4348
  %v4873 = vpop.f32.mrf.mxu0
  %v4874 = vadd.f32 0.0, %v4873
  %v4875 = vpop.f32.mrf.mxu0
  %v4876 = vadd.f32 0.0, %v4875
  %4877 = vdwg.mxu0
  %4878 = vmatpush.bf16.msra.mxu0 %v1347
  %4879 = vmatpush.bf16.msra.mxu0 %v1343
  %4880 = vmatpush.bf16.msra.mxu0 %v1339
  %4881 = vmatpush.bf16.msra.mxu0 %v1335
  %4882 = vmatpush.bf16.msra.mxu0 %v1331
  %4883 = vmatpush.bf16.msra.mxu0 %v1327
  %4884 = vmatpush.bf16.msra.mxu0 %v1323
  %4885 = vmatpush.bf16.msra.mxu0 %v1319
  %4886 = vmatmul.bf16.gmra.mxu0 %v4348
  %v4887 = vpop.f32.mrf.mxu0
  %v4888 = vadd.f32 0.0, %v4887
  %v4889 = vpop.f32.mrf.mxu0
  %v4890 = vadd.f32 0.0, %v4889
  %4891 = vdwg.mxu0
  %4892 = vmatpush.bf16.msra.mxu0 %v1348
  %4893 = vmatpush.bf16.msra.mxu0 %v1344
  %4894 = vmatpush.bf16.msra.mxu0 %v1340
  %4895 = vmatpush.bf16.msra.mxu0 %v1336
  %4896 = vmatpush.bf16.msra.mxu0 %v1332
  %4897 = vmatpush.bf16.msra.mxu0 %v1328
  %4898 = vmatpush.bf16.msra.mxu0 %v1324
  %4899 = vmatpush.bf16.msra.mxu0 %v1320
  %4900 = vmatmul.bf16.gmra.mxu0 %v4348
  %v4901 = vpop.f32.mrf.mxu0
  %v4902 = vadd.f32 0.0, %v4901
  %v4903 = vpop.f32.mrf.mxu0
  %v4904 = vadd.f32 0.0, %v4903
  %4905 = vdwg.mxu0
  %v4906 = vunpack.c.l.bf16 %v4846
  %v4907 = vunpack.c.h.bf16 %v4846
  %v4908 = vunpack.c.l.bf16 %v4847
  %v4909 = vunpack.c.h.bf16 %v4847
  %v4910 = vunpack.c.l.bf16 %v4848
  %v4911 = vunpack.c.h.bf16 %v4848
  %v4912 = vunpack.c.l.bf16 %v4849
  %v4913 = vunpack.c.h.bf16 %v4849
  %v4914 = vadd.f32 %v4906, %v4860
  %v4915 = vadd.f32 %v4907, %v4874
  %v4916 = vadd.f32 %v4908, %v4888
  %v4917 = vadd.f32 %v4909, %v4902
  %v4918 = vadd.f32 %v4910, %v4862
  %v4919 = vadd.f32 %v4911, %v4876
  %v4920 = vadd.f32 %v4912, %v4890
  %v4921 = vadd.f32 %v4913, %v4904
  %v4922 = vxor.u32 %v4914, 2147483648
  %v4923 = vxor.u32 %v4918, 2147483648
  %v4924 = vmul.f32 %v4922, 1.442695
  %v4925 = vpow.pop %v4924
  %v4926 = vmul.f32 %v4923, 1.442695
  %v4927 = vpow.pop %v4926
  %v4928 = vadd.f32 %v4925, 1.0
  %v4929 = vadd.f32 %v4927, 1.0
  %v4930 = vrcp.pop %v4928
  %v4931 = vmul.f32 %v4928, %v4930
  %v4932 = vsub.f32 1.0, %v4931
  %v4933 = vmul.f32 %v4930, %v4932
  %v4934 = vadd.f32 %v4930, %v4933
  %vm4935 = vweird.f32 %v4928
  %vm4936 = vweird.f32 %v4930
  %vm4937 = vmor %vm4935, %vm4936
  %v4938 = vsel %vm4937, %v4930, %v4934
  %v4939 = vand.u32 2147483647, %v4928
  %vm4940 = vcmp.eq.f32.partialorder %v4939, 8.507059e+37
  %v4941 = vand.u32 %v4928, 2147483648
  %v4942 = vor.u32 1.1754944e-38, %v4941
  %v4943 = vsel %vm4940, %v4942, %v4938
  %v4944 = vmul.f32 1.0, %v4943
  %v4945 = vrcp.pop %v4929
  %v4946 = vmul.f32 %v4929, %v4945
  %v4947 = vsub.f32 1.0, %v4946
  %v4948 = vmul.f32 %v4945, %v4947
  %v4949 = vadd.f32 %v4945, %v4948
  %vm4950 = vweird.f32 %v4929
  %vm4951 = vweird.f32 %v4945
  %vm4952 = vmor %vm4950, %vm4951
  %v4953 = vsel %vm4952, %v4945, %v4949
  %v4954 = vand.u32 2147483647, %v4929
  %vm4955 = vcmp.eq.f32.partialorder %v4954, 8.507059e+37
  %v4956 = vand.u32 %v4929, 2147483648
  %v4957 = vor.u32 1.1754944e-38, %v4956
  %v4958 = vsel %vm4955, %v4957, %v4953
  %v4959 = vmul.f32 1.0, %v4958
  %v4960 = vxor.u32 %v4915, 2147483648
  %v4961 = vxor.u32 %v4919, 2147483648
  %v4962 = vmul.f32 %v4960, 1.442695
  %v4963 = vpow.pop %v4962
  %v4964 = vmul.f32 %v4961, 1.442695
  %v4965 = vpow.pop %v4964
  %v4966 = vadd.f32 %v4963, 1.0
  %v4967 = vadd.f32 %v4965, 1.0
  %v4968 = vrcp.pop %v4966
  %v4969 = vmul.f32 %v4966, %v4968
  %v4970 = vsub.f32 1.0, %v4969
  %v4971 = vmul.f32 %v4968, %v4970
  %v4972 = vadd.f32 %v4968, %v4971
  %vm4973 = vweird.f32 %v4966
  %vm4974 = vweird.f32 %v4968
  %vm4975 = vmor %vm4973, %vm4974
  %v4976 = vsel %vm4975, %v4968, %v4972
  %v4977 = vand.u32 2147483647, %v4966
  %vm4978 = vcmp.eq.f32.partialorder %v4977, 8.507059e+37
  %v4979 = vand.u32 %v4966, 2147483648
  %v4980 = vor.u32 1.1754944e-38, %v4979
  %v4981 = vsel %vm4978, %v4980, %v4976
  %v4982 = vmul.f32 1.0, %v4981
  %v4983 = vrcp.pop %v4967
  %v4984 = vmul.f32 %v4967, %v4983
  %v4985 = vsub.f32 1.0, %v4984
  %v4986 = vmul.f32 %v4983, %v4985
  %v4987 = vadd.f32 %v4983, %v4986
  %vm4988 = vweird.f32 %v4967
  %vm4989 = vweird.f32 %v4983
  %vm4990 = vmor %vm4988, %vm4989
  %v4991 = vsel %vm4990, %v4983, %v4987
  %v4992 = vand.u32 2147483647, %v4967
  %vm4993 = vcmp.eq.f32.partialorder %v4992, 8.507059e+37
  %v4994 = vand.u32 %v4967, 2147483648
  %v4995 = vor.u32 1.1754944e-38, %v4994
  %v4996 = vsel %vm4993, %v4995, %v4991
  %v4997 = vmul.f32 1.0, %v4996
  %v4998 = vtanh.pop %v4916
  %v4999 = vtanh.pop %v4920
  %v5000 = vxor.u32 %v4917, 2147483648
  %v5001 = vxor.u32 %v4921, 2147483648
  %v5002 = vmul.f32 %v5000, 1.442695
  %v5003 = vpow.pop %v5002
  %v5004 = vmul.f32 %v5001, 1.442695
  %v5005 = vpow.pop %v5004
  %v5006 = vadd.f32 %v5003, 1.0
  %v5007 = vadd.f32 %v5005, 1.0
  %v5008 = vrcp.pop %v5006
  %v5009 = vmul.f32 %v5006, %v5008
  %v5010 = vsub.f32 1.0, %v5009
  %v5011 = vmul.f32 %v5008, %v5010
  %v5012 = vadd.f32 %v5008, %v5011
  %vm5013 = vweird.f32 %v5006
  %vm5014 = vweird.f32 %v5008
  %vm5015 = vmor %vm5013, %vm5014
  %v5016 = vsel %vm5015, %v5008, %v5012
  %v5017 = vand.u32 2147483647, %v5006
  %vm5018 = vcmp.eq.f32.partialorder %v5017, 8.507059e+37
  %v5019 = vand.u32 %v5006, 2147483648
  %v5020 = vor.u32 1.1754944e-38, %v5019
  %v5021 = vsel %vm5018, %v5020, %v5016
  %v5022 = vmul.f32 1.0, %v5021
  %v5023 = vrcp.pop %v5007
  %v5024 = vmul.f32 %v5007, %v5023
  %v5025 = vsub.f32 1.0, %v5024
  %v5026 = vmul.f32 %v5023, %v5025
  %v5027 = vadd.f32 %v5023, %v5026
  %vm5028 = vweird.f32 %v5007
  %vm5029 = vweird.f32 %v5023
  %vm5030 = vmor %vm5028, %vm5029
  %v5031 = vsel %vm5030, %v5023, %v5027
  %v5032 = vand.u32 2147483647, %v5007
  %vm5033 = vcmp.eq.f32.partialorder %v5032, 8.507059e+37
  %v5034 = vand.u32 %v5007, 2147483648
  %v5035 = vor.u32 1.1754944e-38, %v5034
  %v5036 = vsel %vm5033, %v5035, %v5031
  %v5037 = vmul.f32 1.0, %v5036
  %v5038 = vmul.f32 %v4982, %v4336
  %v5039 = vmul.f32 %v4997, %v4337
  %v5040 = vmul.f32 %v4944, %v4998
  %v5041 = vmul.f32 %v4959, %v4999
  %v5042 = vadd.f32 %v5038, %v5040
  %v5043 = vadd.f32 %v5039, %v5041
  %v5044 = vtanh.pop %v5042
  %v5045 = vtanh.pop %v5043
  %v5046 = vmul.f32 %v5022, %v5044
  %v5047 = vmul.f32 %v5037, %v5045
  %v5048 = vpack.c.bf16 %v5046, %v5046
  %v5049 = vpack.c.bf16 %v5047, %v5047
  %v5052 = vunpack.c.l.b16 %v5048
  %v5053 = vunpack.c.l.b16 %v5049
  %v5054 = vpack.c.b16 %v5053, %v5052
  %5056 = vmatpush.bf16.msra.mxu0 %v1813
  %5057 = vmatpush.bf16.msra.mxu0 %v1809
  %5058 = vmatpush.bf16.msra.mxu0 %v1805
  %5059 = vmatpush.bf16.msra.mxu0 %v1801
  %5060 = vmatpush.bf16.msra.mxu0 %v1797
  %5061 = vmatpush.bf16.msra.mxu0 %v1793
  %5062 = vmatpush.bf16.msra.mxu0 %v1789
  %5063 = vmatpush.bf16.msra.mxu0 %v1785
  %5064 = vmatmul.bf16.gmra.mxu0 %v5054
  %v5065 = vpop.f32.mrf.mxu0
  %v5066 = vadd.f32 %v1017, %v5065
  %v5067 = vpop.f32.mrf.mxu0
  %v5068 = vadd.f32 %v1017, %v5067
  %5069 = vdwg.mxu0
  %5070 = vmatpush.bf16.msra.mxu0 %v1845
  %5071 = vmatpush.bf16.msra.mxu0 %v1841
  %5072 = vmatpush.bf16.msra.mxu0 %v1837
  %5073 = vmatpush.bf16.msra.mxu0 %v1833
  %5074 = vmatpush.bf16.msra.mxu0 %v1829
  %5075 = vmatpush.bf16.msra.mxu0 %v1825
  %5076 = vmatpush.bf16.msra.mxu0 %v1821
  %5077 = vmatpush.bf16.msra.mxu0 %v1817
  %5078 = vmatmul.bf16.gmra.mxu0 %v4594
  %v5079 = vpop.f32.mrf.mxu0
  %v5080 = vadd.f32 %v5066, %v5079
  %v5081 = vpop.f32.mrf.mxu0
  %v5082 = vadd.f32 %v5068, %v5081
  %5083 = vdwg.mxu0
  %5084 = vmatpush.bf16.msra.mxu0 %v1814
  %5085 = vmatpush.bf16.msra.mxu0 %v1810
  %5086 = vmatpush.bf16.msra.mxu0 %v1806
  %5087 = vmatpush.bf16.msra.mxu0 %v1802
  %5088 = vmatpush.bf16.msra.mxu0 %v1798
  %5089 = vmatpush.bf16.msra.mxu0 %v1794
  %5090 = vmatpush.bf16.msra.mxu0 %v1790
  %5091 = vmatpush.bf16.msra.mxu0 %v1786
  %5092 = vmatmul.bf16.gmra.mxu0 %v5054
  %v5093 = vpop.f32.mrf.mxu0
  %v5094 = vadd.f32 %v1018, %v5093
  %v5095 = vpop.f32.mrf.mxu0
  %v5096 = vadd.f32 %v1018, %v5095
  %5097 = vdwg.mxu0
  %5098 = vmatpush.bf16.msra.mxu0 %v1846
  %5099 = vmatpush.bf16.msra.mxu0 %v1842
  %5100 = vmatpush.bf16.msra.mxu0 %v1838
  %5101 = vmatpush.bf16.msra.mxu0 %v1834
  %5102 = vmatpush.bf16.msra.mxu0 %v1830
  %5103 = vmatpush.bf16.msra.mxu0 %v1826
  %5104 = vmatpush.bf16.msra.mxu0 %v1822
  %5105 = vmatpush.bf16.msra.mxu0 %v1818
  %5106 = vmatmul.bf16.gmra.mxu0 %v4594
  %v5107 = vpop.f32.mrf.mxu0
  %v5108 = vadd.f32 %v5094, %v5107
  %v5109 = vpop.f32.mrf.mxu0
  %v5110 = vadd.f32 %v5096, %v5109
  %5111 = vdwg.mxu0
  %5112 = vmatpush.bf16.msra.mxu0 %v1815
  %5113 = vmatpush.bf16.msra.mxu0 %v1811
  %5114 = vmatpush.bf16.msra.mxu0 %v1807
  %5115 = vmatpush.bf16.msra.mxu0 %v1803
  %5116 = vmatpush.bf16.msra.mxu0 %v1799
  %5117 = vmatpush.bf16.msra.mxu0 %v1795
  %5118 = vmatpush.bf16.msra.mxu0 %v1791
  %5119 = vmatpush.bf16.msra.mxu0 %v1787
  %5120 = vmatmul.bf16.gmra.mxu0 %v5054
  %v5121 = vpop.f32.mrf.mxu0
  %v5122 = vadd.f32 %v1019, %v5121
  %v5123 = vpop.f32.mrf.mxu0
  %v5124 = vadd.f32 %v1019, %v5123
  %5125 = vdwg.mxu0
  %5126 = vmatpush.bf16.msra.mxu0 %v1847
  %5127 = vmatpush.bf16.msra.mxu0 %v1843
  %5128 = vmatpush.bf16.msra.mxu0 %v1839
  %5129 = vmatpush.bf16.msra.mxu0 %v1835
  %5130 = vmatpush.bf16.msra.mxu0 %v1831
  %5131 = vmatpush.bf16.msra.mxu0 %v1827
  %5132 = vmatpush.bf16.msra.mxu0 %v1823
  %5133 = vmatpush.bf16.msra.mxu0 %v1819
  %5134 = vmatmul.bf16.gmra.mxu0 %v4594
  %v5135 = vpop.f32.mrf.mxu0
  %v5136 = vadd.f32 %v5122, %v5135
  %v5137 = vpop.f32.mrf.mxu0
  %v5138 = vadd.f32 %v5124, %v5137
  %5139 = vdwg.mxu0
  %5140 = vmatpush.bf16.msra.mxu0 %v1816
  %5141 = vmatpush.bf16.msra.mxu0 %v1812
  %5142 = vmatpush.bf16.msra.mxu0 %v1808
  %5143 = vmatpush.bf16.msra.mxu0 %v1804
  %5144 = vmatpush.bf16.msra.mxu0 %v1800
  %5145 = vmatpush.bf16.msra.mxu0 %v1796
  %5146 = vmatpush.bf16.msra.mxu0 %v1792
  %5147 = vmatpush.bf16.msra.mxu0 %v1788
  %5148 = vmatmul.bf16.gmra.mxu0 %v5054
  %v5149 = vpop.f32.mrf.mxu0
  %v5150 = vadd.f32 %v1020, %v5149
  %v5151 = vpop.f32.mrf.mxu0
  %v5152 = vadd.f32 %v1020, %v5151
  %5153 = vdwg.mxu0
  %5154 = vmatpush.bf16.msra.mxu0 %v1848
  %5155 = vmatpush.bf16.msra.mxu0 %v1844
  %5156 = vmatpush.bf16.msra.mxu0 %v1840
  %5157 = vmatpush.bf16.msra.mxu0 %v1836
  %5158 = vmatpush.bf16.msra.mxu0 %v1832
  %5159 = vmatpush.bf16.msra.mxu0 %v1828
  %5160 = vmatpush.bf16.msra.mxu0 %v1824
  %5161 = vmatpush.bf16.msra.mxu0 %v1820
  %5162 = vmatmul.bf16.gmra.mxu0 %v4594
  %v5163 = vpop.f32.mrf.mxu0
  %v5164 = vadd.f32 %v5150, %v5163
  %v5165 = vpop.f32.mrf.mxu0
  %v5166 = vadd.f32 %v5152, %v5165
  %5167 = vdwg.mxu0
  %v5168 = vxor.u32 %v5080, 2147483648
  %v5169 = vxor.u32 %v5082, 2147483648
  %v5170 = vmul.f32 %v5168, 1.442695
  %v5171 = vpow.pop %v5170
  %v5172 = vmul.f32 %v5169, 1.442695
  %v5173 = vpow.pop %v5172
  %v5174 = vadd.f32 %v5171, 1.0
  %v5175 = vadd.f32 %v5173, 1.0
  %v5176 = vrcp.pop %v5174
  %v5177 = vmul.f32 %v5174, %v5176
  %v5178 = vsub.f32 1.0, %v5177
  %v5179 = vmul.f32 %v5176, %v5178
  %v5180 = vadd.f32 %v5176, %v5179
  %vm5181 = vweird.f32 %v5174
  %vm5182 = vweird.f32 %v5176
  %vm5183 = vmor %vm5181, %vm5182
  %v5184 = vsel %vm5183, %v5176, %v5180
  %v5185 = vand.u32 2147483647, %v5174
  %vm5186 = vcmp.eq.f32.partialorder %v5185, 8.507059e+37
  %v5187 = vand.u32 %v5174, 2147483648
  %v5188 = vor.u32 1.1754944e-38, %v5187
  %v5189 = vsel %vm5186, %v5188, %v5184
  %v5190 = vmul.f32 1.0, %v5189
  %v5191 = vrcp.pop %v5175
  %v5192 = vmul.f32 %v5175, %v5191
  %v5193 = vsub.f32 1.0, %v5192
  %v5194 = vmul.f32 %v5191, %v5193
  %v5195 = vadd.f32 %v5191, %v5194
  %vm5196 = vweird.f32 %v5175
  %vm5197 = vweird.f32 %v5191
  %vm5198 = vmor %vm5196, %vm5197
  %v5199 = vsel %vm5198, %v5191, %v5195
  %v5200 = vand.u32 2147483647, %v5175
  %vm5201 = vcmp.eq.f32.partialorder %v5200, 8.507059e+37
  %v5202 = vand.u32 %v5175, 2147483648
  %v5203 = vor.u32 1.1754944e-38, %v5202
  %v5204 = vsel %vm5201, %v5203, %v5199
  %v5205 = vmul.f32 1.0, %v5204
  %v5206 = vxor.u32 %v5108, 2147483648
  %v5207 = vxor.u32 %v5110, 2147483648
  %v5208 = vmul.f32 %v5206, 1.442695
  %v5209 = vpow.pop %v5208
  %v5210 = vmul.f32 %v5207, 1.442695
  %v5211 = vpow.pop %v5210
  %v5212 = vadd.f32 %v5209, 1.0
  %v5213 = vadd.f32 %v5211, 1.0
  %v5214 = vrcp.pop %v5212
  %v5215 = vmul.f32 %v5212, %v5214
  %v5216 = vsub.f32 1.0, %v5215
  %v5217 = vmul.f32 %v5214, %v5216
  %v5218 = vadd.f32 %v5214, %v5217
  %vm5219 = vweird.f32 %v5212
  %vm5220 = vweird.f32 %v5214
  %vm5221 = vmor %vm5219, %vm5220
  %v5222 = vsel %vm5221, %v5214, %v5218
  %v5223 = vand.u32 2147483647, %v5212
  %vm5224 = vcmp.eq.f32.partialorder %v5223, 8.507059e+37
  %v5225 = vand.u32 %v5212, 2147483648
  %v5226 = vor.u32 1.1754944e-38, %v5225
  %v5227 = vsel %vm5224, %v5226, %v5222
  %v5228 = vmul.f32 1.0, %v5227
  %v5229 = vrcp.pop %v5213
  %v5230 = vmul.f32 %v5213, %v5229
  %v5231 = vsub.f32 1.0, %v5230
  %v5232 = vmul.f32 %v5229, %v5231
  %v5233 = vadd.f32 %v5229, %v5232
  %vm5234 = vweird.f32 %v5213
  %vm5235 = vweird.f32 %v5229
  %vm5236 = vmor %vm5234, %vm5235
  %v5237 = vsel %vm5236, %v5229, %v5233
  %v5238 = vand.u32 2147483647, %v5213
  %vm5239 = vcmp.eq.f32.partialorder %v5238, 8.507059e+37
  %v5240 = vand.u32 %v5213, 2147483648
  %v5241 = vor.u32 1.1754944e-38, %v5240
  %v5242 = vsel %vm5239, %v5241, %v5237
  %v5243 = vmul.f32 1.0, %v5242
  %v5244 = vtanh.pop %v5136
  %v5245 = vtanh.pop %v5138
  %v5246 = vxor.u32 %v5164, 2147483648
  %v5247 = vxor.u32 %v5166, 2147483648
  %v5248 = vmul.f32 %v5246, 1.442695
  %v5249 = vpow.pop %v5248
  %v5250 = vmul.f32 %v5247, 1.442695
  %v5251 = vpow.pop %v5250
  %v5252 = vadd.f32 %v5249, 1.0
  %v5253 = vadd.f32 %v5251, 1.0
  %v5254 = vrcp.pop %v5252
  %v5255 = vmul.f32 %v5252, %v5254
  %v5256 = vsub.f32 1.0, %v5255
  %v5257 = vmul.f32 %v5254, %v5256
  %v5258 = vadd.f32 %v5254, %v5257
  %vm5259 = vweird.f32 %v5252
  %vm5260 = vweird.f32 %v5254
  %vm5261 = vmor %vm5259, %vm5260
  %v5262 = vsel %vm5261, %v5254, %v5258
  %v5263 = vand.u32 2147483647, %v5252
  %vm5264 = vcmp.eq.f32.partialorder %v5263, 8.507059e+37
  %v5265 = vand.u32 %v5252, 2147483648
  %v5266 = vor.u32 1.1754944e-38, %v5265
  %v5267 = vsel %vm5264, %v5266, %v5262
  %v5268 = vmul.f32 1.0, %v5267
  %v5269 = vrcp.pop %v5253
  %v5270 = vmul.f32 %v5253, %v5269
  %v5271 = vsub.f32 1.0, %v5270
  %v5272 = vmul.f32 %v5269, %v5271
  %v5273 = vadd.f32 %v5269, %v5272
  %vm5274 = vweird.f32 %v5253
  %vm5275 = vweird.f32 %v5269
  %vm5276 = vmor %vm5274, %vm5275
  %v5277 = vsel %vm5276, %v5269, %v5273
  %v5278 = vand.u32 2147483647, %v5253
  %vm5279 = vcmp.eq.f32.partialorder %v5278, 8.507059e+37
  %v5280 = vand.u32 %v5253, 2147483648
  %v5281 = vor.u32 1.1754944e-38, %v5280
  %v5282 = vsel %vm5279, %v5281, %v5277
  %v5283 = vmul.f32 1.0, %v5282
  %v5284 = vmul.f32 %v5228, %v4582
  %v5285 = vmul.f32 %v5243, %v4583
  %v5286 = vmul.f32 %v5190, %v5244
  %v5287 = vmul.f32 %v5205, %v5245
  %v5288 = vadd.f32 %v5284, %v5286
  %v5289 = vadd.f32 %v5285, %v5287
  %v5290 = vtanh.pop %v5288
  %v5291 = vtanh.pop %v5289
  %v5292 = vmul.f32 %v5268, %v5290
  %v5293 = vmul.f32 %v5283, %v5291
  %v5294 = vpack.c.bf16 %v5292, %v5292
  %v5295 = vpack.c.bf16 %v5293, %v5293
  %v5298 = vunpack.c.l.b16 %v5294
  %v5299 = vunpack.c.l.b16 %v5295
  %v5300 = vpack.c.b16 %v5299, %v5298
  %v5304 = vunpack.c.l.b16 %v4840
  %v5305 = vunpack.c.l.b16 %v4841
  %v5306 = vpack.c.b16 %v5305, %v5304
  %5308 = vmatpush.bf16.msra.mxu0 %v2385
  %5309 = vmatpush.bf16.msra.mxu0 %v2381
  %5310 = vmatpush.bf16.msra.mxu0 %v2377
  %5311 = vmatpush.bf16.msra.mxu0 %v2373
  %5312 = vmatpush.bf16.msra.mxu0 %v2369
  %5313 = vmatpush.bf16.msra.mxu0 %v2365
  %5314 = vmatpush.bf16.msra.mxu0 %v2361
  %5315 = vmatpush.bf16.msra.mxu0 %v2357
  %5316 = vmatmul.bf16.gmra.mxu0 %v5300
  %v5317 = vpop.f32.mrf.mxu0
  %v5318 = vadd.f32 %v1027, %v5317
  %v5319 = vpop.f32.mrf.mxu0
  %v5320 = vadd.f32 %v1027, %v5319
  %5321 = vdwg.mxu0
  %5322 = vmatpush.bf16.msra.mxu0 %v2417
  %5323 = vmatpush.bf16.msra.mxu0 %v2413
  %5324 = vmatpush.bf16.msra.mxu0 %v2409
  %5325 = vmatpush.bf16.msra.mxu0 %v2405
  %5326 = vmatpush.bf16.msra.mxu0 %v2401
  %5327 = vmatpush.bf16.msra.mxu0 %v2397
  %5328 = vmatpush.bf16.msra.mxu0 %v2393
  %5329 = vmatpush.bf16.msra.mxu0 %v2389
  %5330 = vmatmul.bf16.gmra.mxu0 %v5306
  %v5331 = vpop.f32.mrf.mxu0
  %v5332 = vadd.f32 %v5318, %v5331
  %v5333 = vpop.f32.mrf.mxu0
  %v5334 = vadd.f32 %v5320, %v5333
  %5335 = vdwg.mxu0
  %5336 = vmatpush.bf16.msra.mxu0 %v2386
  %5337 = vmatpush.bf16.msra.mxu0 %v2382
  %5338 = vmatpush.bf16.msra.mxu0 %v2378
  %5339 = vmatpush.bf16.msra.mxu0 %v2374
  %5340 = vmatpush.bf16.msra.mxu0 %v2370
  %5341 = vmatpush.bf16.msra.mxu0 %v2366
  %5342 = vmatpush.bf16.msra.mxu0 %v2362
  %5343 = vmatpush.bf16.msra.mxu0 %v2358
  %5344 = vmatmul.bf16.gmra.mxu0 %v5300
  %v5345 = vpop.f32.mrf.mxu0
  %v5346 = vadd.f32 %v1028, %v5345
  %v5347 = vpop.f32.mrf.mxu0
  %v5348 = vadd.f32 %v1028, %v5347
  %5349 = vdwg.mxu0
  %5350 = vmatpush.bf16.msra.mxu0 %v2418
  %5351 = vmatpush.bf16.msra.mxu0 %v2414
  %5352 = vmatpush.bf16.msra.mxu0 %v2410
  %5353 = vmatpush.bf16.msra.mxu0 %v2406
  %5354 = vmatpush.bf16.msra.mxu0 %v2402
  %5355 = vmatpush.bf16.msra.mxu0 %v2398
  %5356 = vmatpush.bf16.msra.mxu0 %v2394
  %5357 = vmatpush.bf16.msra.mxu0 %v2390
  %5358 = vmatmul.bf16.gmra.mxu0 %v5306
  %v5359 = vpop.f32.mrf.mxu0
  %v5360 = vadd.f32 %v5346, %v5359
  %v5361 = vpop.f32.mrf.mxu0
  %v5362 = vadd.f32 %v5348, %v5361
  %5363 = vdwg.mxu0
  %5364 = vmatpush.bf16.msra.mxu0 %v2387
  %5365 = vmatpush.bf16.msra.mxu0 %v2383
  %5366 = vmatpush.bf16.msra.mxu0 %v2379
  %5367 = vmatpush.bf16.msra.mxu0 %v2375
  %5368 = vmatpush.bf16.msra.mxu0 %v2371
  %5369 = vmatpush.bf16.msra.mxu0 %v2367
  %5370 = vmatpush.bf16.msra.mxu0 %v2363
  %5371 = vmatpush.bf16.msra.mxu0 %v2359
  %5372 = vmatmul.bf16.gmra.mxu0 %v5300
  %v5373 = vpop.f32.mrf.mxu0
  %v5374 = vadd.f32 %v1029, %v5373
  %v5375 = vpop.f32.mrf.mxu0
  %v5376 = vadd.f32 %v1029, %v5375
  %5377 = vdwg.mxu0
  %5378 = vmatpush.bf16.msra.mxu0 %v2419
  %5379 = vmatpush.bf16.msra.mxu0 %v2415
  %5380 = vmatpush.bf16.msra.mxu0 %v2411
  %5381 = vmatpush.bf16.msra.mxu0 %v2407
  %5382 = vmatpush.bf16.msra.mxu0 %v2403
  %5383 = vmatpush.bf16.msra.mxu0 %v2399
  %5384 = vmatpush.bf16.msra.mxu0 %v2395
  %5385 = vmatpush.bf16.msra.mxu0 %v2391
  %5386 = vmatmul.bf16.gmra.mxu0 %v5306
  %v5387 = vpop.f32.mrf.mxu0
  %v5388 = vadd.f32 %v5374, %v5387
  %v5389 = vpop.f32.mrf.mxu0
  %v5390 = vadd.f32 %v5376, %v5389
  %5391 = vdwg.mxu0
  %5392 = vmatpush.bf16.msra.mxu0 %v2388
  %5393 = vmatpush.bf16.msra.mxu0 %v2384
  %5394 = vmatpush.bf16.msra.mxu0 %v2380
  %5395 = vmatpush.bf16.msra.mxu0 %v2376
  %5396 = vmatpush.bf16.msra.mxu0 %v2372
  %5397 = vmatpush.bf16.msra.mxu0 %v2368
  %5398 = vmatpush.bf16.msra.mxu0 %v2364
  %5399 = vmatpush.bf16.msra.mxu0 %v2360
  %5400 = vmatmul.bf16.gmra.mxu0 %v5300
  %v5401 = vpop.f32.mrf.mxu0
  %v5402 = vadd.f32 %v1030, %v5401
  %v5403 = vpop.f32.mrf.mxu0
  %v5404 = vadd.f32 %v1030, %v5403
  %5405 = vdwg.mxu0
  %5406 = vmatpush.bf16.msra.mxu0 %v2420
  %5407 = vmatpush.bf16.msra.mxu0 %v2416
  %5408 = vmatpush.bf16.msra.mxu0 %v2412
  %5409 = vmatpush.bf16.msra.mxu0 %v2408
  %5410 = vmatpush.bf16.msra.mxu0 %v2404
  %5411 = vmatpush.bf16.msra.mxu0 %v2400
  %5412 = vmatpush.bf16.msra.mxu0 %v2396
  %5413 = vmatpush.bf16.msra.mxu0 %v2392
  %5414 = vmatmul.bf16.gmra.mxu0 %v5306
  %v5415 = vpop.f32.mrf.mxu0
  %v5416 = vadd.f32 %v5402, %v5415
  %v5417 = vpop.f32.mrf.mxu0
  %v5418 = vadd.f32 %v5404, %v5417
  %5419 = vdwg.mxu0
  %v5420 = vxor.u32 %v5332, 2147483648
  %v5421 = vxor.u32 %v5334, 2147483648
  %v5422 = vmul.f32 %v5420, 1.442695
  %v5423 = vpow.pop %v5422
  %v5424 = vmul.f32 %v5421, 1.442695
  %v5425 = vpow.pop %v5424
  %v5426 = vadd.f32 %v5423, 1.0
  %v5427 = vadd.f32 %v5425, 1.0
  %v5428 = vrcp.pop %v5426
  %v5429 = vmul.f32 %v5426, %v5428
  %v5430 = vsub.f32 1.0, %v5429
  %v5431 = vmul.f32 %v5428, %v5430
  %v5432 = vadd.f32 %v5428, %v5431
  %vm5433 = vweird.f32 %v5426
  %vm5434 = vweird.f32 %v5428
  %vm5435 = vmor %vm5433, %vm5434
  %v5436 = vsel %vm5435, %v5428, %v5432
  %v5437 = vand.u32 2147483647, %v5426
  %vm5438 = vcmp.eq.f32.partialorder %v5437, 8.507059e+37
  %v5439 = vand.u32 %v5426, 2147483648
  %v5440 = vor.u32 1.1754944e-38, %v5439
  %v5441 = vsel %vm5438, %v5440, %v5436
  %v5442 = vmul.f32 1.0, %v5441
  %v5443 = vrcp.pop %v5427
  %v5444 = vmul.f32 %v5427, %v5443
  %v5445 = vsub.f32 1.0, %v5444
  %v5446 = vmul.f32 %v5443, %v5445
  %v5447 = vadd.f32 %v5443, %v5446
  %vm5448 = vweird.f32 %v5427
  %vm5449 = vweird.f32 %v5443
  %vm5450 = vmor %vm5448, %vm5449
  %v5451 = vsel %vm5450, %v5443, %v5447
  %v5452 = vand.u32 2147483647, %v5427
  %vm5453 = vcmp.eq.f32.partialorder %v5452, 8.507059e+37
  %v5454 = vand.u32 %v5427, 2147483648
  %v5455 = vor.u32 1.1754944e-38, %v5454
  %v5456 = vsel %vm5453, %v5455, %v5451
  %v5457 = vmul.f32 1.0, %v5456
  %v5458 = vxor.u32 %v5360, 2147483648
  %v5459 = vxor.u32 %v5362, 2147483648
  %v5460 = vmul.f32 %v5458, 1.442695
  %v5461 = vpow.pop %v5460
  %v5462 = vmul.f32 %v5459, 1.442695
  %v5463 = vpow.pop %v5462
  %v5464 = vadd.f32 %v5461, 1.0
  %v5465 = vadd.f32 %v5463, 1.0
  %v5466 = vrcp.pop %v5464
  %v5467 = vmul.f32 %v5464, %v5466
  %v5468 = vsub.f32 1.0, %v5467
  %v5469 = vmul.f32 %v5466, %v5468
  %v5470 = vadd.f32 %v5466, %v5469
  %vm5471 = vweird.f32 %v5464
  %vm5472 = vweird.f32 %v5466
  %vm5473 = vmor %vm5471, %vm5472
  %v5474 = vsel %vm5473, %v5466, %v5470
  %v5475 = vand.u32 2147483647, %v5464
  %vm5476 = vcmp.eq.f32.partialorder %v5475, 8.507059e+37
  %v5477 = vand.u32 %v5464, 2147483648
  %v5478 = vor.u32 1.1754944e-38, %v5477
  %v5479 = vsel %vm5476, %v5478, %v5474
  %v5480 = vmul.f32 1.0, %v5479
  %v5481 = vrcp.pop %v5465
  %v5482 = vmul.f32 %v5465, %v5481
  %v5483 = vsub.f32 1.0, %v5482
  %v5484 = vmul.f32 %v5481, %v5483
  %v5485 = vadd.f32 %v5481, %v5484
  %vm5486 = vweird.f32 %v5465
  %vm5487 = vweird.f32 %v5481
  %vm5488 = vmor %vm5486, %vm5487
  %v5489 = vsel %vm5488, %v5481, %v5485
  %v5490 = vand.u32 2147483647, %v5465
  %vm5491 = vcmp.eq.f32.partialorder %v5490, 8.507059e+37
  %v5492 = vand.u32 %v5465, 2147483648
  %v5493 = vor.u32 1.1754944e-38, %v5492
  %v5494 = vsel %vm5491, %v5493, %v5489
  %v5495 = vmul.f32 1.0, %v5494
  %v5496 = vtanh.pop %v5388
  %v5497 = vtanh.pop %v5390
  %v5498 = vxor.u32 %v5416, 2147483648
  %v5499 = vxor.u32 %v5418, 2147483648
  %v5500 = vmul.f32 %v5498, 1.442695
  %v5501 = vpow.pop %v5500
  %v5502 = vmul.f32 %v5499, 1.442695
  %v5503 = vpow.pop %v5502
  %v5504 = vadd.f32 %v5501, 1.0
  %v5505 = vadd.f32 %v5503, 1.0
  %v5506 = vrcp.pop %v5504
  %v5507 = vmul.f32 %v5504, %v5506
  %v5508 = vsub.f32 1.0, %v5507
  %v5509 = vmul.f32 %v5506, %v5508
  %v5510 = vadd.f32 %v5506, %v5509
  %vm5511 = vweird.f32 %v5504
  %vm5512 = vweird.f32 %v5506
  %vm5513 = vmor %vm5511, %vm5512
  %v5514 = vsel %vm5513, %v5506, %v5510
  %v5515 = vand.u32 2147483647, %v5504
  %vm5516 = vcmp.eq.f32.partialorder %v5515, 8.507059e+37
  %v5517 = vand.u32 %v5504, 2147483648
  %v5518 = vor.u32 1.1754944e-38, %v5517
  %v5519 = vsel %vm5516, %v5518, %v5514
  %v5520 = vmul.f32 1.0, %v5519
  %v5521 = vrcp.pop %v5505
  %v5522 = vmul.f32 %v5505, %v5521
  %v5523 = vsub.f32 1.0, %v5522
  %v5524 = vmul.f32 %v5521, %v5523
  %v5525 = vadd.f32 %v5521, %v5524
  %vm5526 = vweird.f32 %v5505
  %vm5527 = vweird.f32 %v5521
  %vm5528 = vmor %vm5526, %vm5527
  %v5529 = vsel %vm5528, %v5521, %v5525
  %v5530 = vand.u32 2147483647, %v5505
  %vm5531 = vcmp.eq.f32.partialorder %v5530, 8.507059e+37
  %v5532 = vand.u32 %v5505, 2147483648
  %v5533 = vor.u32 1.1754944e-38, %v5532
  %v5534 = vsel %vm5531, %v5533, %v5529
  %v5535 = vmul.f32 1.0, %v5534
  %v5536 = vmul.f32 %v5480, %v4834
  %v5537 = vmul.f32 %v5495, %v4835
  %v5538 = vmul.f32 %v5442, %v5496
  %v5539 = vmul.f32 %v5457, %v5497
  %v5540 = vadd.f32 %v5536, %v5538
  %v5541 = vadd.f32 %v5537, %v5539
  %v5542 = vtanh.pop %v5540
  %v5543 = vtanh.pop %v5541
  %v5544 = vmul.f32 %v5520, %v5542
  %v5545 = vmul.f32 %v5535, %v5543
  %v5546 = vpack.c.bf16 %v5544, %v5544
  %v5547 = vpack.c.bf16 %v5545, %v5545
  %s5548 = scalar_lea.vmem [#allocation5], 32
  %5549 = vst [vmem:[%s5548] sm:$0xf] %v5546
  %5550 = vst [vmem:[%s5548 + $0x4] sm:$0xf] %v5547
  %s5551 = scalar_lea.vmem [#allocation4], 160
  %v5552 = vld [vmem:[%s5551] sm:$0xff]
  %v5553 = vld [vmem:[%s5551 + $0x8] sm:$0xff]
  %v5554 = vld [vmem:[%s5551 + $0x10] sm:$0xff]
  %v5555 = vld [vmem:[%s5551 + $0x18] sm:$0xff]
  %5556 = vmatpush.bf16.msra.mxu0 %v1345
  %5557 = vmatpush.bf16.msra.mxu0 %v1341
  %5558 = vmatpush.bf16.msra.mxu0 %v1337
  %5559 = vmatpush.bf16.msra.mxu0 %v1333
  %5560 = vmatpush.bf16.msra.mxu0 %v1329
  %5561 = vmatpush.bf16.msra.mxu0 %v1325
  %5562 = vmatpush.bf16.msra.mxu0 %v1321
  %5563 = vmatpush.bf16.msra.mxu0 %v1317
  %5564 = vmatmul.bf16.gmra.mxu0 %v5054
  %v5565 = vpop.f32.mrf.mxu0
  %v5566 = vadd.f32 0.0, %v5565
  %v5567 = vpop.f32.mrf.mxu0
  %v5568 = vadd.f32 0.0, %v5567
  %5569 = vdwg.mxu0
  %5570 = vmatpush.bf16.msra.mxu0 %v1346
  %5571 = vmatpush.bf16.msra.mxu0 %v1342
  %5572 = vmatpush.bf16.msra.mxu0 %v1338
  %5573 = vmatpush.bf16.msra.mxu0 %v1334
  %5574 = vmatpush.bf16.msra.mxu0 %v1330
  %5575 = vmatpush.bf16.msra.mxu0 %v1326
  %5576 = vmatpush.bf16.msra.mxu0 %v1322
  %5577 = vmatpush.bf16.msra.mxu0 %v1318
  %5578 = vmatmul.bf16.gmra.mxu0 %v5054
  %v5579 = vpop.f32.mrf.mxu0
  %v5580 = vadd.f32 0.0, %v5579
  %v5581 = vpop.f32.mrf.mxu0
  %v5582 = vadd.f32 0.0, %v5581
  %5583 = vdwg.mxu0
  %5584 = vmatpush.bf16.msra.mxu0 %v1347
  %5585 = vmatpush.bf16.msra.mxu0 %v1343
  %5586 = vmatpush.bf16.msra.mxu0 %v1339
  %5587 = vmatpush.bf16.msra.mxu0 %v1335
  %5588 = vmatpush.bf16.msra.mxu0 %v1331
  %5589 = vmatpush.bf16.msra.mxu0 %v1327
  %5590 = vmatpush.bf16.msra.mxu0 %v1323
  %5591 = vmatpush.bf16.msra.mxu0 %v1319
  %5592 = vmatmul.bf16.gmra.mxu0 %v5054
  %v5593 = vpop.f32.mrf.mxu0
  %v5594 = vadd.f32 0.0, %v5593
  %v5595 = vpop.f32.mrf.mxu0
  %v5596 = vadd.f32 0.0, %v5595
  %5597 = vdwg.mxu0
  %5598 = vmatpush.bf16.msra.mxu0 %v1348
  %5599 = vmatpush.bf16.msra.mxu0 %v1344
  %5600 = vmatpush.bf16.msra.mxu0 %v1340
  %5601 = vmatpush.bf16.msra.mxu0 %v1336
  %5602 = vmatpush.bf16.msra.mxu0 %v1332
  %5603 = vmatpush.bf16.msra.mxu0 %v1328
  %5604 = vmatpush.bf16.msra.mxu0 %v1324
  %5605 = vmatpush.bf16.msra.mxu0 %v1320
  %5606 = vmatmul.bf16.gmra.mxu0 %v5054
  %v5607 = vpop.f32.mrf.mxu0
  %v5608 = vadd.f32 0.0, %v5607
  %v5609 = vpop.f32.mrf.mxu0
  %v5610 = vadd.f32 0.0, %v5609
  %5611 = vdwg.mxu0
  %v5612 = vunpack.c.l.bf16 %v5552
  %v5613 = vunpack.c.h.bf16 %v5552
  %v5614 = vunpack.c.l.bf16 %v5553
  %v5615 = vunpack.c.h.bf16 %v5553
  %v5616 = vunpack.c.l.bf16 %v5554
  %v5617 = vunpack.c.h.bf16 %v5554
  %v5618 = vunpack.c.l.bf16 %v5555
  %v5619 = vunpack.c.h.bf16 %v5555
  %v5620 = vadd.f32 %v5612, %v5566
  %v5621 = vadd.f32 %v5613, %v5580
  %v5622 = vadd.f32 %v5614, %v5594
  %v5623 = vadd.f32 %v5615, %v5608
  %v5624 = vadd.f32 %v5616, %v5568
  %v5625 = vadd.f32 %v5617, %v5582
  %v5626 = vadd.f32 %v5618, %v5596
  %v5627 = vadd.f32 %v5619, %v5610
  %v5628 = vxor.u32 %v5620, 2147483648
  %v5629 = vxor.u32 %v5624, 2147483648
  %v5630 = vmul.f32 %v5628, 1.442695
  %v5631 = vpow.pop %v5630
  %v5632 = vmul.f32 %v5629, 1.442695
  %v5633 = vpow.pop %v5632
  %v5634 = vadd.f32 %v5631, 1.0
  %v5635 = vadd.f32 %v5633, 1.0
  %v5636 = vrcp.pop %v5634
  %v5637 = vmul.f32 %v5634, %v5636
  %v5638 = vsub.f32 1.0, %v5637
  %v5639 = vmul.f32 %v5636, %v5638
  %v5640 = vadd.f32 %v5636, %v5639
  %vm5641 = vweird.f32 %v5634
  %vm5642 = vweird.f32 %v5636
  %vm5643 = vmor %vm5641, %vm5642
  %v5644 = vsel %vm5643, %v5636, %v5640
  %v5645 = vand.u32 2147483647, %v5634
  %vm5646 = vcmp.eq.f32.partialorder %v5645, 8.507059e+37
  %v5647 = vand.u32 %v5634, 2147483648
  %v5648 = vor.u32 1.1754944e-38, %v5647
  %v5649 = vsel %vm5646, %v5648, %v5644
  %v5650 = vmul.f32 1.0, %v5649
  %v5651 = vrcp.pop %v5635
  %v5652 = vmul.f32 %v5635, %v5651
  %v5653 = vsub.f32 1.0, %v5652
  %v5654 = vmul.f32 %v5651, %v5653
  %v5655 = vadd.f32 %v5651, %v5654
  %vm5656 = vweird.f32 %v5635
  %vm5657 = vweird.f32 %v5651
  %vm5658 = vmor %vm5656, %vm5657
  %v5659 = vsel %vm5658, %v5651, %v5655
  %v5660 = vand.u32 2147483647, %v5635
  %vm5661 = vcmp.eq.f32.partialorder %v5660, 8.507059e+37
  %v5662 = vand.u32 %v5635, 2147483648
  %v5663 = vor.u32 1.1754944e-38, %v5662
  %v5664 = vsel %vm5661, %v5663, %v5659
  %v5665 = vmul.f32 1.0, %v5664
  %v5666 = vxor.u32 %v5621, 2147483648
  %v5667 = vxor.u32 %v5625, 2147483648
  %v5668 = vmul.f32 %v5666, 1.442695
  %v5669 = vpow.pop %v5668
  %v5670 = vmul.f32 %v5667, 1.442695
  %v5671 = vpow.pop %v5670
  %v5672 = vadd.f32 %v5669, 1.0
  %v5673 = vadd.f32 %v5671, 1.0
  %v5674 = vrcp.pop %v5672
  %v5675 = vmul.f32 %v5672, %v5674
  %v5676 = vsub.f32 1.0, %v5675
  %v5677 = vmul.f32 %v5674, %v5676
  %v5678 = vadd.f32 %v5674, %v5677
  %vm5679 = vweird.f32 %v5672
  %vm5680 = vweird.f32 %v5674
  %vm5681 = vmor %vm5679, %vm5680
  %v5682 = vsel %vm5681, %v5674, %v5678
  %v5683 = vand.u32 2147483647, %v5672
  %vm5684 = vcmp.eq.f32.partialorder %v5683, 8.507059e+37
  %v5685 = vand.u32 %v5672, 2147483648
  %v5686 = vor.u32 1.1754944e-38, %v5685
  %v5687 = vsel %vm5684, %v5686, %v5682
  %v5688 = vmul.f32 1.0, %v5687
  %v5689 = vrcp.pop %v5673
  %v5690 = vmul.f32 %v5673, %v5689
  %v5691 = vsub.f32 1.0, %v5690
  %v5692 = vmul.f32 %v5689, %v5691
  %v5693 = vadd.f32 %v5689, %v5692
  %vm5694 = vweird.f32 %v5673
  %vm5695 = vweird.f32 %v5689
  %vm5696 = vmor %vm5694, %vm5695
  %v5697 = vsel %vm5696, %v5689, %v5693
  %v5698 = vand.u32 2147483647, %v5673
  %vm5699 = vcmp.eq.f32.partialorder %v5698, 8.507059e+37
  %v5700 = vand.u32 %v5673, 2147483648
  %v5701 = vor.u32 1.1754944e-38, %v5700
  %v5702 = vsel %vm5699, %v5701, %v5697
  %v5703 = vmul.f32 1.0, %v5702
  %v5704 = vtanh.pop %v5622
  %v5705 = vtanh.pop %v5626
  %v5706 = vxor.u32 %v5623, 2147483648
  %v5707 = vxor.u32 %v5627, 2147483648
  %v5708 = vmul.f32 %v5706, 1.442695
  %v5709 = vpow.pop %v5708
  %v5710 = vmul.f32 %v5707, 1.442695
  %v5711 = vpow.pop %v5710
  %v5712 = vadd.f32 %v5709, 1.0
  %v5713 = vadd.f32 %v5711, 1.0
  %v5714 = vrcp.pop %v5712
  %v5715 = vmul.f32 %v5712, %v5714
  %v5716 = vsub.f32 1.0, %v5715
  %v5717 = vmul.f32 %v5714, %v5716
  %v5718 = vadd.f32 %v5714, %v5717
  %vm5719 = vweird.f32 %v5712
  %vm5720 = vweird.f32 %v5714
  %vm5721 = vmor %vm5719, %vm5720
  %v5722 = vsel %vm5721, %v5714, %v5718
  %v5723 = vand.u32 2147483647, %v5712
  %vm5724 = vcmp.eq.f32.partialorder %v5723, 8.507059e+37
  %v5725 = vand.u32 %v5712, 2147483648
  %v5726 = vor.u32 1.1754944e-38, %v5725
  %v5727 = vsel %vm5724, %v5726, %v5722
  %v5728 = vmul.f32 1.0, %v5727
  %v5729 = vrcp.pop %v5713
  %v5730 = vmul.f32 %v5713, %v5729
  %v5731 = vsub.f32 1.0, %v5730
  %v5732 = vmul.f32 %v5729, %v5731
  %v5733 = vadd.f32 %v5729, %v5732
  %vm5734 = vweird.f32 %v5713
  %vm5735 = vweird.f32 %v5729
  %vm5736 = vmor %vm5734, %vm5735
  %v5737 = vsel %vm5736, %v5729, %v5733
  %v5738 = vand.u32 2147483647, %v5713
  %vm5739 = vcmp.eq.f32.partialorder %v5738, 8.507059e+37
  %v5740 = vand.u32 %v5713, 2147483648
  %v5741 = vor.u32 1.1754944e-38, %v5740
  %v5742 = vsel %vm5739, %v5741, %v5737
  %v5743 = vmul.f32 1.0, %v5742
  %v5744 = vmul.f32 %v5688, %v5042
  %v5745 = vmul.f32 %v5703, %v5043
  %v5746 = vmul.f32 %v5650, %v5704
  %v5747 = vmul.f32 %v5665, %v5705
  %v5748 = vadd.f32 %v5744, %v5746
  %v5749 = vadd.f32 %v5745, %v5747
  %v5750 = vtanh.pop %v5748
  %v5751 = vtanh.pop %v5749
  %v5752 = vmul.f32 %v5728, %v5750
  %v5753 = vmul.f32 %v5743, %v5751
  %v5754 = vpack.c.bf16 %v5752, %v5752
  %v5755 = vpack.c.bf16 %v5753, %v5753
  %v5758 = vunpack.c.l.b16 %v5754
  %v5759 = vunpack.c.l.b16 %v5755
  %v5760 = vpack.c.b16 %v5759, %v5758
  %5762 = vmatpush.bf16.msra.mxu0 %v1813
  %5763 = vmatpush.bf16.msra.mxu0 %v1809
  %5764 = vmatpush.bf16.msra.mxu0 %v1805
  %5765 = vmatpush.bf16.msra.mxu0 %v1801
  %5766 = vmatpush.bf16.msra.mxu0 %v1797
  %5767 = vmatpush.bf16.msra.mxu0 %v1793
  %5768 = vmatpush.bf16.msra.mxu0 %v1789
  %5769 = vmatpush.bf16.msra.mxu0 %v1785
  %5770 = vmatmul.bf16.gmra.mxu0 %v5760
  %v5771 = vpop.f32.mrf.mxu0
  %v5772 = vadd.f32 %v1017, %v5771
  %v5773 = vpop.f32.mrf.mxu0
  %v5774 = vadd.f32 %v1017, %v5773
  %5775 = vdwg.mxu0
  %5776 = vmatpush.bf16.msra.mxu0 %v1845
  %5777 = vmatpush.bf16.msra.mxu0 %v1841
  %5778 = vmatpush.bf16.msra.mxu0 %v1837
  %5779 = vmatpush.bf16.msra.mxu0 %v1833
  %5780 = vmatpush.bf16.msra.mxu0 %v1829
  %5781 = vmatpush.bf16.msra.mxu0 %v1825
  %5782 = vmatpush.bf16.msra.mxu0 %v1821
  %5783 = vmatpush.bf16.msra.mxu0 %v1817
  %5784 = vmatmul.bf16.gmra.mxu0 %v5300
  %v5785 = vpop.f32.mrf.mxu0
  %v5786 = vadd.f32 %v5772, %v5785
  %v5787 = vpop.f32.mrf.mxu0
  %v5788 = vadd.f32 %v5774, %v5787
  %5789 = vdwg.mxu0
  %5790 = vmatpush.bf16.msra.mxu0 %v1814
  %5791 = vmatpush.bf16.msra.mxu0 %v1810
  %5792 = vmatpush.bf16.msra.mxu0 %v1806
  %5793 = vmatpush.bf16.msra.mxu0 %v1802
  %5794 = vmatpush.bf16.msra.mxu0 %v1798
  %5795 = vmatpush.bf16.msra.mxu0 %v1794
  %5796 = vmatpush.bf16.msra.mxu0 %v1790
  %5797 = vmatpush.bf16.msra.mxu0 %v1786
  %5798 = vmatmul.bf16.gmra.mxu0 %v5760
  %v5799 = vpop.f32.mrf.mxu0
  %v5800 = vadd.f32 %v1018, %v5799
  %v5801 = vpop.f32.mrf.mxu0
  %v5802 = vadd.f32 %v1018, %v5801
  %5803 = vdwg.mxu0
  %5804 = vmatpush.bf16.msra.mxu0 %v1846
  %5805 = vmatpush.bf16.msra.mxu0 %v1842
  %5806 = vmatpush.bf16.msra.mxu0 %v1838
  %5807 = vmatpush.bf16.msra.mxu0 %v1834
  %5808 = vmatpush.bf16.msra.mxu0 %v1830
  %5809 = vmatpush.bf16.msra.mxu0 %v1826
  %5810 = vmatpush.bf16.msra.mxu0 %v1822
  %5811 = vmatpush.bf16.msra.mxu0 %v1818
  %5812 = vmatmul.bf16.gmra.mxu0 %v5300
  %v5813 = vpop.f32.mrf.mxu0
  %v5814 = vadd.f32 %v5800, %v5813
  %v5815 = vpop.f32.mrf.mxu0
  %v5816 = vadd.f32 %v5802, %v5815
  %5817 = vdwg.mxu0
  %5818 = vmatpush.bf16.msra.mxu0 %v1815
  %5819 = vmatpush.bf16.msra.mxu0 %v1811
  %5820 = vmatpush.bf16.msra.mxu0 %v1807
  %5821 = vmatpush.bf16.msra.mxu0 %v1803
  %5822 = vmatpush.bf16.msra.mxu0 %v1799
  %5823 = vmatpush.bf16.msra.mxu0 %v1795
  %5824 = vmatpush.bf16.msra.mxu0 %v1791
  %5825 = vmatpush.bf16.msra.mxu0 %v1787
  %5826 = vmatmul.bf16.gmra.mxu0 %v5760
  %v5827 = vpop.f32.mrf.mxu0
  %v5828 = vadd.f32 %v1019, %v5827
  %v5829 = vpop.f32.mrf.mxu0
  %v5830 = vadd.f32 %v1019, %v5829
  %5831 = vdwg.mxu0
  %5832 = vmatpush.bf16.msra.mxu0 %v1847
  %5833 = vmatpush.bf16.msra.mxu0 %v1843
  %5834 = vmatpush.bf16.msra.mxu0 %v1839
  %5835 = vmatpush.bf16.msra.mxu0 %v1835
  %5836 = vmatpush.bf16.msra.mxu0 %v1831
  %5837 = vmatpush.bf16.msra.mxu0 %v1827
  %5838 = vmatpush.bf16.msra.mxu0 %v1823
  %5839 = vmatpush.bf16.msra.mxu0 %v1819
  %5840 = vmatmul.bf16.gmra.mxu0 %v5300
  %v5841 = vpop.f32.mrf.mxu0
  %v5842 = vadd.f32 %v5828, %v5841
  %v5843 = vpop.f32.mrf.mxu0
  %v5844 = vadd.f32 %v5830, %v5843
  %5845 = vdwg.mxu0
  %5846 = vmatpush.bf16.msra.mxu0 %v1816
  %5847 = vmatpush.bf16.msra.mxu0 %v1812
  %5848 = vmatpush.bf16.msra.mxu0 %v1808
  %5849 = vmatpush.bf16.msra.mxu0 %v1804
  %5850 = vmatpush.bf16.msra.mxu0 %v1800
  %5851 = vmatpush.bf16.msra.mxu0 %v1796
  %5852 = vmatpush.bf16.msra.mxu0 %v1792
  %5853 = vmatpush.bf16.msra.mxu0 %v1788
  %5854 = vmatmul.bf16.gmra.mxu0 %v5760
  %v5855 = vpop.f32.mrf.mxu0
  %v5856 = vadd.f32 %v1020, %v5855
  %v5857 = vpop.f32.mrf.mxu0
  %v5858 = vadd.f32 %v1020, %v5857
  %5859 = vdwg.mxu0
  %5860 = vmatpush.bf16.msra.mxu0 %v1848
  %5861 = vmatpush.bf16.msra.mxu0 %v1844
  %5862 = vmatpush.bf16.msra.mxu0 %v1840
  %5863 = vmatpush.bf16.msra.mxu0 %v1836
  %5864 = vmatpush.bf16.msra.mxu0 %v1832
  %5865 = vmatpush.bf16.msra.mxu0 %v1828
  %5866 = vmatpush.bf16.msra.mxu0 %v1824
  %5867 = vmatpush.bf16.msra.mxu0 %v1820
  %5868 = vmatmul.bf16.gmra.mxu0 %v5300
  %v5869 = vpop.f32.mrf.mxu0
  %v5870 = vadd.f32 %v5856, %v5869
  %v5871 = vpop.f32.mrf.mxu0
  %v5872 = vadd.f32 %v5858, %v5871
  %5873 = vdwg.mxu0
  %v5874 = vxor.u32 %v5786, 2147483648
  %v5875 = vxor.u32 %v5788, 2147483648
  %v5876 = vmul.f32 %v5874, 1.442695
  %v5877 = vpow.pop %v5876
  %v5878 = vmul.f32 %v5875, 1.442695
  %v5879 = vpow.pop %v5878
  %v5880 = vadd.f32 %v5877, 1.0
  %v5881 = vadd.f32 %v5879, 1.0
  %v5882 = vrcp.pop %v5880
  %v5883 = vmul.f32 %v5880, %v5882
  %v5884 = vsub.f32 1.0, %v5883
  %v5885 = vmul.f32 %v5882, %v5884
  %v5886 = vadd.f32 %v5882, %v5885
  %vm5887 = vweird.f32 %v5880
  %vm5888 = vweird.f32 %v5882
  %vm5889 = vmor %vm5887, %vm5888
  %v5890 = vsel %vm5889, %v5882, %v5886
  %v5891 = vand.u32 2147483647, %v5880
  %vm5892 = vcmp.eq.f32.partialorder %v5891, 8.507059e+37
  %v5893 = vand.u32 %v5880, 2147483648
  %v5894 = vor.u32 1.1754944e-38, %v5893
  %v5895 = vsel %vm5892, %v5894, %v5890
  %v5896 = vmul.f32 1.0, %v5895
  %v5897 = vrcp.pop %v5881
  %v5898 = vmul.f32 %v5881, %v5897
  %v5899 = vsub.f32 1.0, %v5898
  %v5900 = vmul.f32 %v5897, %v5899
  %v5901 = vadd.f32 %v5897, %v5900
  %vm5902 = vweird.f32 %v5881
  %vm5903 = vweird.f32 %v5897
  %vm5904 = vmor %vm5902, %vm5903
  %v5905 = vsel %vm5904, %v5897, %v5901
  %v5906 = vand.u32 2147483647, %v5881
  %vm5907 = vcmp.eq.f32.partialorder %v5906, 8.507059e+37
  %v5908 = vand.u32 %v5881, 2147483648
  %v5909 = vor.u32 1.1754944e-38, %v5908
  %v5910 = vsel %vm5907, %v5909, %v5905
  %v5911 = vmul.f32 1.0, %v5910
  %v5912 = vxor.u32 %v5814, 2147483648
  %v5913 = vxor.u32 %v5816, 2147483648
  %v5914 = vmul.f32 %v5912, 1.442695
  %v5915 = vpow.pop %v5914
  %v5916 = vmul.f32 %v5913, 1.442695
  %v5917 = vpow.pop %v5916
  %v5918 = vadd.f32 %v5915, 1.0
  %v5919 = vadd.f32 %v5917, 1.0
  %v5920 = vrcp.pop %v5918
  %v5921 = vmul.f32 %v5918, %v5920
  %v5922 = vsub.f32 1.0, %v5921
  %v5923 = vmul.f32 %v5920, %v5922
  %v5924 = vadd.f32 %v5920, %v5923
  %vm5925 = vweird.f32 %v5918
  %vm5926 = vweird.f32 %v5920
  %vm5927 = vmor %vm5925, %vm5926
  %v5928 = vsel %vm5927, %v5920, %v5924
  %v5929 = vand.u32 2147483647, %v5918
  %vm5930 = vcmp.eq.f32.partialorder %v5929, 8.507059e+37
  %v5931 = vand.u32 %v5918, 2147483648
  %v5932 = vor.u32 1.1754944e-38, %v5931
  %v5933 = vsel %vm5930, %v5932, %v5928
  %v5934 = vmul.f32 1.0, %v5933
  %v5935 = vrcp.pop %v5919
  %v5936 = vmul.f32 %v5919, %v5935
  %v5937 = vsub.f32 1.0, %v5936
  %v5938 = vmul.f32 %v5935, %v5937
  %v5939 = vadd.f32 %v5935, %v5938
  %vm5940 = vweird.f32 %v5919
  %vm5941 = vweird.f32 %v5935
  %vm5942 = vmor %vm5940, %vm5941
  %v5943 = vsel %vm5942, %v5935, %v5939
  %v5944 = vand.u32 2147483647, %v5919
  %vm5945 = vcmp.eq.f32.partialorder %v5944, 8.507059e+37
  %v5946 = vand.u32 %v5919, 2147483648
  %v5947 = vor.u32 1.1754944e-38, %v5946
  %v5948 = vsel %vm5945, %v5947, %v5943
  %v5949 = vmul.f32 1.0, %v5948
  %v5950 = vtanh.pop %v5842
  %v5951 = vtanh.pop %v5844
  %v5952 = vxor.u32 %v5870, 2147483648
  %v5953 = vxor.u32 %v5872, 2147483648
  %v5954 = vmul.f32 %v5952, 1.442695
  %v5955 = vpow.pop %v5954
  %v5956 = vmul.f32 %v5953, 1.442695
  %v5957 = vpow.pop %v5956
  %v5958 = vadd.f32 %v5955, 1.0
  %v5959 = vadd.f32 %v5957, 1.0
  %v5960 = vrcp.pop %v5958
  %v5961 = vmul.f32 %v5958, %v5960
  %v5962 = vsub.f32 1.0, %v5961
  %v5963 = vmul.f32 %v5960, %v5962
  %v5964 = vadd.f32 %v5960, %v5963
  %vm5965 = vweird.f32 %v5958
  %vm5966 = vweird.f32 %v5960
  %vm5967 = vmor %vm5965, %vm5966
  %v5968 = vsel %vm5967, %v5960, %v5964
  %v5969 = vand.u32 2147483647, %v5958
  %vm5970 = vcmp.eq.f32.partialorder %v5969, 8.507059e+37
  %v5971 = vand.u32 %v5958, 2147483648
  %v5972 = vor.u32 1.1754944e-38, %v5971
  %v5973 = vsel %vm5970, %v5972, %v5968
  %v5974 = vmul.f32 1.0, %v5973
  %v5975 = vrcp.pop %v5959
  %v5976 = vmul.f32 %v5959, %v5975
  %v5977 = vsub.f32 1.0, %v5976
  %v5978 = vmul.f32 %v5975, %v5977
  %v5979 = vadd.f32 %v5975, %v5978
  %vm5980 = vweird.f32 %v5959
  %vm5981 = vweird.f32 %v5975
  %vm5982 = vmor %vm5980, %vm5981
  %v5983 = vsel %vm5982, %v5975, %v5979
  %v5984 = vand.u32 2147483647, %v5959
  %vm5985 = vcmp.eq.f32.partialorder %v5984, 8.507059e+37
  %v5986 = vand.u32 %v5959, 2147483648
  %v5987 = vor.u32 1.1754944e-38, %v5986
  %v5988 = vsel %vm5985, %v5987, %v5983
  %v5989 = vmul.f32 1.0, %v5988
  %v5990 = vmul.f32 %v5934, %v5288
  %v5991 = vmul.f32 %v5949, %v5289
  %v5992 = vmul.f32 %v5896, %v5950
  %v5993 = vmul.f32 %v5911, %v5951
  %v5994 = vadd.f32 %v5990, %v5992
  %v5995 = vadd.f32 %v5991, %v5993
  %v5996 = vtanh.pop %v5994
  %v5997 = vtanh.pop %v5995
  %v5998 = vmul.f32 %v5974, %v5996
  %v5999 = vmul.f32 %v5989, %v5997
  %v6000 = vpack.c.bf16 %v5998, %v5998
  %v6001 = vpack.c.bf16 %v5999, %v5999
  %v6004 = vunpack.c.l.b16 %v6000
  %v6005 = vunpack.c.l.b16 %v6001
  %v6006 = vpack.c.b16 %v6005, %v6004
  %v6010 = vunpack.c.l.b16 %v5546
  %v6011 = vunpack.c.l.b16 %v5547
  %v6012 = vpack.c.b16 %v6011, %v6010
  %6014 = vmatpush.bf16.msra.mxu0 %v2385
  %6015 = vmatpush.bf16.msra.mxu0 %v2381
  %6016 = vmatpush.bf16.msra.mxu0 %v2377
  %6017 = vmatpush.bf16.msra.mxu0 %v2373
  %6018 = vmatpush.bf16.msra.mxu0 %v2369
  %6019 = vmatpush.bf16.msra.mxu0 %v2365
  %6020 = vmatpush.bf16.msra.mxu0 %v2361
  %6021 = vmatpush.bf16.msra.mxu0 %v2357
  %6022 = vmatmul.bf16.gmra.mxu0 %v6006
  %v6023 = vpop.f32.mrf.mxu0
  %v6024 = vadd.f32 %v1027, %v6023
  %v6025 = vpop.f32.mrf.mxu0
  %v6026 = vadd.f32 %v1027, %v6025
  %6027 = vdwg.mxu0
  %6028 = vmatpush.bf16.msra.mxu0 %v2417
  %6029 = vmatpush.bf16.msra.mxu0 %v2413
  %6030 = vmatpush.bf16.msra.mxu0 %v2409
  %6031 = vmatpush.bf16.msra.mxu0 %v2405
  %6032 = vmatpush.bf16.msra.mxu0 %v2401
  %6033 = vmatpush.bf16.msra.mxu0 %v2397
  %6034 = vmatpush.bf16.msra.mxu0 %v2393
  %6035 = vmatpush.bf16.msra.mxu0 %v2389
  %6036 = vmatmul.bf16.gmra.mxu0 %v6012
  %v6037 = vpop.f32.mrf.mxu0
  %v6038 = vadd.f32 %v6024, %v6037
  %v6039 = vpop.f32.mrf.mxu0
  %v6040 = vadd.f32 %v6026, %v6039
  %6041 = vdwg.mxu0
  %6042 = vmatpush.bf16.msra.mxu0 %v2386
  %6043 = vmatpush.bf16.msra.mxu0 %v2382
  %6044 = vmatpush.bf16.msra.mxu0 %v2378
  %6045 = vmatpush.bf16.msra.mxu0 %v2374
  %6046 = vmatpush.bf16.msra.mxu0 %v2370
  %6047 = vmatpush.bf16.msra.mxu0 %v2366
  %6048 = vmatpush.bf16.msra.mxu0 %v2362
  %6049 = vmatpush.bf16.msra.mxu0 %v2358
  %6050 = vmatmul.bf16.gmra.mxu0 %v6006
  %v6051 = vpop.f32.mrf.mxu0
  %v6052 = vadd.f32 %v1028, %v6051
  %v6053 = vpop.f32.mrf.mxu0
  %v6054 = vadd.f32 %v1028, %v6053
  %6055 = vdwg.mxu0
  %6056 = vmatpush.bf16.msra.mxu0 %v2418
  %6057 = vmatpush.bf16.msra.mxu0 %v2414
  %6058 = vmatpush.bf16.msra.mxu0 %v2410
  %6059 = vmatpush.bf16.msra.mxu0 %v2406
  %6060 = vmatpush.bf16.msra.mxu0 %v2402
  %6061 = vmatpush.bf16.msra.mxu0 %v2398
  %6062 = vmatpush.bf16.msra.mxu0 %v2394
  %6063 = vmatpush.bf16.msra.mxu0 %v2390
  %6064 = vmatmul.bf16.gmra.mxu0 %v6012
  %v6065 = vpop.f32.mrf.mxu0
  %v6066 = vadd.f32 %v6052, %v6065
  %v6067 = vpop.f32.mrf.mxu0
  %v6068 = vadd.f32 %v6054, %v6067
  %6069 = vdwg.mxu0
  %6070 = vmatpush.bf16.msra.mxu0 %v2387
  %6071 = vmatpush.bf16.msra.mxu0 %v2383
  %6072 = vmatpush.bf16.msra.mxu0 %v2379
  %6073 = vmatpush.bf16.msra.mxu0 %v2375
  %6074 = vmatpush.bf16.msra.mxu0 %v2371
  %6075 = vmatpush.bf16.msra.mxu0 %v2367
  %6076 = vmatpush.bf16.msra.mxu0 %v2363
  %6077 = vmatpush.bf16.msra.mxu0 %v2359
  %6078 = vmatmul.bf16.gmra.mxu0 %v6006
  %v6079 = vpop.f32.mrf.mxu0
  %v6080 = vadd.f32 %v1029, %v6079
  %v6081 = vpop.f32.mrf.mxu0
  %v6082 = vadd.f32 %v1029, %v6081
  %6083 = vdwg.mxu0
  %6084 = vmatpush.bf16.msra.mxu0 %v2419
  %6085 = vmatpush.bf16.msra.mxu0 %v2415
  %6086 = vmatpush.bf16.msra.mxu0 %v2411
  %6087 = vmatpush.bf16.msra.mxu0 %v2407
  %6088 = vmatpush.bf16.msra.mxu0 %v2403
  %6089 = vmatpush.bf16.msra.mxu0 %v2399
  %6090 = vmatpush.bf16.msra.mxu0 %v2395
  %6091 = vmatpush.bf16.msra.mxu0 %v2391
  %6092 = vmatmul.bf16.gmra.mxu0 %v6012
  %v6093 = vpop.f32.mrf.mxu0
  %v6094 = vadd.f32 %v6080, %v6093
  %v6095 = vpop.f32.mrf.mxu0
  %v6096 = vadd.f32 %v6082, %v6095
  %6097 = vdwg.mxu0
  %6098 = vmatpush.bf16.msra.mxu0 %v2388
  %6099 = vmatpush.bf16.msra.mxu0 %v2384
  %6100 = vmatpush.bf16.msra.mxu0 %v2380
  %6101 = vmatpush.bf16.msra.mxu0 %v2376
  %6102 = vmatpush.bf16.msra.mxu0 %v2372
  %6103 = vmatpush.bf16.msra.mxu0 %v2368
  %6104 = vmatpush.bf16.msra.mxu0 %v2364
  %6105 = vmatpush.bf16.msra.mxu0 %v2360
  %6106 = vmatmul.bf16.gmra.mxu0 %v6006
  %v6107 = vpop.f32.mrf.mxu0
  %v6108 = vadd.f32 %v1030, %v6107
  %v6109 = vpop.f32.mrf.mxu0
  %v6110 = vadd.f32 %v1030, %v6109
  %6111 = vdwg.mxu0
  %6112 = vmatpush.bf16.msra.mxu0 %v2420
  %6113 = vmatpush.bf16.msra.mxu0 %v2416
  %6114 = vmatpush.bf16.msra.mxu0 %v2412
  %6115 = vmatpush.bf16.msra.mxu0 %v2408
  %6116 = vmatpush.bf16.msra.mxu0 %v2404
  %6117 = vmatpush.bf16.msra.mxu0 %v2400
  %6118 = vmatpush.bf16.msra.mxu0 %v2396
  %6119 = vmatpush.bf16.msra.mxu0 %v2392
  %6120 = vmatmul.bf16.gmra.mxu0 %v6012
  %v6121 = vpop.f32.mrf.mxu0
  %v6122 = vadd.f32 %v6108, %v6121
  %v6123 = vpop.f32.mrf.mxu0
  %v6124 = vadd.f32 %v6110, %v6123
  %6125 = vdwg.mxu0
  %v6126 = vxor.u32 %v6038, 2147483648
  %v6127 = vxor.u32 %v6040, 2147483648
  %v6128 = vmul.f32 %v6126, 1.442695
  %v6129 = vpow.pop %v6128
  %v6130 = vmul.f32 %v6127, 1.442695
  %v6131 = vpow.pop %v6130
  %v6132 = vadd.f32 %v6129, 1.0
  %v6133 = vadd.f32 %v6131, 1.0
  %v6134 = vrcp.pop %v6132
  %v6135 = vmul.f32 %v6132, %v6134
  %v6136 = vsub.f32 1.0, %v6135
  %v6137 = vmul.f32 %v6134, %v6136
  %v6138 = vadd.f32 %v6134, %v6137
  %vm6139 = vweird.f32 %v6132
  %vm6140 = vweird.f32 %v6134
  %vm6141 = vmor %vm6139, %vm6140
  %v6142 = vsel %vm6141, %v6134, %v6138
  %v6143 = vand.u32 2147483647, %v6132
  %vm6144 = vcmp.eq.f32.partialorder %v6143, 8.507059e+37
  %v6145 = vand.u32 %v6132, 2147483648
  %v6146 = vor.u32 1.1754944e-38, %v6145
  %v6147 = vsel %vm6144, %v6146, %v6142
  %v6148 = vmul.f32 1.0, %v6147
  %v6149 = vrcp.pop %v6133
  %v6150 = vmul.f32 %v6133, %v6149
  %v6151 = vsub.f32 1.0, %v6150
  %v6152 = vmul.f32 %v6149, %v6151
  %v6153 = vadd.f32 %v6149, %v6152
  %vm6154 = vweird.f32 %v6133
  %vm6155 = vweird.f32 %v6149
  %vm6156 = vmor %vm6154, %vm6155
  %v6157 = vsel %vm6156, %v6149, %v6153
  %v6158 = vand.u32 2147483647, %v6133
  %vm6159 = vcmp.eq.f32.partialorder %v6158, 8.507059e+37
  %v6160 = vand.u32 %v6133, 2147483648
  %v6161 = vor.u32 1.1754944e-38, %v6160
  %v6162 = vsel %vm6159, %v6161, %v6157
  %v6163 = vmul.f32 1.0, %v6162
  %v6164 = vxor.u32 %v6066, 2147483648
  %v6165 = vxor.u32 %v6068, 2147483648
  %v6166 = vmul.f32 %v6164, 1.442695
  %v6167 = vpow.pop %v6166
  %v6168 = vmul.f32 %v6165, 1.442695
  %v6169 = vpow.pop %v6168
  %v6170 = vadd.f32 %v6167, 1.0
  %v6171 = vadd.f32 %v6169, 1.0
  %v6172 = vrcp.pop %v6170
  %v6173 = vmul.f32 %v6170, %v6172
  %v6174 = vsub.f32 1.0, %v6173
  %v6175 = vmul.f32 %v6172, %v6174
  %v6176 = vadd.f32 %v6172, %v6175
  %vm6177 = vweird.f32 %v6170
  %vm6178 = vweird.f32 %v6172
  %vm6179 = vmor %vm6177, %vm6178
  %v6180 = vsel %vm6179, %v6172, %v6176
  %v6181 = vand.u32 2147483647, %v6170
  %vm6182 = vcmp.eq.f32.partialorder %v6181, 8.507059e+37
  %v6183 = vand.u32 %v6170, 2147483648
  %v6184 = vor.u32 1.1754944e-38, %v6183
  %v6185 = vsel %vm6182, %v6184, %v6180
  %v6186 = vmul.f32 1.0, %v6185
  %v6187 = vrcp.pop %v6171
  %v6188 = vmul.f32 %v6171, %v6187
  %v6189 = vsub.f32 1.0, %v6188
  %v6190 = vmul.f32 %v6187, %v6189
  %v6191 = vadd.f32 %v6187, %v6190
  %vm6192 = vweird.f32 %v6171
  %vm6193 = vweird.f32 %v6187
  %vm6194 = vmor %vm6192, %vm6193
  %v6195 = vsel %vm6194, %v6187, %v6191
  %v6196 = vand.u32 2147483647, %v6171
  %vm6197 = vcmp.eq.f32.partialorder %v6196, 8.507059e+37
  %v6198 = vand.u32 %v6171, 2147483648
  %v6199 = vor.u32 1.1754944e-38, %v6198
  %v6200 = vsel %vm6197, %v6199, %v6195
  %v6201 = vmul.f32 1.0, %v6200
  %v6202 = vtanh.pop %v6094
  %v6203 = vtanh.pop %v6096
  %v6204 = vxor.u32 %v6122, 2147483648
  %v6205 = vxor.u32 %v6124, 2147483648
  %v6206 = vmul.f32 %v6204, 1.442695
  %v6207 = vpow.pop %v6206
  %v6208 = vmul.f32 %v6205, 1.442695
  %v6209 = vpow.pop %v6208
  %v6210 = vadd.f32 %v6207, 1.0
  %v6211 = vadd.f32 %v6209, 1.0
  %v6212 = vrcp.pop %v6210
  %v6213 = vmul.f32 %v6210, %v6212
  %v6214 = vsub.f32 1.0, %v6213
  %v6215 = vmul.f32 %v6212, %v6214
  %v6216 = vadd.f32 %v6212, %v6215
  %vm6217 = vweird.f32 %v6210
  %vm6218 = vweird.f32 %v6212
  %vm6219 = vmor %vm6217, %vm6218
  %v6220 = vsel %vm6219, %v6212, %v6216
  %v6221 = vand.u32 2147483647, %v6210
  %vm6222 = vcmp.eq.f32.partialorder %v6221, 8.507059e+37
  %v6223 = vand.u32 %v6210, 2147483648
  %v6224 = vor.u32 1.1754944e-38, %v6223
  %v6225 = vsel %vm6222, %v6224, %v6220
  %v6226 = vmul.f32 1.0, %v6225
  %v6227 = vrcp.pop %v6211
  %v6228 = vmul.f32 %v6211, %v6227
  %v6229 = vsub.f32 1.0, %v6228
  %v6230 = vmul.f32 %v6227, %v6229
  %v6231 = vadd.f32 %v6227, %v6230
  %vm6232 = vweird.f32 %v6211
  %vm6233 = vweird.f32 %v6227
  %vm6234 = vmor %vm6232, %vm6233
  %v6235 = vsel %vm6234, %v6227, %v6231
  %v6236 = vand.u32 2147483647, %v6211
  %vm6237 = vcmp.eq.f32.partialorder %v6236, 8.507059e+37
  %v6238 = vand.u32 %v6211, 2147483648
  %v6239 = vor.u32 1.1754944e-38, %v6238
  %v6240 = vsel %vm6237, %v6239, %v6235
  %v6241 = vmul.f32 1.0, %v6240
  %v6242 = vmul.f32 %v6186, %v5540
  %v6243 = vmul.f32 %v6201, %v5541
  %v6244 = vmul.f32 %v6148, %v6202
  %v6245 = vmul.f32 %v6163, %v6203
  %v6246 = vadd.f32 %v6242, %v6244
  %v6247 = vadd.f32 %v6243, %v6245
  %v6248 = vtanh.pop %v6246
  %v6249 = vtanh.pop %v6247
  %v6250 = vmul.f32 %v6226, %v6248
  %v6251 = vmul.f32 %v6241, %v6249
  %v6252 = vpack.c.bf16 %v6250, %v6250
  %v6253 = vpack.c.bf16 %v6251, %v6251
  %s6254 = scalar_lea.vmem [#allocation5], 40
  %6255 = vst [vmem:[%s6254] sm:$0xf] %v6252
  %6256 = vst [vmem:[%s6254 + $0x4] sm:$0xf] %v6253
  %s6257 = scalar_lea.vmem [#allocation4], 192
  %v6258 = vld [vmem:[%s6257] sm:$0xff]
  %v6259 = vld [vmem:[%s6257 + $0x8] sm:$0xff]
  %v6260 = vld [vmem:[%s6257 + $0x10] sm:$0xff]
  %v6261 = vld [vmem:[%s6257 + $0x18] sm:$0xff]
  %6262 = vmatpush.bf16.msra.mxu0 %v1345
  %6263 = vmatpush.bf16.msra.mxu0 %v1341
  %6264 = vmatpush.bf16.msra.mxu0 %v1337
  %6265 = vmatpush.bf16.msra.mxu0 %v1333
  %6266 = vmatpush.bf16.msra.mxu0 %v1329
  %6267 = vmatpush.bf16.msra.mxu0 %v1325
  %6268 = vmatpush.bf16.msra.mxu0 %v1321
  %6269 = vmatpush.bf16.msra.mxu0 %v1317
  %6270 = vmatmul.bf16.gmra.mxu0 %v5760
  %v6271 = vpop.f32.mrf.mxu0
  %v6272 = vadd.f32 0.0, %v6271
  %v6273 = vpop.f32.mrf.mxu0
  %v6274 = vadd.f32 0.0, %v6273
  %6275 = vdwg.mxu0
  %6276 = vmatpush.bf16.msra.mxu0 %v1346
  %6277 = vmatpush.bf16.msra.mxu0 %v1342
  %6278 = vmatpush.bf16.msra.mxu0 %v1338
  %6279 = vmatpush.bf16.msra.mxu0 %v1334
  %6280 = vmatpush.bf16.msra.mxu0 %v1330
  %6281 = vmatpush.bf16.msra.mxu0 %v1326
  %6282 = vmatpush.bf16.msra.mxu0 %v1322
  %6283 = vmatpush.bf16.msra.mxu0 %v1318
  %6284 = vmatmul.bf16.gmra.mxu0 %v5760
  %v6285 = vpop.f32.mrf.mxu0
  %v6286 = vadd.f32 0.0, %v6285
  %v6287 = vpop.f32.mrf.mxu0
  %v6288 = vadd.f32 0.0, %v6287
  %6289 = vdwg.mxu0
  %6290 = vmatpush.bf16.msra.mxu0 %v1347
  %6291 = vmatpush.bf16.msra.mxu0 %v1343
  %6292 = vmatpush.bf16.msra.mxu0 %v1339
  %6293 = vmatpush.bf16.msra.mxu0 %v1335
  %6294 = vmatpush.bf16.msra.mxu0 %v1331
  %6295 = vmatpush.bf16.msra.mxu0 %v1327
  %6296 = vmatpush.bf16.msra.mxu0 %v1323
  %6297 = vmatpush.bf16.msra.mxu0 %v1319
  %6298 = vmatmul.bf16.gmra.mxu0 %v5760
  %v6299 = vpop.f32.mrf.mxu0
  %v6300 = vadd.f32 0.0, %v6299
  %v6301 = vpop.f32.mrf.mxu0
  %v6302 = vadd.f32 0.0, %v6301
  %6303 = vdwg.mxu0
  %6304 = vmatpush.bf16.msra.mxu0 %v1348
  %6305 = vmatpush.bf16.msra.mxu0 %v1344
  %6306 = vmatpush.bf16.msra.mxu0 %v1340
  %6307 = vmatpush.bf16.msra.mxu0 %v1336
  %6308 = vmatpush.bf16.msra.mxu0 %v1332
  %6309 = vmatpush.bf16.msra.mxu0 %v1328
  %6310 = vmatpush.bf16.msra.mxu0 %v1324
  %6311 = vmatpush.bf16.msra.mxu0 %v1320
  %6312 = vmatmul.bf16.gmra.mxu0 %v5760
  %v6313 = vpop.f32.mrf.mxu0
  %v6314 = vadd.f32 0.0, %v6313
  %v6315 = vpop.f32.mrf.mxu0
  %v6316 = vadd.f32 0.0, %v6315
  %6317 = vdwg.mxu0
  %v6318 = vunpack.c.l.bf16 %v6258
  %v6319 = vunpack.c.h.bf16 %v6258
  %v6320 = vunpack.c.l.bf16 %v6259
  %v6321 = vunpack.c.h.bf16 %v6259
  %v6322 = vunpack.c.l.bf16 %v6260
  %v6323 = vunpack.c.h.bf16 %v6260
  %v6324 = vunpack.c.l.bf16 %v6261
  %v6325 = vunpack.c.h.bf16 %v6261
  %v6326 = vadd.f32 %v6318, %v6272
  %v6327 = vadd.f32 %v6319, %v6286
  %v6328 = vadd.f32 %v6320, %v6300
  %v6329 = vadd.f32 %v6321, %v6314
  %v6330 = vadd.f32 %v6322, %v6274
  %v6331 = vadd.f32 %v6323, %v6288
  %v6332 = vadd.f32 %v6324, %v6302
  %v6333 = vadd.f32 %v6325, %v6316
  %v6334 = vxor.u32 %v6326, 2147483648
  %v6335 = vxor.u32 %v6330, 2147483648
  %v6336 = vmul.f32 %v6334, 1.442695
  %v6337 = vpow.pop %v6336
  %v6338 = vmul.f32 %v6335, 1.442695
  %v6339 = vpow.pop %v6338
  %v6340 = vadd.f32 %v6337, 1.0
  %v6341 = vadd.f32 %v6339, 1.0
  %v6342 = vrcp.pop %v6340
  %v6343 = vmul.f32 %v6340, %v6342
  %v6344 = vsub.f32 1.0, %v6343
  %v6345 = vmul.f32 %v6342, %v6344
  %v6346 = vadd.f32 %v6342, %v6345
  %vm6347 = vweird.f32 %v6340
  %vm6348 = vweird.f32 %v6342
  %vm6349 = vmor %vm6347, %vm6348
  %v6350 = vsel %vm6349, %v6342, %v6346
  %v6351 = vand.u32 2147483647, %v6340
  %vm6352 = vcmp.eq.f32.partialorder %v6351, 8.507059e+37
  %v6353 = vand.u32 %v6340, 2147483648
  %v6354 = vor.u32 1.1754944e-38, %v6353
  %v6355 = vsel %vm6352, %v6354, %v6350
  %v6356 = vmul.f32 1.0, %v6355
  %v6357 = vrcp.pop %v6341
  %v6358 = vmul.f32 %v6341, %v6357
  %v6359 = vsub.f32 1.0, %v6358
  %v6360 = vmul.f32 %v6357, %v6359
  %v6361 = vadd.f32 %v6357, %v6360
  %vm6362 = vweird.f32 %v6341
  %vm6363 = vweird.f32 %v6357
  %vm6364 = vmor %vm6362, %vm6363
  %v6365 = vsel %vm6364, %v6357, %v6361
  %v6366 = vand.u32 2147483647, %v6341
  %vm6367 = vcmp.eq.f32.partialorder %v6366, 8.507059e+37
  %v6368 = vand.u32 %v6341, 2147483648
  %v6369 = vor.u32 1.1754944e-38, %v6368
  %v6370 = vsel %vm6367, %v6369, %v6365
  %v6371 = vmul.f32 1.0, %v6370
  %v6372 = vxor.u32 %v6327, 2147483648
  %v6373 = vxor.u32 %v6331, 2147483648
  %v6374 = vmul.f32 %v6372, 1.442695
  %v6375 = vpow.pop %v6374
  %v6376 = vmul.f32 %v6373, 1.442695
  %v6377 = vpow.pop %v6376
  %v6378 = vadd.f32 %v6375, 1.0
  %v6379 = vadd.f32 %v6377, 1.0
  %v6380 = vrcp.pop %v6378
  %v6381 = vmul.f32 %v6378, %v6380
  %v6382 = vsub.f32 1.0, %v6381
  %v6383 = vmul.f32 %v6380, %v6382
  %v6384 = vadd.f32 %v6380, %v6383
  %vm6385 = vweird.f32 %v6378
  %vm6386 = vweird.f32 %v6380
  %vm6387 = vmor %vm6385, %vm6386
  %v6388 = vsel %vm6387, %v6380, %v6384
  %v6389 = vand.u32 2147483647, %v6378
  %vm6390 = vcmp.eq.f32.partialorder %v6389, 8.507059e+37
  %v6391 = vand.u32 %v6378, 2147483648
  %v6392 = vor.u32 1.1754944e-38, %v6391
  %v6393 = vsel %vm6390, %v6392, %v6388
  %v6394 = vmul.f32 1.0, %v6393
  %v6395 = vrcp.pop %v6379
  %v6396 = vmul.f32 %v6379, %v6395
  %v6397 = vsub.f32 1.0, %v6396
  %v6398 = vmul.f32 %v6395, %v6397
  %v6399 = vadd.f32 %v6395, %v6398
  %vm6400 = vweird.f32 %v6379
  %vm6401 = vweird.f32 %v6395
  %vm6402 = vmor %vm6400, %vm6401
  %v6403 = vsel %vm6402, %v6395, %v6399
  %v6404 = vand.u32 2147483647, %v6379
  %vm6405 = vcmp.eq.f32.partialorder %v6404, 8.507059e+37
  %v6406 = vand.u32 %v6379, 2147483648
  %v6407 = vor.u32 1.1754944e-38, %v6406
  %v6408 = vsel %vm6405, %v6407, %v6403
  %v6409 = vmul.f32 1.0, %v6408
  %v6410 = vtanh.pop %v6328
  %v6411 = vtanh.pop %v6332
  %v6412 = vxor.u32 %v6329, 2147483648
  %v6413 = vxor.u32 %v6333, 2147483648
  %v6414 = vmul.f32 %v6412, 1.442695
  %v6415 = vpow.pop %v6414
  %v6416 = vmul.f32 %v6413, 1.442695
  %v6417 = vpow.pop %v6416
  %v6418 = vadd.f32 %v6415, 1.0
  %v6419 = vadd.f32 %v6417, 1.0
  %v6420 = vrcp.pop %v6418
  %v6421 = vmul.f32 %v6418, %v6420
  %v6422 = vsub.f32 1.0, %v6421
  %v6423 = vmul.f32 %v6420, %v6422
  %v6424 = vadd.f32 %v6420, %v6423
  %vm6425 = vweird.f32 %v6418
  %vm6426 = vweird.f32 %v6420
  %vm6427 = vmor %vm6425, %vm6426
  %v6428 = vsel %vm6427, %v6420, %v6424
  %v6429 = vand.u32 2147483647, %v6418
  %vm6430 = vcmp.eq.f32.partialorder %v6429, 8.507059e+37
  %v6431 = vand.u32 %v6418, 2147483648
  %v6432 = vor.u32 1.1754944e-38, %v6431
  %v6433 = vsel %vm6430, %v6432, %v6428
  %v6434 = vmul.f32 1.0, %v6433
  %v6435 = vrcp.pop %v6419
  %v6436 = vmul.f32 %v6419, %v6435
  %v6437 = vsub.f32 1.0, %v6436
  %v6438 = vmul.f32 %v6435, %v6437
  %v6439 = vadd.f32 %v6435, %v6438
  %vm6440 = vweird.f32 %v6419
  %vm6441 = vweird.f32 %v6435
  %vm6442 = vmor %vm6440, %vm6441
  %v6443 = vsel %vm6442, %v6435, %v6439
  %v6444 = vand.u32 2147483647, %v6419
  %vm6445 = vcmp.eq.f32.partialorder %v6444, 8.507059e+37
  %v6446 = vand.u32 %v6419, 2147483648
  %v6447 = vor.u32 1.1754944e-38, %v6446
  %v6448 = vsel %vm6445, %v6447, %v6443
  %v6449 = vmul.f32 1.0, %v6448
  %v6450 = vmul.f32 %v6394, %v5748
  %v6451 = vmul.f32 %v6409, %v5749
  %v6452 = vmul.f32 %v6356, %v6410
  %v6453 = vmul.f32 %v6371, %v6411
  %v6454 = vadd.f32 %v6450, %v6452
  %v6455 = vadd.f32 %v6451, %v6453
  %v6456 = vtanh.pop %v6454
  %v6457 = vtanh.pop %v6455
  %v6458 = vmul.f32 %v6434, %v6456
  %v6459 = vmul.f32 %v6449, %v6457
  %v6460 = vpack.c.bf16 %v6458, %v6458
  %v6461 = vpack.c.bf16 %v6459, %v6459
  %v6464 = vunpack.c.l.b16 %v6460
  %v6465 = vunpack.c.l.b16 %v6461
  %v6466 = vpack.c.b16 %v6465, %v6464
  %6468 = vmatpush.bf16.msra.mxu0 %v1813
  %6469 = vmatpush.bf16.msra.mxu0 %v1809
  %6470 = vmatpush.bf16.msra.mxu0 %v1805
  %6471 = vmatpush.bf16.msra.mxu0 %v1801
  %6472 = vmatpush.bf16.msra.mxu0 %v1797
  %6473 = vmatpush.bf16.msra.mxu0 %v1793
  %6474 = vmatpush.bf16.msra.mxu0 %v1789
  %6475 = vmatpush.bf16.msra.mxu0 %v1785
  %6476 = vmatmul.bf16.gmra.mxu0 %v6466
  %v6477 = vpop.f32.mrf.mxu0
  %v6478 = vadd.f32 %v1017, %v6477
  %v6479 = vpop.f32.mrf.mxu0
  %v6480 = vadd.f32 %v1017, %v6479
  %6481 = vdwg.mxu0
  %6482 = vmatpush.bf16.msra.mxu0 %v1845
  %6483 = vmatpush.bf16.msra.mxu0 %v1841
  %6484 = vmatpush.bf16.msra.mxu0 %v1837
  %6485 = vmatpush.bf16.msra.mxu0 %v1833
  %6486 = vmatpush.bf16.msra.mxu0 %v1829
  %6487 = vmatpush.bf16.msra.mxu0 %v1825
  %6488 = vmatpush.bf16.msra.mxu0 %v1821
  %6489 = vmatpush.bf16.msra.mxu0 %v1817
  %6490 = vmatmul.bf16.gmra.mxu0 %v6006
  %v6491 = vpop.f32.mrf.mxu0
  %v6492 = vadd.f32 %v6478, %v6491
  %v6493 = vpop.f32.mrf.mxu0
  %v6494 = vadd.f32 %v6480, %v6493
  %6495 = vdwg.mxu0
  %6496 = vmatpush.bf16.msra.mxu0 %v1814
  %6497 = vmatpush.bf16.msra.mxu0 %v1810
  %6498 = vmatpush.bf16.msra.mxu0 %v1806
  %6499 = vmatpush.bf16.msra.mxu0 %v1802
  %6500 = vmatpush.bf16.msra.mxu0 %v1798
  %6501 = vmatpush.bf16.msra.mxu0 %v1794
  %6502 = vmatpush.bf16.msra.mxu0 %v1790
  %6503 = vmatpush.bf16.msra.mxu0 %v1786
  %6504 = vmatmul.bf16.gmra.mxu0 %v6466
  %v6505 = vpop.f32.mrf.mxu0
  %v6506 = vadd.f32 %v1018, %v6505
  %v6507 = vpop.f32.mrf.mxu0
  %v6508 = vadd.f32 %v1018, %v6507
  %6509 = vdwg.mxu0
  %6510 = vmatpush.bf16.msra.mxu0 %v1846
  %6511 = vmatpush.bf16.msra.mxu0 %v1842
  %6512 = vmatpush.bf16.msra.mxu0 %v1838
  %6513 = vmatpush.bf16.msra.mxu0 %v1834
  %6514 = vmatpush.bf16.msra.mxu0 %v1830
  %6515 = vmatpush.bf16.msra.mxu0 %v1826
  %6516 = vmatpush.bf16.msra.mxu0 %v1822
  %6517 = vmatpush.bf16.msra.mxu0 %v1818
  %6518 = vmatmul.bf16.gmra.mxu0 %v6006
  %v6519 = vpop.f32.mrf.mxu0
  %v6520 = vadd.f32 %v6506, %v6519
  %v6521 = vpop.f32.mrf.mxu0
  %v6522 = vadd.f32 %v6508, %v6521
  %6523 = vdwg.mxu0
  %6524 = vmatpush.bf16.msra.mxu0 %v1815
  %6525 = vmatpush.bf16.msra.mxu0 %v1811
  %6526 = vmatpush.bf16.msra.mxu0 %v1807
  %6527 = vmatpush.bf16.msra.mxu0 %v1803
  %6528 = vmatpush.bf16.msra.mxu0 %v1799
  %6529 = vmatpush.bf16.msra.mxu0 %v1795
  %6530 = vmatpush.bf16.msra.mxu0 %v1791
  %6531 = vmatpush.bf16.msra.mxu0 %v1787
  %6532 = vmatmul.bf16.gmra.mxu0 %v6466
  %v6533 = vpop.f32.mrf.mxu0
  %v6534 = vadd.f32 %v1019, %v6533
  %v6535 = vpop.f32.mrf.mxu0
  %v6536 = vadd.f32 %v1019, %v6535
  %6537 = vdwg.mxu0
  %6538 = vmatpush.bf16.msra.mxu0 %v1847
  %6539 = vmatpush.bf16.msra.mxu0 %v1843
  %6540 = vmatpush.bf16.msra.mxu0 %v1839
  %6541 = vmatpush.bf16.msra.mxu0 %v1835
  %6542 = vmatpush.bf16.msra.mxu0 %v1831
  %6543 = vmatpush.bf16.msra.mxu0 %v1827
  %6544 = vmatpush.bf16.msra.mxu0 %v1823
  %6545 = vmatpush.bf16.msra.mxu0 %v1819
  %6546 = vmatmul.bf16.gmra.mxu0 %v6006
  %v6547 = vpop.f32.mrf.mxu0
  %v6548 = vadd.f32 %v6534, %v6547
  %v6549 = vpop.f32.mrf.mxu0
  %v6550 = vadd.f32 %v6536, %v6549
  %6551 = vdwg.mxu0
  %6552 = vmatpush.bf16.msra.mxu0 %v1816
  %6553 = vmatpush.bf16.msra.mxu0 %v1812
  %6554 = vmatpush.bf16.msra.mxu0 %v1808
  %6555 = vmatpush.bf16.msra.mxu0 %v1804
  %6556 = vmatpush.bf16.msra.mxu0 %v1800
  %6557 = vmatpush.bf16.msra.mxu0 %v1796
  %6558 = vmatpush.bf16.msra.mxu0 %v1792
  %6559 = vmatpush.bf16.msra.mxu0 %v1788
  %6560 = vmatmul.bf16.gmra.mxu0 %v6466
  %v6561 = vpop.f32.mrf.mxu0
  %v6562 = vadd.f32 %v1020, %v6561
  %v6563 = vpop.f32.mrf.mxu0
  %v6564 = vadd.f32 %v1020, %v6563
  %6565 = vdwg.mxu0
  %6566 = vmatpush.bf16.msra.mxu0 %v1848
  %6567 = vmatpush.bf16.msra.mxu0 %v1844
  %6568 = vmatpush.bf16.msra.mxu0 %v1840
  %6569 = vmatpush.bf16.msra.mxu0 %v1836
  %6570 = vmatpush.bf16.msra.mxu0 %v1832
  %6571 = vmatpush.bf16.msra.mxu0 %v1828
  %6572 = vmatpush.bf16.msra.mxu0 %v1824
  %6573 = vmatpush.bf16.msra.mxu0 %v1820
  %6574 = vmatmul.bf16.gmra.mxu0 %v6006
  %v6575 = vpop.f32.mrf.mxu0
  %v6576 = vadd.f32 %v6562, %v6575
  %v6577 = vpop.f32.mrf.mxu0
  %v6578 = vadd.f32 %v6564, %v6577
  %6579 = vdwg.mxu0
  %v6580 = vxor.u32 %v6492, 2147483648
  %v6581 = vxor.u32 %v6494, 2147483648
  %v6582 = vmul.f32 %v6580, 1.442695
  %v6583 = vpow.pop %v6582
  %v6584 = vmul.f32 %v6581, 1.442695
  %v6585 = vpow.pop %v6584
  %v6586 = vadd.f32 %v6583, 1.0
  %v6587 = vadd.f32 %v6585, 1.0
  %v6588 = vrcp.pop %v6586
  %v6589 = vmul.f32 %v6586, %v6588
  %v6590 = vsub.f32 1.0, %v6589
  %v6591 = vmul.f32 %v6588, %v6590
  %v6592 = vadd.f32 %v6588, %v6591
  %vm6593 = vweird.f32 %v6586
  %vm6594 = vweird.f32 %v6588
  %vm6595 = vmor %vm6593, %vm6594
  %v6596 = vsel %vm6595, %v6588, %v6592
  %v6597 = vand.u32 2147483647, %v6586
  %vm6598 = vcmp.eq.f32.partialorder %v6597, 8.507059e+37
  %v6599 = vand.u32 %v6586, 2147483648
  %v6600 = vor.u32 1.1754944e-38, %v6599
  %v6601 = vsel %vm6598, %v6600, %v6596
  %v6602 = vmul.f32 1.0, %v6601
  %v6603 = vrcp.pop %v6587
  %v6604 = vmul.f32 %v6587, %v6603
  %v6605 = vsub.f32 1.0, %v6604
  %v6606 = vmul.f32 %v6603, %v6605
  %v6607 = vadd.f32 %v6603, %v6606
  %vm6608 = vweird.f32 %v6587
  %vm6609 = vweird.f32 %v6603
  %vm6610 = vmor %vm6608, %vm6609
  %v6611 = vsel %vm6610, %v6603, %v6607
  %v6612 = vand.u32 2147483647, %v6587
  %vm6613 = vcmp.eq.f32.partialorder %v6612, 8.507059e+37
  %v6614 = vand.u32 %v6587, 2147483648
  %v6615 = vor.u32 1.1754944e-38, %v6614
  %v6616 = vsel %vm6613, %v6615, %v6611
  %v6617 = vmul.f32 1.0, %v6616
  %v6618 = vxor.u32 %v6520, 2147483648
  %v6619 = vxor.u32 %v6522, 2147483648
  %v6620 = vmul.f32 %v6618, 1.442695
  %v6621 = vpow.pop %v6620
  %v6622 = vmul.f32 %v6619, 1.442695
  %v6623 = vpow.pop %v6622
  %v6624 = vadd.f32 %v6621, 1.0
  %v6625 = vadd.f32 %v6623, 1.0
  %v6626 = vrcp.pop %v6624
  %v6627 = vmul.f32 %v6624, %v6626
  %v6628 = vsub.f32 1.0, %v6627
  %v6629 = vmul.f32 %v6626, %v6628
  %v6630 = vadd.f32 %v6626, %v6629
  %vm6631 = vweird.f32 %v6624
  %vm6632 = vweird.f32 %v6626
  %vm6633 = vmor %vm6631, %vm6632
  %v6634 = vsel %vm6633, %v6626, %v6630
  %v6635 = vand.u32 2147483647, %v6624
  %vm6636 = vcmp.eq.f32.partialorder %v6635, 8.507059e+37
  %v6637 = vand.u32 %v6624, 2147483648
  %v6638 = vor.u32 1.1754944e-38, %v6637
  %v6639 = vsel %vm6636, %v6638, %v6634
  %v6640 = vmul.f32 1.0, %v6639
  %v6641 = vrcp.pop %v6625
  %v6642 = vmul.f32 %v6625, %v6641
  %v6643 = vsub.f32 1.0, %v6642
  %v6644 = vmul.f32 %v6641, %v6643
  %v6645 = vadd.f32 %v6641, %v6644
  %vm6646 = vweird.f32 %v6625
  %vm6647 = vweird.f32 %v6641
  %vm6648 = vmor %vm6646, %vm6647
  %v6649 = vsel %vm6648, %v6641, %v6645
  %v6650 = vand.u32 2147483647, %v6625
  %vm6651 = vcmp.eq.f32.partialorder %v6650, 8.507059e+37
  %v6652 = vand.u32 %v6625, 2147483648
  %v6653 = vor.u32 1.1754944e-38, %v6652
  %v6654 = vsel %vm6651, %v6653, %v6649
  %v6655 = vmul.f32 1.0, %v6654
  %v6656 = vtanh.pop %v6548
  %v6657 = vtanh.pop %v6550
  %v6658 = vxor.u32 %v6576, 2147483648
  %v6659 = vxor.u32 %v6578, 2147483648
  %v6660 = vmul.f32 %v6658, 1.442695
  %v6661 = vpow.pop %v6660
  %v6662 = vmul.f32 %v6659, 1.442695
  %v6663 = vpow.pop %v6662
  %v6664 = vadd.f32 %v6661, 1.0
  %v6665 = vadd.f32 %v6663, 1.0
  %v6666 = vrcp.pop %v6664
  %v6667 = vmul.f32 %v6664, %v6666
  %v6668 = vsub.f32 1.0, %v6667
  %v6669 = vmul.f32 %v6666, %v6668
  %v6670 = vadd.f32 %v6666, %v6669
  %vm6671 = vweird.f32 %v6664
  %vm6672 = vweird.f32 %v6666
  %vm6673 = vmor %vm6671, %vm6672
  %v6674 = vsel %vm6673, %v6666, %v6670
  %v6675 = vand.u32 2147483647, %v6664
  %vm6676 = vcmp.eq.f32.partialorder %v6675, 8.507059e+37
  %v6677 = vand.u32 %v6664, 2147483648
  %v6678 = vor.u32 1.1754944e-38, %v6677
  %v6679 = vsel %vm6676, %v6678, %v6674
  %v6680 = vmul.f32 1.0, %v6679
  %v6681 = vrcp.pop %v6665
  %v6682 = vmul.f32 %v6665, %v6681
  %v6683 = vsub.f32 1.0, %v6682
  %v6684 = vmul.f32 %v6681, %v6683
  %v6685 = vadd.f32 %v6681, %v6684
  %vm6686 = vweird.f32 %v6665
  %vm6687 = vweird.f32 %v6681
  %vm6688 = vmor %vm6686, %vm6687
  %v6689 = vsel %vm6688, %v6681, %v6685
  %v6690 = vand.u32 2147483647, %v6665
  %vm6691 = vcmp.eq.f32.partialorder %v6690, 8.507059e+37
  %v6692 = vand.u32 %v6665, 2147483648
  %v6693 = vor.u32 1.1754944e-38, %v6692
  %v6694 = vsel %vm6691, %v6693, %v6689
  %v6695 = vmul.f32 1.0, %v6694
  %v6696 = vmul.f32 %v6640, %v5994
  %v6697 = vmul.f32 %v6655, %v5995
  %v6698 = vmul.f32 %v6602, %v6656
  %v6699 = vmul.f32 %v6617, %v6657
  %v6700 = vadd.f32 %v6696, %v6698
  %v6701 = vadd.f32 %v6697, %v6699
  %v6702 = vtanh.pop %v6700
  %v6703 = vtanh.pop %v6701
  %v6704 = vmul.f32 %v6680, %v6702
  %v6705 = vmul.f32 %v6695, %v6703
  %v6706 = vpack.c.bf16 %v6704, %v6704
  %v6707 = vpack.c.bf16 %v6705, %v6705
  %v6710 = vunpack.c.l.b16 %v6706
  %v6711 = vunpack.c.l.b16 %v6707
  %v6712 = vpack.c.b16 %v6711, %v6710
  %v6716 = vunpack.c.l.b16 %v6252
  %v6717 = vunpack.c.l.b16 %v6253
  %v6718 = vpack.c.b16 %v6717, %v6716
  %6720 = vmatpush.bf16.msra.mxu0 %v2385
  %6721 = vmatpush.bf16.msra.mxu0 %v2381
  %6722 = vmatpush.bf16.msra.mxu0 %v2377
  %6723 = vmatpush.bf16.msra.mxu0 %v2373
  %6724 = vmatpush.bf16.msra.mxu0 %v2369
  %6725 = vmatpush.bf16.msra.mxu0 %v2365
  %6726 = vmatpush.bf16.msra.mxu0 %v2361
  %6727 = vmatpush.bf16.msra.mxu0 %v2357
  %6728 = vmatmul.bf16.gmra.mxu0 %v6712
  %v6729 = vpop.f32.mrf.mxu0
  %v6730 = vadd.f32 %v1027, %v6729
  %v6731 = vpop.f32.mrf.mxu0
  %v6732 = vadd.f32 %v1027, %v6731
  %6733 = vdwg.mxu0
  %6734 = vmatpush.bf16.msra.mxu0 %v2417
  %6735 = vmatpush.bf16.msra.mxu0 %v2413
  %6736 = vmatpush.bf16.msra.mxu0 %v2409
  %6737 = vmatpush.bf16.msra.mxu0 %v2405
  %6738 = vmatpush.bf16.msra.mxu0 %v2401
  %6739 = vmatpush.bf16.msra.mxu0 %v2397
  %6740 = vmatpush.bf16.msra.mxu0 %v2393
  %6741 = vmatpush.bf16.msra.mxu0 %v2389
  %6742 = vmatmul.bf16.gmra.mxu0 %v6718
  %v6743 = vpop.f32.mrf.mxu0
  %v6744 = vadd.f32 %v6730, %v6743
  %v6745 = vpop.f32.mrf.mxu0
  %v6746 = vadd.f32 %v6732, %v6745
  %6747 = vdwg.mxu0
  %6748 = vmatpush.bf16.msra.mxu0 %v2386
  %6749 = vmatpush.bf16.msra.mxu0 %v2382
  %6750 = vmatpush.bf16.msra.mxu0 %v2378
  %6751 = vmatpush.bf16.msra.mxu0 %v2374
  %6752 = vmatpush.bf16.msra.mxu0 %v2370
  %6753 = vmatpush.bf16.msra.mxu0 %v2366
  %6754 = vmatpush.bf16.msra.mxu0 %v2362
  %6755 = vmatpush.bf16.msra.mxu0 %v2358
  %6756 = vmatmul.bf16.gmra.mxu0 %v6712
  %v6757 = vpop.f32.mrf.mxu0
  %v6758 = vadd.f32 %v1028, %v6757
  %v6759 = vpop.f32.mrf.mxu0
  %v6760 = vadd.f32 %v1028, %v6759
  %6761 = vdwg.mxu0
  %6762 = vmatpush.bf16.msra.mxu0 %v2418
  %6763 = vmatpush.bf16.msra.mxu0 %v2414
  %6764 = vmatpush.bf16.msra.mxu0 %v2410
  %6765 = vmatpush.bf16.msra.mxu0 %v2406
  %6766 = vmatpush.bf16.msra.mxu0 %v2402
  %6767 = vmatpush.bf16.msra.mxu0 %v2398
  %6768 = vmatpush.bf16.msra.mxu0 %v2394
  %6769 = vmatpush.bf16.msra.mxu0 %v2390
  %6770 = vmatmul.bf16.gmra.mxu0 %v6718
  %v6771 = vpop.f32.mrf.mxu0
  %v6772 = vadd.f32 %v6758, %v6771
  %v6773 = vpop.f32.mrf.mxu0
  %v6774 = vadd.f32 %v6760, %v6773
  %6775 = vdwg.mxu0
  %6776 = vmatpush.bf16.msra.mxu0 %v2387
  %6777 = vmatpush.bf16.msra.mxu0 %v2383
  %6778 = vmatpush.bf16.msra.mxu0 %v2379
  %6779 = vmatpush.bf16.msra.mxu0 %v2375
  %6780 = vmatpush.bf16.msra.mxu0 %v2371
  %6781 = vmatpush.bf16.msra.mxu0 %v2367
  %6782 = vmatpush.bf16.msra.mxu0 %v2363
  %6783 = vmatpush.bf16.msra.mxu0 %v2359
  %6784 = vmatmul.bf16.gmra.mxu0 %v6712
  %v6785 = vpop.f32.mrf.mxu0
  %v6786 = vadd.f32 %v1029, %v6785
  %v6787 = vpop.f32.mrf.mxu0
  %v6788 = vadd.f32 %v1029, %v6787
  %6789 = vdwg.mxu0
  %6790 = vmatpush.bf16.msra.mxu0 %v2419
  %6791 = vmatpush.bf16.msra.mxu0 %v2415
  %6792 = vmatpush.bf16.msra.mxu0 %v2411
  %6793 = vmatpush.bf16.msra.mxu0 %v2407
  %6794 = vmatpush.bf16.msra.mxu0 %v2403
  %6795 = vmatpush.bf16.msra.mxu0 %v2399
  %6796 = vmatpush.bf16.msra.mxu0 %v2395
  %6797 = vmatpush.bf16.msra.mxu0 %v2391
  %6798 = vmatmul.bf16.gmra.mxu0 %v6718
  %v6799 = vpop.f32.mrf.mxu0
  %v6800 = vadd.f32 %v6786, %v6799
  %v6801 = vpop.f32.mrf.mxu0
  %v6802 = vadd.f32 %v6788, %v6801
  %6803 = vdwg.mxu0
  %6804 = vmatpush.bf16.msra.mxu0 %v2388
  %6805 = vmatpush.bf16.msra.mxu0 %v2384
  %6806 = vmatpush.bf16.msra.mxu0 %v2380
  %6807 = vmatpush.bf16.msra.mxu0 %v2376
  %6808 = vmatpush.bf16.msra.mxu0 %v2372
  %6809 = vmatpush.bf16.msra.mxu0 %v2368
  %6810 = vmatpush.bf16.msra.mxu0 %v2364
  %6811 = vmatpush.bf16.msra.mxu0 %v2360
  %6812 = vmatmul.bf16.gmra.mxu0 %v6712
  %v6813 = vpop.f32.mrf.mxu0
  %v6814 = vadd.f32 %v1030, %v6813
  %v6815 = vpop.f32.mrf.mxu0
  %v6816 = vadd.f32 %v1030, %v6815
  %6817 = vdwg.mxu0
  %6818 = vmatpush.bf16.msra.mxu0 %v2420
  %6819 = vmatpush.bf16.msra.mxu0 %v2416
  %6820 = vmatpush.bf16.msra.mxu0 %v2412
  %6821 = vmatpush.bf16.msra.mxu0 %v2408
  %6822 = vmatpush.bf16.msra.mxu0 %v2404
  %6823 = vmatpush.bf16.msra.mxu0 %v2400
  %6824 = vmatpush.bf16.msra.mxu0 %v2396
  %6825 = vmatpush.bf16.msra.mxu0 %v2392
  %6826 = vmatmul.bf16.gmra.mxu0 %v6718
  %v6827 = vpop.f32.mrf.mxu0
  %v6828 = vadd.f32 %v6814, %v6827
  %v6829 = vpop.f32.mrf.mxu0
  %v6830 = vadd.f32 %v6816, %v6829
  %6831 = vdwg.mxu0
  %v6832 = vxor.u32 %v6744, 2147483648
  %v6833 = vxor.u32 %v6746, 2147483648
  %v6834 = vmul.f32 %v6832, 1.442695
  %v6835 = vpow.pop %v6834
  %v6836 = vmul.f32 %v6833, 1.442695
  %v6837 = vpow.pop %v6836
  %v6838 = vadd.f32 %v6835, 1.0
  %v6839 = vadd.f32 %v6837, 1.0
  %v6840 = vrcp.pop %v6838
  %v6841 = vmul.f32 %v6838, %v6840
  %v6842 = vsub.f32 1.0, %v6841
  %v6843 = vmul.f32 %v6840, %v6842
  %v6844 = vadd.f32 %v6840, %v6843
  %vm6845 = vweird.f32 %v6838
  %vm6846 = vweird.f32 %v6840
  %vm6847 = vmor %vm6845, %vm6846
  %v6848 = vsel %vm6847, %v6840, %v6844
  %v6849 = vand.u32 2147483647, %v6838
  %vm6850 = vcmp.eq.f32.partialorder %v6849, 8.507059e+37
  %v6851 = vand.u32 %v6838, 2147483648
  %v6852 = vor.u32 1.1754944e-38, %v6851
  %v6853 = vsel %vm6850, %v6852, %v6848
  %v6854 = vmul.f32 1.0, %v6853
  %v6855 = vrcp.pop %v6839
  %v6856 = vmul.f32 %v6839, %v6855
  %v6857 = vsub.f32 1.0, %v6856
  %v6858 = vmul.f32 %v6855, %v6857
  %v6859 = vadd.f32 %v6855, %v6858
  %vm6860 = vweird.f32 %v6839
  %vm6861 = vweird.f32 %v6855
  %vm6862 = vmor %vm6860, %vm6861
  %v6863 = vsel %vm6862, %v6855, %v6859
  %v6864 = vand.u32 2147483647, %v6839
  %vm6865 = vcmp.eq.f32.partialorder %v6864, 8.507059e+37
  %v6866 = vand.u32 %v6839, 2147483648
  %v6867 = vor.u32 1.1754944e-38, %v6866
  %v6868 = vsel %vm6865, %v6867, %v6863
  %v6869 = vmul.f32 1.0, %v6868
  %v6870 = vxor.u32 %v6772, 2147483648
  %v6871 = vxor.u32 %v6774, 2147483648
  %v6872 = vmul.f32 %v6870, 1.442695
  %v6873 = vpow.pop %v6872
  %v6874 = vmul.f32 %v6871, 1.442695
  %v6875 = vpow.pop %v6874
  %v6876 = vadd.f32 %v6873, 1.0
  %v6877 = vadd.f32 %v6875, 1.0
  %v6878 = vrcp.pop %v6876
  %v6879 = vmul.f32 %v6876, %v6878
  %v6880 = vsub.f32 1.0, %v6879
  %v6881 = vmul.f32 %v6878, %v6880
  %v6882 = vadd.f32 %v6878, %v6881
  %vm6883 = vweird.f32 %v6876
  %vm6884 = vweird.f32 %v6878
  %vm6885 = vmor %vm6883, %vm6884
  %v6886 = vsel %vm6885, %v6878, %v6882
  %v6887 = vand.u32 2147483647, %v6876
  %vm6888 = vcmp.eq.f32.partialorder %v6887, 8.507059e+37
  %v6889 = vand.u32 %v6876, 2147483648
  %v6890 = vor.u32 1.1754944e-38, %v6889
  %v6891 = vsel %vm6888, %v6890, %v6886
  %v6892 = vmul.f32 1.0, %v6891
  %v6893 = vrcp.pop %v6877
  %v6894 = vmul.f32 %v6877, %v6893
  %v6895 = vsub.f32 1.0, %v6894
  %v6896 = vmul.f32 %v6893, %v6895
  %v6897 = vadd.f32 %v6893, %v6896
  %vm6898 = vweird.f32 %v6877
  %vm6899 = vweird.f32 %v6893
  %vm6900 = vmor %vm6898, %vm6899
  %v6901 = vsel %vm6900, %v6893, %v6897
  %v6902 = vand.u32 2147483647, %v6877
  %vm6903 = vcmp.eq.f32.partialorder %v6902, 8.507059e+37
  %v6904 = vand.u32 %v6877, 2147483648
  %v6905 = vor.u32 1.1754944e-38, %v6904
  %v6906 = vsel %vm6903, %v6905, %v6901
  %v6907 = vmul.f32 1.0, %v6906
  %v6908 = vtanh.pop %v6800
  %v6909 = vtanh.pop %v6802
  %v6910 = vxor.u32 %v6828, 2147483648
  %v6911 = vxor.u32 %v6830, 2147483648
  %v6912 = vmul.f32 %v6910, 1.442695
  %v6913 = vpow.pop %v6912
  %v6914 = vmul.f32 %v6911, 1.442695
  %v6915 = vpow.pop %v6914
  %v6916 = vadd.f32 %v6913, 1.0
  %v6917 = vadd.f32 %v6915, 1.0
  %v6918 = vrcp.pop %v6916
  %v6919 = vmul.f32 %v6916, %v6918
  %v6920 = vsub.f32 1.0, %v6919
  %v6921 = vmul.f32 %v6918, %v6920
  %v6922 = vadd.f32 %v6918, %v6921
  %vm6923 = vweird.f32 %v6916
  %vm6924 = vweird.f32 %v6918
  %vm6925 = vmor %vm6923, %vm6924
  %v6926 = vsel %vm6925, %v6918, %v6922
  %v6927 = vand.u32 2147483647, %v6916
  %vm6928 = vcmp.eq.f32.partialorder %v6927, 8.507059e+37
  %v6929 = vand.u32 %v6916, 2147483648
  %v6930 = vor.u32 1.1754944e-38, %v6929
  %v6931 = vsel %vm6928, %v6930, %v6926
  %v6932 = vmul.f32 1.0, %v6931
  %v6933 = vrcp.pop %v6917
  %v6934 = vmul.f32 %v6917, %v6933
  %v6935 = vsub.f32 1.0, %v6934
  %v6936 = vmul.f32 %v6933, %v6935
  %v6937 = vadd.f32 %v6933, %v6936
  %vm6938 = vweird.f32 %v6917
  %vm6939 = vweird.f32 %v6933
  %vm6940 = vmor %vm6938, %vm6939
  %v6941 = vsel %vm6940, %v6933, %v6937
  %v6942 = vand.u32 2147483647, %v6917
  %vm6943 = vcmp.eq.f32.partialorder %v6942, 8.507059e+37
  %v6944 = vand.u32 %v6917, 2147483648
  %v6945 = vor.u32 1.1754944e-38, %v6944
  %v6946 = vsel %vm6943, %v6945, %v6941
  %v6947 = vmul.f32 1.0, %v6946
  %v6948 = vmul.f32 %v6892, %v6246
  %v6949 = vmul.f32 %v6907, %v6247
  %v6950 = vmul.f32 %v6854, %v6908
  %v6951 = vmul.f32 %v6869, %v6909
  %v6952 = vadd.f32 %v6948, %v6950
  %v6953 = vadd.f32 %v6949, %v6951
  %v6954 = vtanh.pop %v6952
  %v6955 = vtanh.pop %v6953
  %v6956 = vmul.f32 %v6932, %v6954
  %v6957 = vmul.f32 %v6947, %v6955
  %v6958 = vpack.c.bf16 %v6956, %v6956
  %v6959 = vpack.c.bf16 %v6957, %v6957
  %s6960 = scalar_lea.vmem [#allocation5], 48
  %6961 = vst [vmem:[%s6960] sm:$0xf] %v6958
  %6962 = vst [vmem:[%s6960 + $0x4] sm:$0xf] %v6959
  %s6963 = scalar_lea.vmem [#allocation4], 224
  %v6964 = vld [vmem:[%s6963] sm:$0xff]
  %v6965 = vld [vmem:[%s6963 + $0x8] sm:$0xff]
  %v6966 = vld [vmem:[%s6963 + $0x10] sm:$0xff]
  %v6967 = vld [vmem:[%s6963 + $0x18] sm:$0xff]
  %6968 = vmatpush.bf16.msra.mxu0 %v1345
  %6969 = vmatpush.bf16.msra.mxu0 %v1341
  %6970 = vmatpush.bf16.msra.mxu0 %v1337
  %6971 = vmatpush.bf16.msra.mxu0 %v1333
  %6972 = vmatpush.bf16.msra.mxu0 %v1329
  %6973 = vmatpush.bf16.msra.mxu0 %v1325
  %6974 = vmatpush.bf16.msra.mxu0 %v1321
  %6975 = vmatpush.bf16.msra.mxu0 %v1317
  %6976 = vmatmul.bf16.gmra.mxu0 %v6466
  %v6977 = vpop.f32.mrf.mxu0
  %v6978 = vadd.f32 0.0, %v6977
  %v6979 = vpop.f32.mrf.mxu0
  %v6980 = vadd.f32 0.0, %v6979
  %6981 = vdwg.mxu0
  %6982 = vmatpush.bf16.msra.mxu0 %v1346
  %6983 = vmatpush.bf16.msra.mxu0 %v1342
  %6984 = vmatpush.bf16.msra.mxu0 %v1338
  %6985 = vmatpush.bf16.msra.mxu0 %v1334
  %6986 = vmatpush.bf16.msra.mxu0 %v1330
  %6987 = vmatpush.bf16.msra.mxu0 %v1326
  %6988 = vmatpush.bf16.msra.mxu0 %v1322
  %6989 = vmatpush.bf16.msra.mxu0 %v1318
  %6990 = vmatmul.bf16.gmra.mxu0 %v6466
  %v6991 = vpop.f32.mrf.mxu0
  %v6992 = vadd.f32 0.0, %v6991
  %v6993 = vpop.f32.mrf.mxu0
  %v6994 = vadd.f32 0.0, %v6993
  %6995 = vdwg.mxu0
  %6996 = vmatpush.bf16.msra.mxu0 %v1347
  %6997 = vmatpush.bf16.msra.mxu0 %v1343
  %6998 = vmatpush.bf16.msra.mxu0 %v1339
  %6999 = vmatpush.bf16.msra.mxu0 %v1335
  %7000 = vmatpush.bf16.msra.mxu0 %v1331
  %7001 = vmatpush.bf16.msra.mxu0 %v1327
  %7002 = vmatpush.bf16.msra.mxu0 %v1323
  %7003 = vmatpush.bf16.msra.mxu0 %v1319
  %7004 = vmatmul.bf16.gmra.mxu0 %v6466
  %v7005 = vpop.f32.mrf.mxu0
  %v7006 = vadd.f32 0.0, %v7005
  %v7007 = vpop.f32.mrf.mxu0
  %v7008 = vadd.f32 0.0, %v7007
  %7009 = vdwg.mxu0
  %7010 = vmatpush.bf16.msra.mxu0 %v1348
  %7011 = vmatpush.bf16.msra.mxu0 %v1344
  %7012 = vmatpush.bf16.msra.mxu0 %v1340
  %7013 = vmatpush.bf16.msra.mxu0 %v1336
  %7014 = vmatpush.bf16.msra.mxu0 %v1332
  %7015 = vmatpush.bf16.msra.mxu0 %v1328
  %7016 = vmatpush.bf16.msra.mxu0 %v1324
  %7017 = vmatpush.bf16.msra.mxu0 %v1320
  %7018 = vmatmul.bf16.gmra.mxu0 %v6466
  %v7019 = vpop.f32.mrf.mxu0
  %v7020 = vadd.f32 0.0, %v7019
  %v7021 = vpop.f32.mrf.mxu0
  %v7022 = vadd.f32 0.0, %v7021
  %7023 = vdwg.mxu0
  %v7024 = vunpack.c.l.bf16 %v6964
  %v7025 = vunpack.c.h.bf16 %v6964
  %v7026 = vunpack.c.l.bf16 %v6965
  %v7027 = vunpack.c.h.bf16 %v6965
  %v7028 = vunpack.c.l.bf16 %v6966
  %v7029 = vunpack.c.h.bf16 %v6966
  %v7030 = vunpack.c.l.bf16 %v6967
  %v7031 = vunpack.c.h.bf16 %v6967
  %v7032 = vadd.f32 %v7024, %v6978
  %v7033 = vadd.f32 %v7025, %v6992
  %v7034 = vadd.f32 %v7026, %v7006
  %v7035 = vadd.f32 %v7027, %v7020
  %v7036 = vadd.f32 %v7028, %v6980
  %v7037 = vadd.f32 %v7029, %v6994
  %v7038 = vadd.f32 %v7030, %v7008
  %v7039 = vadd.f32 %v7031, %v7022
  %v7040 = vxor.u32 %v7032, 2147483648
  %v7041 = vxor.u32 %v7036, 2147483648
  %v7042 = vmul.f32 %v7040, 1.442695
  %v7043 = vpow.pop %v7042
  %v7044 = vmul.f32 %v7041, 1.442695
  %v7045 = vpow.pop %v7044
  %v7046 = vadd.f32 %v7043, 1.0
  %v7047 = vadd.f32 %v7045, 1.0
  %v7048 = vrcp.pop %v7046
  %v7049 = vmul.f32 %v7046, %v7048
  %v7050 = vsub.f32 1.0, %v7049
  %v7051 = vmul.f32 %v7048, %v7050
  %v7052 = vadd.f32 %v7048, %v7051
  %vm7053 = vweird.f32 %v7046
  %vm7054 = vweird.f32 %v7048
  %vm7055 = vmor %vm7053, %vm7054
  %v7056 = vsel %vm7055, %v7048, %v7052
  %v7057 = vand.u32 2147483647, %v7046
  %vm7058 = vcmp.eq.f32.partialorder %v7057, 8.507059e+37
  %v7059 = vand.u32 %v7046, 2147483648
  %v7060 = vor.u32 1.1754944e-38, %v7059
  %v7061 = vsel %vm7058, %v7060, %v7056
  %v7062 = vmul.f32 1.0, %v7061
  %v7063 = vrcp.pop %v7047
  %v7064 = vmul.f32 %v7047, %v7063
  %v7065 = vsub.f32 1.0, %v7064
  %v7066 = vmul.f32 %v7063, %v7065
  %v7067 = vadd.f32 %v7063, %v7066
  %vm7068 = vweird.f32 %v7047
  %vm7069 = vweird.f32 %v7063
  %vm7070 = vmor %vm7068, %vm7069
  %v7071 = vsel %vm7070, %v7063, %v7067
  %v7072 = vand.u32 2147483647, %v7047
  %vm7073 = vcmp.eq.f32.partialorder %v7072, 8.507059e+37
  %v7074 = vand.u32 %v7047, 2147483648
  %v7075 = vor.u32 1.1754944e-38, %v7074
  %v7076 = vsel %vm7073, %v7075, %v7071
  %v7077 = vmul.f32 1.0, %v7076
  %v7078 = vxor.u32 %v7033, 2147483648
  %v7079 = vxor.u32 %v7037, 2147483648
  %v7080 = vmul.f32 %v7078, 1.442695
  %v7081 = vpow.pop %v7080
  %v7082 = vmul.f32 %v7079, 1.442695
  %v7083 = vpow.pop %v7082
  %v7084 = vadd.f32 %v7081, 1.0
  %v7085 = vadd.f32 %v7083, 1.0
  %v7086 = vrcp.pop %v7084
  %v7087 = vmul.f32 %v7084, %v7086
  %v7088 = vsub.f32 1.0, %v7087
  %v7089 = vmul.f32 %v7086, %v7088
  %v7090 = vadd.f32 %v7086, %v7089
  %vm7091 = vweird.f32 %v7084
  %vm7092 = vweird.f32 %v7086
  %vm7093 = vmor %vm7091, %vm7092
  %v7094 = vsel %vm7093, %v7086, %v7090
  %v7095 = vand.u32 2147483647, %v7084
  %vm7096 = vcmp.eq.f32.partialorder %v7095, 8.507059e+37
  %v7097 = vand.u32 %v7084, 2147483648
  %v7098 = vor.u32 1.1754944e-38, %v7097
  %v7099 = vsel %vm7096, %v7098, %v7094
  %v7100 = vmul.f32 1.0, %v7099
  %v7101 = vrcp.pop %v7085
  %v7102 = vmul.f32 %v7085, %v7101
  %v7103 = vsub.f32 1.0, %v7102
  %v7104 = vmul.f32 %v7101, %v7103
  %v7105 = vadd.f32 %v7101, %v7104
  %vm7106 = vweird.f32 %v7085
  %vm7107 = vweird.f32 %v7101
  %vm7108 = vmor %vm7106, %vm7107
  %v7109 = vsel %vm7108, %v7101, %v7105
  %v7110 = vand.u32 2147483647, %v7085
  %vm7111 = vcmp.eq.f32.partialorder %v7110, 8.507059e+37
  %v7112 = vand.u32 %v7085, 2147483648
  %v7113 = vor.u32 1.1754944e-38, %v7112
  %v7114 = vsel %vm7111, %v7113, %v7109
  %v7115 = vmul.f32 1.0, %v7114
  %v7116 = vtanh.pop %v7034
  %v7117 = vtanh.pop %v7038
  %v7118 = vxor.u32 %v7035, 2147483648
  %v7119 = vxor.u32 %v7039, 2147483648
  %v7120 = vmul.f32 %v7118, 1.442695
  %v7121 = vpow.pop %v7120
  %v7122 = vmul.f32 %v7119, 1.442695
  %v7123 = vpow.pop %v7122
  %v7124 = vadd.f32 %v7121, 1.0
  %v7125 = vadd.f32 %v7123, 1.0
  %v7126 = vrcp.pop %v7124
  %v7127 = vmul.f32 %v7124, %v7126
  %v7128 = vsub.f32 1.0, %v7127
  %v7129 = vmul.f32 %v7126, %v7128
  %v7130 = vadd.f32 %v7126, %v7129
  %vm7131 = vweird.f32 %v7124
  %vm7132 = vweird.f32 %v7126
  %vm7133 = vmor %vm7131, %vm7132
  %v7134 = vsel %vm7133, %v7126, %v7130
  %v7135 = vand.u32 2147483647, %v7124
  %vm7136 = vcmp.eq.f32.partialorder %v7135, 8.507059e+37
  %v7137 = vand.u32 %v7124, 2147483648
  %v7138 = vor.u32 1.1754944e-38, %v7137
  %v7139 = vsel %vm7136, %v7138, %v7134
  %v7140 = vmul.f32 1.0, %v7139
  %v7141 = vrcp.pop %v7125
  %v7142 = vmul.f32 %v7125, %v7141
  %v7143 = vsub.f32 1.0, %v7142
  %v7144 = vmul.f32 %v7141, %v7143
  %v7145 = vadd.f32 %v7141, %v7144
  %vm7146 = vweird.f32 %v7125
  %vm7147 = vweird.f32 %v7141
  %vm7148 = vmor %vm7146, %vm7147
  %v7149 = vsel %vm7148, %v7141, %v7145
  %v7150 = vand.u32 2147483647, %v7125
  %vm7151 = vcmp.eq.f32.partialorder %v7150, 8.507059e+37
  %v7152 = vand.u32 %v7125, 2147483648
  %v7153 = vor.u32 1.1754944e-38, %v7152
  %v7154 = vsel %vm7151, %v7153, %v7149
  %v7155 = vmul.f32 1.0, %v7154
  %v7156 = vmul.f32 %v7100, %v6454
  %v7157 = vmul.f32 %v7115, %v6455
  %v7158 = vmul.f32 %v7062, %v7116
  %v7159 = vmul.f32 %v7077, %v7117
  %v7160 = vadd.f32 %v7156, %v7158
  %v7161 = vadd.f32 %v7157, %v7159
  %v7162 = vtanh.pop %v7160
  %v7163 = vtanh.pop %v7161
  %v7164 = vmul.f32 %v7140, %v7162
  %v7165 = vmul.f32 %v7155, %v7163
  %v7166 = vpack.c.bf16 %v7164, %v7164
  %v7167 = vpack.c.bf16 %v7165, %v7165
  %v7170 = vunpack.c.l.b16 %v7166
  %v7171 = vunpack.c.l.b16 %v7167
  %v7172 = vpack.c.b16 %v7171, %v7170
  %7174 = vmatpush.bf16.msra.mxu0 %v1813
  %7175 = vmatpush.bf16.msra.mxu0 %v1809
  %7176 = vmatpush.bf16.msra.mxu0 %v1805
  %7177 = vmatpush.bf16.msra.mxu0 %v1801
  %7178 = vmatpush.bf16.msra.mxu0 %v1797
  %7179 = vmatpush.bf16.msra.mxu0 %v1793
  %7180 = vmatpush.bf16.msra.mxu0 %v1789
  %7181 = vmatpush.bf16.msra.mxu0 %v1785
  %7182 = vmatmul.bf16.gmra.mxu0 %v7172
  %v7183 = vpop.f32.mrf.mxu0
  %v7184 = vadd.f32 %v1017, %v7183
  %v7185 = vpop.f32.mrf.mxu0
  %v7186 = vadd.f32 %v1017, %v7185
  %7187 = vdwg.mxu0
  %7188 = vmatpush.bf16.msra.mxu0 %v1845
  %7189 = vmatpush.bf16.msra.mxu0 %v1841
  %7190 = vmatpush.bf16.msra.mxu0 %v1837
  %7191 = vmatpush.bf16.msra.mxu0 %v1833
  %7192 = vmatpush.bf16.msra.mxu0 %v1829
  %7193 = vmatpush.bf16.msra.mxu0 %v1825
  %7194 = vmatpush.bf16.msra.mxu0 %v1821
  %7195 = vmatpush.bf16.msra.mxu0 %v1817
  %7196 = vmatmul.bf16.gmra.mxu0 %v6712
  %v7197 = vpop.f32.mrf.mxu0
  %v7198 = vadd.f32 %v7184, %v7197
  %v7199 = vpop.f32.mrf.mxu0
  %v7200 = vadd.f32 %v7186, %v7199
  %7201 = vdwg.mxu0
  %7202 = vmatpush.bf16.msra.mxu0 %v1814
  %7203 = vmatpush.bf16.msra.mxu0 %v1810
  %7204 = vmatpush.bf16.msra.mxu0 %v1806
  %7205 = vmatpush.bf16.msra.mxu0 %v1802
  %7206 = vmatpush.bf16.msra.mxu0 %v1798
  %7207 = vmatpush.bf16.msra.mxu0 %v1794
  %7208 = vmatpush.bf16.msra.mxu0 %v1790
  %7209 = vmatpush.bf16.msra.mxu0 %v1786
  %7210 = vmatmul.bf16.gmra.mxu0 %v7172
  %v7211 = vpop.f32.mrf.mxu0
  %v7212 = vadd.f32 %v1018, %v7211
  %v7213 = vpop.f32.mrf.mxu0
  %v7214 = vadd.f32 %v1018, %v7213
  %7215 = vdwg.mxu0
  %7216 = vmatpush.bf16.msra.mxu0 %v1846
  %7217 = vmatpush.bf16.msra.mxu0 %v1842
  %7218 = vmatpush.bf16.msra.mxu0 %v1838
  %7219 = vmatpush.bf16.msra.mxu0 %v1834
  %7220 = vmatpush.bf16.msra.mxu0 %v1830
  %7221 = vmatpush.bf16.msra.mxu0 %v1826
  %7222 = vmatpush.bf16.msra.mxu0 %v1822
  %7223 = vmatpush.bf16.msra.mxu0 %v1818
  %7224 = vmatmul.bf16.gmra.mxu0 %v6712
  %v7225 = vpop.f32.mrf.mxu0
  %v7226 = vadd.f32 %v7212, %v7225
  %v7227 = vpop.f32.mrf.mxu0
  %v7228 = vadd.f32 %v7214, %v7227
  %7229 = vdwg.mxu0
  %7230 = vmatpush.bf16.msra.mxu0 %v1815
  %7231 = vmatpush.bf16.msra.mxu0 %v1811
  %7232 = vmatpush.bf16.msra.mxu0 %v1807
  %7233 = vmatpush.bf16.msra.mxu0 %v1803
  %7234 = vmatpush.bf16.msra.mxu0 %v1799
  %7235 = vmatpush.bf16.msra.mxu0 %v1795
  %7236 = vmatpush.bf16.msra.mxu0 %v1791
  %7237 = vmatpush.bf16.msra.mxu0 %v1787
  %7238 = vmatmul.bf16.gmra.mxu0 %v7172
  %v7239 = vpop.f32.mrf.mxu0
  %v7240 = vadd.f32 %v1019, %v7239
  %v7241 = vpop.f32.mrf.mxu0
  %v7242 = vadd.f32 %v1019, %v7241
  %7243 = vdwg.mxu0
  %7244 = vmatpush.bf16.msra.mxu0 %v1847
  %7245 = vmatpush.bf16.msra.mxu0 %v1843
  %7246 = vmatpush.bf16.msra.mxu0 %v1839
  %7247 = vmatpush.bf16.msra.mxu0 %v1835
  %7248 = vmatpush.bf16.msra.mxu0 %v1831
  %7249 = vmatpush.bf16.msra.mxu0 %v1827
  %7250 = vmatpush.bf16.msra.mxu0 %v1823
  %7251 = vmatpush.bf16.msra.mxu0 %v1819
  %7252 = vmatmul.bf16.gmra.mxu0 %v6712
  %v7253 = vpop.f32.mrf.mxu0
  %v7254 = vadd.f32 %v7240, %v7253
  %v7255 = vpop.f32.mrf.mxu0
  %v7256 = vadd.f32 %v7242, %v7255
  %7257 = vdwg.mxu0
  %7258 = vmatpush.bf16.msra.mxu0 %v1816
  %7259 = vmatpush.bf16.msra.mxu0 %v1812
  %7260 = vmatpush.bf16.msra.mxu0 %v1808
  %7261 = vmatpush.bf16.msra.mxu0 %v1804
  %7262 = vmatpush.bf16.msra.mxu0 %v1800
  %7263 = vmatpush.bf16.msra.mxu0 %v1796
  %7264 = vmatpush.bf16.msra.mxu0 %v1792
  %7265 = vmatpush.bf16.msra.mxu0 %v1788
  %7266 = vmatmul.bf16.gmra.mxu0 %v7172
  %v7267 = vpop.f32.mrf.mxu0
  %v7268 = vadd.f32 %v1020, %v7267
  %v7269 = vpop.f32.mrf.mxu0
  %v7270 = vadd.f32 %v1020, %v7269
  %7271 = vdwg.mxu0
  %7272 = vmatpush.bf16.msra.mxu0 %v1848
  %7273 = vmatpush.bf16.msra.mxu0 %v1844
  %7274 = vmatpush.bf16.msra.mxu0 %v1840
  %7275 = vmatpush.bf16.msra.mxu0 %v1836
  %7276 = vmatpush.bf16.msra.mxu0 %v1832
  %7277 = vmatpush.bf16.msra.mxu0 %v1828
  %7278 = vmatpush.bf16.msra.mxu0 %v1824
  %7279 = vmatpush.bf16.msra.mxu0 %v1820
  %7280 = vmatmul.bf16.gmra.mxu0 %v6712
  %v7281 = vpop.f32.mrf.mxu0
  %v7282 = vadd.f32 %v7268, %v7281
  %v7283 = vpop.f32.mrf.mxu0
  %v7284 = vadd.f32 %v7270, %v7283
  %7285 = vdwg.mxu0
  %v7286 = vxor.u32 %v7198, 2147483648
  %v7287 = vxor.u32 %v7200, 2147483648
  %v7288 = vmul.f32 %v7286, 1.442695
  %v7289 = vpow.pop %v7288
  %v7290 = vmul.f32 %v7287, 1.442695
  %v7291 = vpow.pop %v7290
  %v7292 = vadd.f32 %v7289, 1.0
  %v7293 = vadd.f32 %v7291, 1.0
  %v7294 = vrcp.pop %v7292
  %v7295 = vmul.f32 %v7292, %v7294
  %v7296 = vsub.f32 1.0, %v7295
  %v7297 = vmul.f32 %v7294, %v7296
  %v7298 = vadd.f32 %v7294, %v7297
  %vm7299 = vweird.f32 %v7292
  %vm7300 = vweird.f32 %v7294
  %vm7301 = vmor %vm7299, %vm7300
  %v7302 = vsel %vm7301, %v7294, %v7298
  %v7303 = vand.u32 2147483647, %v7292
  %vm7304 = vcmp.eq.f32.partialorder %v7303, 8.507059e+37
  %v7305 = vand.u32 %v7292, 2147483648
  %v7306 = vor.u32 1.1754944e-38, %v7305
  %v7307 = vsel %vm7304, %v7306, %v7302
  %v7308 = vmul.f32 1.0, %v7307
  %v7309 = vrcp.pop %v7293
  %v7310 = vmul.f32 %v7293, %v7309
  %v7311 = vsub.f32 1.0, %v7310
  %v7312 = vmul.f32 %v7309, %v7311
  %v7313 = vadd.f32 %v7309, %v7312
  %vm7314 = vweird.f32 %v7293
  %vm7315 = vweird.f32 %v7309
  %vm7316 = vmor %vm7314, %vm7315
  %v7317 = vsel %vm7316, %v7309, %v7313
  %v7318 = vand.u32 2147483647, %v7293
  %vm7319 = vcmp.eq.f32.partialorder %v7318, 8.507059e+37
  %v7320 = vand.u32 %v7293, 2147483648
  %v7321 = vor.u32 1.1754944e-38, %v7320
  %v7322 = vsel %vm7319, %v7321, %v7317
  %v7323 = vmul.f32 1.0, %v7322
  %v7324 = vxor.u32 %v7226, 2147483648
  %v7325 = vxor.u32 %v7228, 2147483648
  %v7326 = vmul.f32 %v7324, 1.442695
  %v7327 = vpow.pop %v7326
  %v7328 = vmul.f32 %v7325, 1.442695
  %v7329 = vpow.pop %v7328
  %v7330 = vadd.f32 %v7327, 1.0
  %v7331 = vadd.f32 %v7329, 1.0
  %v7332 = vrcp.pop %v7330
  %v7333 = vmul.f32 %v7330, %v7332
  %v7334 = vsub.f32 1.0, %v7333
  %v7335 = vmul.f32 %v7332, %v7334
  %v7336 = vadd.f32 %v7332, %v7335
  %vm7337 = vweird.f32 %v7330
  %vm7338 = vweird.f32 %v7332
  %vm7339 = vmor %vm7337, %vm7338
  %v7340 = vsel %vm7339, %v7332, %v7336
  %v7341 = vand.u32 2147483647, %v7330
  %vm7342 = vcmp.eq.f32.partialorder %v7341, 8.507059e+37
  %v7343 = vand.u32 %v7330, 2147483648
  %v7344 = vor.u32 1.1754944e-38, %v7343
  %v7345 = vsel %vm7342, %v7344, %v7340
  %v7346 = vmul.f32 1.0, %v7345
  %v7347 = vrcp.pop %v7331
  %v7348 = vmul.f32 %v7331, %v7347
  %v7349 = vsub.f32 1.0, %v7348
  %v7350 = vmul.f32 %v7347, %v7349
  %v7351 = vadd.f32 %v7347, %v7350
  %vm7352 = vweird.f32 %v7331
  %vm7353 = vweird.f32 %v7347
  %vm7354 = vmor %vm7352, %vm7353
  %v7355 = vsel %vm7354, %v7347, %v7351
  %v7356 = vand.u32 2147483647, %v7331
  %vm7357 = vcmp.eq.f32.partialorder %v7356, 8.507059e+37
  %v7358 = vand.u32 %v7331, 2147483648
  %v7359 = vor.u32 1.1754944e-38, %v7358
  %v7360 = vsel %vm7357, %v7359, %v7355
  %v7361 = vmul.f32 1.0, %v7360
  %v7362 = vtanh.pop %v7254
  %v7363 = vtanh.pop %v7256
  %v7364 = vxor.u32 %v7282, 2147483648
  %v7365 = vxor.u32 %v7284, 2147483648
  %v7366 = vmul.f32 %v7364, 1.442695
  %v7367 = vpow.pop %v7366
  %v7368 = vmul.f32 %v7365, 1.442695
  %v7369 = vpow.pop %v7368
  %v7370 = vadd.f32 %v7367, 1.0
  %v7371 = vadd.f32 %v7369, 1.0
  %v7372 = vrcp.pop %v7370
  %v7373 = vmul.f32 %v7370, %v7372
  %v7374 = vsub.f32 1.0, %v7373
  %v7375 = vmul.f32 %v7372, %v7374
  %v7376 = vadd.f32 %v7372, %v7375
  %vm7377 = vweird.f32 %v7370
  %vm7378 = vweird.f32 %v7372
  %vm7379 = vmor %vm7377, %vm7378
  %v7380 = vsel %vm7379, %v7372, %v7376
  %v7381 = vand.u32 2147483647, %v7370
  %vm7382 = vcmp.eq.f32.partialorder %v7381, 8.507059e+37
  %v7383 = vand.u32 %v7370, 2147483648
  %v7384 = vor.u32 1.1754944e-38, %v7383
  %v7385 = vsel %vm7382, %v7384, %v7380
  %v7386 = vmul.f32 1.0, %v7385
  %v7387 = vrcp.pop %v7371
  %v7388 = vmul.f32 %v7371, %v7387
  %v7389 = vsub.f32 1.0, %v7388
  %v7390 = vmul.f32 %v7387, %v7389
  %v7391 = vadd.f32 %v7387, %v7390
  %vm7392 = vweird.f32 %v7371
  %vm7393 = vweird.f32 %v7387
  %vm7394 = vmor %vm7392, %vm7393
  %v7395 = vsel %vm7394, %v7387, %v7391
  %v7396 = vand.u32 2147483647, %v7371
  %vm7397 = vcmp.eq.f32.partialorder %v7396, 8.507059e+37
  %v7398 = vand.u32 %v7371, 2147483648
  %v7399 = vor.u32 1.1754944e-38, %v7398
  %v7400 = vsel %vm7397, %v7399, %v7395
  %v7401 = vmul.f32 1.0, %v7400
  %v7402 = vmul.f32 %v7346, %v6700
  %v7403 = vmul.f32 %v7361, %v6701
  %v7404 = vmul.f32 %v7308, %v7362
  %v7405 = vmul.f32 %v7323, %v7363
  %v7406 = vadd.f32 %v7402, %v7404
  %v7407 = vadd.f32 %v7403, %v7405
  %v7408 = vtanh.pop %v7406
  %v7409 = vtanh.pop %v7407
  %v7410 = vmul.f32 %v7386, %v7408
  %v7411 = vmul.f32 %v7401, %v7409
  %v7412 = vpack.c.bf16 %v7410, %v7410
  %v7413 = vpack.c.bf16 %v7411, %v7411
  %v7416 = vunpack.c.l.b16 %v7412
  %v7417 = vunpack.c.l.b16 %v7413
  %v7418 = vpack.c.b16 %v7417, %v7416
  %v7422 = vunpack.c.l.b16 %v6958
  %v7423 = vunpack.c.l.b16 %v6959
  %v7424 = vpack.c.b16 %v7423, %v7422
  %7426 = vmatpush.bf16.msra.mxu0 %v2385
  %7427 = vmatpush.bf16.msra.mxu0 %v2381
  %7428 = vmatpush.bf16.msra.mxu0 %v2377
  %7429 = vmatpush.bf16.msra.mxu0 %v2373
  %7430 = vmatpush.bf16.msra.mxu0 %v2369
  %7431 = vmatpush.bf16.msra.mxu0 %v2365
  %7432 = vmatpush.bf16.msra.mxu0 %v2361
  %7433 = vmatpush.bf16.msra.mxu0 %v2357
  %7434 = vmatmul.bf16.gmra.mxu0 %v7418
  %v7435 = vpop.f32.mrf.mxu0
  %v7436 = vadd.f32 %v1027, %v7435
  %v7437 = vpop.f32.mrf.mxu0
  %v7438 = vadd.f32 %v1027, %v7437
  %7439 = vdwg.mxu0
  %7440 = vmatpush.bf16.msra.mxu0 %v2417
  %7441 = vmatpush.bf16.msra.mxu0 %v2413
  %7442 = vmatpush.bf16.msra.mxu0 %v2409
  %7443 = vmatpush.bf16.msra.mxu0 %v2405
  %7444 = vmatpush.bf16.msra.mxu0 %v2401
  %7445 = vmatpush.bf16.msra.mxu0 %v2397
  %7446 = vmatpush.bf16.msra.mxu0 %v2393
  %7447 = vmatpush.bf16.msra.mxu0 %v2389
  %7448 = vmatmul.bf16.gmra.mxu0 %v7424
  %v7449 = vpop.f32.mrf.mxu0
  %v7450 = vadd.f32 %v7436, %v7449
  %v7451 = vpop.f32.mrf.mxu0
  %v7452 = vadd.f32 %v7438, %v7451
  %7453 = vdwg.mxu0
  %7454 = vmatpush.bf16.msra.mxu0 %v2386
  %7455 = vmatpush.bf16.msra.mxu0 %v2382
  %7456 = vmatpush.bf16.msra.mxu0 %v2378
  %7457 = vmatpush.bf16.msra.mxu0 %v2374
  %7458 = vmatpush.bf16.msra.mxu0 %v2370
  %7459 = vmatpush.bf16.msra.mxu0 %v2366
  %7460 = vmatpush.bf16.msra.mxu0 %v2362
  %7461 = vmatpush.bf16.msra.mxu0 %v2358
  %7462 = vmatmul.bf16.gmra.mxu0 %v7418
  %v7463 = vpop.f32.mrf.mxu0
  %v7464 = vadd.f32 %v1028, %v7463
  %v7465 = vpop.f32.mrf.mxu0
  %v7466 = vadd.f32 %v1028, %v7465
  %7467 = vdwg.mxu0
  %7468 = vmatpush.bf16.msra.mxu0 %v2418
  %7469 = vmatpush.bf16.msra.mxu0 %v2414
  %7470 = vmatpush.bf16.msra.mxu0 %v2410
  %7471 = vmatpush.bf16.msra.mxu0 %v2406
  %7472 = vmatpush.bf16.msra.mxu0 %v2402
  %7473 = vmatpush.bf16.msra.mxu0 %v2398
  %7474 = vmatpush.bf16.msra.mxu0 %v2394
  %7475 = vmatpush.bf16.msra.mxu0 %v2390
  %7476 = vmatmul.bf16.gmra.mxu0 %v7424
  %v7477 = vpop.f32.mrf.mxu0
  %v7478 = vadd.f32 %v7464, %v7477
  %v7479 = vpop.f32.mrf.mxu0
  %v7480 = vadd.f32 %v7466, %v7479
  %7481 = vdwg.mxu0
  %7482 = vmatpush.bf16.msra.mxu0 %v2387
  %7483 = vmatpush.bf16.msra.mxu0 %v2383
  %7484 = vmatpush.bf16.msra.mxu0 %v2379
  %7485 = vmatpush.bf16.msra.mxu0 %v2375
  %7486 = vmatpush.bf16.msra.mxu0 %v2371
  %7487 = vmatpush.bf16.msra.mxu0 %v2367
  %7488 = vmatpush.bf16.msra.mxu0 %v2363
  %7489 = vmatpush.bf16.msra.mxu0 %v2359
  %7490 = vmatmul.bf16.gmra.mxu0 %v7418
  %v7491 = vpop.f32.mrf.mxu0
  %v7492 = vadd.f32 %v1029, %v7491
  %v7493 = vpop.f32.mrf.mxu0
  %v7494 = vadd.f32 %v1029, %v7493
  %7495 = vdwg.mxu0
  %7496 = vmatpush.bf16.msra.mxu0 %v2419
  %7497 = vmatpush.bf16.msra.mxu0 %v2415
  %7498 = vmatpush.bf16.msra.mxu0 %v2411
  %7499 = vmatpush.bf16.msra.mxu0 %v2407
  %7500 = vmatpush.bf16.msra.mxu0 %v2403
  %7501 = vmatpush.bf16.msra.mxu0 %v2399
  %7502 = vmatpush.bf16.msra.mxu0 %v2395
  %7503 = vmatpush.bf16.msra.mxu0 %v2391
  %7504 = vmatmul.bf16.gmra.mxu0 %v7424
  %v7505 = vpop.f32.mrf.mxu0
  %v7506 = vadd.f32 %v7492, %v7505
  %v7507 = vpop.f32.mrf.mxu0
  %v7508 = vadd.f32 %v7494, %v7507
  %7509 = vdwg.mxu0
  %7510 = vmatpush.bf16.msra.mxu0 %v2388
  %7511 = vmatpush.bf16.msra.mxu0 %v2384
  %7512 = vmatpush.bf16.msra.mxu0 %v2380
  %7513 = vmatpush.bf16.msra.mxu0 %v2376
  %7514 = vmatpush.bf16.msra.mxu0 %v2372
  %7515 = vmatpush.bf16.msra.mxu0 %v2368
  %7516 = vmatpush.bf16.msra.mxu0 %v2364
  %7517 = vmatpush.bf16.msra.mxu0 %v2360
  %7518 = vmatmul.bf16.gmra.mxu0 %v7418
  %v7519 = vpop.f32.mrf.mxu0
  %v7520 = vadd.f32 %v1030, %v7519
  %v7521 = vpop.f32.mrf.mxu0
  %v7522 = vadd.f32 %v1030, %v7521
  %7523 = vdwg.mxu0
  %7524 = vmatpush.bf16.msra.mxu0 %v2420
  %7525 = vmatpush.bf16.msra.mxu0 %v2416
  %7526 = vmatpush.bf16.msra.mxu0 %v2412
  %7527 = vmatpush.bf16.msra.mxu0 %v2408
  %7528 = vmatpush.bf16.msra.mxu0 %v2404
  %7529 = vmatpush.bf16.msra.mxu0 %v2400
  %7530 = vmatpush.bf16.msra.mxu0 %v2396
  %7531 = vmatpush.bf16.msra.mxu0 %v2392
  %7532 = vmatmul.bf16.gmra.mxu0 %v7424
  %v7533 = vpop.f32.mrf.mxu0
  %v7534 = vadd.f32 %v7520, %v7533
  %v7535 = vpop.f32.mrf.mxu0
  %v7536 = vadd.f32 %v7522, %v7535
  %7537 = vdwg.mxu0
  %v7538 = vxor.u32 %v7450, 2147483648
  %v7539 = vxor.u32 %v7452, 2147483648
  %v7540 = vmul.f32 %v7538, 1.442695
  %v7541 = vpow.pop %v7540
  %v7542 = vmul.f32 %v7539, 1.442695
  %v7543 = vpow.pop %v7542
  %v7544 = vadd.f32 %v7541, 1.0
  %v7545 = vadd.f32 %v7543, 1.0
  %v7546 = vrcp.pop %v7544
  %v7547 = vmul.f32 %v7544, %v7546
  %v7548 = vsub.f32 1.0, %v7547
  %v7549 = vmul.f32 %v7546, %v7548
  %v7550 = vadd.f32 %v7546, %v7549
  %vm7551 = vweird.f32 %v7544
  %vm7552 = vweird.f32 %v7546
  %vm7553 = vmor %vm7551, %vm7552
  %v7554 = vsel %vm7553, %v7546, %v7550
  %v7555 = vand.u32 2147483647, %v7544
  %vm7556 = vcmp.eq.f32.partialorder %v7555, 8.507059e+37
  %v7557 = vand.u32 %v7544, 2147483648
  %v7558 = vor.u32 1.1754944e-38, %v7557
  %v7559 = vsel %vm7556, %v7558, %v7554
  %v7560 = vmul.f32 1.0, %v7559
  %v7561 = vrcp.pop %v7545
  %v7562 = vmul.f32 %v7545, %v7561
  %v7563 = vsub.f32 1.0, %v7562
  %v7564 = vmul.f32 %v7561, %v7563
  %v7565 = vadd.f32 %v7561, %v7564
  %vm7566 = vweird.f32 %v7545
  %vm7567 = vweird.f32 %v7561
  %vm7568 = vmor %vm7566, %vm7567
  %v7569 = vsel %vm7568, %v7561, %v7565
  %v7570 = vand.u32 2147483647, %v7545
  %vm7571 = vcmp.eq.f32.partialorder %v7570, 8.507059e+37
  %v7572 = vand.u32 %v7545, 2147483648
  %v7573 = vor.u32 1.1754944e-38, %v7572
  %v7574 = vsel %vm7571, %v7573, %v7569
  %v7575 = vmul.f32 1.0, %v7574
  %v7576 = vxor.u32 %v7478, 2147483648
  %v7577 = vxor.u32 %v7480, 2147483648
  %v7578 = vmul.f32 %v7576, 1.442695
  %v7579 = vpow.pop %v7578
  %v7580 = vmul.f32 %v7577, 1.442695
  %v7581 = vpow.pop %v7580
  %v7582 = vadd.f32 %v7579, 1.0
  %v7583 = vadd.f32 %v7581, 1.0
  %v7584 = vrcp.pop %v7582
  %v7585 = vmul.f32 %v7582, %v7584
  %v7586 = vsub.f32 1.0, %v7585
  %v7587 = vmul.f32 %v7584, %v7586
  %v7588 = vadd.f32 %v7584, %v7587
  %vm7589 = vweird.f32 %v7582
  %vm7590 = vweird.f32 %v7584
  %vm7591 = vmor %vm7589, %vm7590
  %v7592 = vsel %vm7591, %v7584, %v7588
  %v7593 = vand.u32 2147483647, %v7582
  %vm7594 = vcmp.eq.f32.partialorder %v7593, 8.507059e+37
  %v7595 = vand.u32 %v7582, 2147483648
  %v7596 = vor.u32 1.1754944e-38, %v7595
  %v7597 = vsel %vm7594, %v7596, %v7592
  %v7598 = vmul.f32 1.0, %v7597
  %v7599 = vrcp.pop %v7583
  %v7600 = vmul.f32 %v7583, %v7599
  %v7601 = vsub.f32 1.0, %v7600
  %v7602 = vmul.f32 %v7599, %v7601
  %v7603 = vadd.f32 %v7599, %v7602
  %vm7604 = vweird.f32 %v7583
  %vm7605 = vweird.f32 %v7599
  %vm7606 = vmor %vm7604, %vm7605
  %v7607 = vsel %vm7606, %v7599, %v7603
  %v7608 = vand.u32 2147483647, %v7583
  %vm7609 = vcmp.eq.f32.partialorder %v7608, 8.507059e+37
  %v7610 = vand.u32 %v7583, 2147483648
  %v7611 = vor.u32 1.1754944e-38, %v7610
  %v7612 = vsel %vm7609, %v7611, %v7607
  %v7613 = vmul.f32 1.0, %v7612
  %v7614 = vtanh.pop %v7506
  %v7615 = vtanh.pop %v7508
  %v7616 = vxor.u32 %v7534, 2147483648
  %v7617 = vxor.u32 %v7536, 2147483648
  %v7618 = vmul.f32 %v7616, 1.442695
  %v7619 = vpow.pop %v7618
  %v7620 = vmul.f32 %v7617, 1.442695
  %v7621 = vpow.pop %v7620
  %v7622 = vadd.f32 %v7619, 1.0
  %v7623 = vadd.f32 %v7621, 1.0
  %v7624 = vrcp.pop %v7622
  %v7625 = vmul.f32 %v7622, %v7624
  %v7626 = vsub.f32 1.0, %v7625
  %v7627 = vmul.f32 %v7624, %v7626
  %v7628 = vadd.f32 %v7624, %v7627
  %vm7629 = vweird.f32 %v7622
  %vm7630 = vweird.f32 %v7624
  %vm7631 = vmor %vm7629, %vm7630
  %v7632 = vsel %vm7631, %v7624, %v7628
  %v7633 = vand.u32 2147483647, %v7622
  %vm7634 = vcmp.eq.f32.partialorder %v7633, 8.507059e+37
  %v7635 = vand.u32 %v7622, 2147483648
  %v7636 = vor.u32 1.1754944e-38, %v7635
  %v7637 = vsel %vm7634, %v7636, %v7632
  %v7638 = vmul.f32 1.0, %v7637
  %v7639 = vrcp.pop %v7623
  %v7640 = vmul.f32 %v7623, %v7639
  %v7641 = vsub.f32 1.0, %v7640
  %v7642 = vmul.f32 %v7639, %v7641
  %v7643 = vadd.f32 %v7639, %v7642
  %vm7644 = vweird.f32 %v7623
  %vm7645 = vweird.f32 %v7639
  %vm7646 = vmor %vm7644, %vm7645
  %v7647 = vsel %vm7646, %v7639, %v7643
  %v7648 = vand.u32 2147483647, %v7623
  %vm7649 = vcmp.eq.f32.partialorder %v7648, 8.507059e+37
  %v7650 = vand.u32 %v7623, 2147483648
  %v7651 = vor.u32 1.1754944e-38, %v7650
  %v7652 = vsel %vm7649, %v7651, %v7647
  %v7653 = vmul.f32 1.0, %v7652
  %v7654 = vmul.f32 %v7598, %v6952
  %v7655 = vmul.f32 %v7613, %v6953
  %v7656 = vmul.f32 %v7560, %v7614
  %v7657 = vmul.f32 %v7575, %v7615
  %v7658 = vadd.f32 %v7654, %v7656
  %v7659 = vadd.f32 %v7655, %v7657
  %v7660 = vtanh.pop %v7658
  %v7661 = vtanh.pop %v7659
  %v7662 = vmul.f32 %v7638, %v7660
  %v7663 = vmul.f32 %v7653, %v7661
  %v7664 = vpack.c.bf16 %v7662, %v7662
  %v7665 = vpack.c.bf16 %v7663, %v7663
  %s7666 = scalar_lea.vmem [#allocation5], 56
  %7667 = vst [vmem:[%s7666] sm:$0xf] %v7664
  %7668 = vst [vmem:[%s7666 + $0x4] sm:$0xf] %v7665
  %7669 = vst [vmem:[#allocation2] sm:$0xf] %v7166
  %7670 = vst [vmem:[#allocation2 + $0x4] sm:$0xf] %v7167
  %7671 = vst [vmem:[%s1199] sm:$0xf] %v7412
  %7672 = vst [vmem:[%s1199 + $0x4] sm:$0xf] %v7413
  %7673 = vst [vmem:[%s1205] sm:$0xf] %v7664
  %7674 = vst [vmem:[%s1205 + $0x4] sm:$0xf] %v7665
  %7675 = vst [vmem:[#allocation3] sm:$0xff] %v7160
  %7676 = vst [vmem:[#allocation3 + $0x8] sm:$0xff] %v7161
  %7677 = vst [vmem:[%s1202] sm:$0xff] %v7406
  %7678 = vst [vmem:[%s1202 + $0x8] sm:$0xff] %v7407
  %7679 = vst [vmem:[%s1208] sm:$0xff] %v7658
  %7680 = vst [vmem:[%s1208 + $0x8] sm:$0xff] %v7659
  %v7681 = vld [vmem:[#allocation5] sm:$0xf]
  %v7682 = vld [vmem:[#allocation5 + $0x4] sm:$0xf]
  %v7683 = vld [vmem:[#allocation5 + $0x8] sm:$0xf]
  %v7684 = vld [vmem:[#allocation5 + $0xc] sm:$0xf]
  %v7685 = vld [vmem:[#allocation5 + $0x10] sm:$0xf]
  %v7686 = vld [vmem:[#allocation5 + $0x14] sm:$0xf]
  %v7687 = vld [vmem:[#allocation5 + $0x18] sm:$0xf]
  %v7688 = vld [vmem:[#allocation5 + $0x1c] sm:$0xf]
  %v7689 = vld [vmem:[#allocation5 + $0x20] sm:$0xf]
  %v7690 = vld [vmem:[#allocation5 + $0x24] sm:$0xf]
  %v7691 = vld [vmem:[#allocation5 + $0x28] sm:$0xf]
  %v7692 = vld [vmem:[#allocation5 + $0x2c] sm:$0xf]
  %v7693 = vld [vmem:[#allocation5 + $0x30] sm:$0xf]
  %v7694 = vld [vmem:[#allocation5 + $0x34] sm:$0xf]
  %v7695 = vld [vmem:[#allocation5 + $0x38] sm:$0xf]
  %v7696 = vld [vmem:[#allocation5 + $0x3c] sm:$0xf]
  %v7697 = vld [vmem:[%s0 + $0x8] sm:$0xf]
  %v7698 = vld [vmem:[%s0 + $0x14] sm:$0xf]
  %v7699 = vld [vmem:[%s0 + $0x20] sm:$0xf]
  %v7700 = vld [vmem:[%s0 + $0x2c] sm:$0xf]
  %v7701 = vld [vmem:[%s0 + $0x38] sm:$0xf]
  %v7702 = vld [vmem:[%s0 + $0x44] sm:$0xf]
  %v7703 = vld [vmem:[%s0 + $0x50] sm:$0xf]
  %v7704 = vld [vmem:[%s0 + $0x5c] sm:$0xf]
  %v7705 = vld [vmem:[%s0 + $0x68] sm:$0xf]
  %v7706 = vld [vmem:[%s0 + $0x74] sm:$0xf]
  %v7707 = vld [vmem:[%s0 + $0x80] sm:$0xf]
  %v7708 = vld [vmem:[%s0 + $0x8c] sm:$0xf]
  %v7709 = vld [vmem:[%s0 + $0x98] sm:$0xf]
  %v7710 = vld [vmem:[%s0 + $0xa4] sm:$0xf]
  %v7711 = vld [vmem:[%s0 + $0xb0] sm:$0xf]
  %v7712 = vld [vmem:[%s0 + $0xbc] sm:$0xf]
  %v7713 = vld [vmem:[%s8] sm:$0xf]
  %v7714 = vld [vmem:[%s8 + $0x4] sm:$0xf]
  %v7715 = vld [vmem:[%s8 + $0x8] sm:$0xf]
  %v7716 = vld [vmem:[%s8 + $0xc] sm:$0xf]
  %v7717 = vld [vmem:[%s8 + $0x10] sm:$0xf]
  %v7718 = vld [vmem:[%s8 + $0x14] sm:$0xf]
  %v7719 = vld [vmem:[%s8 + $0x18] sm:$0xf]
  %v7720 = vld [vmem:[%s8 + $0x1c] sm:$0xf]
  %v7721 = vld [vmem:[%s8 + $0x20] sm:$0xf]
  %v7722 = vld [vmem:[%s8 + $0x24] sm:$0xf]
  %v7723 = vld [vmem:[%s8 + $0x28] sm:$0xf]
  %v7724 = vld [vmem:[%s8 + $0x2c] sm:$0xf]
  %v7725 = vld [vmem:[%s8 + $0x30] sm:$0xf]
  %v7726 = vld [vmem:[%s8 + $0x34] sm:$0xf]
  %v7727 = vld [vmem:[%s8 + $0x38] sm:$0xf]
  %v7728 = vld [vmem:[%s8 + $0x3c] sm:$0xf]
  %v7729 = vld [vmem:[%s9] sm:$0xf]
  %v7730 = vld [vmem:[%s9 + $0x4] sm:$0xf]
  %v7731 = vld [vmem:[%s9 + $0x8] sm:$0xf]
  %v7732 = vld [vmem:[%s9 + $0xc] sm:$0xf]
  %v7733 = vld [vmem:[%s9 + $0x10] sm:$0xf]
  %v7734 = vld [vmem:[%s9 + $0x14] sm:$0xf]
  %v7735 = vld [vmem:[%s9 + $0x18] sm:$0xf]
  %v7736 = vld [vmem:[%s9 + $0x1c] sm:$0xf]
  %v7737 = vld [vmem:[%s9 + $0x20] sm:$0xf]
  %v7738 = vld [vmem:[%s9 + $0x24] sm:$0xf]
  %v7739 = vld [vmem:[%s9 + $0x28] sm:$0xf]
  %v7740 = vld [vmem:[%s9 + $0x2c] sm:$0xf]
  %v7741 = vld [vmem:[%s9 + $0x30] sm:$0xf]
  %v7742 = vld [vmem:[%s9 + $0x34] sm:$0xf]
  %v7743 = vld [vmem:[%s9 + $0x38] sm:$0xf]
  %v7744 = vld [vmem:[%s9 + $0x3c] sm:$0xf]
  %v7761 = vunpack.c.l.b16 %v7697
  %v7762 = vunpack.c.l.b16 %v7698
  %v7763 = vunpack.c.l.b16 %v7699
  %v7764 = vunpack.c.l.b16 %v7700
  %v7765 = vunpack.c.l.b16 %v7701
  %v7766 = vunpack.c.l.b16 %v7702
  %v7767 = vunpack.c.l.b16 %v7703
  %v7768 = vunpack.c.l.b16 %v7704
  %v7769 = vunpack.c.l.b16 %v7705
  %v7770 = vunpack.c.l.b16 %v7706
  %v7771 = vunpack.c.l.b16 %v7707
  %v7772 = vunpack.c.l.b16 %v7708
  %v7773 = vunpack.c.l.b16 %v7709
  %v7774 = vunpack.c.l.b16 %v7710
  %v7775 = vunpack.c.l.b16 %v7711
  %v7776 = vunpack.c.l.b16 %v7712
  %v7777 = vpack.c.b16 %v7762, %v7761
  %v7778 = vpack.c.b16 %v7764, %v7763
  %v7779 = vpack.c.b16 %v7766, %v7765
  %v7780 = vpack.c.b16 %v7768, %v7767
  %v7781 = vpack.c.b16 %v7770, %v7769
  %v7782 = vpack.c.b16 %v7772, %v7771
  %v7783 = vpack.c.b16 %v7774, %v7773
  %v7784 = vpack.c.b16 %v7776, %v7775
  %v7809 = vunpack.c.l.b16 %v7729
  %v7810 = vunpack.c.l.b16 %v7730
  %v7811 = vunpack.c.l.b16 %v7731
  %v7812 = vunpack.c.l.b16 %v7732
  %v7813 = vunpack.c.l.b16 %v7733
  %v7814 = vunpack.c.l.b16 %v7734
  %v7815 = vunpack.c.l.b16 %v7735
  %v7816 = vunpack.c.l.b16 %v7736
  %v7817 = vunpack.c.l.b16 %v7737
  %v7818 = vunpack.c.l.b16 %v7738
  %v7819 = vunpack.c.l.b16 %v7739
  %v7820 = vunpack.c.l.b16 %v7740
  %v7821 = vunpack.c.l.b16 %v7741
  %v7822 = vunpack.c.l.b16 %v7742
  %v7823 = vunpack.c.l.b16 %v7743
  %v7824 = vunpack.c.l.b16 %v7744
  %v7825 = vpack.c.b16 %v7810, %v7809
  %v7826 = vpack.c.b16 %v7812, %v7811
  %v7827 = vpack.c.b16 %v7814, %v7813
  %v7828 = vpack.c.b16 %v7816, %v7815
  %v7829 = vpack.c.b16 %v7818, %v7817
  %v7830 = vpack.c.b16 %v7820, %v7819
  %v7831 = vpack.c.b16 %v7822, %v7821
  %v7832 = vpack.c.b16 %v7824, %v7823
  %7841 = vmatpush.bf16.msra.mxu0 %v7832
  %7842 = vmatpush.bf16.msra.mxu0 %v7831
  %7843 = vmatpush.bf16.msra.mxu0 %v7830
  %7844 = vmatpush.bf16.msra.mxu0 %v7829
  %7845 = vmatpush.bf16.msra.mxu0 %v7828
  %7846 = vmatpush.bf16.msra.mxu0 %v7827
  %7847 = vmatpush.bf16.msra.mxu0 %v7826
  %7848 = vmatpush.bf16.msra.mxu0 %v7825
  %7849 = vmatmul.bf16.gmra.mxu0 %v7777
  %v7850 = vpop.f32.mrf.mxu0
  %v7851 = vadd.f32 0.0, %v7850
  %v7852 = vpop.f32.mrf.mxu0
  %v7853 = vadd.f32 0.0, %v7852
  %7854 = vmatmul.bf16.gmra.mxu0 %v7778
  %v7855 = vpop.f32.mrf.mxu0
  %v7856 = vadd.f32 0.0, %v7855
  %v7857 = vpop.f32.mrf.mxu0
  %v7858 = vadd.f32 0.0, %v7857
  %7859 = vmatmul.bf16.gmra.mxu0 %v7779
  %v7860 = vpop.f32.mrf.mxu0
  %v7861 = vadd.f32 0.0, %v7860
  %v7862 = vpop.f32.mrf.mxu0
  %v7863 = vadd.f32 0.0, %v7862
  %7864 = vmatmul.bf16.gmra.mxu0 %v7780
  %v7865 = vpop.f32.mrf.mxu0
  %v7866 = vadd.f32 0.0, %v7865
  %v7867 = vpop.f32.mrf.mxu0
  %v7868 = vadd.f32 0.0, %v7867
  %7869 = vmatmul.bf16.gmra.mxu0 %v7781
  %v7870 = vpop.f32.mrf.mxu0
  %v7871 = vadd.f32 0.0, %v7870
  %v7872 = vpop.f32.mrf.mxu0
  %v7873 = vadd.f32 0.0, %v7872
  %7874 = vmatmul.bf16.gmra.mxu0 %v7782
  %v7875 = vpop.f32.mrf.mxu0
  %v7876 = vadd.f32 0.0, %v7875
  %v7877 = vpop.f32.mrf.mxu0
  %v7878 = vadd.f32 0.0, %v7877
  %7879 = vmatmul.bf16.gmra.mxu0 %v7783
  %v7880 = vpop.f32.mrf.mxu0
  %v7881 = vadd.f32 0.0, %v7880
  %v7882 = vpop.f32.mrf.mxu0
  %v7883 = vadd.f32 0.0, %v7882
  %7884 = vmatmul.bf16.gmra.mxu0 %v7784
  %v7885 = vpop.f32.mrf.mxu0
  %v7886 = vadd.f32 0.0, %v7885
  %v7887 = vpop.f32.mrf.mxu0
  %v7888 = vadd.f32 0.0, %v7887
  %7889 = vdwg.mxu0
  %v7906 = vunpack.c.l.b16 %v7681
  %v7907 = vunpack.c.l.b16 %v7682
  %v7908 = vunpack.c.l.b16 %v7683
  %v7909 = vunpack.c.l.b16 %v7684
  %v7910 = vunpack.c.l.b16 %v7685
  %v7911 = vunpack.c.l.b16 %v7686
  %v7912 = vunpack.c.l.b16 %v7687
  %v7913 = vunpack.c.l.b16 %v7688
  %v7914 = vunpack.c.l.b16 %v7689
  %v7915 = vunpack.c.l.b16 %v7690
  %v7916 = vunpack.c.l.b16 %v7691
  %v7917 = vunpack.c.l.b16 %v7692
  %v7918 = vunpack.c.l.b16 %v7693
  %v7919 = vunpack.c.l.b16 %v7694
  %v7920 = vunpack.c.l.b16 %v7695
  %v7921 = vunpack.c.l.b16 %v7696
  %v7922 = vpack.c.b16 %v7907, %v7906
  %v7923 = vpack.c.b16 %v7909, %v7908
  %v7924 = vpack.c.b16 %v7911, %v7910
  %v7925 = vpack.c.b16 %v7913, %v7912
  %v7926 = vpack.c.b16 %v7915, %v7914
  %v7927 = vpack.c.b16 %v7917, %v7916
  %v7928 = vpack.c.b16 %v7919, %v7918
  %v7929 = vpack.c.b16 %v7921, %v7920
  %v7954 = vunpack.c.l.b16 %v7713
  %v7955 = vunpack.c.l.b16 %v7714
  %v7956 = vunpack.c.l.b16 %v7715
  %v7957 = vunpack.c.l.b16 %v7716
  %v7958 = vunpack.c.l.b16 %v7717
  %v7959 = vunpack.c.l.b16 %v7718
  %v7960 = vunpack.c.l.b16 %v7719
  %v7961 = vunpack.c.l.b16 %v7720
  %v7962 = vunpack.c.l.b16 %v7721
  %v7963 = vunpack.c.l.b16 %v7722
  %v7964 = vunpack.c.l.b16 %v7723
  %v7965 = vunpack.c.l.b16 %v7724
  %v7966 = vunpack.c.l.b16 %v7725
  %v7967 = vunpack.c.l.b16 %v7726
  %v7968 = vunpack.c.l.b16 %v7727
  %v7969 = vunpack.c.l.b16 %v7728
  %v7970 = vpack.c.b16 %v7955, %v7954
  %v7971 = vpack.c.b16 %v7957, %v7956
  %v7972 = vpack.c.b16 %v7959, %v7958
  %v7973 = vpack.c.b16 %v7961, %v7960
  %v7974 = vpack.c.b16 %v7963, %v7962
  %v7975 = vpack.c.b16 %v7965, %v7964
  %v7976 = vpack.c.b16 %v7967, %v7966
  %v7977 = vpack.c.b16 %v7969, %v7968
  %7986 = vmatpush.bf16.msra.mxu0 %v7977
  %7987 = vmatpush.bf16.msra.mxu0 %v7976
  %7988 = vmatpush.bf16.msra.mxu0 %v7975
  %7989 = vmatpush.bf16.msra.mxu0 %v7974
  %7990 = vmatpush.bf16.msra.mxu0 %v7973
  %7991 = vmatpush.bf16.msra.mxu0 %v7972
  %7992 = vmatpush.bf16.msra.mxu0 %v7971
  %7993 = vmatpush.bf16.msra.mxu0 %v7970
  %7994 = vmatmul.bf16.gmra.mxu0 %v7922
  %v7995 = vpop.f32.mrf.mxu0
  %v7996 = vadd.f32 %v7851, %v7995
  %v7997 = vpop.f32.mrf.mxu0
  %v7998 = vadd.f32 %v7853, %v7997
  %7999 = vmatmul.bf16.gmra.mxu0 %v7923
  %v8000 = vpop.f32.mrf.mxu0
  %v8001 = vadd.f32 %v7856, %v8000
  %v8002 = vpop.f32.mrf.mxu0
  %v8003 = vadd.f32 %v7858, %v8002
  %8004 = vmatmul.bf16.gmra.mxu0 %v7924
  %v8005 = vpop.f32.mrf.mxu0
  %v8006 = vadd.f32 %v7861, %v8005
  %v8007 = vpop.f32.mrf.mxu0
  %v8008 = vadd.f32 %v7863, %v8007
  %8009 = vmatmul.bf16.gmra.mxu0 %v7925
  %v8010 = vpop.f32.mrf.mxu0
  %v8011 = vadd.f32 %v7866, %v8010
  %v8012 = vpop.f32.mrf.mxu0
  %v8013 = vadd.f32 %v7868, %v8012
  %8014 = vmatmul.bf16.gmra.mxu0 %v7926
  %v8015 = vpop.f32.mrf.mxu0
  %v8016 = vadd.f32 %v7871, %v8015
  %v8017 = vpop.f32.mrf.mxu0
  %v8018 = vadd.f32 %v7873, %v8017
  %8019 = vmatmul.bf16.gmra.mxu0 %v7927
  %v8020 = vpop.f32.mrf.mxu0
  %v8021 = vadd.f32 %v7876, %v8020
  %v8022 = vpop.f32.mrf.mxu0
  %v8023 = vadd.f32 %v7878, %v8022
  %8024 = vmatmul.bf16.gmra.mxu0 %v7928
  %v8025 = vpop.f32.mrf.mxu0
  %v8026 = vadd.f32 %v7881, %v8025
  %v8027 = vpop.f32.mrf.mxu0
  %v8028 = vadd.f32 %v7883, %v8027
  %8029 = vmatmul.bf16.gmra.mxu0 %v7929
  %v8030 = vpop.f32.mrf.mxu0
  %v8031 = vadd.f32 %v7886, %v8030
  %v8032 = vpop.f32.mrf.mxu0
  %v8033 = vadd.f32 %v7888, %v8032
  %8034 = vdwg.mxu0
  %v8035 = vld [vmem:[%s10] sm:$0x1]
  %v8037 = vperm.slane %v8035, 0
  %v8039 = vadd.f32 %v7996, %v8037
  %v8040 = vadd.f32 %v7998, %v8037
  %v8041 = vadd.f32 %v8001, %v8037
  %v8042 = vadd.f32 %v8003, %v8037
  %v8043 = vadd.f32 %v8006, %v8037
  %v8044 = vadd.f32 %v8008, %v8037
  %v8045 = vadd.f32 %v8011, %v8037
  %v8046 = vadd.f32 %v8013, %v8037
  %v8047 = vadd.f32 %v8016, %v8037
  %v8048 = vadd.f32 %v8018, %v8037
  %v8049 = vadd.f32 %v8021, %v8037
  %v8050 = vadd.f32 %v8023, %v8037
  %v8051 = vadd.f32 %v8026, %v8037
  %v8052 = vadd.f32 %v8028, %v8037
  %v8053 = vadd.f32 %v8031, %v8037
  %v8054 = vadd.f32 %v8033, %v8037
  %v8055 = vmax.f32 %v8039, 0.0
  %v8056 = vmax.f32 %v8040, 0.0
  %v8057 = vmax.f32 %v8041, 0.0
  %v8058 = vmax.f32 %v8042, 0.0
  %v8059 = vmax.f32 %v8043, 0.0
  %v8060 = vmax.f32 %v8044, 0.0
  %v8061 = vmax.f32 %v8045, 0.0
  %v8062 = vmax.f32 %v8046, 0.0
  %v8063 = vmax.f32 %v8047, 0.0
  %v8064 = vmax.f32 %v8048, 0.0
  %v8065 = vmax.f32 %v8049, 0.0
  %v8066 = vmax.f32 %v8050, 0.0
  %v8067 = vmax.f32 %v8051, 0.0
  %v8068 = vmax.f32 %v8052, 0.0
  %v8069 = vmax.f32 %v8053, 0.0
  %v8070 = vmax.f32 %v8054, 0.0
  %v8071 = vpack.c.bf16 %v8056, %v8055
  %v8072 = vpack.c.bf16 %v8058, %v8057
  %v8073 = vpack.c.bf16 %v8060, %v8059
  %v8074 = vpack.c.bf16 %v8062, %v8061
  %v8075 = vpack.c.bf16 %v8064, %v8063
  %v8076 = vpack.c.bf16 %v8066, %v8065
  %v8077 = vpack.c.bf16 %v8068, %v8067
  %v8078 = vpack.c.bf16 %v8070, %v8069
  %v8079 = vld [vmem:[%s11] sm:$0xf]
  %v8080 = vld [vmem:[%s11 + $0x4] sm:$0xf]
  %v8081 = vld [vmem:[%s11 + $0x8] sm:$0xf]
  %v8082 = vld [vmem:[%s11 + $0xc] sm:$0xf]
  %v8083 = vld [vmem:[%s11 + $0x10] sm:$0xf]
  %v8084 = vld [vmem:[%s11 + $0x14] sm:$0xf]
  %v8085 = vld [vmem:[%s11 + $0x18] sm:$0xf]
  %v8086 = vld [vmem:[%s11 + $0x1c] sm:$0xf]
  %v8087 = vld [vmem:[%s11 + $0x20] sm:$0xf]
  %v8088 = vld [vmem:[%s11 + $0x24] sm:$0xf]
  %v8089 = vld [vmem:[%s11 + $0x28] sm:$0xf]
  %v8090 = vld [vmem:[%s11 + $0x2c] sm:$0xf]
  %v8091 = vld [vmem:[%s11 + $0x30] sm:$0xf]
  %v8092 = vld [vmem:[%s11 + $0x34] sm:$0xf]
  %v8093 = vld [vmem:[%s11 + $0x38] sm:$0xf]
  %v8094 = vld [vmem:[%s11 + $0x3c] sm:$0xf]
  %v8095 = vld [vmem:[%s12] sm:$0x1]
  %v8097 = vperm.slane %v8095, 0
  %v8115 = vunpack.c.l.b16 %v8079
  %v8116 = vunpack.c.l.b16 %v8080
  %v8117 = vunpack.c.l.b16 %v8081
  %v8118 = vunpack.c.l.b16 %v8082
  %v8119 = vunpack.c.l.b16 %v8083
  %v8120 = vunpack.c.l.b16 %v8084
  %v8121 = vunpack.c.l.b16 %v8085
  %v8122 = vunpack.c.l.b16 %v8086
  %v8123 = vunpack.c.l.b16 %v8087
  %v8124 = vunpack.c.l.b16 %v8088
  %v8125 = vunpack.c.l.b16 %v8089
  %v8126 = vunpack.c.l.b16 %v8090
  %v8127 = vunpack.c.l.b16 %v8091
  %v8128 = vunpack.c.l.b16 %v8092
  %v8129 = vunpack.c.l.b16 %v8093
  %v8130 = vunpack.c.l.b16 %v8094
  %v8131 = vpack.c.b16 %v8116, %v8115
  %v8132 = vpack.c.b16 %v8118, %v8117
  %v8133 = vpack.c.b16 %v8120, %v8119
  %v8134 = vpack.c.b16 %v8122, %v8121
  %v8135 = vpack.c.b16 %v8124, %v8123
  %v8136 = vpack.c.b16 %v8126, %v8125
  %v8137 = vpack.c.b16 %v8128, %v8127
  %v8138 = vpack.c.b16 %v8130, %v8129
  %8147 = vmatpush.bf16.msra.mxu0 %v8138
  %8148 = vmatpush.bf16.msra.mxu0 %v8137
  %8149 = vmatpush.bf16.msra.mxu0 %v8136
  %8150 = vmatpush.bf16.msra.mxu0 %v8135
  %8151 = vmatpush.bf16.msra.mxu0 %v8134
  %8152 = vmatpush.bf16.msra.mxu0 %v8133
  %8153 = vmatpush.bf16.msra.mxu0 %v8132
  %8154 = vmatpush.bf16.msra.mxu0 %v8131
  %8155 = vmatmul.bf16.gmra.mxu0 %v8071
  %v8156 = vpop.f32.mrf.mxu0
  %v8157 = vadd.f32 %v8097, %v8156
  %v8158 = vpop.f32.mrf.mxu0
  %v8159 = vadd.f32 %v8097, %v8158
  %8160 = vmatmul.bf16.gmra.mxu0 %v8072
  %v8161 = vpop.f32.mrf.mxu0
  %v8162 = vadd.f32 %v8097, %v8161
  %v8163 = vpop.f32.mrf.mxu0
  %v8164 = vadd.f32 %v8097, %v8163
  %8165 = vmatmul.bf16.gmra.mxu0 %v8073
  %v8166 = vpop.f32.mrf.mxu0
  %v8167 = vadd.f32 %v8097, %v8166
  %v8168 = vpop.f32.mrf.mxu0
  %v8169 = vadd.f32 %v8097, %v8168
  %8170 = vmatmul.bf16.gmra.mxu0 %v8074
  %v8171 = vpop.f32.mrf.mxu0
  %v8172 = vadd.f32 %v8097, %v8171
  %v8173 = vpop.f32.mrf.mxu0
  %v8174 = vadd.f32 %v8097, %v8173
  %8175 = vmatmul.bf16.gmra.mxu0 %v8075
  %v8176 = vpop.f32.mrf.mxu0
  %v8177 = vadd.f32 %v8097, %v8176
  %v8178 = vpop.f32.mrf.mxu0
  %v8179 = vadd.f32 %v8097, %v8178
  %8180 = vmatmul.bf16.gmra.mxu0 %v8076
  %v8181 = vpop.f32.mrf.mxu0
  %v8182 = vadd.f32 %v8097, %v8181
  %v8183 = vpop.f32.mrf.mxu0
  %v8184 = vadd.f32 %v8097, %v8183
  %8185 = vmatmul.bf16.gmra.mxu0 %v8077
  %v8186 = vpop.f32.mrf.mxu0
  %v8187 = vadd.f32 %v8097, %v8186
  %v8188 = vpop.f32.mrf.mxu0
  %v8189 = vadd.f32 %v8097, %v8188
  %8190 = vmatmul.bf16.gmra.mxu0 %v8078
  %v8191 = vpop.f32.mrf.mxu0
  %v8192 = vadd.f32 %v8097, %v8191
  %v8193 = vpop.f32.mrf.mxu0
  %v8194 = vadd.f32 %v8097, %v8193
  %8195 = vdwg.mxu0
  %v8196 = vmax.f32 %v8157, 0.0
  %v8197 = vmax.f32 %v8159, 0.0
  %v8198 = vmax.f32 %v8162, 0.0
  %v8199 = vmax.f32 %v8164, 0.0
  %v8200 = vmax.f32 %v8167, 0.0
  %v8201 = vmax.f32 %v8169, 0.0
  %v8202 = vmax.f32 %v8172, 0.0
  %v8203 = vmax.f32 %v8174, 0.0
  %v8204 = vmax.f32 %v8177, 0.0
  %v8205 = vmax.f32 %v8179, 0.0
  %v8206 = vmax.f32 %v8182, 0.0
  %v8207 = vmax.f32 %v8184, 0.0
  %v8208 = vmax.f32 %v8187, 0.0
  %v8209 = vmax.f32 %v8189, 0.0
  %v8210 = vmax.f32 %v8192, 0.0
  %v8211 = vmax.f32 %v8194, 0.0
  %v8212 = vld [vmem:[%s13] sm:$0x1]
  %v8214 = vperm.slane %v8212, 0
  %v8216 = vmul.f32 %v8196, %v8214
  %v8217 = vmul.f32 %v8197, %v8214
  %v8218 = vmul.f32 %v8198, %v8214
  %v8219 = vmul.f32 %v8199, %v8214
  %v8220 = vmul.f32 %v8200, %v8214
  %v8221 = vmul.f32 %v8201, %v8214
  %v8222 = vmul.f32 %v8202, %v8214
  %v8223 = vmul.f32 %v8203, %v8214
  %v8224 = vmul.f32 %v8204, %v8214
  %v8225 = vmul.f32 %v8205, %v8214
  %v8226 = vmul.f32 %v8206, %v8214
  %v8227 = vmul.f32 %v8207, %v8214
  %v8228 = vmul.f32 %v8208, %v8214
  %v8229 = vmul.f32 %v8209, %v8214
  %v8230 = vmul.f32 %v8210, %v8214
  %v8231 = vmul.f32 %v8211, %v8214
  %8232 = vadd.xlane.f32.xlu0 %v8216
  %v8233 = vpop.xlane.xlu0 %8232
  %8234 = vadd.xlane.f32.xlu0 %v8217
  %v8235 = vpop.xlane.xlu0 %8234
  %8236 = vadd.xlane.f32.xlu0 %v8218
  %v8237 = vpop.xlane.xlu0 %8236
  %8238 = vadd.xlane.f32.xlu0 %v8219
  %v8239 = vpop.xlane.xlu0 %8238
  %8240 = vadd.xlane.f32.xlu0 %v8220
  %v8241 = vpop.xlane.xlu0 %8240
  %8242 = vadd.xlane.f32.xlu0 %v8221
  %v8243 = vpop.xlane.xlu0 %8242
  %8244 = vadd.xlane.f32.xlu0 %v8222
  %v8245 = vpop.xlane.xlu0 %8244
  %8246 = vadd.xlane.f32.xlu0 %v8223
  %v8247 = vpop.xlane.xlu0 %8246
  %8248 = vadd.xlane.f32.xlu0 %v8224
  %v8249 = vpop.xlane.xlu0 %8248
  %8250 = vadd.xlane.f32.xlu0 %v8225
  %v8251 = vpop.xlane.xlu0 %8250
  %8252 = vadd.xlane.f32.xlu0 %v8226
  %v8253 = vpop.xlane.xlu0 %8252
  %8254 = vadd.xlane.f32.xlu0 %v8227
  %v8255 = vpop.xlane.xlu0 %8254
  %8256 = vadd.xlane.f32.xlu0 %v8228
  %v8257 = vpop.xlane.xlu0 %8256
  %8258 = vadd.xlane.f32.xlu0 %v8229
  %v8259 = vpop.xlane.xlu0 %8258
  %8260 = vadd.xlane.f32.xlu0 %v8230
  %v8261 = vpop.xlane.xlu0 %8260
  %8262 = vadd.xlane.f32.xlu0 %v8231
  %v8263 = vpop.xlane.xlu0 %8262
  %v8264 = vld [vmem:[#allocation6] sm:$0x1]
  %v8266 = vperm.slane %v8264, 0
  %8267 = vset.pattern.permute.xlu0 0
  %8268 = vperm.xlu0 %8267, %v8266
  %v8269 = vpop.permute.xlu0 %8268
  %v8271 = vadd.f32 %v8233, %v8269
  %v8272 = vadd.f32 %v8235, %v8269
  %v8273 = vadd.f32 %v8237, %v8269
  %v8274 = vadd.f32 %v8239, %v8269
  %v8275 = vadd.f32 %v8241, %v8269
  %v8276 = vadd.f32 %v8243, %v8269
  %v8277 = vadd.f32 %v8245, %v8269
  %v8278 = vadd.f32 %v8247, %v8269
  %v8279 = vadd.f32 %v8249, %v8269
  %v8280 = vadd.f32 %v8251, %v8269
  %v8281 = vadd.f32 %v8253, %v8269
  %v8282 = vadd.f32 %v8255, %v8269
  %v8283 = vadd.f32 %v8257, %v8269
  %v8284 = vadd.f32 %v8259, %v8269
  %v8285 = vadd.f32 %v8261, %v8269
  %v8286 = vadd.f32 %v8263, %v8269
  %v8287 = vxor.u32 %v8271, 2147483648
  %v8288 = vxor.u32 %v8272, 2147483648
  %v8289 = vxor.u32 %v8273, 2147483648
  %v8290 = vxor.u32 %v8274, 2147483648
  %v8291 = vxor.u32 %v8275, 2147483648
  %v8292 = vxor.u32 %v8276, 2147483648
  %v8293 = vxor.u32 %v8277, 2147483648
  %v8294 = vxor.u32 %v8278, 2147483648
  %v8295 = vxor.u32 %v8279, 2147483648
  %v8296 = vxor.u32 %v8280, 2147483648
  %v8297 = vxor.u32 %v8281, 2147483648
  %v8298 = vxor.u32 %v8282, 2147483648
  %v8299 = vxor.u32 %v8283, 2147483648
  %v8300 = vxor.u32 %v8284, 2147483648
  %v8301 = vxor.u32 %v8285, 2147483648
  %v8302 = vxor.u32 %v8286, 2147483648
  %v8303 = vmul.f32 %v8287, 1.442695
  %v8304 = vpow.pop %v8303
  %v8305 = vmul.f32 %v8288, 1.442695
  %v8306 = vpow.pop %v8305
  %v8307 = vmul.f32 %v8289, 1.442695
  %v8308 = vpow.pop %v8307
  %v8309 = vmul.f32 %v8290, 1.442695
  %v8310 = vpow.pop %v8309
  %v8311 = vmul.f32 %v8291, 1.442695
  %v8312 = vpow.pop %v8311
  %v8313 = vmul.f32 %v8292, 1.442695
  %v8314 = vpow.pop %v8313
  %v8315 = vmul.f32 %v8293, 1.442695
  %v8316 = vpow.pop %v8315
  %v8317 = vmul.f32 %v8294, 1.442695
  %v8318 = vpow.pop %v8317
  %v8319 = vmul.f32 %v8295, 1.442695
  %v8320 = vpow.pop %v8319
  %v8321 = vmul.f32 %v8296, 1.442695
  %v8322 = vpow.pop %v8321
  %v8323 = vmul.f32 %v8297, 1.442695
  %v8324 = vpow.pop %v8323
  %v8325 = vmul.f32 %v8298, 1.442695
  %v8326 = vpow.pop %v8325
  %v8327 = vmul.f32 %v8299, 1.442695
  %v8328 = vpow.pop %v8327
  %v8329 = vmul.f32 %v8300, 1.442695
  %v8330 = vpow.pop %v8329
  %v8331 = vmul.f32 %v8301, 1.442695
  %v8332 = vpow.pop %v8331
  %v8333 = vmul.f32 %v8302, 1.442695
  %v8334 = vpow.pop %v8333
  %v8335 = vadd.f32 %v8304, 1.0
  %v8336 = vadd.f32 %v8306, 1.0
  %v8337 = vadd.f32 %v8308, 1.0
  %v8338 = vadd.f32 %v8310, 1.0
  %v8339 = vadd.f32 %v8312, 1.0
  %v8340 = vadd.f32 %v8314, 1.0
  %v8341 = vadd.f32 %v8316, 1.0
  %v8342 = vadd.f32 %v8318, 1.0
  %v8343 = vadd.f32 %v8320, 1.0
  %v8344 = vadd.f32 %v8322, 1.0
  %v8345 = vadd.f32 %v8324, 1.0
  %v8346 = vadd.f32 %v8326, 1.0
  %v8347 = vadd.f32 %v8328, 1.0
  %v8348 = vadd.f32 %v8330, 1.0
  %v8349 = vadd.f32 %v8332, 1.0
  %v8350 = vadd.f32 %v8334, 1.0
  %v8351 = vrcp.pop %v8335
  %v8352 = vmul.f32 %v8335, %v8351
  %v8353 = vsub.f32 1.0, %v8352
  %v8354 = vmul.f32 %v8351, %v8353
  %v8355 = vadd.f32 %v8351, %v8354
  %vm8356 = vweird.f32 %v8335
  %vm8357 = vweird.f32 %v8351
  %vm8358 = vmor %vm8356, %vm8357
  %v8359 = vsel %vm8358, %v8351, %v8355
  %v8360 = vand.u32 2147483647, %v8335
  %vm8361 = vcmp.eq.f32.partialorder %v8360, 8.507059e+37
  %v8362 = vand.u32 %v8335, 2147483648
  %v8363 = vor.u32 1.1754944e-38, %v8362
  %v8364 = vsel %vm8361, %v8363, %v8359
  %v8365 = vmul.f32 1.0, %v8364
  %v8366 = vrcp.pop %v8336
  %v8367 = vmul.f32 %v8336, %v8366
  %v8368 = vsub.f32 1.0, %v8367
  %v8369 = vmul.f32 %v8366, %v8368
  %v8370 = vadd.f32 %v8366, %v8369
  %vm8371 = vweird.f32 %v8336
  %vm8372 = vweird.f32 %v8366
  %vm8373 = vmor %vm8371, %vm8372
  %v8374 = vsel %vm8373, %v8366, %v8370
  %v8375 = vand.u32 2147483647, %v8336
  %vm8376 = vcmp.eq.f32.partialorder %v8375, 8.507059e+37
  %v8377 = vand.u32 %v8336, 2147483648
  %v8378 = vor.u32 1.1754944e-38, %v8377
  %v8379 = vsel %vm8376, %v8378, %v8374
  %v8380 = vmul.f32 1.0, %v8379
  %v8381 = vrcp.pop %v8337
  %v8382 = vmul.f32 %v8337, %v8381
  %v8383 = vsub.f32 1.0, %v8382
  %v8384 = vmul.f32 %v8381, %v8383
  %v8385 = vadd.f32 %v8381, %v8384
  %vm8386 = vweird.f32 %v8337
  %vm8387 = vweird.f32 %v8381
  %vm8388 = vmor %vm8386, %vm8387
  %v8389 = vsel %vm8388, %v8381, %v8385
  %v8390 = vand.u32 2147483647, %v8337
  %vm8391 = vcmp.eq.f32.partialorder %v8390, 8.507059e+37
  %v8392 = vand.u32 %v8337, 2147483648
  %v8393 = vor.u32 1.1754944e-38, %v8392
  %v8394 = vsel %vm8391, %v8393, %v8389
  %v8395 = vmul.f32 1.0, %v8394
  %v8396 = vrcp.pop %v8338
  %v8397 = vmul.f32 %v8338, %v8396
  %v8398 = vsub.f32 1.0, %v8397
  %v8399 = vmul.f32 %v8396, %v8398
  %v8400 = vadd.f32 %v8396, %v8399
  %vm8401 = vweird.f32 %v8338
  %vm8402 = vweird.f32 %v8396
  %vm8403 = vmor %vm8401, %vm8402
  %v8404 = vsel %vm8403, %v8396, %v8400
  %v8405 = vand.u32 2147483647, %v8338
  %vm8406 = vcmp.eq.f32.partialorder %v8405, 8.507059e+37
  %v8407 = vand.u32 %v8338, 2147483648
  %v8408 = vor.u32 1.1754944e-38, %v8407
  %v8409 = vsel %vm8406, %v8408, %v8404
  %v8410 = vmul.f32 1.0, %v8409
  %v8411 = vrcp.pop %v8339
  %v8412 = vmul.f32 %v8339, %v8411
  %v8413 = vsub.f32 1.0, %v8412
  %v8414 = vmul.f32 %v8411, %v8413
  %v8415 = vadd.f32 %v8411, %v8414
  %vm8416 = vweird.f32 %v8339
  %vm8417 = vweird.f32 %v8411
  %vm8418 = vmor %vm8416, %vm8417
  %v8419 = vsel %vm8418, %v8411, %v8415
  %v8420 = vand.u32 2147483647, %v8339
  %vm8421 = vcmp.eq.f32.partialorder %v8420, 8.507059e+37
  %v8422 = vand.u32 %v8339, 2147483648
  %v8423 = vor.u32 1.1754944e-38, %v8422
  %v8424 = vsel %vm8421, %v8423, %v8419
  %v8425 = vmul.f32 1.0, %v8424
  %v8426 = vrcp.pop %v8340
  %v8427 = vmul.f32 %v8340, %v8426
  %v8428 = vsub.f32 1.0, %v8427
  %v8429 = vmul.f32 %v8426, %v8428
  %v8430 = vadd.f32 %v8426, %v8429
  %vm8431 = vweird.f32 %v8340
  %vm8432 = vweird.f32 %v8426
  %vm8433 = vmor %vm8431, %vm8432
  %v8434 = vsel %vm8433, %v8426, %v8430
  %v8435 = vand.u32 2147483647, %v8340
  %vm8436 = vcmp.eq.f32.partialorder %v8435, 8.507059e+37
  %v8437 = vand.u32 %v8340, 2147483648
  %v8438 = vor.u32 1.1754944e-38, %v8437
  %v8439 = vsel %vm8436, %v8438, %v8434
  %v8440 = vmul.f32 1.0, %v8439
  %v8441 = vrcp.pop %v8341
  %v8442 = vmul.f32 %v8341, %v8441
  %v8443 = vsub.f32 1.0, %v8442
  %v8444 = vmul.f32 %v8441, %v8443
  %v8445 = vadd.f32 %v8441, %v8444
  %vm8446 = vweird.f32 %v8341
  %vm8447 = vweird.f32 %v8441
  %vm8448 = vmor %vm8446, %vm8447
  %v8449 = vsel %vm8448, %v8441, %v8445
  %v8450 = vand.u32 2147483647, %v8341
  %vm8451 = vcmp.eq.f32.partialorder %v8450, 8.507059e+37
  %v8452 = vand.u32 %v8341, 2147483648
  %v8453 = vor.u32 1.1754944e-38, %v8452
  %v8454 = vsel %vm8451, %v8453, %v8449
  %v8455 = vmul.f32 1.0, %v8454
  %v8456 = vrcp.pop %v8342
  %v8457 = vmul.f32 %v8342, %v8456
  %v8458 = vsub.f32 1.0, %v8457
  %v8459 = vmul.f32 %v8456, %v8458
  %v8460 = vadd.f32 %v8456, %v8459
  %vm8461 = vweird.f32 %v8342
  %vm8462 = vweird.f32 %v8456
  %vm8463 = vmor %vm8461, %vm8462
  %v8464 = vsel %vm8463, %v8456, %v8460
  %v8465 = vand.u32 2147483647, %v8342
  %vm8466 = vcmp.eq.f32.partialorder %v8465, 8.507059e+37
  %v8467 = vand.u32 %v8342, 2147483648
  %v8468 = vor.u32 1.1754944e-38, %v8467
  %v8469 = vsel %vm8466, %v8468, %v8464
  %v8470 = vmul.f32 1.0, %v8469
  %v8471 = vrcp.pop %v8343
  %v8472 = vmul.f32 %v8343, %v8471
  %v8473 = vsub.f32 1.0, %v8472
  %v8474 = vmul.f32 %v8471, %v8473
  %v8475 = vadd.f32 %v8471, %v8474
  %vm8476 = vweird.f32 %v8343
  %vm8477 = vweird.f32 %v8471
  %vm8478 = vmor %vm8476, %vm8477
  %v8479 = vsel %vm8478, %v8471, %v8475
  %v8480 = vand.u32 2147483647, %v8343
  %vm8481 = vcmp.eq.f32.partialorder %v8480, 8.507059e+37
  %v8482 = vand.u32 %v8343, 2147483648
  %v8483 = vor.u32 1.1754944e-38, %v8482
  %v8484 = vsel %vm8481, %v8483, %v8479
  %v8485 = vmul.f32 1.0, %v8484
  %v8486 = vrcp.pop %v8344
  %v8487 = vmul.f32 %v8344, %v8486
  %v8488 = vsub.f32 1.0, %v8487
  %v8489 = vmul.f32 %v8486, %v8488
  %v8490 = vadd.f32 %v8486, %v8489
  %vm8491 = vweird.f32 %v8344
  %vm8492 = vweird.f32 %v8486
  %vm8493 = vmor %vm8491, %vm8492
  %v8494 = vsel %vm8493, %v8486, %v8490
  %v8495 = vand.u32 2147483647, %v8344
  %vm8496 = vcmp.eq.f32.partialorder %v8495, 8.507059e+37
  %v8497 = vand.u32 %v8344, 2147483648
  %v8498 = vor.u32 1.1754944e-38, %v8497
  %v8499 = vsel %vm8496, %v8498, %v8494
  %v8500 = vmul.f32 1.0, %v8499
  %v8501 = vrcp.pop %v8345
  %v8502 = vmul.f32 %v8345, %v8501
  %v8503 = vsub.f32 1.0, %v8502
  %v8504 = vmul.f32 %v8501, %v8503
  %v8505 = vadd.f32 %v8501, %v8504
  %vm8506 = vweird.f32 %v8345
  %vm8507 = vweird.f32 %v8501
  %vm8508 = vmor %vm8506, %vm8507
  %v8509 = vsel %vm8508, %v8501, %v8505
  %v8510 = vand.u32 2147483647, %v8345
  %vm8511 = vcmp.eq.f32.partialorder %v8510, 8.507059e+37
  %v8512 = vand.u32 %v8345, 2147483648
  %v8513 = vor.u32 1.1754944e-38, %v8512
  %v8514 = vsel %vm8511, %v8513, %v8509
  %v8515 = vmul.f32 1.0, %v8514
  %v8516 = vrcp.pop %v8346
  %v8517 = vmul.f32 %v8346, %v8516
  %v8518 = vsub.f32 1.0, %v8517
  %v8519 = vmul.f32 %v8516, %v8518
  %v8520 = vadd.f32 %v8516, %v8519
  %vm8521 = vweird.f32 %v8346
  %vm8522 = vweird.f32 %v8516
  %vm8523 = vmor %vm8521, %vm8522
  %v8524 = vsel %vm8523, %v8516, %v8520
  %v8525 = vand.u32 2147483647, %v8346
  %vm8526 = vcmp.eq.f32.partialorder %v8525, 8.507059e+37
  %v8527 = vand.u32 %v8346, 2147483648
  %v8528 = vor.u32 1.1754944e-38, %v8527
  %v8529 = vsel %vm8526, %v8528, %v8524
  %v8530 = vmul.f32 1.0, %v8529
  %v8531 = vrcp.pop %v8347
  %v8532 = vmul.f32 %v8347, %v8531
  %v8533 = vsub.f32 1.0, %v8532
  %v8534 = vmul.f32 %v8531, %v8533
  %v8535 = vadd.f32 %v8531, %v8534
  %vm8536 = vweird.f32 %v8347
  %vm8537 = vweird.f32 %v8531
  %vm8538 = vmor %vm8536, %vm8537
  %v8539 = vsel %vm8538, %v8531, %v8535
  %v8540 = vand.u32 2147483647, %v8347
  %vm8541 = vcmp.eq.f32.partialorder %v8540, 8.507059e+37
  %v8542 = vand.u32 %v8347, 2147483648
  %v8543 = vor.u32 1.1754944e-38, %v8542
  %v8544 = vsel %vm8541, %v8543, %v8539
  %v8545 = vmul.f32 1.0, %v8544
  %v8546 = vrcp.pop %v8348
  %v8547 = vmul.f32 %v8348, %v8546
  %v8548 = vsub.f32 1.0, %v8547
  %v8549 = vmul.f32 %v8546, %v8548
  %v8550 = vadd.f32 %v8546, %v8549
  %vm8551 = vweird.f32 %v8348
  %vm8552 = vweird.f32 %v8546
  %vm8553 = vmor %vm8551, %vm8552
  %v8554 = vsel %vm8553, %v8546, %v8550
  %v8555 = vand.u32 2147483647, %v8348
  %vm8556 = vcmp.eq.f32.partialorder %v8555, 8.507059e+37
  %v8557 = vand.u32 %v8348, 2147483648
  %v8558 = vor.u32 1.1754944e-38, %v8557
  %v8559 = vsel %vm8556, %v8558, %v8554
  %v8560 = vmul.f32 1.0, %v8559
  %v8561 = vrcp.pop %v8349
  %v8562 = vmul.f32 %v8349, %v8561
  %v8563 = vsub.f32 1.0, %v8562
  %v8564 = vmul.f32 %v8561, %v8563
  %v8565 = vadd.f32 %v8561, %v8564
  %vm8566 = vweird.f32 %v8349
  %vm8567 = vweird.f32 %v8561
  %vm8568 = vmor %vm8566, %vm8567
  %v8569 = vsel %vm8568, %v8561, %v8565
  %v8570 = vand.u32 2147483647, %v8349
  %vm8571 = vcmp.eq.f32.partialorder %v8570, 8.507059e+37
  %v8572 = vand.u32 %v8349, 2147483648
  %v8573 = vor.u32 1.1754944e-38, %v8572
  %v8574 = vsel %vm8571, %v8573, %v8569
  %v8575 = vmul.f32 1.0, %v8574
  %v8576 = vrcp.pop %v8350
  %v8577 = vmul.f32 %v8350, %v8576
  %v8578 = vsub.f32 1.0, %v8577
  %v8579 = vmul.f32 %v8576, %v8578
  %v8580 = vadd.f32 %v8576, %v8579
  %vm8581 = vweird.f32 %v8350
  %vm8582 = vweird.f32 %v8576
  %vm8583 = vmor %vm8581, %vm8582
  %v8584 = vsel %vm8583, %v8576, %v8580
  %v8585 = vand.u32 2147483647, %v8350
  %vm8586 = vcmp.eq.f32.partialorder %v8585, 8.507059e+37
  %v8587 = vand.u32 %v8350, 2147483648
  %v8588 = vor.u32 1.1754944e-38, %v8587
  %v8589 = vsel %vm8586, %v8588, %v8584
  %v8590 = vmul.f32 1.0, %v8589
  %v8607 = vlaneseq
  %v8608 = vand.u32 %v8607, 127
  %v8609 = vperm.slane %v8365, %v8608
  %v8610 = vadd.s32 %v8608, 4294967288
  %v8611 = vperm.slane %v8380, %v8610
  %vm8612 = vcmask 130112
  %v8613 = vsel %vm8612, %v8611, %v8609
  %v8614 = vperm.slane %v8395, %v8608
  %v8615 = vperm.slane %v8410, %v8610
  %v8616 = vsel %vm8612, %v8615, %v8614
  %v8617 = vperm.slane %v8425, %v8608
  %v8618 = vperm.slane %v8440, %v8610
  %v8619 = vsel %vm8612, %v8618, %v8617
  %v8620 = vperm.slane %v8455, %v8608
  %v8621 = vperm.slane %v8470, %v8610
  %v8622 = vsel %vm8612, %v8621, %v8620
  %v8623 = vperm.slane %v8485, %v8608
  %v8624 = vperm.slane %v8500, %v8610
  %v8625 = vsel %vm8612, %v8624, %v8623
  %v8626 = vperm.slane %v8515, %v8608
  %v8627 = vperm.slane %v8530, %v8610
  %v8628 = vsel %vm8612, %v8627, %v8626
  %v8629 = vperm.slane %v8545, %v8608
  %v8630 = vperm.slane %v8560, %v8610
  %v8631 = vsel %vm8612, %v8630, %v8629
  %v8632 = vperm.slane %v8575, %v8608
  %v8633 = vperm.slane %v8590, %v8610
  %v8634 = vsel %vm8612, %v8633, %v8632
  %vm8635 = vcmask 1041409
  %v8636 = vsel %vm8635, %v8616, %v8613
  %vm8637 = vcmask 1042434
  %v8638 = vsel %vm8637, %v8619, %v8636
  %vm8639 = vcmask 1043459
  %v8640 = vsel %vm8639, %v8622, %v8638
  %vm8641 = vcmask 1044484
  %v8642 = vsel %vm8641, %v8625, %v8640
  %vm8643 = vcmask 1045509
  %v8644 = vsel %vm8643, %v8628, %v8642
  %vm8645 = vcmask 1046534
  %v8646 = vsel %vm8645, %v8631, %v8644
  %vm8647 = vcmask 1047559
  %v8648 = vsel %vm8647, %v8634, %v8646
  %8650 = vxpose.xlu0.b32.start [1/16] %v8648, 128
  %8651 = vxpose.xlu0.b32.cont [2/16] 0.0, 128
  %8652 = vxpose.xlu0.b32.cont [3/16] 0.0, 128
  %8653 = vxpose.xlu0.b32.cont [4/16] 0.0, 128
  %8654 = vxpose.xlu0.b32.cont [5/16] 0.0, 128
  %8655 = vxpose.xlu0.b32.cont [6/16] 0.0, 128
  %8656 = vxpose.xlu0.b32.cont [7/16] 0.0, 128
  %8657 = vxpose.xlu0.b32.cont [8/16] 0.0, 128
  %8658 = vxpose.xlu0.b32.cont [9/16] 0.0, 128
  %8659 = vxpose.xlu0.b32.cont [10/16] 0.0, 128
  %8660 = vxpose.xlu0.b32.cont [11/16] 0.0, 128
  %8661 = vxpose.xlu0.b32.cont [12/16] 0.0, 128
  %8662 = vxpose.xlu0.b32.cont [13/16] 0.0, 128
  %8663 = vxpose.xlu0.b32.cont [14/16] 0.0, 128
  %8664 = vxpose.xlu0.b32.cont [15/16] 0.0, 128
  %8665 = vxpose.xlu0.b32.end [16/16] 0.0, 128
  %v8666 = vpop.trf.xlu0
  %v8667 = vpop.trf.xlu0
  %v8668 = vpop.trf.xlu0
  %v8669 = vpop.trf.xlu0
  %v8670 = vpop.trf.xlu0
  %v8671 = vpop.trf.xlu0
  %v8672 = vpop.trf.xlu0
  %v8673 = vpop.trf.xlu0
  %v8674 = vpop.trf.xlu0
  %v8675 = vpop.trf.xlu0
  %v8676 = vpop.trf.xlu0
  %v8677 = vpop.trf.xlu0
  %v8678 = vpop.trf.xlu0
  %v8679 = vpop.trf.xlu0
  %v8680 = vpop.trf.xlu0
  %v8681 = vpop.trf.xlu0
  %vm8682 = vcmask 64512
  %8683 = vst.msk [vmem:[%s15] sm:$0xff] %vm8682, %v8666
  %8684 = vst.msk [vmem:[%s15 + $0x8] sm:$0xff] %vm8682, %v8667
  // Predicated region
  $region66: #{critic_forward.1} parent=0 // pred_check
    _
  $region67: #{critic_forward.1} parent=0 // pred_check_branch
    %8686 = sbr.rel (0) target = $region69
  $region68: #{critic_forward.1} parent=0 // pred_region
    _
  $region69: #{critic_forward.1} parent=0 // pred_fallthru
    _
  // Predicated region
  $region70: #{critic_forward.1} parent=0 // pred_check
    _
  $region71: #{critic_forward.1} parent=0 // pred_check_branch
    %8688 = sbr.rel (0) target = $region73
  $region72: #{critic_forward.1} parent=0 // pred_region
    _
  $region73: #{critic_forward.1} parent=0 // pred_fallthru
    _

</llo_original>
